<compile_context>
chip_gen: v7x
topology: tpu7x:2x2x1
jax: 0.10.0
libtpu: 0.0.40
codegen_flags: <defaults>
</compile_context>

<pallas_src>
import functools

import jax
import jax.numpy as jnp
from jax import lax
from jax.experimental import pallas as pl
from jax.experimental.pallas import tpu as pltpu


def _round_up(v, m):
    return ((v + m - 1) // m) * m


# ----------------------------- in-kernel math --------------------------------

def _sigmoid(x):
    # exp -> EUP, approximate reciprocal -> EUP (both off the VPU critical path).
    return pl.reciprocal(1.0 + jnp.exp(-x), approx=True)


def _gelu(x):
    # tanh-approx GELU (EUP tanh); |err| vs exact erf-GELU < 1e-3.
    c = 0.7978845608028654  # sqrt(2/pi)
    return 0.5 * x * (1.0 + jnp.tanh(c * (x + 0.044715 * x * x * x)))


# ------------------------------ fused kernel ----------------------------------

def _block_kernel(x_ref, w_ref, b_ref, bal_ref, o_ref,
                  feat, pad_c, pad_l, pad_r, *, meta):
    """One grid step == one batch image; everything stays in VMEM."""
    H, W, C0, Ctot = meta["H"], meta["W"], meta["C0"], meta["Ctot"]
    S = H * W
    PADT = meta["PADT"]                      # 16-aligned halo depth (>= W+1)

    def wsl(off, r, c):                      # bf16 weight view (16-row aligned)
        return w_ref[off:off + r, :c]

    def bsl(off, r, c):                      # f32 bias/aux view (8-row aligned)
        return b_ref[off:off + r, :c]

    # Halo bands of the padded conv buffers must be zero.  Zero them every grid
    # step (only 2*PADT rows each, trivial) instead of @pl.when(pid==0): the
    # latter would leave core 1 uninitialised when the "parallel" batch axis is
    # sharded across TensorCores (v7x megacore).  Interiors are fully rewritten
    # each layer before being read.
    for buf in (pad_c, pad_l, pad_r):
        buf[:PADT, :] = jnp.zeros((PADT, buf.shape[1]), jnp.bfloat16)
        buf[PADT + S:, :] = jnp.zeros((PADT, buf.shape[1]), jnp.bfloat16)

    # Seed the growing (DenseNet) feature map: (C0, S) -> (S, C0) XLU flip.
    feat[:, :C0] = jnp.transpose(x_ref[...])

    # Column-validity masks (the flat row-major layout wraps rows at x=0/x=W-1).
    msk = bsl(meta["mask"], S, 2)
    keep_not_first = msk[:, 0:1]             # 0.0 where x == 0     (dx=+1 taps)
    keep_not_last = msk[:, 1:2]              # 0.0 where x == W-1   (dx=-1 taps)

    for lc in meta["layers"]:
        Cin, G, Hh = lc["Cin"], lc["G"], lc["Hh"]
        cur = feat[:, :Cin]                                   # (S, Cin) f32
        cur_bf = cur.astype(jnp.bfloat16)

        # ---- MAConv mutual-affine: both branches packed block-diagonally ---
        t = jnp.dot(cur_bf, wsl(lc["w1"], Cin, Hh),
                    preferred_element_type=jnp.float32) + bsl(lc["b1"], 1, Hh)
        t = jnp.maximum(t, 0.0)
        st = jnp.dot(t.astype(jnp.bfloat16), wsl(lc["w2"], Hh, 2 * Cin),
                     preferred_element_type=jnp.float32) + bsl(lc["b2"], 1, 2 * Cin)
        # fc2 columns are ordered [scale(all Cin) | shift(all Cin)] -> one
        # sigmoid / mul / add over the full channel width.
        m = cur * _sigmoid(st[:, :Cin]) + st[:, Cin:]

        # ---- stage into zero-padded bf16 conv buffers (pre-masked copies) --
        # Column W-1 never legitimately feeds dx=-1 taps, column 0 never feeds
        # dx=+1 taps -> two pre-masked copies remove all per-tap mask work.
        pad_c[PADT:PADT + S, :Cin] = m.astype(jnp.bfloat16)
        pad_l[PADT:PADT + S, :Cin] = (m * keep_not_last).astype(jnp.bfloat16)
        pad_r[PADT:PADT + S, :Cin] = (m * keep_not_first).astype(jnp.bfloat16)

        # ---- 3x3 conv: 9 shifted accumulating MXU matmuls (MRB-friendly) ---
        acc = None
        k = 0
        for dy in (-1, 0, 1):
            for dx in (-1, 0, 1):
                buf = pad_c if dx == 0 else (pad_l if dx < 0 else pad_r)
                start = PADT + dy * W + dx
                sh = buf[start:start + S, :Cin]          # bf16, no cast, no mask
                d = jnp.dot(sh, wsl(lc["wc"][k], Cin, G),
                            preferred_element_type=jnp.float32)
                acc = d if acc is None else acc + d
                k += 1
        y = _gelu(acc + bsl(lc["bc"], 1, G))

        # ---- PixelAttention: y * sigmoid(Conv1x1(y)); append to feature map -
        a = jnp.dot(y.astype(jnp.bfloat16), wsl(lc["pw"], G, G),
                    preferred_element_type=jnp.float32) + bsl(lc["pb"], 1, G)
        feat[:, Cin:Cin + G] = y * _sigmoid(a)
        # TODO(synk): for large G / many layers, switch to per-layer (S,G)
        # scratch chunks + chunked LFF to keep appends vreg-aligned.

    # ---- LFF (1x1 conv, transposed weight) + Balance residual ---------------
    # einsum('ck,sk->cs') produces the result channel-major directly, so the
    # store is lane-dense (last dim S, multiple of 128) and the residual comes
    # straight from x_ref (C0,S) with no transpose at all.
    lff = jnp.einsum("ck,sk->cs",
                     wsl(meta["lw"], C0, Ctot),
                     feat[...].astype(jnp.bfloat16),
                     preferred_element_type=jnp.float32)
    lff = lff + bsl(meta["lb"], C0, 1)
    bal = bal_ref[0]
    o_ref[...] = (bal * lff + (1.0 - bal) * x_ref[...]).astype(o_ref.dtype)


# ----------------------- parameter packing (wrapper) ---------------------------

class _RowPacker:
    """Packs many small 2-D arrays row-wise into one lane-dense buffer."""

    def __init__(self, dtype, row_align):
        self.dtype = dtype
        self.row_align = row_align
        self.rows = 0
        self._chunks = []

    def add(self, arr):
        off = self.rows
        self._chunks.append((off, arr))
        self.rows = off + _round_up(arr.shape[0], self.row_align)
        return off

    def finalize(self, min_cols=128):
        cols = max([a.shape[1] for _, a in self._chunks] + [min_cols])
        cols = _round_up(cols, 128)
        buf = jnp.zeros((max(self.rows, self.row_align), cols), self.dtype)
        for off, a in self._chunks:
            buf = buf.at[off:off + a.shape[0], :a.shape[1]].set(
                a.astype(self.dtype))
        return buf


def block_forward_pallas(params, x_nchw):
    N, C0, H, W = x_nchw.shape
    S = H * W
    x = x_nchw.reshape(N, C0, S).astype(jnp.float32)   # pure reshape, no transpose

    wpk = _RowPacker(jnp.bfloat16, 16)   # bf16 weights  (16-row = packed-tile align)
    bpk = _RowPacker(jnp.float32, 8)     # f32 biases / masks

    layers_meta = []
    Cin = C0
    for lp in params["layers"]:
        # NOTE: round() split (matches the reference; identical to PyTorch's
        # int()-style split for even channel counts used here).
        c0 = round(Cin * 0.5)
        c1 = Cin - c0
        G = lp["pa_w"].shape[0]
        g0 = round(G * 0.5)
        br0, br1 = lp["branches"]
        h0 = br0["fc_w1"].shape[1]
        h1 = br1["fc_w1"].shape[1]
        Hh = h0 + h1

        # fc1: block-diagonal over the two branches, fed by the full Cin channels.
        w1p = jnp.zeros((Cin, Hh), jnp.float32)
        w1p = w1p.at[c0:, :h0].set(br0["fc_w1"])          # branch0 reads split1
        w1p = w1p.at[:c0, h0:].set(br1["fc_w1"])          # branch1 reads split0
        b1p = jnp.concatenate([br0["fc_b1"], br1["fc_b1"]])

        # fc2: columns re-ordered to [scale0 scale1 | shift0 shift1].
        w2p = jnp.zeros((Hh, 2 * Cin), jnp.float32)
        w2p = w2p.at[:h0, :c0].set(br0["fc_w2"][:, :c0])
        w2p = w2p.at[:h0, Cin:Cin + c0].set(br0["fc_w2"][:, c0:])
        w2p = w2p.at[h0:, c0:Cin].set(br1["fc_w2"][:, :c1])
        w2p = w2p.at[h0:, Cin + c0:].set(br1["fc_w2"][:, c1:])
        b2p = jnp.concatenate([br0["fc_b2"][:c0], br1["fc_b2"][:c1],
                               br0["fc_b2"][c0:], br1["fc_b2"][c1:]])

        # 3x3 conv: block-diagonal over the two branches, one weight per tap.
        wc = jnp.zeros((3, 3, Cin, G), jnp.float32)
        wc = wc.at[:, :, :c0, :g0].set(br0["conv_w"])
        wc = wc.at[:, :, c0:, g0:].set(br1["conv_w"])
        bc = jnp.concatenate([br0["conv_b"], br1["conv_b"]])
        wc9 = wc.reshape(9, Cin, G)

        layers_meta.append(dict(
            Cin=Cin, G=G, Hh=Hh,
            w1=wpk.add(w1p), w2=wpk.add(w2p),
            wc=[wpk.add(wc9[k]) for k in range(9)],
            pw=wpk.add(lp["pa_w"]),
            b1=bpk.add(b1p.reshape(1, -1)), b2=bpk.add(b2p.reshape(1, -1)),
            bc=bpk.add(bc.reshape(1, -1)), pb=bpk.add(lp["pa_b"].reshape(1, -1))))
        Cin += G
    Ctot = Cin

    lw_off = wpk.add(jnp.transpose(params["lff_w"]))       # (C0, Ctot)
    lb_off = bpk.add(params["lff_b"].reshape(-1, 1))        # (C0, 1)

    # Column-validity masks for the pre-masked conv-buffer copies.
    xc = jnp.arange(S, dtype=jnp.int32) % W
    masks = jnp.stack([(xc >= 1), (xc <= W - 2)], axis=-1).astype(jnp.float32)
    mask_off = bpk.add(masks)                               # (S, 2)

    wbuf = wpk.finalize()
    bbuf = bpk.finalize()
    bal = jnp.asarray(params["balance"], jnp.float32).reshape(1)

    PADT = _round_up(W + 1, 16)
    cmax = max(lm["Cin"] for lm in layers_meta)
    meta = dict(H=H, W=W, C0=C0, Ctot=Ctot, PADT=PADT, layers=layers_meta,
                lw=lw_off, lb=lb_off, mask=mask_off)

    # Explicit VMEM budget (v7x: 64 MiB physical / 32 MiB default scoped;
    # v5e default scoped is only 16 MiB).
    vmem_bytes = (S * Ctot * 4                          # feat
                  + 3 * (S + 2 * PADT) * cmax * 2       # padded bf16 conv buffers
                  + 2 * 2 * C0 * S * 4                  # double-buffered x / out
                  + 2 * (wbuf.size * 2 + bbuf.size * 4))
    vmem_limit = int(min(56 * 2**20, max(32 * 2**20, 2 * vmem_bytes)))

    # TODO(synk): for very large H*W, or N==1 on v7x (2 TensorCores), add a
    # second "parallel" spatial-tile grid axis with an nConvLayers-deep row halo
    # so both cores get work; at these sizes one image per grid step fits VMEM.
    out = pl.pallas_call(
        functools.partial(_block_kernel, meta=meta),
        out_shape=jax.ShapeDtypeStruct((N, C0, S), jnp.float32),
        grid=(N,),
        in_specs=[
            pl.BlockSpec((None, C0, S), lambda n: (n, 0, 0)),     # x  (C0, S)
            pl.BlockSpec(wbuf.shape, lambda n: (0, 0)),           # packed bf16 weights
            pl.BlockSpec(bbuf.shape, lambda n: (0, 0)),           # packed f32 biases/masks
            pl.BlockSpec(memory_space=pltpu.MemorySpace.SMEM),    # balance scalar
        ],
        out_specs=pl.BlockSpec((None, C0, S), lambda n: (n, 0, 0)),
        scratch_shapes=[pltpu.VMEM((S, Ctot), jnp.float32),
                        pltpu.VMEM((S + 2 * PADT, cmax), jnp.bfloat16),
                        pltpu.VMEM((S + 2 * PADT, cmax), jnp.bfloat16),
                        pltpu.VMEM((S + 2 * PADT, cmax), jnp.bfloat16)],
        compiler_params=pltpu.CompilerParams(
            dimension_semantics=("parallel",),
            vmem_limit_bytes=vmem_limit),
    )(x, wbuf, bbuf, bal)

    return out.reshape(N, C0, H, W)                     # pure reshape, no transpose


# ------------------------ pure-JAX reference (check) ---------------------------

def _conv1x1_ref(x, w, b):
    return jnp.einsum("nhwc,cd->nhwd", x, w) + b.reshape(1, 1, 1, -1)


def _conv3x3_ref(x, w_hwio, b):
    y = lax.conv_general_dilated(
        x, w_hwio, window_strides=(1, 1), padding=((1, 1), (1, 1)),
        dimension_numbers=("NHWC", "HWIO", "NHWC"))
    return y + b.reshape(1, 1, 1, -1)


def block_forward_ref(params, x_nchw):
    x = jnp.transpose(x_nchw, (0, 2, 3, 1)).astype(jnp.float32)
    x_in, cur = x, x
    for lp in params["layers"]:
        Cin = cur.shape[-1]
        c0 = round(Cin * 0.5)
        splits = [cur[..., :c0], cur[..., c0:]]
        outs = []
        for i in (0, 1):
            bp = lp["branches"][i]
            xs, xo = splits[i], splits[1 - i]
            ci = xs.shape[-1]
            t = jax.nn.relu(_conv1x1_ref(xo, bp["fc_w1"], bp["fc_b1"]))
            st = _conv1x1_ref(t, bp["fc_w2"], bp["fc_b2"])
            m = xs * jax.nn.sigmoid(st[..., :ci]) + st[..., ci:]
            outs.append(_conv3x3_ref(m, bp["conv_w"], bp["conv_b"]))
        y = jax.nn.gelu(jnp.concatenate(outs, -1), approximate=False)
        att = y * jax.nn.sigmoid(_conv1x1_ref(y, lp["pa_w"], lp["pa_b"]))
        cur = jnp.concatenate([cur, att], -1)
    lff = _conv1x1_ref(cur, params["lff_w"], params["lff_b"])
    a = params["balance"]
    return jnp.transpose(a * lff + (1.0 - a) * x_in, (0, 3, 1, 2))


# -------------------------- deterministic parameters ---------------------------

def init_block_params(key, G0, G, C):
    kit = iter(jax.random.split(key, 32 * (C + 1)))

    def nrm(shape, scale=0.1):
        return scale * jax.random.normal(next(kit), shape, dtype=jnp.float32)

    layers = []
    Cin = G0
    for _ in range(C):
        c0 = round(Cin * 0.5)
        in_splits = (c0, Cin - c0)
        g0 = round(G * 0.5)
        out_splits = (g0, G - g0)
        branches = []
        for i in (0, 1):
            ci, gi = in_splits[i], out_splits[i]
            cr = Cin - ci
            hidden = max(cr // 2, 1)                   # reduction = 2
            branches.append(dict(
                fc_w1=nrm((cr, hidden)), fc_b1=nrm((hidden,)),
                fc_w2=nrm((hidden, 2 * ci)), fc_b2=nrm((2 * ci,)),
                conv_w=nrm((3, 3, ci, gi)), conv_b=nrm((gi,)),
            ))
        layers.append(dict(branches=branches,
                           pa_w=nrm((G, G)), pa_b=nrm((G,))))
        Cin += G
    return dict(layers=layers,
                lff_w=nrm((Cin, G0)), lff_b=nrm((G0,)),
                balance=jnp.float32(0.5))


# ------------------------------------ main -------------------------------------

if __name__ == "__main__":
    G0, G, C = 8, 8, 2           # growRate0, growRate, nConvLayers
    N, H, W = 2, 16, 16
    key = jax.random.PRNGKey(0)
    kp, kx = jax.random.split(key)
    params = init_block_params(kp, G0, G, C)
    x = jax.random.normal(kx, (N, G0, H, W), dtype=jnp.float32)   # NCHW input

    out = jax.block_until_ready(jax.jit(block_forward_pallas)(params, x))
    assert out.shape == (N, G0, H, W), out.shape

    ref = block_forward_ref(params, x)
    err = float(jnp.max(jnp.abs(out - ref)))
    if not (err < 5e-2):
        raise AssertionError(f"Pallas output mismatch vs reference: max|diff|={err}")
    print("KERNEL_OK")
</pallas_src>

<mosaic_0001>
module attributes {stable_mosaic.version = 11 : i64} {
  func.func @_block_kernel(%arg0: i32, %arg1: memref<1x8x256xf32, #tpu.memory_space<vmem>>, %arg2: memref<400x128xbf16, #tpu.memory_space<vmem>>, %arg3: memref<328x128xf32, #tpu.memory_space<vmem>>, %arg4: memref<1xf32, #tpu.memory_space<smem>>, %arg5: memref<1x8x256xf32, #tpu.memory_space<vmem>>, %arg6: memref<256x24xf32, #tpu.memory_space<vmem>>, %arg7: memref<320x16xbf16, #tpu.memory_space<vmem>>, %arg8: memref<320x16xbf16, #tpu.memory_space<vmem>>, %arg9: memref<320x16xbf16, #tpu.memory_space<vmem>>) attributes {dimension_semantics = [#tpu.dimension_semantics<parallel>], iteration_bounds = array<i64: 2>, scalar_prefetch = 0 : i64, scratch_operands = 4 : i64, tpu.core_type = #tpu.core_type<tc>, window_params = [{transform_indices = @transform_0, window_bounds = array<i64: 1, 8, 256>}, {pipeline_mode = #tpu.pipeline_mode<synchronous>, transform_indices = @transform_1, window_bounds = array<i64: 400, 128>}, {pipeline_mode = #tpu.pipeline_mode<synchronous>, transform_indices = @transform_2, window_bounds = array<i64: 328, 128>}, {transform_indices = @transform_3, window_bounds = array<i64: 1>}, {transform_indices = @transform_4, window_bounds = array<i64: 1, 8, 256>}]} {
    %cst = arith.constant 0.000000e+00 : bf16
    %0 = vector.broadcast %cst : bf16 to vector<32x16xbf16>
    %c0 = arith.constant 0 : index
    %c0_0 = arith.constant 0 : index
    %1 = vector.load %arg7[%c0, %c0_0] : memref<320x16xbf16, #tpu.memory_space<vmem>>, vector<32x16xbf16>
    tpu.vector_store %arg7[%c0, %c0_0], %0 {strides = array<i32>} : memref<320x16xbf16, #tpu.memory_space<vmem>>, vector<32x16xbf16>,
    %cst_1 = arith.constant 0.000000e+00 : bf16
    %2 = vector.broadcast %cst_1 : bf16 to vector<32x16xbf16>
    %c288 = arith.constant 288 : index
    %c0_2 = arith.constant 0 : index
    %3 = vector.load %arg7[%c288, %c0_2] : memref<320x16xbf16, #tpu.memory_space<vmem>>, vector<32x16xbf16>
    tpu.vector_store %arg7[%c288, %c0_2], %2 {strides = array<i32>} : memref<320x16xbf16, #tpu.memory_space<vmem>>, vector<32x16xbf16>,
    %cst_3 = arith.constant 0.000000e+00 : bf16
    %4 = vector.broadcast %cst_3 : bf16 to vector<32x16xbf16>
    %c0_4 = arith.constant 0 : index
    %c0_5 = arith.constant 0 : index
    %5 = vector.load %arg8[%c0_4, %c0_5] : memref<320x16xbf16, #tpu.memory_space<vmem>>, vector<32x16xbf16>
    tpu.vector_store %arg8[%c0_4, %c0_5], %4 {strides = array<i32>} : memref<320x16xbf16, #tpu.memory_space<vmem>>, vector<32x16xbf16>,
    %cst_6 = arith.constant 0.000000e+00 : bf16
    %6 = vector.broadcast %cst_6 : bf16 to vector<32x16xbf16>
    %c288_7 = arith.constant 288 : index
    %c0_8 = arith.constant 0 : index
    %7 = vector.load %arg8[%c288_7, %c0_8] : memref<320x16xbf16, #tpu.memory_space<vmem>>, vector<32x16xbf16>
    tpu.vector_store %arg8[%c288_7, %c0_8], %6 {strides = array<i32>} : memref<320x16xbf16, #tpu.memory_space<vmem>>, vector<32x16xbf16>,
    %cst_9 = arith.constant 0.000000e+00 : bf16
    %8 = vector.broadcast %cst_9 : bf16 to vector<32x16xbf16>
    %c0_10 = arith.constant 0 : index
    %c0_11 = arith.constant 0 : index
    %9 = vector.load %arg9[%c0_10, %c0_11] : memref<320x16xbf16, #tpu.memory_space<vmem>>, vector<32x16xbf16>
    tpu.vector_store %arg9[%c0_10, %c0_11], %8 {strides = array<i32>} : memref<320x16xbf16, #tpu.memory_space<vmem>>, vector<32x16xbf16>,
    %cst_12 = arith.constant 0.000000e+00 : bf16
    %10 = vector.broadcast %cst_12 : bf16 to vector<32x16xbf16>
    %c288_13 = arith.constant 288 : index
    %c0_14 = arith.constant 0 : index
    %11 = vector.load %arg9[%c288_13, %c0_14] : memref<320x16xbf16, #tpu.memory_space<vmem>>, vector<32x16xbf16>
    tpu.vector_store %arg9[%c288_13, %c0_14], %10 {strides = array<i32>} : memref<320x16xbf16, #tpu.memory_space<vmem>>, vector<32x16xbf16>,
    %c0_15 = arith.constant 0 : index
    %c0_16 = arith.constant 0 : index
    %c0_17 = arith.constant 0 : index
    %12 = vector.load %arg1[%c0_15, %c0_16, %c0_17] : memref<1x8x256xf32, #tpu.memory_space<vmem>>, vector<1x8x256xf32>
    %13 = vector.shape_cast %12 : vector<1x8x256xf32> to vector<8x256xf32>
    %14 = tpu.transpose %13, [1, 0] : vector<8x256xf32> -> vector<256x8xf32>
    %c0_18 = arith.constant 0 : index
    %c0_19 = arith.constant 0 : index
    %15 = vector.load %arg6[%c0_18, %c0_19] : memref<256x24xf32, #tpu.memory_space<vmem>>, vector<256x8xf32>
    tpu.vector_store %arg6[%c0_18, %c0_19], %14 {strides = array<i32>} : memref<256x24xf32, #tpu.memory_space<vmem>>, vector<256x8xf32>,
    %c72 = arith.constant 72 : index
    %c0_20 = arith.constant 0 : index
    %16 = vector.load %arg3[%c72, %c0_20] : memref<328x128xf32, #tpu.memory_space<vmem>>, vector<256x2xf32>
    %17 = vector.extract_strided_slice %16 {offsets = [0, 0], sizes = [256, 1], strides = [1, 1]} : vector<256x2xf32> to vector<256x1xf32>
    %18 = vector.extract_strided_slice %16 {offsets = [0, 1], sizes = [256, 1], strides = [1, 1]} : vector<256x2xf32> to vector<256x1xf32>
    %c0_21 = arith.constant 0 : index
    %c0_22 = arith.constant 0 : index
    %19 = vector.load %arg6[%c0_21, %c0_22] : memref<256x24xf32, #tpu.memory_space<vmem>>, vector<256x8xf32>
    %20 = arith.truncf %19 : vector<256x8xf32> to vector<256x8xbf16>
    %c0_23 = arith.constant 0 : index
    %c0_24 = arith.constant 0 : index
    %21 = vector.load %arg2[%c0_23, %c0_24] : memref<400x128xbf16, #tpu.memory_space<vmem>>, vector<8x4xbf16>
    %cst_25 = arith.constant dense<0.000000e+00> : vector<256x4xf32>
    %22 = tpu.matmul %20, %21, %cst_25 {dimension_numbers = #tpu.dot_dimension_numbers<[1], [0], [0], [1], [0, 0, 1, 1], [], []>} : vector<256x8xbf16>, vector<8x4xbf16>, vector<256x4xf32> -> vector<256x4xf32>
    %c0_26 = arith.constant 0 : index
    %c0_27 = arith.constant 0 : index
    %23 = vector.load %arg3[%c0_26, %c0_27] : memref<328x128xf32, #tpu.memory_space<vmem>>, vector<1x4xf32>
    %24 = vector.broadcast %23 : vector<1x4xf32> to vector<256x4xf32>
    %25 = arith.addf %22, %24 : vector<256x4xf32>
    %cst_28 = arith.constant 0.000000e+00 : f32
    %26 = vector.broadcast %cst_28 : f32 to vector<256x4xf32>
    %27 = arith.maximumf %25, %26 : vector<256x4xf32>
    %28 = arith.truncf %27 : vector<256x4xf32> to vector<256x4xbf16>
    %c16 = arith.constant 16 : index
    %c0_29 = arith.constant 0 : index
    %29 = vector.load %arg2[%c16, %c0_29] : memref<400x128xbf16, #tpu.memory_space<vmem>>, vector<4x16xbf16>
    %cst_30 = arith.constant dense<0.000000e+00> : vector<256x16xf32>
    %30 = tpu.matmul %28, %29, %cst_30 {dimension_numbers = #tpu.dot_dimension_numbers<[1], [0], [0], [1], [0, 0, 1, 1], [], []>} : vector<256x4xbf16>, vector<4x16xbf16>, vector<256x16xf32> -> vector<256x16xf32>
    %c8 = arith.constant 8 : index
    %c0_31 = arith.constant 0 : index
    %31 = vector.load %arg3[%c8, %c0_31] : memref<328x128xf32, #tpu.memory_space<vmem>>, vector<1x16xf32>
    %32 = vector.broadcast %31 : vector<1x16xf32> to vector<256x16xf32>
    %33 = arith.addf %30, %32 : vector<256x16xf32>
    %34 = vector.extract_strided_slice %33 {offsets = [0, 0], sizes = [256, 8], strides = [1, 1]} : vector<256x16xf32> to vector<256x8xf32>
    %cst_32 = arith.constant 0.000000e+00 : f32
    %35 = vector.broadcast %cst_32 : f32 to vector<256x8xf32>
    %36 = arith.subf %35, %34 : vector<256x8xf32>
    %37 = math.exp %36 : vector<256x8xf32>
    %cst_33 = arith.constant 1.000000e+00 : f32
    %38 = vector.broadcast %cst_33 : f32 to vector<256x8xf32>
    %39 = arith.addf %38, %37 : vector<256x8xf32>
    %40 = tpu.reciprocal %39 {approx = true} : vector<256x8xf32> -> vector<256x8xf32>
    %41 = arith.mulf %19, %40 : vector<256x8xf32>
    %42 = vector.extract_strided_slice %33 {offsets = [0, 8], sizes = [256, 8], strides = [1, 1]} : vector<256x16xf32> to vector<256x8xf32>
    %43 = arith.addf %41, %42 : vector<256x8xf32>
    %44 = arith.truncf %43 : vector<256x8xf32> to vector<256x8xbf16>
    %c32 = arith.constant 32 : index
    %c0_34 = arith.constant 0 : index
    %45 = vector.load %arg7[%c32, %c0_34] : memref<320x16xbf16, #tpu.memory_space<vmem>>, vector<256x8xbf16>
    tpu.vector_store %arg7[%c32, %c0_34], %44 {strides = array<i32>} : memref<320x16xbf16, #tpu.memory_space<vmem>>, vector<256x8xbf16>,
    %46 = vector.broadcast %18 : vector<256x1xf32> to vector<256x8xf32>
    %47 = arith.mulf %43, %46 : vector<256x8xf32>
    %48 = arith.truncf %47 : vector<256x8xf32> to vector<256x8xbf16>
    %c32_35 = arith.constant 32 : index
    %c0_36 = arith.constant 0 : index
    %49 = vector.load %arg8[%c32_35, %c0_36] : memref<320x16xbf16, #tpu.memory_space<vmem>>, vector<256x8xbf16>
    tpu.vector_store %arg8[%c32_35, %c0_36], %48 {strides = array<i32>} : memref<320x16xbf16, #tpu.memory_space<vmem>>, vector<256x8xbf16>,
    %50 = vector.broadcast %17 : vector<256x1xf32> to vector<256x8xf32>
    %51 = arith.mulf %43, %50 : vector<256x8xf32>
    %52 = arith.truncf %51 : vector<256x8xf32> to vector<256x8xbf16>
    %c32_37 = arith.constant 32 : index
    %c0_38 = arith.constant 0 : index
    %53 = vector.load %arg9[%c32_37, %c0_38] : memref<320x16xbf16, #tpu.memory_space<vmem>>, vector<256x8xbf16>
    tpu.vector_store %arg9[%c32_37, %c0_38], %52 {strides = array<i32>} : memref<320x16xbf16, #tpu.memory_space<vmem>>, vector<256x8xbf16>,
    %c15 = arith.constant 15 : index
    %c0_39 = arith.constant 0 : index
    %54 = vector.load %arg8[%c15, %c0_39] : memref<320x16xbf16, #tpu.memory_space<vmem>>, vector<256x8xbf16>
    %c32_40 = arith.constant 32 : index
    %c0_41 = arith.constant 0 : index
    %55 = vector.load %arg2[%c32_40, %c0_41] : memref<400x128xbf16, #tpu.memory_space<vmem>>, vector<8x8xbf16>
    %cst_42 = arith.constant dense<0.000000e+00> : vector<256x8xf32>
    %56 = tpu.matmul %54, %55, %cst_42 {dimension_numbers = #tpu.dot_dimension_numbers<[1], [0], [0], [1], [0, 0, 1, 1], [], []>} : vector<256x8xbf16>, vector<8x8xbf16>, vector<256x8xf32> -> vector<256x8xf32>
    %c16_43 = arith.constant 16 : index
    %c0_44 = arith.constant 0 : index
    %57 = vector.load %arg7[%c16_43, %c0_44] : memref<320x16xbf16, #tpu.memory_space<vmem>>, vector<256x8xbf16>
    %c48 = arith.constant 48 : index
    %c0_45 = arith.constant 0 : index
    %58 = vector.load %arg2[%c48, %c0_45] : memref<400x128xbf16, #tpu.memory_space<vmem>>, vector<8x8xbf16>
    %cst_46 = arith.constant dense<0.000000e+00> : vector<256x8xf32>
    %59 = tpu.matmul %57, %58, %cst_46 {dimension_numbers = #tpu.dot_dimension_numbers<[1], [0], [0], [1], [0, 0, 1, 1], [], []>} : vector<256x8xbf16>, vector<8x8xbf16>, vector<256x8xf32> -> vector<256x8xf32>
    %60 = arith.addf %56, %59 : vector<256x8xf32>
    %c17 = arith.constant 17 : index
    %c0_47 = arith.constant 0 : index
    %61 = vector.load %arg9[%c17, %c0_47] : memref<320x16xbf16, #tpu.memory_space<vmem>>, vector<256x8xbf16>
    %c64 = arith.constant 64 : index
    %c0_48 = arith.constant 0 : index
    %62 = vector.load %arg2[%c64, %c0_48] : memref<400x128xbf16, #tpu.memory_space<vmem>>, vector<8x8xbf16>
    %cst_49 = arith.constant dense<0.000000e+00> : vector<256x8xf32>
    %63 = tpu.matmul %61, %62, %cst_49 {dimension_numbers = #tpu.dot_dimension_numbers<[1], [0], [0], [1], [0, 0, 1, 1], [], []>} : vector<256x8xbf16>, vector<8x8xbf16>, vector<256x8xf32> -> vector<256x8xf32>
    %64 = arith.addf %60, %63 : vector<256x8xf32>
    %c31 = arith.constant 31 : index
    %c0_50 = arith.constant 0 : index
    %65 = vector.load %arg8[%c31, %c0_50] : memref<320x16xbf16, #tpu.memory_space<vmem>>, vector<256x8xbf16>
    %c80 = arith.constant 80 : index
    %c0_51 = arith.constant 0 : index
    %66 = vector.load %arg2[%c80, %c0_51] : memref<400x128xbf16, #tpu.memory_space<vmem>>, vector<8x8xbf16>
    %cst_52 = arith.constant dense<0.000000e+00> : vector<256x8xf32>
    %67 = tpu.matmul %65, %66, %cst_52 {dimension_numbers = #tpu.dot_dimension_numbers<[1], [0], [0], [1], [0, 0, 1, 1], [], []>} : vector<256x8xbf16>, vector<8x8xbf16>, vector<256x8xf32> -> vector<256x8xf32>
    %68 = arith.addf %64, %67 : vector<256x8xf32>
    %c32_53 = arith.constant 32 : index
    %c0_54 = arith.constant 0 : index
    %69 = vector.load %arg7[%c32_53, %c0_54] : memref<320x16xbf16, #tpu.memory_space<vmem>>, vector<256x8xbf16>
    %c96 = arith.constant 96 : index
    %c0_55 = arith.constant 0 : index
    %70 = vector.load %arg2[%c96, %c0_55] : memref<400x128xbf16, #tpu.memory_space<vmem>>, vector<8x8xbf16>
    %cst_56 = arith.constant dense<0.000000e+00> : vector<256x8xf32>
    %71 = tpu.matmul %69, %70, %cst_56 {dimension_numbers = #tpu.dot_dimension_numbers<[1], [0], [0], [1], [0, 0, 1, 1], [], []>} : vector<256x8xbf16>, vector<8x8xbf16>, vector<256x8xf32> -> vector<256x8xf32>
    %72 = arith.addf %68, %71 : vector<256x8xf32>
    %c33 = arith.constant 33 : index
    %c0_57 = arith.constant 0 : index
    %73 = vector.load %arg9[%c33, %c0_57] : memref<320x16xbf16, #tpu.memory_space<vmem>>, vector<256x8xbf16>
    %c112 = arith.constant 112 : index
    %c0_58 = arith.constant 0 : index
    %74 = vector.load %arg2[%c112, %c0_58] : memref<400x128xbf16, #tpu.memory_space<vmem>>, vector<8x8xbf16>
    %cst_59 = arith.constant dense<0.000000e+00> : vector<256x8xf32>
    %75 = tpu.matmul %73, %74, %cst_59 {dimension_numbers = #tpu.dot_dimension_numbers<[1], [0], [0], [1], [0, 0, 1, 1], [], []>} : vector<256x8xbf16>, vector<8x8xbf16>, vector<256x8xf32> -> vector<256x8xf32>
    %76 = arith.addf %72, %75 : vector<256x8xf32>
    %c47 = arith.constant 47 : index
    %c0_60 = arith.constant 0 : index
    %77 = vector.load %arg8[%c47, %c0_60] : memref<320x16xbf16, #tpu.memory_space<vmem>>, vector<256x8xbf16>
    %c128 = arith.constant 128 : index
    %c0_61 = arith.constant 0 : index
    %78 = vector.load %arg2[%c128, %c0_61] : memref<400x128xbf16, #tpu.memory_space<vmem>>, vector<8x8xbf16>
    %cst_62 = arith.constant dense<0.000000e+00> : vector<256x8xf32>
    %79 = tpu.matmul %77, %78, %cst_62 {dimension_numbers = #tpu.dot_dimension_numbers<[1], [0], [0], [1], [0, 0, 1, 1], [], []>} : vector<256x8xbf16>, vector<8x8xbf16>, vector<256x8xf32> -> vector<256x8xf32>
    %80 = arith.addf %76, %79 : vector<256x8xf32>
    %c48_63 = arith.constant 48 : index
    %c0_64 = arith.constant 0 : index
    %81 = vector.load %arg7[%c48_63, %c0_64] : memref<320x16xbf16, #tpu.memory_space<vmem>>, vector<256x8xbf16>
    %c144 = arith.constant 144 : index
    %c0_65 = arith.constant 0 : index
    %82 = vector.load %arg2[%c144, %c0_65] : memref<400x128xbf16, #tpu.memory_space<vmem>>, vector<8x8xbf16>
    %cst_66 = arith.constant dense<0.000000e+00> : vector<256x8xf32>
    %83 = tpu.matmul %81, %82, %cst_66 {dimension_numbers = #tpu.dot_dimension_numbers<[1], [0], [0], [1], [0, 0, 1, 1], [], []>} : vector<256x8xbf16>, vector<8x8xbf16>, vector<256x8xf32> -> vector<256x8xf32>
    %84 = arith.addf %80, %83 : vector<256x8xf32>
    %c49 = arith.constant 49 : index
    %c0_67 = arith.constant 0 : index
    %85 = vector.load %arg9[%c49, %c0_67] : memref<320x16xbf16, #tpu.memory_space<vmem>>, vector<256x8xbf16>
    %c160 = arith.constant 160 : index
    %c0_68 = arith.constant 0 : index
    %86 = vector.load %arg2[%c160, %c0_68] : memref<400x128xbf16, #tpu.memory_space<vmem>>, vector<8x8xbf16>
    %cst_69 = arith.constant dense<0.000000e+00> : vector<256x8xf32>
    %87 = tpu.matmul %85, %86, %cst_69 {dimension_numbers = #tpu.dot_dimension_numbers<[1], [0], [0], [1], [0, 0, 1, 1], [], []>} : vector<256x8xbf16>, vector<8x8xbf16>, vector<256x8xf32> -> vector<256x8xf32>
    %88 = arith.addf %84, %87 : vector<256x8xf32>
    %c16_70 = arith.constant 16 : index
    %c0_71 = arith.constant 0 : index
    %89 = vector.load %arg3[%c16_70, %c0_71] : memref<328x128xf32, #tpu.memory_space<vmem>>, vector<1x8xf32>
    %90 = vector.broadcast %89 : vector<1x8xf32> to vector<256x8xf32>
    %91 = arith.addf %88, %90 : vector<256x8xf32>
    %cst_72 = arith.constant 5.000000e-01 : f32
    %92 = vector.broadcast %cst_72 : f32 to vector<256x8xf32>
    %93 = arith.mulf %92, %91 : vector<256x8xf32>
    %cst_73 = arith.constant 4.471500e-02 : f32
    %94 = vector.broadcast %cst_73 : f32 to vector<256x8xf32>
    %95 = arith.mulf %94, %91 : vector<256x8xf32>
    %96 = arith.mulf %95, %91 : vector<256x8xf32>
    %97 = arith.mulf %96, %91 : vector<256x8xf32>
    %98 = arith.addf %91, %97 : vector<256x8xf32>
    %cst_74 = arith.constant 0.797884583 : f32
    %99 = vector.broadcast %cst_74 : f32 to vector<256x8xf32>
    %100 = arith.mulf %99, %98 : vector<256x8xf32>
    %101 = math.tanh %100 : vector<256x8xf32>
    %cst_75 = arith.constant 1.000000e+00 : f32
    %102 = vector.broadcast %cst_75 : f32 to vector<256x8xf32>
    %103 = arith.addf %102, %101 : vector<256x8xf32>
    %104 = arith.mulf %93, %103 : vector<256x8xf32>
    %105 = arith.truncf %104 : vector<256x8xf32> to vector<256x8xbf16>
    %c176 = arith.constant 176 : index
    %c0_76 = arith.constant 0 : index
    %106 = vector.load %arg2[%c176, %c0_76] : memref<400x128xbf16, #tpu.memory_space<vmem>>, vector<8x8xbf16>
    %cst_77 = arith.constant dense<0.000000e+00> : vector<256x8xf32>
    %107 = tpu.matmul %105, %106, %cst_77 {dimension_numbers = #tpu.dot_dimension_numbers<[1], [0], [0], [1], [0, 0, 1, 1], [], []>} : vector<256x8xbf16>, vector<8x8xbf16>, vector<256x8xf32> -> vector<256x8xf32>
    %c24 = arith.constant 24 : index
    %c0_78 = arith.constant 0 : index
    %108 = vector.load %arg3[%c24, %c0_78] : memref<328x128xf32, #tpu.memory_space<vmem>>, vector<1x8xf32>
    %109 = vector.broadcast %108 : vector<1x8xf32> to vector<256x8xf32>
    %110 = arith.addf %107, %109 : vector<256x8xf32>
    %cst_79 = arith.constant 0.000000e+00 : f32
    %111 = vector.broadcast %cst_79 : f32 to vector<256x8xf32>
    %112 = arith.subf %111, %110 : vector<256x8xf32>
    %113 = math.exp %112 : vector<256x8xf32>
    %cst_80 = arith.constant 1.000000e+00 : f32
    %114 = vector.broadcast %cst_80 : f32 to vector<256x8xf32>
    %115 = arith.addf %114, %113 : vector<256x8xf32>
    %116 = tpu.reciprocal %115 {approx = true} : vector<256x8xf32> -> vector<256x8xf32>
    %117 = arith.mulf %104, %116 : vector<256x8xf32>
    %c0_81 = arith.constant 0 : index
    %c8_82 = arith.constant 8 : index
    %118 = vector.load %arg6[%c0_81, %c8_82] : memref<256x24xf32, #tpu.memory_space<vmem>>, vector<256x8xf32>
    tpu.vector_store %arg6[%c0_81, %c8_82], %117 {strides = array<i32>} : memref<256x24xf32, #tpu.memory_space<vmem>>, vector<256x8xf32>,
    %c0_83 = arith.constant 0 : index
    %c0_84 = arith.constant 0 : index
    %119 = vector.load %arg6[%c0_83, %c0_84] : memref<256x24xf32, #tpu.memory_space<vmem>>, vector<256x16xf32>
    %120 = arith.truncf %119 : vector<256x16xf32> to vector<256x16xbf16>
    %c192 = arith.constant 192 : index
    %c0_85 = arith.constant 0 : index
    %121 = vector.load %arg2[%c192, %c0_85] : memref<400x128xbf16, #tpu.memory_space<vmem>>, vector<16x8xbf16>
    %cst_86 = arith.constant dense<0.000000e+00> : vector<256x8xf32>
    %122 = tpu.matmul %120, %121, %cst_86 {dimension_numbers = #tpu.dot_dimension_numbers<[1], [0], [0], [1], [0, 0, 1, 1], [], []>} : vector<256x16xbf16>, vector<16x8xbf16>, vector<256x8xf32> -> vector<256x8xf32>
    %c32_87 = arith.constant 32 : index
    %c0_88 = arith.constant 0 : index
    %123 = vector.load %arg3[%c32_87, %c0_88] : memref<328x128xf32, #tpu.memory_space<vmem>>, vector<1x8xf32>
    %124 = vector.broadcast %123 : vector<1x8xf32> to vector<256x8xf32>
    %125 = arith.addf %122, %124 : vector<256x8xf32>
    %cst_89 = arith.constant 0.000000e+00 : f32
    %126 = vector.broadcast %cst_89 : f32 to vector<256x8xf32>
    %127 = arith.maximumf %125, %126 : vector<256x8xf32>
    %128 = arith.truncf %127 : vector<256x8xf32> to vector<256x8xbf16>
    %c208 = arith.constant 208 : index
    %c0_90 = arith.constant 0 : index
    %129 = vector.load %arg2[%c208, %c0_90] : memref<400x128xbf16, #tpu.memory_space<vmem>>, vector<8x32xbf16>
    %cst_91 = arith.constant dense<0.000000e+00> : vector<256x32xf32>
    %130 = tpu.matmul %128, %129, %cst_91 {dimension_numbers = #tpu.dot_dimension_numbers<[1], [0], [0], [1], [0, 0, 1, 1], [], []>} : vector<256x8xbf16>, vector<8x32xbf16>, vector<256x32xf32> -> vector<256x32xf32>
    %c40 = arith.constant 40 : index
    %c0_92 = arith.constant 0 : index
    %131 = vector.load %arg3[%c40, %c0_92] : memref<328x128xf32, #tpu.memory_space<vmem>>, vector<1x32xf32>
    %132 = vector.broadcast %131 : vector<1x32xf32> to vector<256x32xf32>
    %133 = arith.addf %130, %132 : vector<256x32xf32>
    %134 = vector.extract_strided_slice %133 {offsets = [0, 0], sizes = [256, 16], strides = [1, 1]} : vector<256x32xf32> to vector<256x16xf32>
    %cst_93 = arith.constant 0.000000e+00 : f32
    %135 = vector.broadcast %cst_93 : f32 to vector<256x16xf32>
    %136 = arith.subf %135, %134 : vector<256x16xf32>
    %137 = math.exp %136 : vector<256x16xf32>
    %cst_94 = arith.constant 1.000000e+00 : f32
    %138 = vector.broadcast %cst_94 : f32 to vector<256x16xf32>
    %139 = arith.addf %138, %137 : vector<256x16xf32>
    %140 = tpu.reciprocal %139 {approx = true} : vector<256x16xf32> -> vector<256x16xf32>
    %141 = arith.mulf %119, %140 : vector<256x16xf32>
    %142 = vector.extract_strided_slice %133 {offsets = [0, 16], sizes = [256, 16], strides = [1, 1]} : vector<256x32xf32> to vector<256x16xf32>
    %143 = arith.addf %141, %142 : vector<256x16xf32>
    %144 = arith.truncf %143 : vector<256x16xf32> to vector<256x16xbf16>
    %c32_95 = arith.constant 32 : index
    %c0_96 = arith.constant 0 : index
    %145 = vector.load %arg7[%c32_95, %c0_96] : memref<320x16xbf16, #tpu.memory_space<vmem>>, vector<256x16xbf16>
    tpu.vector_store %arg7[%c32_95, %c0_96], %144 {strides = array<i32>} : memref<320x16xbf16, #tpu.memory_space<vmem>>, vector<256x16xbf16>,
    %146 = vector.broadcast %18 : vector<256x1xf32> to vector<256x16xf32>
    %147 = arith.mulf %143, %146 : vector<256x16xf32>
    %148 = arith.truncf %147 : vector<256x16xf32> to vector<256x16xbf16>
    %c32_97 = arith.constant 32 : index
    %c0_98 = arith.constant 0 : index
    %149 = vector.load %arg8[%c32_97, %c0_98] : memref<320x16xbf16, #tpu.memory_space<vmem>>, vector<256x16xbf16>
    tpu.vector_store %arg8[%c32_97, %c0_98], %148 {strides = array<i32>} : memref<320x16xbf16, #tpu.memory_space<vmem>>, vector<256x16xbf16>,
    %150 = vector.broadcast %17 : vector<256x1xf32> to vector<256x16xf32>
    %151 = arith.mulf %143, %150 : vector<256x16xf32>
    %152 = arith.truncf %151 : vector<256x16xf32> to vector<256x16xbf16>
    %c32_99 = arith.constant 32 : index
    %c0_100 = arith.constant 0 : index
    %153 = vector.load %arg9[%c32_99, %c0_100] : memref<320x16xbf16, #tpu.memory_space<vmem>>, vector<256x16xbf16>
    tpu.vector_store %arg9[%c32_99, %c0_100], %152 {strides = array<i32>} : memref<320x16xbf16, #tpu.memory_space<vmem>>, vector<256x16xbf16>,
    %c15_101 = arith.constant 15 : index
    %c0_102 = arith.constant 0 : index
    %154 = vector.load %arg8[%c15_101, %c0_102] : memref<320x16xbf16, #tpu.memory_space<vmem>>, vector<256x16xbf16>
    %c224 = arith.constant 224 : index
    %c0_103 = arith.constant 0 : index
    %155 = vector.load %arg2[%c224, %c0_103] : memref<400x128xbf16, #tpu.memory_space<vmem>>, vector<16x8xbf16>
    %cst_104 = arith.constant dense<0.000000e+00> : vector<256x8xf32>
    %156 = tpu.matmul %154, %155, %cst_104 {dimension_numbers = #tpu.dot_dimension_numbers<[1], [0], [0], [1], [0, 0, 1, 1], [], []>} : vector<256x16xbf16>, vector<16x8xbf16>, vector<256x8xf32> -> vector<256x8xf32>
    %c16_105 = arith.constant 16 : index
    %c0_106 = arith.constant 0 : index
    %157 = vector.load %arg7[%c16_105, %c0_106] : memref<320x16xbf16, #tpu.memory_space<vmem>>, vector<256x16xbf16>
    %c240 = arith.constant 240 : index
    %c0_107 = arith.constant 0 : index
    %158 = vector.load %arg2[%c240, %c0_107] : memref<400x128xbf16, #tpu.memory_space<vmem>>, vector<16x8xbf16>
    %cst_108 = arith.constant dense<0.000000e+00> : vector<256x8xf32>
    %159 = tpu.matmul %157, %158, %cst_108 {dimension_numbers = #tpu.dot_dimension_numbers<[1], [0], [0], [1], [0, 0, 1, 1], [], []>} : vector<256x16xbf16>, vector<16x8xbf16>, vector<256x8xf32> -> vector<256x8xf32>
    %160 = arith.addf %156, %159 : vector<256x8xf32>
    %c17_109 = arith.constant 17 : index
    %c0_110 = arith.constant 0 : index
    %161 = vector.load %arg9[%c17_109, %c0_110] : memref<320x16xbf16, #tpu.memory_space<vmem>>, vector<256x16xbf16>
    %c256 = arith.constant 256 : index
    %c0_111 = arith.constant 0 : index
    %162 = vector.load %arg2[%c256, %c0_111] : memref<400x128xbf16, #tpu.memory_space<vmem>>, vector<16x8xbf16>
    %cst_112 = arith.constant dense<0.000000e+00> : vector<256x8xf32>
    %163 = tpu.matmul %161, %162, %cst_112 {dimension_numbers = #tpu.dot_dimension_numbers<[1], [0], [0], [1], [0, 0, 1, 1], [], []>} : vector<256x16xbf16>, vector<16x8xbf16>, vector<256x8xf32> -> vector<256x8xf32>
    %164 = arith.addf %160, %163 : vector<256x8xf32>
    %c31_113 = arith.constant 31 : index
    %c0_114 = arith.constant 0 : index
    %165 = vector.load %arg8[%c31_113, %c0_114] : memref<320x16xbf16, #tpu.memory_space<vmem>>, vector<256x16xbf16>
    %c272 = arith.constant 272 : index
    %c0_115 = arith.constant 0 : index
    %166 = vector.load %arg2[%c272, %c0_115] : memref<400x128xbf16, #tpu.memory_space<vmem>>, vector<16x8xbf16>
    %cst_116 = arith.constant dense<0.000000e+00> : vector<256x8xf32>
    %167 = tpu.matmul %165, %166, %cst_116 {dimension_numbers = #tpu.dot_dimension_numbers<[1], [0], [0], [1], [0, 0, 1, 1], [], []>} : vector<256x16xbf16>, vector<16x8xbf16>, vector<256x8xf32> -> vector<256x8xf32>
    %168 = arith.addf %164, %167 : vector<256x8xf32>
    %c32_117 = arith.constant 32 : index
    %c0_118 = arith.constant 0 : index
    %169 = vector.load %arg7[%c32_117, %c0_118] : memref<320x16xbf16, #tpu.memory_space<vmem>>, vector<256x16xbf16>
    %c288_119 = arith.constant 288 : index
    %c0_120 = arith.constant 0 : index
    %170 = vector.load %arg2[%c288_119, %c0_120] : memref<400x128xbf16, #tpu.memory_space<vmem>>, vector<16x8xbf16>
    %cst_121 = arith.constant dense<0.000000e+00> : vector<256x8xf32>
    %171 = tpu.matmul %169, %170, %cst_121 {dimension_numbers = #tpu.dot_dimension_numbers<[1], [0], [0], [1], [0, 0, 1, 1], [], []>} : vector<256x16xbf16>, vector<16x8xbf16>, vector<256x8xf32> -> vector<256x8xf32>
    %172 = arith.addf %168, %171 : vector<256x8xf32>
    %c33_122 = arith.constant 33 : index
    %c0_123 = arith.constant 0 : index
    %173 = vector.load %arg9[%c33_122, %c0_123] : memref<320x16xbf16, #tpu.memory_space<vmem>>, vector<256x16xbf16>
    %c304 = arith.constant 304 : index
    %c0_124 = arith.constant 0 : index
    %174 = vector.load %arg2[%c304, %c0_124] : memref<400x128xbf16, #tpu.memory_space<vmem>>, vector<16x8xbf16>
    %cst_125 = arith.constant dense<0.000000e+00> : vector<256x8xf32>
    %175 = tpu.matmul %173, %174, %cst_125 {dimension_numbers = #tpu.dot_dimension_numbers<[1], [0], [0], [1], [0, 0, 1, 1], [], []>} : vector<256x16xbf16>, vector<16x8xbf16>, vector<256x8xf32> -> vector<256x8xf32>
    %176 = arith.addf %172, %175 : vector<256x8xf32>
    %c47_126 = arith.constant 47 : index
    %c0_127 = arith.constant 0 : index
    %177 = vector.load %arg8[%c47_126, %c0_127] : memref<320x16xbf16, #tpu.memory_space<vmem>>, vector<256x16xbf16>
    %c320 = arith.constant 320 : index
    %c0_128 = arith.constant 0 : index
    %178 = vector.load %arg2[%c320, %c0_128] : memref<400x128xbf16, #tpu.memory_space<vmem>>, vector<16x8xbf16>
    %cst_129 = arith.constant dense<0.000000e+00> : vector<256x8xf32>
    %179 = tpu.matmul %177, %178, %cst_129 {dimension_numbers = #tpu.dot_dimension_numbers<[1], [0], [0], [1], [0, 0, 1, 1], [], []>} : vector<256x16xbf16>, vector<16x8xbf16>, vector<256x8xf32> -> vector<256x8xf32>
    %180 = arith.addf %176, %179 : vector<256x8xf32>
    %c48_130 = arith.constant 48 : index
    %c0_131 = arith.constant 0 : index
    %181 = vector.load %arg7[%c48_130, %c0_131] : memref<320x16xbf16, #tpu.memory_space<vmem>>, vector<256x16xbf16>
    %c336 = arith.constant 336 : index
    %c0_132 = arith.constant 0 : index
    %182 = vector.load %arg2[%c336, %c0_132] : memref<400x128xbf16, #tpu.memory_space<vmem>>, vector<16x8xbf16>
    %cst_133 = arith.constant dense<0.000000e+00> : vector<256x8xf32>
    %183 = tpu.matmul %181, %182, %cst_133 {dimension_numbers = #tpu.dot_dimension_numbers<[1], [0], [0], [1], [0, 0, 1, 1], [], []>} : vector<256x16xbf16>, vector<16x8xbf16>, vector<256x8xf32> -> vector<256x8xf32>
    %184 = arith.addf %180, %183 : vector<256x8xf32>
    %c49_134 = arith.constant 49 : index
    %c0_135 = arith.constant 0 : index
    %185 = vector.load %arg9[%c49_134, %c0_135] : memref<320x16xbf16, #tpu.memory_space<vmem>>, vector<256x16xbf16>
    %c352 = arith.constant 352 : index
    %c0_136 = arith.constant 0 : index
    %186 = vector.load %arg2[%c352, %c0_136] : memref<400x128xbf16, #tpu.memory_space<vmem>>, vector<16x8xbf16>
    %cst_137 = arith.constant dense<0.000000e+00> : vector<256x8xf32>
    %187 = tpu.matmul %185, %186, %cst_137 {dimension_numbers = #tpu.dot_dimension_numbers<[1], [0], [0], [1], [0, 0, 1, 1], [], []>} : vector<256x16xbf16>, vector<16x8xbf16>, vector<256x8xf32> -> vector<256x8xf32>
    %188 = arith.addf %184, %187 : vector<256x8xf32>
    %c48_138 = arith.constant 48 : index
    %c0_139 = arith.constant 0 : index
    %189 = vector.load %arg3[%c48_138, %c0_139] : memref<328x128xf32, #tpu.memory_space<vmem>>, vector<1x8xf32>
    %190 = vector.broadcast %189 : vector<1x8xf32> to vector<256x8xf32>
    %191 = arith.addf %188, %190 : vector<256x8xf32>
    %cst_140 = arith.constant 5.000000e-01 : f32
    %192 = vector.broadcast %cst_140 : f32 to vector<256x8xf32>
    %193 = arith.mulf %192, %191 : vector<256x8xf32>
    %cst_141 = arith.constant 4.471500e-02 : f32
    %194 = vector.broadcast %cst_141 : f32 to vector<256x8xf32>
    %195 = arith.mulf %194, %191 : vector<256x8xf32>
    %196 = arith.mulf %195, %191 : vector<256x8xf32>
    %197 = arith.mulf %196, %191 : vector<256x8xf32>
    %198 = arith.addf %191, %197 : vector<256x8xf32>
    %cst_142 = arith.constant 0.797884583 : f32
    %199 = vector.broadcast %cst_142 : f32 to vector<256x8xf32>
    %200 = arith.mulf %199, %198 : vector<256x8xf32>
    %201 = math.tanh %200 : vector<256x8xf32>
    %cst_143 = arith.constant 1.000000e+00 : f32
    %202 = vector.broadcast %cst_143 : f32 to vector<256x8xf32>
    %203 = arith.addf %202, %201 : vector<256x8xf32>
    %204 = arith.mulf %193, %203 : vector<256x8xf32>
    %205 = arith.truncf %204 : vector<256x8xf32> to vector<256x8xbf16>
    %c368 = arith.constant 368 : index
    %c0_144 = arith.constant 0 : index
    %206 = vector.load %arg2[%c368, %c0_144] : memref<400x128xbf16, #tpu.memory_space<vmem>>, vector<8x8xbf16>
    %cst_145 = arith.constant dense<0.000000e+00> : vector<256x8xf32>
    %207 = tpu.matmul %205, %206, %cst_145 {dimension_numbers = #tpu.dot_dimension_numbers<[1], [0], [0], [1], [0, 0, 1, 1], [], []>} : vector<256x8xbf16>, vector<8x8xbf16>, vector<256x8xf32> -> vector<256x8xf32>
    %c56 = arith.constant 56 : index
    %c0_146 = arith.constant 0 : index
    %208 = vector.load %arg3[%c56, %c0_146] : memref<328x128xf32, #tpu.memory_space<vmem>>, vector<1x8xf32>
    %209 = vector.broadcast %208 : vector<1x8xf32> to vector<256x8xf32>
    %210 = arith.addf %207, %209 : vector<256x8xf32>
    %cst_147 = arith.constant 0.000000e+00 : f32
    %211 = vector.broadcast %cst_147 : f32 to vector<256x8xf32>
    %212 = arith.subf %211, %210 : vector<256x8xf32>
    %213 = math.exp %212 : vector<256x8xf32>
    %cst_148 = arith.constant 1.000000e+00 : f32
    %214 = vector.broadcast %cst_148 : f32 to vector<256x8xf32>
    %215 = arith.addf %214, %213 : vector<256x8xf32>
    %216 = tpu.reciprocal %215 {approx = true} : vector<256x8xf32> -> vector<256x8xf32>
    %217 = arith.mulf %204, %216 : vector<256x8xf32>
    %c0_149 = arith.constant 0 : index
    %c16_150 = arith.constant 16 : index
    %218 = vector.load %arg6[%c0_149, %c16_150] : memref<256x24xf32, #tpu.memory_space<vmem>>, vector<256x8xf32>
    tpu.vector_store %arg6[%c0_149, %c16_150], %217 {strides = array<i32>} : memref<256x24xf32, #tpu.memory_space<vmem>>, vector<256x8xf32>,
    %c384 = arith.constant 384 : index
    %c0_151 = arith.constant 0 : index
    %219 = vector.load %arg2[%c384, %c0_151] : memref<400x128xbf16, #tpu.memory_space<vmem>>, vector<8x24xbf16>
    %c0_152 = arith.constant 0 : index
    %c0_153 = arith.constant 0 : index
    %220 = vector.load %arg6[%c0_152, %c0_153] : memref<256x24xf32, #tpu.memory_space<vmem>>, vector<256x24xf32>
    %221 = arith.truncf %220 : vector<256x24xf32> to vector<256x24xbf16>
    "tpu.trace_start"() <{level = 10 : i32, message = "ck,sk->cs"}> : () -> ()
    %cst_154 = arith.constant dense<0.000000e+00> : vector<8x256xf32>
    %222 = tpu.matmul %219, %221, %cst_154 {dimension_numbers = #tpu.dot_dimension_numbers<[1], [1], [0], [0], [0, 0, 1, 0], [], []>} : vector<8x24xbf16>, vector<256x24xbf16>, vector<8x256xf32> -> vector<8x256xf32>
    "tpu.trace_stop"() : () -> ()
    %c64_155 = arith.constant 64 : index
    %c0_156 = arith.constant 0 : index
    %223 = vector.load %arg3[%c64_155, %c0_156] : memref<328x128xf32, #tpu.memory_space<vmem>>, vector<8x1xf32>
    %224 = vector.broadcast %223 : vector<8x1xf32> to vector<8x256xf32>
    %225 = arith.addf %222, %224 : vector<8x256xf32>
    %c0_157 = arith.constant 0 : index
    %226 = memref.load %arg4[%c0_157] : memref<1xf32, #tpu.memory_space<smem>>
    %227 = vector.broadcast %226 : f32 to vector<8x256xf32>
    %228 = arith.mulf %227, %225 : vector<8x256xf32>
    %cst_158 = arith.constant 1.000000e+00 : f32
    %229 = arith.subf %cst_158, %226 : f32
    %c0_159 = arith.constant 0 : index
    %c0_160 = arith.constant 0 : index
    %c0_161 = arith.constant 0 : index
    %230 = vector.load %arg1[%c0_159, %c0_160, %c0_161] : memref<1x8x256xf32, #tpu.memory_space<vmem>>, vector<1x8x256xf32>
    %231 = vector.shape_cast %230 : vector<1x8x256xf32> to vector<8x256xf32>
    %232 = vector.broadcast %229 : f32 to vector<8x256xf32>
    %233 = arith.mulf %232, %231 : vector<8x256xf32>
    %234 = arith.addf %228, %233 : vector<8x256xf32>
    %c0_162 = arith.constant 0 : index
    %c0_163 = arith.constant 0 : index
    %c0_164 = arith.constant 0 : index
    %235 = vector.load %arg5[%c0_162, %c0_163, %c0_164] : memref<1x8x256xf32, #tpu.memory_space<vmem>>, vector<1x8x256xf32>
    %236 = vector.shape_cast %235 : vector<1x8x256xf32> to vector<8x256xf32>
    %237 = vector.shape_cast %234 : vector<8x256xf32> to vector<1x8x256xf32>
    tpu.vector_store %arg5[%c0_162, %c0_163, %c0_164], %237 {strides = array<i32>} : memref<1x8x256xf32, #tpu.memory_space<vmem>>, vector<1x8x256xf32>,
    return
  }
  func.func @transform_0(%arg0: i32) -> (i32, i32, i32) {
    %c0_i32 = arith.constant 0 : i32
    %c0_i32_0 = arith.constant 0 : i32
    %c0_i32_1 = arith.constant 0 : i32
    return %arg0, %c0_i32, %c0_i32_0 : i32, i32, i32
  }
  func.func @transform_1(%arg0: i32) -> (i32, i32) {
    %c0_i32 = arith.constant 0 : i32
    %c0_i32_0 = arith.constant 0 : i32
    %c0_i32_1 = arith.constant 0 : i32
    return %c0_i32, %c0_i32_0 : i32, i32
  }
  func.func @transform_2(%arg0: i32) -> (i32, i32) {
    %c0_i32 = arith.constant 0 : i32
    %c0_i32_0 = arith.constant 0 : i32
    %c0_i32_1 = arith.constant 0 : i32
    return %c0_i32, %c0_i32_0 : i32, i32
  }
  func.func @transform_3(%arg0: i32) -> i32 {
    %c0_i32 = arith.constant 0 : i32
    %c0_i32_0 = arith.constant 0 : i32
    return %c0_i32 : i32
  }
  func.func @transform_4(%arg0: i32) -> (i32, i32, i32) {
    %c0_i32 = arith.constant 0 : i32
    %c0_i32_0 = arith.constant 0 : i32
    %c0_i32_1 = arith.constant 0 : i32
    return %arg0, %c0_i32, %c0_i32_0 : i32, i32, i32
  }
}

</mosaic_0001>

<llo_original>
// kernel: block_forward_pallas.1
$region0: #{block_forward_pallas.1}
  #allocation0 [shape = 'u32[]', space=smem, size = 0x4, offset = 0x4, fixed_abs, tag = 'smem constant byte address 0x4 - core index']
  #allocation1 [shape = 'u32[144,128]{1,0:T(1,128)}', space=vmem, size = 0x12000, scoped, tag = 'internal scratch']
  #allocation2 [shape = 'f32[256,24]{1,0:T(8,128)}', space=vmem, size = 0x20000, scoped, tag = 'scratch operand']
  #allocation3 [shape = 'bf16[320,16]{1,0:T(16,128)(2,1)}', space=vmem, size = 0x14000, scoped, tag = 'scratch operand']
  #allocation4 [shape = 'bf16[320,16]{1,0:T(16,128)(2,1)}', space=vmem, size = 0x14000, scoped, tag = 'scratch operand']
  #allocation5 [shape = 'bf16[320,16]{1,0:T(16,128)(2,1)}', space=vmem, size = 0x14000, scoped, tag = 'scratch operand']
  #allocation6 [shape = 'f32[1]{0:T(128)S(6)}', space=smem, size = 0x200, scoped, tag = 'scoped memory for block_forward_pallas.1']
  %s0 = inlined_call_operand.vmem [shape: f32[2,8,256], index: 0, kind: input, shape index: {}]
  %s1 = inlined_call_operand.vmem [shape: bf16[400,128], index: 1, kind: input, shape index: {}]
  %s2 = inlined_call_operand.vmem [shape: f32[328,128], index: 2, kind: input, shape index: {}]
  %s3 = inlined_call_operand.<no memory space> [shape: f32[1], index: 3, kind: input, shape index: {}]
  %s4 = inlined_call_operand.vmem [shape: f32[2,8,256], index: 4, kind: output, shape index: {}]
  %s5 = sld [smem:[#allocation0]]
  $region49: #{block_forward_pallas.1} parent=0
    _
  %s7 = ssub.s32 1, %s5
  %s8 = scalar_select 0, %s7, %s5
  %9 = sst [smem:[#allocation6]] %s3
  loop: start=0, step=1, limit=4
  $region2: #{block_forward_pallas.1} parent=0 // loop_pre_header
    _
  $region3: #{block_forward_pallas.1} parent=0 // loop_header
    %s11 = sphi 0, %s15
    %p12 = scmp.ge.s32.totalorder %s11, 4
    %s21 = sphi 0, %s23
    %s24 = sphi 0, %s21
    %s25 = sphi 0, %s24
    %s41 = sphi 0, %s25
    %s45 = sphi 0, %s45
    %s47 = sphi 0, %s45
    %s48 = sphi 0, %s47
    %s62 = sphi 0, %s48
    %s66 = sphi 0, %s66
    %s68 = sphi 0, %s66
    %s69 = sphi 0, %s68
    %s83 = sphi 0, %s69
    %s87 = sphi 0, %s87
    %s89 = sphi 0, %s87
    %s90 = sphi 0, %s89
    %s104 = sphi 0, %s90
    %s110 = sphi 0, %s112
    %s113 = sphi 0, %s110
    %s114 = sphi 0, %s113
    %s130 = sphi 0, %s114
  $region4: #{block_forward_pallas.1} parent=0 // loop_header_branch
    %14 = sbr.rel (%p12) target = $region8
  $region5: #{block_forward_pallas.1} parent=0 // loop_body
    %s16 = ssub.s32 %s11, 1
    %s17 = ssub.s32 %s11, 2
    %s18 = sadd.s32 %s11, 1
    %s19 = ssub.s32 %s11, %s18
    %p20 = scmp.eq.s32.totalorder %s19, 0
    %s22 = sadd.s32 %s21, 1
    %s23 = scalar_select %p20, %s21, %s22
    %p26 = pneg %p20
    %p27 = scmp.eq.s32.totalorder %s11, 1
    %p28 = por %p26, %p27
    %p29 = scmp.ne.s32.totalorder %s21, %s24
    %p30 = scmp.eq.s32.totalorder %s11, 0
    %p31 = por %p29, %p30
    %p32 = scmp.ne.s32.totalorder %s21, %s24
    %p33 = scmp.eq.s32.totalorder %s16, 1
    %p34 = por %p32, %p33
    %p35 = scmp.ne.s32.totalorder %s24, %s25
    %p36 = scmp.eq.s32.totalorder %s16, 0
    %p37 = por %p35, %p36
    %p38 = scmp.ne.s32.totalorder %s24, %s25
    %p39 = scmp.eq.s32.totalorder %s17, 1
    %p40 = por %p38, %p39
    %p42 = scmp.ne.s32.totalorder %s25, %s41
    %p43 = scmp.eq.s32.totalorder %s17, 0
    %p44 = por %p42, %p43
    %s46 = sadd.s32 %s45, 1
    %p49 = scmp.eq.s32.totalorder %s11, 1
    %p50 = scmp.ne.s32.totalorder %s45, %s47
    %p51 = scmp.eq.s32.totalorder %s11, 0
    %p52 = por %p50, %p51
    %p53 = scmp.ne.s32.totalorder %s45, %s47
    %p54 = scmp.eq.s32.totalorder %s16, 1
    %p55 = por %p53, %p54
    %p56 = scmp.ne.s32.totalorder %s47, %s48
    %p57 = scmp.eq.s32.totalorder %s16, 0
    %p58 = por %p56, %p57
    %p59 = scmp.ne.s32.totalorder %s47, %s48
    %p60 = scmp.eq.s32.totalorder %s17, 1
    %p61 = por %p59, %p60
    %p63 = scmp.ne.s32.totalorder %s48, %s62
    %p64 = scmp.eq.s32.totalorder %s17, 0
    %p65 = por %p63, %p64
    %s67 = sadd.s32 %s66, 1
    %p70 = scmp.eq.s32.totalorder %s11, 1
    %p71 = scmp.ne.s32.totalorder %s66, %s68
    %p72 = scmp.eq.s32.totalorder %s11, 0
    %p73 = por %p71, %p72
    %p74 = scmp.ne.s32.totalorder %s66, %s68
    %p75 = scmp.eq.s32.totalorder %s16, 1
    %p76 = por %p74, %p75
    %p77 = scmp.ne.s32.totalorder %s68, %s69
    %p78 = scmp.eq.s32.totalorder %s16, 0
    %p79 = por %p77, %p78
    %p80 = scmp.ne.s32.totalorder %s68, %s69
    %p81 = scmp.eq.s32.totalorder %s17, 1
    %p82 = por %p80, %p81
    %p84 = scmp.ne.s32.totalorder %s69, %s83
    %p85 = scmp.eq.s32.totalorder %s17, 0
    %p86 = por %p84, %p85
    %s88 = sadd.s32 %s87, 1
    %p91 = scmp.eq.s32.totalorder %s11, 1
    %p92 = scmp.ne.s32.totalorder %s87, %s89
    %p93 = scmp.eq.s32.totalorder %s11, 0
    %p94 = por %p92, %p93
    %p95 = scmp.ne.s32.totalorder %s87, %s89
    %p96 = scmp.eq.s32.totalorder %s16, 1
    %p97 = por %p95, %p96
    %p98 = scmp.ne.s32.totalorder %s89, %s90
    %p99 = scmp.eq.s32.totalorder %s16, 0
    %p100 = por %p98, %p99
    %p101 = scmp.ne.s32.totalorder %s89, %s90
    %p102 = scmp.eq.s32.totalorder %s17, 1
    %p103 = por %p101, %p102
    %p105 = scmp.ne.s32.totalorder %s90, %s104
    %p106 = scmp.eq.s32.totalorder %s17, 0
    %p107 = por %p105, %p106
    %s108 = ssub.s32 %s11, %s18
    %p109 = scmp.eq.s32.totalorder %s108, 0
    %s111 = sadd.s32 %s110, 1
    %s112 = scalar_select %p109, %s110, %s111
    %p115 = pneg %p109
    %p116 = scmp.eq.s32.totalorder %s11, 1
    %p117 = por %p115, %p116
    %p118 = scmp.ne.s32.totalorder %s110, %s113
    %p119 = scmp.eq.s32.totalorder %s11, 0
    %p120 = por %p118, %p119
    %p121 = scmp.ne.s32.totalorder %s110, %s113
    %p122 = scmp.eq.s32.totalorder %s16, 1
    %p123 = por %p121, %p122
    %p124 = scmp.ne.s32.totalorder %s113, %s114
    %p125 = scmp.eq.s32.totalorder %s16, 0
    %p126 = por %p124, %p125
    %p127 = scmp.ne.s32.totalorder %s113, %s114
    %p128 = scmp.eq.s32.totalorder %s17, 1
    %p129 = por %p127, %p128
    %p131 = scmp.ne.s32.totalorder %s114, %s130
    %p132 = scmp.eq.s32.totalorder %s17, 0
    %p133 = por %p131, %p132
    %p134 = scmp.le.s32.totalorder 1, %s11
    %p135 = scmp.lt.s32.totalorder %s11, 3
    %p136 = pnand %p134, %p135
    %p137 = pneg %p136
    // Predicated region
    $region9: #{block_forward_pallas.1} parent=5 // pred_check
      _
    $region10: #{block_forward_pallas.1} parent=5 // pred_check_branch
      %139 = sbr.rel (%p136) target = $region12
    $region11: #{block_forward_pallas.1} parent=5 // pred_region
      %s140 = ssub.s32 %s11, 1
      // Predicated region
      $region13: #{block_forward_pallas.1} parent=11 // pred_check
        %p141 = pneg %p58
      $region14: #{block_forward_pallas.1} parent=11 // pred_check_branch
        %143 = sbr.rel (%p141) target = $region16
      $region15: #{block_forward_pallas.1} parent=11 // pred_region
        _
      $region16: #{block_forward_pallas.1} parent=11 // pred_fallthru
        _
      // Predicated region
      $region17: #{block_forward_pallas.1} parent=11 // pred_check
        %p144 = pneg %p79
      $region18: #{block_forward_pallas.1} parent=11 // pred_check_branch
        %146 = sbr.rel (%p144) target = $region20
      $region19: #{block_forward_pallas.1} parent=11 // pred_region
        _
      $region20: #{block_forward_pallas.1} parent=11 // pred_fallthru
        _
      // Predicated region
      $region21: #{block_forward_pallas.1} parent=11 // pred_check
        %p147 = pneg %p100
      $region22: #{block_forward_pallas.1} parent=11 // pred_check_branch
        %149 = sbr.rel (%p147) target = $region24
      $region23: #{block_forward_pallas.1} parent=11 // pred_region
        _
      $region24: #{block_forward_pallas.1} parent=11 // pred_fallthru
        _
    $region12: #{block_forward_pallas.1} parent=5 // pred_fallthru
      _
    %p150 = scmp.lt.s32.totalorder %s11, 2
    // Predicated region
    $region25: #{block_forward_pallas.1} parent=5 // pred_check
      %p151 = pneg %p150
    $region26: #{block_forward_pallas.1} parent=5 // pred_check_branch
      %153 = sbr.rel (%p151) target = $region28
    $region27: #{block_forward_pallas.1} parent=5 // pred_region
      // Predicated region
      $region29: #{block_forward_pallas.1} parent=27 // pred_check
        %p154 = pneg %p31
      $region30: #{block_forward_pallas.1} parent=27 // pred_check_branch
        %156 = sbr.rel (%p154) target = $region32
      $region31: #{block_forward_pallas.1} parent=27 // pred_region
        %p157 = scmp.lt.s32.totalorder %s11, 1
        %s158 = scalar_select %p157, %s11, 1
        %s159 = smul.addr %s158, 2
        %s160 = smul.addr %s159, 8
        %s161 = scalar_lea.vmem %s0, %s160
      $region32: #{block_forward_pallas.1} parent=27 // pred_fallthru
        _
    $region28: #{block_forward_pallas.1} parent=5 // pred_fallthru
      _
    %p162 = scmp.le.s32.totalorder 1, %s11
    %p163 = scmp.lt.s32.totalorder %s11, 3
    %p164 = pnand %p162, %p163
    %p165 = pneg %p164
    // Predicated region
    $region33: #{block_forward_pallas.1} parent=5 // pred_check
      _
    $region34: #{block_forward_pallas.1} parent=5 // pred_check_branch
      %167 = sbr.rel (%p164) target = $region36
    $region35: #{block_forward_pallas.1} parent=5 // pred_region
      %s168 = ssub.s32 %s11, 1
      %p169 = scmp.lt.s32.totalorder %s16, 1
      %s170 = scalar_select %p169, %s16, 1
      %s171 = smul.addr %s170, 2
      %s172 = smul.addr %s171, 8
      %s173 = scalar_lea.vmem %s0, %s172
      %p174 = pneg %p37
      %p175 = pneg %p34
      %p176 = pneg %p58
      %p177 = pneg %p55
      %p178 = pneg %p79
      %p179 = pneg %p76
      %p180 = pneg %p100
      %p181 = pneg %p97
      %p182 = pneg %p126
      %p183 = pneg %p123
      %p184 = scmp.lt.s32.totalorder %s16, 1
      %s185 = scalar_select %p184, %s16, 1
      %s186 = smul.addr %s185, 2
      %s187 = smul.addr %s186, 8
      %s188 = scalar_lea.vmem %s4, %s187
      %p189 = scmp.lt.s32.totalorder %s16, 1
      %s190 = scalar_select %p189, %s16, 1
      %s191 = smul.addr %s190, 2
      %s192 = smul.addr %s191, 8
      %s193 = scalar_lea.vmem %s0, %s192
      %p194 = scmp.lt.s32.totalorder %s16, 1
      %s195 = scalar_select %p194, %s16, 1
      %s196 = smul.addr %s195, 2
      %s197 = smul.addr %s196, 8
      %s198 = scalar_lea.vmem %s4, %s197
      %vm200 = vcmask 130048
      %201 = vst.msk [vmem:[#allocation3] sm:$0xff] %vm200, 0
      %202 = vst.msk [vmem:[#allocation3 + $0x8] sm:$0xff] %vm200, 0
      %203 = vst.msk [vmem:[#allocation3 + $0x90] sm:$0xff] %vm200, 0
      %204 = vst.msk [vmem:[#allocation3 + $0x98] sm:$0xff] %vm200, 0
      %205 = vst.msk [vmem:[#allocation4] sm:$0xff] %vm200, 0
      %206 = vst.msk [vmem:[#allocation4 + $0x8] sm:$0xff] %vm200, 0
      %207 = vst.msk [vmem:[#allocation4 + $0x90] sm:$0xff] %vm200, 0
      %208 = vst.msk [vmem:[#allocation4 + $0x98] sm:$0xff] %vm200, 0
      %209 = vst.msk [vmem:[#allocation5] sm:$0xff] %vm200, 0
      %210 = vst.msk [vmem:[#allocation5 + $0x8] sm:$0xff] %vm200, 0
      %211 = vst.msk [vmem:[#allocation5 + $0x90] sm:$0xff] %vm200, 0
      %212 = vst.msk [vmem:[#allocation5 + $0x98] sm:$0xff] %vm200, 0
      %v213 = vld [vmem:[%s193] sm:$0xff]
      %v214 = vld [vmem:[%s193 + $0x8] sm:$0xff]
      %215 = vxpose.xlu0.b32.start [1/16] %v213, 128
      %216 = vxpose.xlu0.b32.cont [2/16] 0.0, 128
      %217 = vxpose.xlu0.b32.cont [3/16] 0.0, 128
      %218 = vxpose.xlu0.b32.cont [4/16] 0.0, 128
      %219 = vxpose.xlu0.b32.cont [5/16] 0.0, 128
      %220 = vxpose.xlu0.b32.cont [6/16] 0.0, 128
      %221 = vxpose.xlu0.b32.cont [7/16] 0.0, 128
      %222 = vxpose.xlu0.b32.cont [8/16] 0.0, 128
      %223 = vxpose.xlu0.b32.cont [9/16] 0.0, 128
      %224 = vxpose.xlu0.b32.cont [10/16] 0.0, 128
      %225 = vxpose.xlu0.b32.cont [11/16] 0.0, 128
      %226 = vxpose.xlu0.b32.cont [12/16] 0.0, 128
      %227 = vxpose.xlu0.b32.cont [13/16] 0.0, 128
      %228 = vxpose.xlu0.b32.cont [14/16] 0.0, 128
      %229 = vxpose.xlu0.b32.cont [15/16] 0.0, 128
      %230 = vxpose.xlu0.b32.end [16/16] 0.0, 128
      %v231 = vpop.trf.xlu0
      %v232 = vpop.trf.xlu0
      %v233 = vpop.trf.xlu0
      %v234 = vpop.trf.xlu0
      %v235 = vpop.trf.xlu0
      %v236 = vpop.trf.xlu0
      %v237 = vpop.trf.xlu0
      %v238 = vpop.trf.xlu0
      %v239 = vpop.trf.xlu0
      %v240 = vpop.trf.xlu0
      %v241 = vpop.trf.xlu0
      %v242 = vpop.trf.xlu0
      %v243 = vpop.trf.xlu0
      %v244 = vpop.trf.xlu0
      %v245 = vpop.trf.xlu0
      %v246 = vpop.trf.xlu0
      %247 = vxpose.xlu0.b32.start [1/16] %v214, 128
      %248 = vxpose.xlu0.b32.cont [2/16] 0.0, 128
      %249 = vxpose.xlu0.b32.cont [3/16] 0.0, 128
      %250 = vxpose.xlu0.b32.cont [4/16] 0.0, 128
      %251 = vxpose.xlu0.b32.cont [5/16] 0.0, 128
      %252 = vxpose.xlu0.b32.cont [6/16] 0.0, 128
      %253 = vxpose.xlu0.b32.cont [7/16] 0.0, 128
      %254 = vxpose.xlu0.b32.cont [8/16] 0.0, 128
      %255 = vxpose.xlu0.b32.cont [9/16] 0.0, 128
      %256 = vxpose.xlu0.b32.cont [10/16] 0.0, 128
      %257 = vxpose.xlu0.b32.cont [11/16] 0.0, 128
      %258 = vxpose.xlu0.b32.cont [12/16] 0.0, 128
      %259 = vxpose.xlu0.b32.cont [13/16] 0.0, 128
      %260 = vxpose.xlu0.b32.cont [14/16] 0.0, 128
      %261 = vxpose.xlu0.b32.cont [15/16] 0.0, 128
      %262 = vxpose.xlu0.b32.end [16/16] 0.0, 128
      %v263 = vpop.trf.xlu0
      %v264 = vpop.trf.xlu0
      %v265 = vpop.trf.xlu0
      %v266 = vpop.trf.xlu0
      %v267 = vpop.trf.xlu0
      %v268 = vpop.trf.xlu0
      %v269 = vpop.trf.xlu0
      %v270 = vpop.trf.xlu0
      %v271 = vpop.trf.xlu0
      %v272 = vpop.trf.xlu0
      %v273 = vpop.trf.xlu0
      %v274 = vpop.trf.xlu0
      %v275 = vpop.trf.xlu0
      %v276 = vpop.trf.xlu0
      %v277 = vpop.trf.xlu0
      %v278 = vpop.trf.xlu0
      %vm279 = vcmask 64512
      %280 = vst.msk [vmem:[#allocation2] sm:$0xff] %vm279, %v231
      %281 = vst.msk [vmem:[#allocation2 + $0x8] sm:$0xff] %vm279, %v232
      %282 = vst.msk [vmem:[#allocation2 + $0x10] sm:$0xff] %vm279, %v233
      %283 = vst.msk [vmem:[#allocation2 + $0x18] sm:$0xff] %vm279, %v234
      %284 = vst.msk [vmem:[#allocation2 + $0x20] sm:$0xff] %vm279, %v235
      %285 = vst.msk [vmem:[#allocation2 + $0x28] sm:$0xff] %vm279, %v236
      %286 = vst.msk [vmem:[#allocation2 + $0x30] sm:$0xff] %vm279, %v237
      %287 = vst.msk [vmem:[#allocation2 + $0x38] sm:$0xff] %vm279, %v238
      %288 = vst.msk [vmem:[#allocation2 + $0x40] sm:$0xff] %vm279, %v239
      %289 = vst.msk [vmem:[#allocation2 + $0x48] sm:$0xff] %vm279, %v240
      %290 = vst.msk [vmem:[#allocation2 + $0x50] sm:$0xff] %vm279, %v241
      %291 = vst.msk [vmem:[#allocation2 + $0x58] sm:$0xff] %vm279, %v242
      %292 = vst.msk [vmem:[#allocation2 + $0x60] sm:$0xff] %vm279, %v243
      %293 = vst.msk [vmem:[#allocation2 + $0x68] sm:$0xff] %vm279, %v244
      %294 = vst.msk [vmem:[#allocation2 + $0x70] sm:$0xff] %vm279, %v245
      %295 = vst.msk [vmem:[#allocation2 + $0x78] sm:$0xff] %vm279, %v246
      %296 = vst.msk [vmem:[#allocation2 + $0x80] sm:$0xff] %vm279, %v263
      %297 = vst.msk [vmem:[#allocation2 + $0x88] sm:$0xff] %vm279, %v264
      %298 = vst.msk [vmem:[#allocation2 + $0x90] sm:$0xff] %vm279, %v265
      %299 = vst.msk [vmem:[#allocation2 + $0x98] sm:$0xff] %vm279, %v266
      %300 = vst.msk [vmem:[#allocation2 + $0xa0] sm:$0xff] %vm279, %v267
      %301 = vst.msk [vmem:[#allocation2 + $0xa8] sm:$0xff] %vm279, %v268
      %302 = vst.msk [vmem:[#allocation2 + $0xb0] sm:$0xff] %vm279, %v269
      %303 = vst.msk [vmem:[#allocation2 + $0xb8] sm:$0xff] %vm279, %v270
      %304 = vst.msk [vmem:[#allocation2 + $0xc0] sm:$0xff] %vm279, %v271
      %305 = vst.msk [vmem:[#allocation2 + $0xc8] sm:$0xff] %vm279, %v272
      %306 = vst.msk [vmem:[#allocation2 + $0xd0] sm:$0xff] %vm279, %v273
      %307 = vst.msk [vmem:[#allocation2 + $0xd8] sm:$0xff] %vm279, %v274
      %308 = vst.msk [vmem:[#allocation2 + $0xe0] sm:$0xff] %vm279, %v275
      %309 = vst.msk [vmem:[#allocation2 + $0xe8] sm:$0xff] %vm279, %v276
      %310 = vst.msk [vmem:[#allocation2 + $0xf0] sm:$0xff] %vm279, %v277
      %311 = vst.msk [vmem:[#allocation2 + $0xf8] sm:$0xff] %vm279, %v278
      %v312 = vld [vmem:[%s2 + $0x48] sm:$0xff]
      %v313 = vld [vmem:[%s2 + $0x50] sm:$0xff]
      %v314 = vld [vmem:[%s2 + $0x58] sm:$0xff]
      %v315 = vld [vmem:[%s2 + $0x60] sm:$0xff]
      %v316 = vld [vmem:[%s2 + $0x68] sm:$0xff]
      %v317 = vld [vmem:[%s2 + $0x70] sm:$0xff]
      %v318 = vld [vmem:[%s2 + $0x78] sm:$0xff]
      %v319 = vld [vmem:[%s2 + $0x80] sm:$0xff]
      %v320 = vld [vmem:[%s2 + $0x88] sm:$0xff]
      %v321 = vld [vmem:[%s2 + $0x90] sm:$0xff]
      %v322 = vld [vmem:[%s2 + $0x98] sm:$0xff]
      %v323 = vld [vmem:[%s2 + $0xa0] sm:$0xff]
      %v324 = vld [vmem:[%s2 + $0xa8] sm:$0xff]
      %v325 = vld [vmem:[%s2 + $0xb0] sm:$0xff]
      %v326 = vld [vmem:[%s2 + $0xb8] sm:$0xff]
      %v327 = vld [vmem:[%s2 + $0xc0] sm:$0xff]
      %v328 = vld [vmem:[%s2 + $0xc8] sm:$0xff]
      %v329 = vld [vmem:[%s2 + $0xd0] sm:$0xff]
      %v330 = vld [vmem:[%s2 + $0xd8] sm:$0xff]
      %v331 = vld [vmem:[%s2 + $0xe0] sm:$0xff]
      %v332 = vld [vmem:[%s2 + $0xe8] sm:$0xff]
      %v333 = vld [vmem:[%s2 + $0xf0] sm:$0xff]
      %v334 = vld [vmem:[%s2 + $0xf8] sm:$0xff]
      %v335 = vld [vmem:[%s2 + $0x100] sm:$0xff]
      %v336 = vld [vmem:[%s2 + $0x108] sm:$0xff]
      %v337 = vld [vmem:[%s2 + $0x110] sm:$0xff]
      %v338 = vld [vmem:[%s2 + $0x118] sm:$0xff]
      %v339 = vld [vmem:[%s2 + $0x120] sm:$0xff]
      %v340 = vld [vmem:[%s2 + $0x128] sm:$0xff]
      %v341 = vld [vmem:[%s2 + $0x130] sm:$0xff]
      %v342 = vld [vmem:[%s2 + $0x138] sm:$0xff]
      %v343 = vld [vmem:[%s2 + $0x140] sm:$0xff]
      %v344 = vld [vmem:[#allocation2] sm:$0xff]
      %v345 = vld [vmem:[#allocation2 + $0x8] sm:$0xff]
      %v346 = vld [vmem:[#allocation2 + $0x10] sm:$0xff]
      %v347 = vld [vmem:[#allocation2 + $0x18] sm:$0xff]
      %v348 = vld [vmem:[#allocation2 + $0x20] sm:$0xff]
      %v349 = vld [vmem:[#allocation2 + $0x28] sm:$0xff]
      %v350 = vld [vmem:[#allocation2 + $0x30] sm:$0xff]
      %v351 = vld [vmem:[#allocation2 + $0x38] sm:$0xff]
      %v352 = vld [vmem:[#allocation2 + $0x40] sm:$0xff]
      %v353 = vld [vmem:[#allocation2 + $0x48] sm:$0xff]
      %v354 = vld [vmem:[#allocation2 + $0x50] sm:$0xff]
      %v355 = vld [vmem:[#allocation2 + $0x58] sm:$0xff]
      %v356 = vld [vmem:[#allocation2 + $0x60] sm:$0xff]
      %v357 = vld [vmem:[#allocation2 + $0x68] sm:$0xff]
      %v358 = vld [vmem:[#allocation2 + $0x70] sm:$0xff]
      %v359 = vld [vmem:[#allocation2 + $0x78] sm:$0xff]
      %v360 = vld [vmem:[#allocation2 + $0x80] sm:$0xff]
      %v361 = vld [vmem:[#allocation2 + $0x88] sm:$0xff]
      %v362 = vld [vmem:[#allocation2 + $0x90] sm:$0xff]
      %v363 = vld [vmem:[#allocation2 + $0x98] sm:$0xff]
      %v364 = vld [vmem:[#allocation2 + $0xa0] sm:$0xff]
      %v365 = vld [vmem:[#allocation2 + $0xa8] sm:$0xff]
      %v366 = vld [vmem:[#allocation2 + $0xb0] sm:$0xff]
      %v367 = vld [vmem:[#allocation2 + $0xb8] sm:$0xff]
      %v368 = vld [vmem:[#allocation2 + $0xc0] sm:$0xff]
      %v369 = vld [vmem:[#allocation2 + $0xc8] sm:$0xff]
      %v370 = vld [vmem:[#allocation2 + $0xd0] sm:$0xff]
      %v371 = vld [vmem:[#allocation2 + $0xd8] sm:$0xff]
      %v372 = vld [vmem:[#allocation2 + $0xe0] sm:$0xff]
      %v373 = vld [vmem:[#allocation2 + $0xe8] sm:$0xff]
      %v374 = vld [vmem:[#allocation2 + $0xf0] sm:$0xff]
      %v375 = vld [vmem:[#allocation2 + $0xf8] sm:$0xff]
      %v376 = vpack.c.bf16 %v345, %v344
      %v377 = vpack.c.bf16 %v347, %v346
      %v378 = vpack.c.bf16 %v349, %v348
      %v379 = vpack.c.bf16 %v351, %v350
      %v380 = vpack.c.bf16 %v353, %v352
      %v381 = vpack.c.bf16 %v355, %v354
      %v382 = vpack.c.bf16 %v357, %v356
      %v383 = vpack.c.bf16 %v359, %v358
      %v384 = vpack.c.bf16 %v361, %v360
      %v385 = vpack.c.bf16 %v363, %v362
      %v386 = vpack.c.bf16 %v365, %v364
      %v387 = vpack.c.bf16 %v367, %v366
      %v388 = vpack.c.bf16 %v369, %v368
      %v389 = vpack.c.bf16 %v371, %v370
      %v390 = vpack.c.bf16 %v373, %v372
      %v391 = vpack.c.bf16 %v375, %v374
      %v392 = vld [vmem:[%s1] sm:$0xf]
      %v393 = vld [vmem:[%s2] sm:$0x1]
      %v394 = vlaneseq
      %v395 = vshrl.u32 %v394, 7
      %v396 = vsub.s32 0, %v395
      %v397 = vrot.slane %v393, %v396
      %v399 = vsel %vm279, %v376, 0
      %v402 = vsel %vm279, %v377, 0
      %v405 = vsel %vm279, %v378, 0
      %v408 = vsel %vm279, %v379, 0
      %v411 = vsel %vm279, %v380, 0
      %v414 = vsel %vm279, %v381, 0
      %v417 = vsel %vm279, %v382, 0
      %v420 = vsel %vm279, %v383, 0
      %v423 = vsel %vm279, %v384, 0
      %v426 = vsel %vm279, %v385, 0
      %v429 = vsel %vm279, %v386, 0
      %v432 = vsel %vm279, %v387, 0
      %v435 = vsel %vm279, %v388, 0
      %v438 = vsel %vm279, %v389, 0
      %v441 = vsel %vm279, %v390, 0
      %v444 = vsel %vm279, %v391, 0
      %vm446 = vcmask 1043456
      %v448 = vsel %vm446, %v392, 0
      %450 = vmatprep.subr.bf16.mxu0 0
      %451 = vmatpush1.bf16.msra.mxu0 %v448
      %452 = vmatprep.subr.bf16.mxu0 0
      %453 = vmatpush1.bf16.msra.mxu0 0
      %454 = vmatprep.subr.bf16.mxu0 0
      %455 = vmatpush1.bf16.msra.mxu0 0
      %456 = vmatprep.subr.bf16.mxu0 0
      %457 = vmatpush1.bf16.msra.mxu0 0
      %458 = vmatprep.subr.bf16.mxu0 0
      %459 = vmatpush1.bf16.msra.mxu0 0
      %460 = vmatprep.subr.bf16.mxu0 0
      %461 = vmatpush1.bf16.msra.mxu0 0
      %462 = vmatprep.subr.bf16.mxu0 0
      %463 = vmatpush1.bf16.msra.mxu0 0
      %464 = vmatprep.subr.bf16.mxu0 0
      %465 = vmatpush1.bf16.msra.mxu0 0
      %466 = vmatprep.subr.bf16.mxu0 0
      %467 = vmatpush1.bf16.msra.mxu0 0
      %468 = vmatprep.subr.bf16.mxu0 0
      %469 = vmatpush1.bf16.msra.mxu0 0
      %470 = vmatprep.subr.bf16.mxu0 0
      %471 = vmatpush1.bf16.msra.mxu0 0
      %472 = vmatprep.subr.bf16.mxu0 0
      %473 = vmatpush1.bf16.msra.mxu0 0
      %474 = vmatprep.subr.bf16.mxu0 0
      %475 = vmatpush1.bf16.msra.mxu0 0
      %476 = vmatprep.subr.bf16.mxu0 0
      %477 = vmatpush1.bf16.msra.mxu0 0
      %478 = vmatprep.subr.bf16.mxu0 0
      %479 = vmatpush1.bf16.msra.mxu0 0
      %480 = vmatprep.subr.bf16.mxu0 0
      %481 = vmatpush1.bf16.msra.mxu0 0
      %482 = vmatprep.mubr.bf16.mxu0 0
      %483 = vmatmul.mubr.bf16.gmra.mrb[0].mxu0 %v399
      %v484 = vpop.f32.mrb[0].mxu0
      %v485 = vadd.f32 %v397, %v484
      %v486 = vpop.f32.mrb[0].mxu0
      %v487 = vpop.f32.mrb[0].mxu0
      %v488 = vadd.f32 %v397, %v487
      %v489 = vpop.f32.mrb[0].mxu0
      %490 = vmatprep.mubr.bf16.mxu0 0
      %491 = vmatmul.mubr.bf16.gmra.mrb[0].mxu0 %v402
      %v492 = vpop.f32.mrb[0].mxu0
      %v493 = vadd.f32 %v397, %v492
      %v494 = vpop.f32.mrb[0].mxu0
      %v495 = vpop.f32.mrb[0].mxu0
      %v496 = vadd.f32 %v397, %v495
      %v497 = vpop.f32.mrb[0].mxu0
      %498 = vmatprep.mubr.bf16.mxu0 0
      %499 = vmatmul.mubr.bf16.gmra.mrb[0].mxu0 %v405
      %v500 = vpop.f32.mrb[0].mxu0
      %v501 = vadd.f32 %v397, %v500
      %v502 = vpop.f32.mrb[0].mxu0
      %v503 = vpop.f32.mrb[0].mxu0
      %v504 = vadd.f32 %v397, %v503
      %v505 = vpop.f32.mrb[0].mxu0
      %506 = vmatprep.mubr.bf16.mxu0 0
      %507 = vmatmul.mubr.bf16.gmra.mrb[0].mxu0 %v408
      %v508 = vpop.f32.mrb[0].mxu0
      %v509 = vadd.f32 %v397, %v508
      %v510 = vpop.f32.mrb[0].mxu0
      %v511 = vpop.f32.mrb[0].mxu0
      %v512 = vadd.f32 %v397, %v511
      %v513 = vpop.f32.mrb[0].mxu0
      %514 = vmatprep.mubr.bf16.mxu0 0
      %515 = vmatmul.mubr.bf16.gmra.mrb[0].mxu0 %v411
      %v516 = vpop.f32.mrb[0].mxu0
      %v517 = vadd.f32 %v397, %v516
      %v518 = vpop.f32.mrb[0].mxu0
      %v519 = vpop.f32.mrb[0].mxu0
      %v520 = vadd.f32 %v397, %v519
      %v521 = vpop.f32.mrb[0].mxu0
      %522 = vmatprep.mubr.bf16.mxu0 0
      %523 = vmatmul.mubr.bf16.gmra.mrb[0].mxu0 %v414
      %v524 = vpop.f32.mrb[0].mxu0
      %v525 = vadd.f32 %v397, %v524
      %v526 = vpop.f32.mrb[0].mxu0
      %v527 = vpop.f32.mrb[0].mxu0
      %v528 = vadd.f32 %v397, %v527
      %v529 = vpop.f32.mrb[0].mxu0
      %530 = vmatprep.mubr.bf16.mxu0 0
      %531 = vmatmul.mubr.bf16.gmra.mrb[0].mxu0 %v417
      %v532 = vpop.f32.mrb[0].mxu0
      %v533 = vadd.f32 %v397, %v532
      %v534 = vpop.f32.mrb[0].mxu0
      %v535 = vpop.f32.mrb[0].mxu0
      %v536 = vadd.f32 %v397, %v535
      %v537 = vpop.f32.mrb[0].mxu0
      %538 = vmatprep.mubr.bf16.mxu0 0
      %539 = vmatmul.mubr.bf16.gmra.mrb[0].mxu0 %v420
      %v540 = vpop.f32.mrb[0].mxu0
      %v541 = vadd.f32 %v397, %v540
      %v542 = vpop.f32.mrb[0].mxu0
      %v543 = vpop.f32.mrb[0].mxu0
      %v544 = vadd.f32 %v397, %v543
      %v545 = vpop.f32.mrb[0].mxu0
      %546 = vmatprep.mubr.bf16.mxu0 0
      %547 = vmatmul.mubr.bf16.gmra.mrb[0].mxu0 %v423
      %v548 = vpop.f32.mrb[0].mxu0
      %v549 = vadd.f32 %v397, %v548
      %v550 = vpop.f32.mrb[0].mxu0
      %v551 = vpop.f32.mrb[0].mxu0
      %v552 = vadd.f32 %v397, %v551
      %v553 = vpop.f32.mrb[0].mxu0
      %554 = vmatprep.mubr.bf16.mxu0 0
      %555 = vmatmul.mubr.bf16.gmra.mrb[0].mxu0 %v426
      %v556 = vpop.f32.mrb[0].mxu0
      %v557 = vadd.f32 %v397, %v556
      %v558 = vpop.f32.mrb[0].mxu0
      %v559 = vpop.f32.mrb[0].mxu0
      %v560 = vadd.f32 %v397, %v559
      %v561 = vpop.f32.mrb[0].mxu0
      %562 = vmatprep.mubr.bf16.mxu0 0
      %563 = vmatmul.mubr.bf16.gmra.mrb[0].mxu0 %v429
      %v564 = vpop.f32.mrb[0].mxu0
      %v565 = vadd.f32 %v397, %v564
      %v566 = vpop.f32.mrb[0].mxu0
      %v567 = vpop.f32.mrb[0].mxu0
      %v568 = vadd.f32 %v397, %v567
      %v569 = vpop.f32.mrb[0].mxu0
      %570 = vmatprep.mubr.bf16.mxu0 0
      %571 = vmatmul.mubr.bf16.gmra.mrb[0].mxu0 %v432
      %v572 = vpop.f32.mrb[0].mxu0
      %v573 = vadd.f32 %v397, %v572
      %v574 = vpop.f32.mrb[0].mxu0
      %v575 = vpop.f32.mrb[0].mxu0
      %v576 = vadd.f32 %v397, %v575
      %v577 = vpop.f32.mrb[0].mxu0
      %578 = vmatprep.mubr.bf16.mxu0 0
      %579 = vmatmul.mubr.bf16.gmra.mrb[0].mxu0 %v435
      %v580 = vpop.f32.mrb[0].mxu0
      %v581 = vadd.f32 %v397, %v580
      %v582 = vpop.f32.mrb[0].mxu0
      %v583 = vpop.f32.mrb[0].mxu0
      %v584 = vadd.f32 %v397, %v583
      %v585 = vpop.f32.mrb[0].mxu0
      %586 = vmatprep.mubr.bf16.mxu0 0
      %587 = vmatmul.mubr.bf16.gmra.mrb[0].mxu0 %v438
      %v588 = vpop.f32.mrb[0].mxu0
      %v589 = vadd.f32 %v397, %v588
      %v590 = vpop.f32.mrb[0].mxu0
      %v591 = vpop.f32.mrb[0].mxu0
      %v592 = vadd.f32 %v397, %v591
      %v593 = vpop.f32.mrb[0].mxu0
      %594 = vmatprep.mubr.bf16.mxu0 0
      %595 = vmatmul.mubr.bf16.gmra.mrb[0].mxu0 %v441
      %v596 = vpop.f32.mrb[0].mxu0
      %v597 = vadd.f32 %v397, %v596
      %v598 = vpop.f32.mrb[0].mxu0
      %v599 = vpop.f32.mrb[0].mxu0
      %v600 = vadd.f32 %v397, %v599
      %v601 = vpop.f32.mrb[0].mxu0
      %602 = vmatprep.mubr.bf16.mxu0 0
      %603 = vmatmul.mubr.bf16.gmra.mrb[0].mxu0 %v444
      %v604 = vpop.f32.mrb[0].mxu0
      %v605 = vadd.f32 %v397, %v604
      %v606 = vpop.f32.mrb[0].mxu0
      %v607 = vpop.f32.mrb[0].mxu0
      %v608 = vadd.f32 %v397, %v607
      %v609 = vpop.f32.mrb[0].mxu0
      %610 = vdwg.mxu0
      %v611 = vmax.f32 %v485, 0.0
      %v612 = vmax.f32 %v488, 0.0
      %v613 = vmax.f32 %v493, 0.0
      %v614 = vmax.f32 %v496, 0.0
      %v615 = vmax.f32 %v501, 0.0
      %v616 = vmax.f32 %v504, 0.0
      %v617 = vmax.f32 %v509, 0.0
      %v618 = vmax.f32 %v512, 0.0
      %v619 = vmax.f32 %v517, 0.0
      %v620 = vmax.f32 %v520, 0.0
      %v621 = vmax.f32 %v525, 0.0
      %v622 = vmax.f32 %v528, 0.0
      %v623 = vmax.f32 %v533, 0.0
      %v624 = vmax.f32 %v536, 0.0
      %v625 = vmax.f32 %v541, 0.0
      %v626 = vmax.f32 %v544, 0.0
      %v627 = vmax.f32 %v549, 0.0
      %v628 = vmax.f32 %v552, 0.0
      %v629 = vmax.f32 %v557, 0.0
      %v630 = vmax.f32 %v560, 0.0
      %v631 = vmax.f32 %v565, 0.0
      %v632 = vmax.f32 %v568, 0.0
      %v633 = vmax.f32 %v573, 0.0
      %v634 = vmax.f32 %v576, 0.0
      %v635 = vmax.f32 %v581, 0.0
      %v636 = vmax.f32 %v584, 0.0
      %v637 = vmax.f32 %v589, 0.0
      %v638 = vmax.f32 %v592, 0.0
      %v639 = vmax.f32 %v597, 0.0
      %v640 = vmax.f32 %v600, 0.0
      %v641 = vmax.f32 %v605, 0.0
      %v642 = vmax.f32 %v608, 0.0
      %v643 = vpack.c.bf16 %v612, %v611
      %v644 = vpack.c.bf16 %v614, %v613
      %v645 = vpack.c.bf16 %v616, %v615
      %v646 = vpack.c.bf16 %v618, %v617
      %v647 = vpack.c.bf16 %v620, %v619
      %v648 = vpack.c.bf16 %v622, %v621
      %v649 = vpack.c.bf16 %v624, %v623
      %v650 = vpack.c.bf16 %v626, %v625
      %v651 = vpack.c.bf16 %v628, %v627
      %v652 = vpack.c.bf16 %v630, %v629
      %v653 = vpack.c.bf16 %v632, %v631
      %v654 = vpack.c.bf16 %v634, %v633
      %v655 = vpack.c.bf16 %v636, %v635
      %v656 = vpack.c.bf16 %v638, %v637
      %v657 = vpack.c.bf16 %v640, %v639
      %v658 = vpack.c.bf16 %v642, %v641
      %v659 = vld [vmem:[%s1 + $0x8] sm:$0x3]
      %v660 = vld [vmem:[%s2 + $0x8] sm:$0x1]
      %v661 = vlaneseq
      %v662 = vshrl.u32 %v661, 7
      %v663 = vsub.s32 0, %v662
      %v664 = vrot.slane %v660, %v663
      %vm665 = vcmask 31744
      %v667 = vsel %vm665, %v643, 0
      %v670 = vsel %vm665, %v644, 0
      %v673 = vsel %vm665, %v645, 0
      %v676 = vsel %vm665, %v646, 0
      %v679 = vsel %vm665, %v647, 0
      %v682 = vsel %vm665, %v648, 0
      %v685 = vsel %vm665, %v649, 0
      %v688 = vsel %vm665, %v650, 0
      %v691 = vsel %vm665, %v651, 0
      %v694 = vsel %vm665, %v652, 0
      %v697 = vsel %vm665, %v653, 0
      %v700 = vsel %vm665, %v654, 0
      %v703 = vsel %vm665, %v655, 0
      %v706 = vsel %vm665, %v656, 0
      %v709 = vsel %vm665, %v657, 0
      %v712 = vsel %vm665, %v658, 0
      %vm714 = vcmask 1041408
      %v716 = vsel %vm714, %v659, 0
      %718 = vmatprep.subr.bf16.mxu0 0
      %719 = vmatpush1.bf16.msra.mxu0 %v716
      %720 = vmatprep.subr.bf16.mxu0 0
      %721 = vmatpush1.bf16.msra.mxu0 0
      %722 = vmatprep.subr.bf16.mxu0 0
      %723 = vmatpush1.bf16.msra.mxu0 0
      %724 = vmatprep.subr.bf16.mxu0 0
      %725 = vmatpush1.bf16.msra.mxu0 0
      %726 = vmatprep.subr.bf16.mxu0 0
      %727 = vmatpush1.bf16.msra.mxu0 0
      %728 = vmatprep.subr.bf16.mxu0 0
      %729 = vmatpush1.bf16.msra.mxu0 0
      %730 = vmatprep.subr.bf16.mxu0 0
      %731 = vmatpush1.bf16.msra.mxu0 0
      %732 = vmatprep.subr.bf16.mxu0 0
      %733 = vmatpush1.bf16.msra.mxu0 0
      %734 = vmatprep.subr.bf16.mxu0 0
      %735 = vmatpush1.bf16.msra.mxu0 0
      %736 = vmatprep.subr.bf16.mxu0 0
      %737 = vmatpush1.bf16.msra.mxu0 0
      %738 = vmatprep.subr.bf16.mxu0 0
      %739 = vmatpush1.bf16.msra.mxu0 0
      %740 = vmatprep.subr.bf16.mxu0 0
      %741 = vmatpush1.bf16.msra.mxu0 0
      %742 = vmatprep.subr.bf16.mxu0 0
      %743 = vmatpush1.bf16.msra.mxu0 0
      %744 = vmatprep.subr.bf16.mxu0 0
      %745 = vmatpush1.bf16.msra.mxu0 0
      %746 = vmatprep.subr.bf16.mxu0 0
      %747 = vmatpush1.bf16.msra.mxu0 0
      %748 = vmatprep.subr.bf16.mxu0 0
      %749 = vmatpush1.bf16.msra.mxu0 0
      %750 = vmatprep.mubr.bf16.mxu0 0
      %751 = vmatmul.mubr.bf16.gmra.mrb[0].mxu0 %v667
      %v752 = vpop.f32.mrb[0].mxu0
      %v753 = vadd.f32 %v664, %v752
      %v754 = vpop.f32.mrb[0].mxu0
      %v755 = vpop.f32.mrb[0].mxu0
      %v756 = vadd.f32 %v664, %v755
      %v757 = vpop.f32.mrb[0].mxu0
      %758 = vmatprep.mubr.bf16.mxu0 0
      %759 = vmatmul.mubr.bf16.gmra.mrb[0].mxu0 %v670
      %v760 = vpop.f32.mrb[0].mxu0
      %v761 = vadd.f32 %v664, %v760
      %v762 = vpop.f32.mrb[0].mxu0
      %v763 = vpop.f32.mrb[0].mxu0
      %v764 = vadd.f32 %v664, %v763
      %v765 = vpop.f32.mrb[0].mxu0
      %766 = vmatprep.mubr.bf16.mxu0 0
      %767 = vmatmul.mubr.bf16.gmra.mrb[0].mxu0 %v673
      %v768 = vpop.f32.mrb[0].mxu0
      %v769 = vadd.f32 %v664, %v768
      %v770 = vpop.f32.mrb[0].mxu0
      %v771 = vpop.f32.mrb[0].mxu0
      %v772 = vadd.f32 %v664, %v771
      %v773 = vpop.f32.mrb[0].mxu0
      %774 = vmatprep.mubr.bf16.mxu0 0
      %775 = vmatmul.mubr.bf16.gmra.mrb[0].mxu0 %v676
      %v776 = vpop.f32.mrb[0].mxu0
      %v777 = vadd.f32 %v664, %v776
      %v778 = vpop.f32.mrb[0].mxu0
      %v779 = vpop.f32.mrb[0].mxu0
      %v780 = vadd.f32 %v664, %v779
      %v781 = vpop.f32.mrb[0].mxu0
      %782 = vmatprep.mubr.bf16.mxu0 0
      %783 = vmatmul.mubr.bf16.gmra.mrb[0].mxu0 %v679
      %v784 = vpop.f32.mrb[0].mxu0
      %v785 = vadd.f32 %v664, %v784
      %v786 = vpop.f32.mrb[0].mxu0
      %v787 = vpop.f32.mrb[0].mxu0
      %v788 = vadd.f32 %v664, %v787
      %v789 = vpop.f32.mrb[0].mxu0
      %790 = vmatprep.mubr.bf16.mxu0 0
      %791 = vmatmul.mubr.bf16.gmra.mrb[0].mxu0 %v682
      %v792 = vpop.f32.mrb[0].mxu0
      %v793 = vadd.f32 %v664, %v792
      %v794 = vpop.f32.mrb[0].mxu0
      %v795 = vpop.f32.mrb[0].mxu0
      %v796 = vadd.f32 %v664, %v795
      %v797 = vpop.f32.mrb[0].mxu0
      %798 = vmatprep.mubr.bf16.mxu0 0
      %799 = vmatmul.mubr.bf16.gmra.mrb[0].mxu0 %v685
      %v800 = vpop.f32.mrb[0].mxu0
      %v801 = vadd.f32 %v664, %v800
      %v802 = vpop.f32.mrb[0].mxu0
      %v803 = vpop.f32.mrb[0].mxu0
      %v804 = vadd.f32 %v664, %v803
      %v805 = vpop.f32.mrb[0].mxu0
      %806 = vmatprep.mubr.bf16.mxu0 0
      %807 = vmatmul.mubr.bf16.gmra.mrb[0].mxu0 %v688
      %v808 = vpop.f32.mrb[0].mxu0
      %v809 = vadd.f32 %v664, %v808
      %v810 = vpop.f32.mrb[0].mxu0
      %v811 = vpop.f32.mrb[0].mxu0
      %v812 = vadd.f32 %v664, %v811
      %v813 = vpop.f32.mrb[0].mxu0
      %814 = vmatprep.mubr.bf16.mxu0 0
      %815 = vmatmul.mubr.bf16.gmra.mrb[0].mxu0 %v691
      %v816 = vpop.f32.mrb[0].mxu0
      %v817 = vadd.f32 %v664, %v816
      %v818 = vpop.f32.mrb[0].mxu0
      %v819 = vpop.f32.mrb[0].mxu0
      %v820 = vadd.f32 %v664, %v819
      %v821 = vpop.f32.mrb[0].mxu0
      %822 = vmatprep.mubr.bf16.mxu0 0
      %823 = vmatmul.mubr.bf16.gmra.mrb[0].mxu0 %v694
      %v824 = vpop.f32.mrb[0].mxu0
      %v825 = vadd.f32 %v664, %v824
      %v826 = vpop.f32.mrb[0].mxu0
      %v827 = vpop.f32.mrb[0].mxu0
      %v828 = vadd.f32 %v664, %v827
      %v829 = vpop.f32.mrb[0].mxu0
      %830 = vmatprep.mubr.bf16.mxu0 0
      %831 = vmatmul.mubr.bf16.gmra.mrb[0].mxu0 %v697
      %v832 = vpop.f32.mrb[0].mxu0
      %v833 = vadd.f32 %v664, %v832
      %v834 = vpop.f32.mrb[0].mxu0
      %v835 = vpop.f32.mrb[0].mxu0
      %v836 = vadd.f32 %v664, %v835
      %v837 = vpop.f32.mrb[0].mxu0
      %838 = vmatprep.mubr.bf16.mxu0 0
      %839 = vmatmul.mubr.bf16.gmra.mrb[0].mxu0 %v700
      %v840 = vpop.f32.mrb[0].mxu0
      %v841 = vadd.f32 %v664, %v840
      %v842 = vpop.f32.mrb[0].mxu0
      %v843 = vpop.f32.mrb[0].mxu0
      %v844 = vadd.f32 %v664, %v843
      %v845 = vpop.f32.mrb[0].mxu0
      %846 = vmatprep.mubr.bf16.mxu0 0
      %847 = vmatmul.mubr.bf16.gmra.mrb[0].mxu0 %v703
      %v848 = vpop.f32.mrb[0].mxu0
      %v849 = vadd.f32 %v664, %v848
      %v850 = vpop.f32.mrb[0].mxu0
      %v851 = vpop.f32.mrb[0].mxu0
      %v852 = vadd.f32 %v664, %v851
      %v853 = vpop.f32.mrb[0].mxu0
      %854 = vmatprep.mubr.bf16.mxu0 0
      %855 = vmatmul.mubr.bf16.gmra.mrb[0].mxu0 %v706
      %v856 = vpop.f32.mrb[0].mxu0
      %v857 = vadd.f32 %v664, %v856
      %v858 = vpop.f32.mrb[0].mxu0
      %v859 = vpop.f32.mrb[0].mxu0
      %v860 = vadd.f32 %v664, %v859
      %v861 = vpop.f32.mrb[0].mxu0
      %862 = vmatprep.mubr.bf16.mxu0 0
      %863 = vmatmul.mubr.bf16.gmra.mrb[0].mxu0 %v709
      %v864 = vpop.f32.mrb[0].mxu0
      %v865 = vadd.f32 %v664, %v864
      %v866 = vpop.f32.mrb[0].mxu0
      %v867 = vpop.f32.mrb[0].mxu0
      %v868 = vadd.f32 %v664, %v867
      %v869 = vpop.f32.mrb[0].mxu0
      %870 = vmatprep.mubr.bf16.mxu0 0
      %871 = vmatmul.mubr.bf16.gmra.mrb[0].mxu0 %v712
      %v872 = vpop.f32.mrb[0].mxu0
      %v873 = vadd.f32 %v664, %v872
      %v874 = vpop.f32.mrb[0].mxu0
      %v875 = vpop.f32.mrb[0].mxu0
      %v876 = vadd.f32 %v664, %v875
      %v877 = vpop.f32.mrb[0].mxu0
      %878 = vdwg.mxu0
      %v879 = vsub.f32 0.0, %v753
      %v880 = vsub.f32 0.0, %v756
      %v881 = vsub.f32 0.0, %v761
      %v882 = vsub.f32 0.0, %v764
      %v883 = vsub.f32 0.0, %v769
      %v884 = vsub.f32 0.0, %v772
      %v885 = vsub.f32 0.0, %v777
      %v886 = vsub.f32 0.0, %v780
      %v887 = vsub.f32 0.0, %v785
      %v888 = vsub.f32 0.0, %v788
      %v889 = vsub.f32 0.0, %v793
      %v890 = vsub.f32 0.0, %v796
      %v891 = vsub.f32 0.0, %v801
      %v892 = vsub.f32 0.0, %v804
      %v893 = vsub.f32 0.0, %v809
      %v894 = vsub.f32 0.0, %v812
      %v895 = vsub.f32 0.0, %v817
      %v896 = vsub.f32 0.0, %v820
      %v897 = vsub.f32 0.0, %v825
      %v898 = vsub.f32 0.0, %v828
      %v899 = vsub.f32 0.0, %v833
      %v900 = vsub.f32 0.0, %v836
      %v901 = vsub.f32 0.0, %v841
      %v902 = vsub.f32 0.0, %v844
      %v903 = vsub.f32 0.0, %v849
      %v904 = vsub.f32 0.0, %v852
      %v905 = vsub.f32 0.0, %v857
      %v906 = vsub.f32 0.0, %v860
      %v907 = vsub.f32 0.0, %v865
      %v908 = vsub.f32 0.0, %v868
      %v909 = vsub.f32 0.0, %v873
      %v910 = vsub.f32 0.0, %v876
      %v911 = vmul.f32 %v879, 1.442695
      %v912 = vpow.pop %v911
      %v913 = vmul.f32 %v880, 1.442695
      %v914 = vpow.pop %v913
      %v915 = vmul.f32 %v881, 1.442695
      %v916 = vpow.pop %v915
      %v917 = vmul.f32 %v882, 1.442695
      %v918 = vpow.pop %v917
      %v919 = vmul.f32 %v883, 1.442695
      %v920 = vpow.pop %v919
      %v921 = vmul.f32 %v884, 1.442695
      %v922 = vpow.pop %v921
      %v923 = vmul.f32 %v885, 1.442695
      %v924 = vpow.pop %v923
      %v925 = vmul.f32 %v886, 1.442695
      %v926 = vpow.pop %v925
      %v927 = vmul.f32 %v887, 1.442695
      %v928 = vpow.pop %v927
      %v929 = vmul.f32 %v888, 1.442695
      %v930 = vpow.pop %v929
      %v931 = vmul.f32 %v889, 1.442695
      %v932 = vpow.pop %v931
      %v933 = vmul.f32 %v890, 1.442695
      %v934 = vpow.pop %v933
      %v935 = vmul.f32 %v891, 1.442695
      %v936 = vpow.pop %v935
      %v937 = vmul.f32 %v892, 1.442695
      %v938 = vpow.pop %v937
      %v939 = vmul.f32 %v893, 1.442695
      %v940 = vpow.pop %v939
      %v941 = vmul.f32 %v894, 1.442695
      %v942 = vpow.pop %v941
      %v943 = vmul.f32 %v895, 1.442695
      %v944 = vpow.pop %v943
      %v945 = vmul.f32 %v896, 1.442695
      %v946 = vpow.pop %v945
      %v947 = vmul.f32 %v897, 1.442695
      %v948 = vpow.pop %v947
      %v949 = vmul.f32 %v898, 1.442695
      %v950 = vpow.pop %v949
      %v951 = vmul.f32 %v899, 1.442695
      %v952 = vpow.pop %v951
      %v953 = vmul.f32 %v900, 1.442695
      %v954 = vpow.pop %v953
      %v955 = vmul.f32 %v901, 1.442695
      %v956 = vpow.pop %v955
      %v957 = vmul.f32 %v902, 1.442695
      %v958 = vpow.pop %v957
      %v959 = vmul.f32 %v903, 1.442695
      %v960 = vpow.pop %v959
      %v961 = vmul.f32 %v904, 1.442695
      %v962 = vpow.pop %v961
      %v963 = vmul.f32 %v905, 1.442695
      %v964 = vpow.pop %v963
      %v965 = vmul.f32 %v906, 1.442695
      %v966 = vpow.pop %v965
      %v967 = vmul.f32 %v907, 1.442695
      %v968 = vpow.pop %v967
      %v969 = vmul.f32 %v908, 1.442695
      %v970 = vpow.pop %v969
      %v971 = vmul.f32 %v909, 1.442695
      %v972 = vpow.pop %v971
      %v973 = vmul.f32 %v910, 1.442695
      %v974 = vpow.pop %v973
      %v975 = vadd.f32 %v912, 1.0
      %v976 = vadd.f32 %v914, 1.0
      %v977 = vadd.f32 %v916, 1.0
      %v978 = vadd.f32 %v918, 1.0
      %v979 = vadd.f32 %v920, 1.0
      %v980 = vadd.f32 %v922, 1.0
      %v981 = vadd.f32 %v924, 1.0
      %v982 = vadd.f32 %v926, 1.0
      %v983 = vadd.f32 %v928, 1.0
      %v984 = vadd.f32 %v930, 1.0
      %v985 = vadd.f32 %v932, 1.0
      %v986 = vadd.f32 %v934, 1.0
      %v987 = vadd.f32 %v936, 1.0
      %v988 = vadd.f32 %v938, 1.0
      %v989 = vadd.f32 %v940, 1.0
      %v990 = vadd.f32 %v942, 1.0
      %v991 = vadd.f32 %v944, 1.0
      %v992 = vadd.f32 %v946, 1.0
      %v993 = vadd.f32 %v948, 1.0
      %v994 = vadd.f32 %v950, 1.0
      %v995 = vadd.f32 %v952, 1.0
      %v996 = vadd.f32 %v954, 1.0
      %v997 = vadd.f32 %v956, 1.0
      %v998 = vadd.f32 %v958, 1.0
      %v999 = vadd.f32 %v960, 1.0
      %v1000 = vadd.f32 %v962, 1.0
      %v1001 = vadd.f32 %v964, 1.0
      %v1002 = vadd.f32 %v966, 1.0
      %v1003 = vadd.f32 %v968, 1.0
      %v1004 = vadd.f32 %v970, 1.0
      %v1005 = vadd.f32 %v972, 1.0
      %v1006 = vadd.f32 %v974, 1.0
      %v1007 = vrcp.pop %v975
      %v1008 = vrcp.pop %v976
      %v1009 = vrcp.pop %v977
      %v1010 = vrcp.pop %v978
      %v1011 = vrcp.pop %v979
      %v1012 = vrcp.pop %v980
      %v1013 = vrcp.pop %v981
      %v1014 = vrcp.pop %v982
      %v1015 = vrcp.pop %v983
      %v1016 = vrcp.pop %v984
      %v1017 = vrcp.pop %v985
      %v1018 = vrcp.pop %v986
      %v1019 = vrcp.pop %v987
      %v1020 = vrcp.pop %v988
      %v1021 = vrcp.pop %v989
      %v1022 = vrcp.pop %v990
      %v1023 = vrcp.pop %v991
      %v1024 = vrcp.pop %v992
      %v1025 = vrcp.pop %v993
      %v1026 = vrcp.pop %v994
      %v1027 = vrcp.pop %v995
      %v1028 = vrcp.pop %v996
      %v1029 = vrcp.pop %v997
      %v1030 = vrcp.pop %v998
      %v1031 = vrcp.pop %v999
      %v1032 = vrcp.pop %v1000
      %v1033 = vrcp.pop %v1001
      %v1034 = vrcp.pop %v1002
      %v1035 = vrcp.pop %v1003
      %v1036 = vrcp.pop %v1004
      %v1037 = vrcp.pop %v1005
      %v1038 = vrcp.pop %v1006
      %v1039 = vmul.f32 %v344, %v1007
      %v1040 = vmul.f32 %v345, %v1008
      %v1041 = vmul.f32 %v346, %v1009
      %v1042 = vmul.f32 %v347, %v1010
      %v1043 = vmul.f32 %v348, %v1011
      %v1044 = vmul.f32 %v349, %v1012
      %v1045 = vmul.f32 %v350, %v1013
      %v1046 = vmul.f32 %v351, %v1014
      %v1047 = vmul.f32 %v352, %v1015
      %v1048 = vmul.f32 %v353, %v1016
      %v1049 = vmul.f32 %v354, %v1017
      %v1050 = vmul.f32 %v355, %v1018
      %v1051 = vmul.f32 %v356, %v1019
      %v1052 = vmul.f32 %v357, %v1020
      %v1053 = vmul.f32 %v358, %v1021
      %v1054 = vmul.f32 %v359, %v1022
      %v1055 = vmul.f32 %v360, %v1023
      %v1056 = vmul.f32 %v361, %v1024
      %v1057 = vmul.f32 %v362, %v1025
      %v1058 = vmul.f32 %v363, %v1026
      %v1059 = vmul.f32 %v364, %v1027
      %v1060 = vmul.f32 %v365, %v1028
      %v1061 = vmul.f32 %v366, %v1029
      %v1062 = vmul.f32 %v367, %v1030
      %v1063 = vmul.f32 %v368, %v1031
      %v1064 = vmul.f32 %v369, %v1032
      %v1065 = vmul.f32 %v370, %v1033
      %v1066 = vmul.f32 %v371, %v1034
      %v1067 = vmul.f32 %v372, %v1035
      %v1068 = vmul.f32 %v373, %v1036
      %v1069 = vmul.f32 %v374, %v1037
      %v1070 = vmul.f32 %v375, %v1038
      %1103 = vrot.lane.b32.xlu0 %v753, 120
      %v1104 = vpop.permute.xlu0 %1103
      %1105 = vrot.lane.b32.xlu0 %v756, 120
      %v1106 = vpop.permute.xlu0 %1105
      %1107 = vrot.lane.b32.xlu0 %v761, 120
      %v1108 = vpop.permute.xlu0 %1107
      %1109 = vrot.lane.b32.xlu0 %v764, 120
      %v1110 = vpop.permute.xlu0 %1109
      %1111 = vrot.lane.b32.xlu0 %v769, 120
      %v1112 = vpop.permute.xlu0 %1111
      %1113 = vrot.lane.b32.xlu0 %v772, 120
      %v1114 = vpop.permute.xlu0 %1113
      %1115 = vrot.lane.b32.xlu0 %v777, 120
      %v1116 = vpop.permute.xlu0 %1115
      %1117 = vrot.lane.b32.xlu0 %v780, 120
      %v1118 = vpop.permute.xlu0 %1117
      %1119 = vrot.lane.b32.xlu0 %v785, 120
      %v1120 = vpop.permute.xlu0 %1119
      %1121 = vrot.lane.b32.xlu0 %v788, 120
      %v1122 = vpop.permute.xlu0 %1121
      %1123 = vrot.lane.b32.xlu0 %v793, 120
      %v1124 = vpop.permute.xlu0 %1123
      %1125 = vrot.lane.b32.xlu0 %v796, 120
      %v1126 = vpop.permute.xlu0 %1125
      %1127 = vrot.lane.b32.xlu0 %v801, 120
      %v1128 = vpop.permute.xlu0 %1127
      %1129 = vrot.lane.b32.xlu0 %v804, 120
      %v1130 = vpop.permute.xlu0 %1129
      %1131 = vrot.lane.b32.xlu0 %v809, 120
      %v1132 = vpop.permute.xlu0 %1131
      %1133 = vrot.lane.b32.xlu0 %v812, 120
      %v1134 = vpop.permute.xlu0 %1133
      %1135 = vrot.lane.b32.xlu0 %v817, 120
      %v1136 = vpop.permute.xlu0 %1135
      %1137 = vrot.lane.b32.xlu0 %v820, 120
      %v1138 = vpop.permute.xlu0 %1137
      %1139 = vrot.lane.b32.xlu0 %v825, 120
      %v1140 = vpop.permute.xlu0 %1139
      %1141 = vrot.lane.b32.xlu0 %v828, 120
      %v1142 = vpop.permute.xlu0 %1141
      %1143 = vrot.lane.b32.xlu0 %v833, 120
      %v1144 = vpop.permute.xlu0 %1143
      %1145 = vrot.lane.b32.xlu0 %v836, 120
      %v1146 = vpop.permute.xlu0 %1145
      %1147 = vrot.lane.b32.xlu0 %v841, 120
      %v1148 = vpop.permute.xlu0 %1147
      %1149 = vrot.lane.b32.xlu0 %v844, 120
      %v1150 = vpop.permute.xlu0 %1149
      %1151 = vrot.lane.b32.xlu0 %v849, 120
      %v1152 = vpop.permute.xlu0 %1151
      %1153 = vrot.lane.b32.xlu0 %v852, 120
      %v1154 = vpop.permute.xlu0 %1153
      %1155 = vrot.lane.b32.xlu0 %v857, 120
      %v1156 = vpop.permute.xlu0 %1155
      %1157 = vrot.lane.b32.xlu0 %v860, 120
      %v1158 = vpop.permute.xlu0 %1157
      %1159 = vrot.lane.b32.xlu0 %v865, 120
      %v1160 = vpop.permute.xlu0 %1159
      %1161 = vrot.lane.b32.xlu0 %v868, 120
      %v1162 = vpop.permute.xlu0 %1161
      %1163 = vrot.lane.b32.xlu0 %v873, 120
      %v1164 = vpop.permute.xlu0 %1163
      %1165 = vrot.lane.b32.xlu0 %v876, 120
      %v1166 = vpop.permute.xlu0 %1165
      %v1199 = vadd.f32 %v1039, %v1104
      %v1200 = vadd.f32 %v1040, %v1106
      %v1201 = vadd.f32 %v1041, %v1108
      %v1202 = vadd.f32 %v1042, %v1110
      %v1203 = vadd.f32 %v1043, %v1112
      %v1204 = vadd.f32 %v1044, %v1114
      %v1205 = vadd.f32 %v1045, %v1116
      %v1206 = vadd.f32 %v1046, %v1118
      %v1207 = vadd.f32 %v1047, %v1120
      %v1208 = vadd.f32 %v1048, %v1122
      %v1209 = vadd.f32 %v1049, %v1124
      %v1210 = vadd.f32 %v1050, %v1126
      %v1211 = vadd.f32 %v1051, %v1128
      %v1212 = vadd.f32 %v1052, %v1130
      %v1213 = vadd.f32 %v1053, %v1132
      %v1214 = vadd.f32 %v1054, %v1134
      %v1215 = vadd.f32 %v1055, %v1136
      %v1216 = vadd.f32 %v1056, %v1138
      %v1217 = vadd.f32 %v1057, %v1140
      %v1218 = vadd.f32 %v1058, %v1142
      %v1219 = vadd.f32 %v1059, %v1144
      %v1220 = vadd.f32 %v1060, %v1146
      %v1221 = vadd.f32 %v1061, %v1148
      %v1222 = vadd.f32 %v1062, %v1150
      %v1223 = vadd.f32 %v1063, %v1152
      %v1224 = vadd.f32 %v1064, %v1154
      %v1225 = vadd.f32 %v1065, %v1156
      %v1226 = vadd.f32 %v1066, %v1158
      %v1227 = vadd.f32 %v1067, %v1160
      %v1228 = vadd.f32 %v1068, %v1162
      %v1229 = vadd.f32 %v1069, %v1164
      %v1230 = vadd.f32 %v1070, %v1166
      %v1231 = vpack.c.bf16 %v1200, %v1199
      %v1232 = vpack.c.bf16 %v1202, %v1201
      %v1233 = vpack.c.bf16 %v1204, %v1203
      %v1234 = vpack.c.bf16 %v1206, %v1205
      %v1235 = vpack.c.bf16 %v1208, %v1207
      %v1236 = vpack.c.bf16 %v1210, %v1209
      %v1237 = vpack.c.bf16 %v1212, %v1211
      %v1238 = vpack.c.bf16 %v1214, %v1213
      %v1239 = vpack.c.bf16 %v1216, %v1215
      %v1240 = vpack.c.bf16 %v1218, %v1217
      %v1241 = vpack.c.bf16 %v1220, %v1219
      %v1242 = vpack.c.bf16 %v1222, %v1221
      %v1243 = vpack.c.bf16 %v1224, %v1223
      %v1244 = vpack.c.bf16 %v1226, %v1225
      %v1245 = vpack.c.bf16 %v1228, %v1227
      %v1246 = vpack.c.bf16 %v1230, %v1229
      %1247 = vst.msk [vmem:[#allocation3 + $0x10] sm:$0xff] %vm279, %v1231
      %1248 = vst.msk [vmem:[#allocation3 + $0x18] sm:$0xff] %vm279, %v1232
      %1249 = vst.msk [vmem:[#allocation3 + $0x20] sm:$0xff] %vm279, %v1233
      %1250 = vst.msk [vmem:[#allocation3 + $0x28] sm:$0xff] %vm279, %v1234
      %1251 = vst.msk [vmem:[#allocation3 + $0x30] sm:$0xff] %vm279, %v1235
      %1252 = vst.msk [vmem:[#allocation3 + $0x38] sm:$0xff] %vm279, %v1236
      %1253 = vst.msk [vmem:[#allocation3 + $0x40] sm:$0xff] %vm279, %v1237
      %1254 = vst.msk [vmem:[#allocation3 + $0x48] sm:$0xff] %vm279, %v1238
      %1255 = vst.msk [vmem:[#allocation3 + $0x50] sm:$0xff] %vm279, %v1239
      %1256 = vst.msk [vmem:[#allocation3 + $0x58] sm:$0xff] %vm279, %v1240
      %1257 = vst.msk [vmem:[#allocation3 + $0x60] sm:$0xff] %vm279, %v1241
      %1258 = vst.msk [vmem:[#allocation3 + $0x68] sm:$0xff] %vm279, %v1242
      %1259 = vst.msk [vmem:[#allocation3 + $0x70] sm:$0xff] %vm279, %v1243
      %1260 = vst.msk [vmem:[#allocation3 + $0x78] sm:$0xff] %vm279, %v1244
      %1261 = vst.msk [vmem:[#allocation3 + $0x80] sm:$0xff] %vm279, %v1245
      %1262 = vst.msk [vmem:[#allocation3 + $0x88] sm:$0xff] %vm279, %v1246
      %1264 = vset.pattern.permute.xlu0 1
      %1265 = vperm.xlu0 %1264, %v312
      %v1266 = vpop.permute.xlu0 %1265
      %1269 = vset.pattern.permute.xlu0 1
      %1270 = vperm.xlu0 %1269, %v313
      %v1271 = vpop.permute.xlu0 %1270
      %1274 = vset.pattern.permute.xlu0 1
      %1275 = vperm.xlu0 %1274, %v314
      %v1276 = vpop.permute.xlu0 %1275
      %1279 = vset.pattern.permute.xlu0 1
      %1280 = vperm.xlu0 %1279, %v315
      %v1281 = vpop.permute.xlu0 %1280
      %1284 = vset.pattern.permute.xlu0 1
      %1285 = vperm.xlu0 %1284, %v316
      %v1286 = vpop.permute.xlu0 %1285
      %1289 = vset.pattern.permute.xlu0 1
      %1290 = vperm.xlu0 %1289, %v317
      %v1291 = vpop.permute.xlu0 %1290
      %1294 = vset.pattern.permute.xlu0 1
      %1295 = vperm.xlu0 %1294, %v318
      %v1296 = vpop.permute.xlu0 %1295
      %1299 = vset.pattern.permute.xlu0 1
      %1300 = vperm.xlu0 %1299, %v319
      %v1301 = vpop.permute.xlu0 %1300
      %1304 = vset.pattern.permute.xlu0 1
      %1305 = vperm.xlu0 %1304, %v320
      %v1306 = vpop.permute.xlu0 %1305
      %1309 = vset.pattern.permute.xlu0 1
      %1310 = vperm.xlu0 %1309, %v321
      %v1311 = vpop.permute.xlu0 %1310
      %1314 = vset.pattern.permute.xlu0 1
      %1315 = vperm.xlu0 %1314, %v322
      %v1316 = vpop.permute.xlu0 %1315
      %1319 = vset.pattern.permute.xlu0 1
      %1320 = vperm.xlu0 %1319, %v323
      %v1321 = vpop.permute.xlu0 %1320
      %1324 = vset.pattern.permute.xlu0 1
      %1325 = vperm.xlu0 %1324, %v324
      %v1326 = vpop.permute.xlu0 %1325
      %1329 = vset.pattern.permute.xlu0 1
      %1330 = vperm.xlu0 %1329, %v325
      %v1331 = vpop.permute.xlu0 %1330
      %1334 = vset.pattern.permute.xlu0 1
      %1335 = vperm.xlu0 %1334, %v326
      %v1336 = vpop.permute.xlu0 %1335
      %1339 = vset.pattern.permute.xlu0 1
      %1340 = vperm.xlu0 %1339, %v327
      %v1341 = vpop.permute.xlu0 %1340
      %1344 = vset.pattern.permute.xlu0 1
      %1345 = vperm.xlu0 %1344, %v328
      %v1346 = vpop.permute.xlu0 %1345
      %1349 = vset.pattern.permute.xlu0 1
      %1350 = vperm.xlu0 %1349, %v329
      %v1351 = vpop.permute.xlu0 %1350
      %1354 = vset.pattern.permute.xlu0 1
      %1355 = vperm.xlu0 %1354, %v330
      %v1356 = vpop.permute.xlu0 %1355
      %1359 = vset.pattern.permute.xlu0 1
      %1360 = vperm.xlu0 %1359, %v331
      %v1361 = vpop.permute.xlu0 %1360
      %1364 = vset.pattern.permute.xlu0 1
      %1365 = vperm.xlu0 %1364, %v332
      %v1366 = vpop.permute.xlu0 %1365
      %1369 = vset.pattern.permute.xlu0 1
      %1370 = vperm.xlu0 %1369, %v333
      %v1371 = vpop.permute.xlu0 %1370
      %1374 = vset.pattern.permute.xlu0 1
      %1375 = vperm.xlu0 %1374, %v334
      %v1376 = vpop.permute.xlu0 %1375
      %1379 = vset.pattern.permute.xlu0 1
      %1380 = vperm.xlu0 %1379, %v335
      %v1381 = vpop.permute.xlu0 %1380
      %1384 = vset.pattern.permute.xlu0 1
      %1385 = vperm.xlu0 %1384, %v336
      %v1386 = vpop.permute.xlu0 %1385
      %1389 = vset.pattern.permute.xlu0 1
      %1390 = vperm.xlu0 %1389, %v337
      %v1391 = vpop.permute.xlu0 %1390
      %1394 = vset.pattern.permute.xlu0 1
      %1395 = vperm.xlu0 %1394, %v338
      %v1396 = vpop.permute.xlu0 %1395
      %1399 = vset.pattern.permute.xlu0 1
      %1400 = vperm.xlu0 %1399, %v339
      %v1401 = vpop.permute.xlu0 %1400
      %1404 = vset.pattern.permute.xlu0 1
      %1405 = vperm.xlu0 %1404, %v340
      %v1406 = vpop.permute.xlu0 %1405
      %1409 = vset.pattern.permute.xlu0 1
      %1410 = vperm.xlu0 %1409, %v341
      %v1411 = vpop.permute.xlu0 %1410
      %1414 = vset.pattern.permute.xlu0 1
      %1415 = vperm.xlu0 %1414, %v342
      %v1416 = vpop.permute.xlu0 %1415
      %1419 = vset.pattern.permute.xlu0 1
      %1420 = vperm.xlu0 %1419, %v343
      %v1421 = vpop.permute.xlu0 %1420
      %v1423 = vmul.f32 %v1199, %v1266
      %v1424 = vmul.f32 %v1200, %v1271
      %v1425 = vmul.f32 %v1201, %v1276
      %v1426 = vmul.f32 %v1202, %v1281
      %v1427 = vmul.f32 %v1203, %v1286
      %v1428 = vmul.f32 %v1204, %v1291
      %v1429 = vmul.f32 %v1205, %v1296
      %v1430 = vmul.f32 %v1206, %v1301
      %v1431 = vmul.f32 %v1207, %v1306
      %v1432 = vmul.f32 %v1208, %v1311
      %v1433 = vmul.f32 %v1209, %v1316
      %v1434 = vmul.f32 %v1210, %v1321
      %v1435 = vmul.f32 %v1211, %v1326
      %v1436 = vmul.f32 %v1212, %v1331
      %v1437 = vmul.f32 %v1213, %v1336
      %v1438 = vmul.f32 %v1214, %v1341
      %v1439 = vmul.f32 %v1215, %v1346
      %v1440 = vmul.f32 %v1216, %v1351
      %v1441 = vmul.f32 %v1217, %v1356
      %v1442 = vmul.f32 %v1218, %v1361
      %v1443 = vmul.f32 %v1219, %v1366
      %v1444 = vmul.f32 %v1220, %v1371
      %v1445 = vmul.f32 %v1221, %v1376
      %v1446 = vmul.f32 %v1222, %v1381
      %v1447 = vmul.f32 %v1223, %v1386
      %v1448 = vmul.f32 %v1224, %v1391
      %v1449 = vmul.f32 %v1225, %v1396
      %v1450 = vmul.f32 %v1226, %v1401
      %v1451 = vmul.f32 %v1227, %v1406
      %v1452 = vmul.f32 %v1228, %v1411
      %v1453 = vmul.f32 %v1229, %v1416
      %v1454 = vmul.f32 %v1230, %v1421
      %v1455 = vpack.c.bf16 %v1424, %v1423
      %v1456 = vpack.c.bf16 %v1426, %v1425
      %v1457 = vpack.c.bf16 %v1428, %v1427
      %v1458 = vpack.c.bf16 %v1430, %v1429
      %v1459 = vpack.c.bf16 %v1432, %v1431
      %v1460 = vpack.c.bf16 %v1434, %v1433
      %v1461 = vpack.c.bf16 %v1436, %v1435
      %v1462 = vpack.c.bf16 %v1438, %v1437
      %v1463 = vpack.c.bf16 %v1440, %v1439
      %v1464 = vpack.c.bf16 %v1442, %v1441
      %v1465 = vpack.c.bf16 %v1444, %v1443
      %v1466 = vpack.c.bf16 %v1446, %v1445
      %v1467 = vpack.c.bf16 %v1448, %v1447
      %v1468 = vpack.c.bf16 %v1450, %v1449
      %v1469 = vpack.c.bf16 %v1452, %v1451
      %v1470 = vpack.c.bf16 %v1454, %v1453
      %1471 = vst.msk [vmem:[#allocation4 + $0x10] sm:$0xff] %vm279, %v1455
      %1472 = vst.msk [vmem:[#allocation4 + $0x18] sm:$0xff] %vm279, %v1456
      %1473 = vst.msk [vmem:[#allocation4 + $0x20] sm:$0xff] %vm279, %v1457
      %1474 = vst.msk [vmem:[#allocation4 + $0x28] sm:$0xff] %vm279, %v1458
      %1475 = vst.msk [vmem:[#allocation4 + $0x30] sm:$0xff] %vm279, %v1459
      %1476 = vst.msk [vmem:[#allocation4 + $0x38] sm:$0xff] %vm279, %v1460
      %1477 = vst.msk [vmem:[#allocation4 + $0x40] sm:$0xff] %vm279, %v1461
      %1478 = vst.msk [vmem:[#allocation4 + $0x48] sm:$0xff] %vm279, %v1462
      %1479 = vst.msk [vmem:[#allocation4 + $0x50] sm:$0xff] %vm279, %v1463
      %1480 = vst.msk [vmem:[#allocation4 + $0x58] sm:$0xff] %vm279, %v1464
      %1481 = vst.msk [vmem:[#allocation4 + $0x60] sm:$0xff] %vm279, %v1465
      %1482 = vst.msk [vmem:[#allocation4 + $0x68] sm:$0xff] %vm279, %v1466
      %1483 = vst.msk [vmem:[#allocation4 + $0x70] sm:$0xff] %vm279, %v1467
      %1484 = vst.msk [vmem:[#allocation4 + $0x78] sm:$0xff] %vm279, %v1468
      %1485 = vst.msk [vmem:[#allocation4 + $0x80] sm:$0xff] %vm279, %v1469
      %1486 = vst.msk [vmem:[#allocation4 + $0x88] sm:$0xff] %vm279, %v1470
      %1487 = vset.pattern.permute.xlu0 0
      %1488 = vperm.xlu0 %1487, %v312
      %v1489 = vpop.permute.xlu0 %1488
      %1491 = vset.pattern.permute.xlu0 0
      %1492 = vperm.xlu0 %1491, %v313
      %v1493 = vpop.permute.xlu0 %1492
      %1495 = vset.pattern.permute.xlu0 0
      %1496 = vperm.xlu0 %1495, %v314
      %v1497 = vpop.permute.xlu0 %1496
      %1499 = vset.pattern.permute.xlu0 0
      %1500 = vperm.xlu0 %1499, %v315
      %v1501 = vpop.permute.xlu0 %1500
      %1503 = vset.pattern.permute.xlu0 0
      %1504 = vperm.xlu0 %1503, %v316
      %v1505 = vpop.permute.xlu0 %1504
      %1507 = vset.pattern.permute.xlu0 0
      %1508 = vperm.xlu0 %1507, %v317
      %v1509 = vpop.permute.xlu0 %1508
      %1511 = vset.pattern.permute.xlu0 0
      %1512 = vperm.xlu0 %1511, %v318
      %v1513 = vpop.permute.xlu0 %1512
      %1515 = vset.pattern.permute.xlu0 0
      %1516 = vperm.xlu0 %1515, %v319
      %v1517 = vpop.permute.xlu0 %1516
      %1519 = vset.pattern.permute.xlu0 0
      %1520 = vperm.xlu0 %1519, %v320
      %v1521 = vpop.permute.xlu0 %1520
      %1523 = vset.pattern.permute.xlu0 0
      %1524 = vperm.xlu0 %1523, %v321
      %v1525 = vpop.permute.xlu0 %1524
      %1527 = vset.pattern.permute.xlu0 0
      %1528 = vperm.xlu0 %1527, %v322
      %v1529 = vpop.permute.xlu0 %1528
      %1531 = vset.pattern.permute.xlu0 0
      %1532 = vperm.xlu0 %1531, %v323
      %v1533 = vpop.permute.xlu0 %1532
      %1535 = vset.pattern.permute.xlu0 0
      %1536 = vperm.xlu0 %1535, %v324
      %v1537 = vpop.permute.xlu0 %1536
      %1539 = vset.pattern.permute.xlu0 0
      %1540 = vperm.xlu0 %1539, %v325
      %v1541 = vpop.permute.xlu0 %1540
      %1543 = vset.pattern.permute.xlu0 0
      %1544 = vperm.xlu0 %1543, %v326
      %v1545 = vpop.permute.xlu0 %1544
      %1547 = vset.pattern.permute.xlu0 0
      %1548 = vperm.xlu0 %1547, %v327
      %v1549 = vpop.permute.xlu0 %1548
      %1551 = vset.pattern.permute.xlu0 0
      %1552 = vperm.xlu0 %1551, %v328
      %v1553 = vpop.permute.xlu0 %1552
      %1555 = vset.pattern.permute.xlu0 0
      %1556 = vperm.xlu0 %1555, %v329
      %v1557 = vpop.permute.xlu0 %1556
      %1559 = vset.pattern.permute.xlu0 0
      %1560 = vperm.xlu0 %1559, %v330
      %v1561 = vpop.permute.xlu0 %1560
      %1563 = vset.pattern.permute.xlu0 0
      %1564 = vperm.xlu0 %1563, %v331
      %v1565 = vpop.permute.xlu0 %1564
      %1567 = vset.pattern.permute.xlu0 0
      %1568 = vperm.xlu0 %1567, %v332
      %v1569 = vpop.permute.xlu0 %1568
      %1571 = vset.pattern.permute.xlu0 0
      %1572 = vperm.xlu0 %1571, %v333
      %v1573 = vpop.permute.xlu0 %1572
      %1575 = vset.pattern.permute.xlu0 0
      %1576 = vperm.xlu0 %1575, %v334
      %v1577 = vpop.permute.xlu0 %1576
      %1579 = vset.pattern.permute.xlu0 0
      %1580 = vperm.xlu0 %1579, %v335
      %v1581 = vpop.permute.xlu0 %1580
      %1583 = vset.pattern.permute.xlu0 0
      %1584 = vperm.xlu0 %1583, %v336
      %v1585 = vpop.permute.xlu0 %1584
      %1587 = vset.pattern.permute.xlu0 0
      %1588 = vperm.xlu0 %1587, %v337
      %v1589 = vpop.permute.xlu0 %1588
      %1591 = vset.pattern.permute.xlu0 0
      %1592 = vperm.xlu0 %1591, %v338
      %v1593 = vpop.permute.xlu0 %1592
      %1595 = vset.pattern.permute.xlu0 0
      %1596 = vperm.xlu0 %1595, %v339
      %v1597 = vpop.permute.xlu0 %1596
      %1599 = vset.pattern.permute.xlu0 0
      %1600 = vperm.xlu0 %1599, %v340
      %v1601 = vpop.permute.xlu0 %1600
      %1603 = vset.pattern.permute.xlu0 0
      %1604 = vperm.xlu0 %1603, %v341
      %v1605 = vpop.permute.xlu0 %1604
      %1607 = vset.pattern.permute.xlu0 0
      %1608 = vperm.xlu0 %1607, %v342
      %v1609 = vpop.permute.xlu0 %1608
      %1611 = vset.pattern.permute.xlu0 0
      %1612 = vperm.xlu0 %1611, %v343
      %v1613 = vpop.permute.xlu0 %1612
      %v1615 = vmul.f32 %v1199, %v1489
      %v1616 = vmul.f32 %v1200, %v1493
      %v1617 = vmul.f32 %v1201, %v1497
      %v1618 = vmul.f32 %v1202, %v1501
      %v1619 = vmul.f32 %v1203, %v1505
      %v1620 = vmul.f32 %v1204, %v1509
      %v1621 = vmul.f32 %v1205, %v1513
      %v1622 = vmul.f32 %v1206, %v1517
      %v1623 = vmul.f32 %v1207, %v1521
      %v1624 = vmul.f32 %v1208, %v1525
      %v1625 = vmul.f32 %v1209, %v1529
      %v1626 = vmul.f32 %v1210, %v1533
      %v1627 = vmul.f32 %v1211, %v1537
      %v1628 = vmul.f32 %v1212, %v1541
      %v1629 = vmul.f32 %v1213, %v1545
      %v1630 = vmul.f32 %v1214, %v1549
      %v1631 = vmul.f32 %v1215, %v1553
      %v1632 = vmul.f32 %v1216, %v1557
      %v1633 = vmul.f32 %v1217, %v1561
      %v1634 = vmul.f32 %v1218, %v1565
      %v1635 = vmul.f32 %v1219, %v1569
      %v1636 = vmul.f32 %v1220, %v1573
      %v1637 = vmul.f32 %v1221, %v1577
      %v1638 = vmul.f32 %v1222, %v1581
      %v1639 = vmul.f32 %v1223, %v1585
      %v1640 = vmul.f32 %v1224, %v1589
      %v1641 = vmul.f32 %v1225, %v1593
      %v1642 = vmul.f32 %v1226, %v1597
      %v1643 = vmul.f32 %v1227, %v1601
      %v1644 = vmul.f32 %v1228, %v1605
      %v1645 = vmul.f32 %v1229, %v1609
      %v1646 = vmul.f32 %v1230, %v1613
      %v1647 = vpack.c.bf16 %v1616, %v1615
      %v1648 = vpack.c.bf16 %v1618, %v1617
      %v1649 = vpack.c.bf16 %v1620, %v1619
      %v1650 = vpack.c.bf16 %v1622, %v1621
      %v1651 = vpack.c.bf16 %v1624, %v1623
      %v1652 = vpack.c.bf16 %v1626, %v1625
      %v1653 = vpack.c.bf16 %v1628, %v1627
      %v1654 = vpack.c.bf16 %v1630, %v1629
      %v1655 = vpack.c.bf16 %v1632, %v1631
      %v1656 = vpack.c.bf16 %v1634, %v1633
      %v1657 = vpack.c.bf16 %v1636, %v1635
      %v1658 = vpack.c.bf16 %v1638, %v1637
      %v1659 = vpack.c.bf16 %v1640, %v1639
      %v1660 = vpack.c.bf16 %v1642, %v1641
      %v1661 = vpack.c.bf16 %v1644, %v1643
      %v1662 = vpack.c.bf16 %v1646, %v1645
      %1663 = vst.msk [vmem:[#allocation5 + $0x10] sm:$0xff] %vm279, %v1647
      %1664 = vst.msk [vmem:[#allocation5 + $0x18] sm:$0xff] %vm279, %v1648
      %1665 = vst.msk [vmem:[#allocation5 + $0x20] sm:$0xff] %vm279, %v1649
      %1666 = vst.msk [vmem:[#allocation5 + $0x28] sm:$0xff] %vm279, %v1650
      %1667 = vst.msk [vmem:[#allocation5 + $0x30] sm:$0xff] %vm279, %v1651
      %1668 = vst.msk [vmem:[#allocation5 + $0x38] sm:$0xff] %vm279, %v1652
      %1669 = vst.msk [vmem:[#allocation5 + $0x40] sm:$0xff] %vm279, %v1653
      %1670 = vst.msk [vmem:[#allocation5 + $0x48] sm:$0xff] %vm279, %v1654
      %1671 = vst.msk [vmem:[#allocation5 + $0x50] sm:$0xff] %vm279, %v1655
      %1672 = vst.msk [vmem:[#allocation5 + $0x58] sm:$0xff] %vm279, %v1656
      %1673 = vst.msk [vmem:[#allocation5 + $0x60] sm:$0xff] %vm279, %v1657
      %1674 = vst.msk [vmem:[#allocation5 + $0x68] sm:$0xff] %vm279, %v1658
      %1675 = vst.msk [vmem:[#allocation5 + $0x70] sm:$0xff] %vm279, %v1659
      %1676 = vst.msk [vmem:[#allocation5 + $0x78] sm:$0xff] %vm279, %v1660
      %1677 = vst.msk [vmem:[#allocation5 + $0x80] sm:$0xff] %vm279, %v1661
      %1678 = vst.msk [vmem:[#allocation5 + $0x88] sm:$0xff] %vm279, %v1662
      %v1679 = vld [vmem:[#allocation4] sm:$0x80]
      %v1680 = vld [vmem:[#allocation4 + $0x8] sm:$0xff]
      %v1681 = vld [vmem:[#allocation4 + $0x10] sm:$0xff]
      %v1682 = vld [vmem:[#allocation4 + $0x18] sm:$0xff]
      %v1683 = vld [vmem:[#allocation4 + $0x20] sm:$0xff]
      %v1684 = vld [vmem:[#allocation4 + $0x28] sm:$0xff]
      %v1685 = vld [vmem:[#allocation4 + $0x30] sm:$0xff]
      %v1686 = vld [vmem:[#allocation4 + $0x38] sm:$0xff]
      %v1687 = vld [vmem:[#allocation4 + $0x40] sm:$0xff]
      %v1688 = vld [vmem:[#allocation4 + $0x48] sm:$0xff]
      %v1689 = vld [vmem:[#allocation4 + $0x50] sm:$0xff]
      %v1690 = vld [vmem:[#allocation4 + $0x58] sm:$0xff]
      %v1691 = vld [vmem:[#allocation4 + $0x60] sm:$0xff]
      %v1692 = vld [vmem:[#allocation4 + $0x68] sm:$0xff]
      %v1693 = vld [vmem:[#allocation4 + $0x70] sm:$0xff]
      %v1694 = vld [vmem:[#allocation4 + $0x78] sm:$0xff]
      %v1695 = vld [vmem:[#allocation4 + $0x80] sm:$0xff]
      %v1696 = vld [vmem:[%s1 + $0x10] sm:$0xf]
      %v1697 = vld [vmem:[#allocation3 + $0x8] sm:$0xff]
      %v1698 = vld [vmem:[#allocation3 + $0x10] sm:$0xff]
      %v1699 = vld [vmem:[#allocation3 + $0x18] sm:$0xff]
      %v1700 = vld [vmem:[#allocation3 + $0x20] sm:$0xff]
      %v1701 = vld [vmem:[#allocation3 + $0x28] sm:$0xff]
      %v1702 = vld [vmem:[#allocation3 + $0x30] sm:$0xff]
      %v1703 = vld [vmem:[#allocation3 + $0x38] sm:$0xff]
      %v1704 = vld [vmem:[#allocation3 + $0x40] sm:$0xff]
      %v1705 = vld [vmem:[#allocation3 + $0x48] sm:$0xff]
      %v1706 = vld [vmem:[#allocation3 + $0x50] sm:$0xff]
      %v1707 = vld [vmem:[#allocation3 + $0x58] sm:$0xff]
      %v1708 = vld [vmem:[#allocation3 + $0x60] sm:$0xff]
      %v1709 = vld [vmem:[#allocation3 + $0x68] sm:$0xff]
      %v1710 = vld [vmem:[#allocation3 + $0x70] sm:$0xff]
      %v1711 = vld [vmem:[#allocation3 + $0x78] sm:$0xff]
      %v1712 = vld [vmem:[#allocation3 + $0x80] sm:$0xff]
      %v1713 = vld [vmem:[%s1 + $0x18] sm:$0xf]
      %v1715 = vsel %vm279, %v1697, 0
      %v1718 = vsel %vm279, %v1698, 0
      %v1721 = vsel %vm279, %v1699, 0
      %v1724 = vsel %vm279, %v1700, 0
      %v1727 = vsel %vm279, %v1701, 0
      %v1730 = vsel %vm279, %v1702, 0
      %v1733 = vsel %vm279, %v1703, 0
      %v1736 = vsel %vm279, %v1704, 0
      %v1739 = vsel %vm279, %v1705, 0
      %v1742 = vsel %vm279, %v1706, 0
      %v1745 = vsel %vm279, %v1707, 0
      %v1748 = vsel %vm279, %v1708, 0
      %v1751 = vsel %vm279, %v1709, 0
      %v1754 = vsel %vm279, %v1710, 0
      %v1757 = vsel %vm279, %v1711, 0
      %v1760 = vsel %vm279, %v1712, 0
      %v1763 = vsel %vm446, %v1713, 0
      %1765 = vmatprep.subr.bf16.mxu0 0
      %1766 = vmatpush1.bf16.msra.mxu0 %v1763
      %1767 = vmatprep.subr.bf16.mxu0 0
      %1768 = vmatpush1.bf16.msra.mxu0 0
      %1769 = vmatprep.subr.bf16.mxu0 0
      %1770 = vmatpush1.bf16.msra.mxu0 0
      %1771 = vmatprep.subr.bf16.mxu0 0
      %1772 = vmatpush1.bf16.msra.mxu0 0
      %1773 = vmatprep.subr.bf16.mxu0 0
      %1774 = vmatpush1.bf16.msra.mxu0 0
      %1775 = vmatprep.subr.bf16.mxu0 0
      %1776 = vmatpush1.bf16.msra.mxu0 0
      %1777 = vmatprep.subr.bf16.mxu0 0
      %1778 = vmatpush1.bf16.msra.mxu0 0
      %1779 = vmatprep.subr.bf16.mxu0 0
      %1780 = vmatpush1.bf16.msra.mxu0 0
      %1781 = vmatprep.subr.bf16.mxu0 0
      %1782 = vmatpush1.bf16.msra.mxu0 0
      %1783 = vmatprep.subr.bf16.mxu0 0
      %1784 = vmatpush1.bf16.msra.mxu0 0
      %1785 = vmatprep.subr.bf16.mxu0 0
      %1786 = vmatpush1.bf16.msra.mxu0 0
      %1787 = vmatprep.subr.bf16.mxu0 0
      %1788 = vmatpush1.bf16.msra.mxu0 0
      %1789 = vmatprep.subr.bf16.mxu0 0
      %1790 = vmatpush1.bf16.msra.mxu0 0
      %1791 = vmatprep.subr.bf16.mxu0 0
      %1792 = vmatpush1.bf16.msra.mxu0 0
      %1793 = vmatprep.subr.bf16.mxu0 0
      %1794 = vmatpush1.bf16.msra.mxu0 0
      %1795 = vmatprep.subr.bf16.mxu0 0
      %1796 = vmatpush1.bf16.msra.mxu0 0
      %1797 = vmatprep.mubr.bf16.mxu0 0
      %1798 = vmatmul.mubr.bf16.gmra.mrb[0].mxu0 %v1715
      %v1799 = vpop.f32.mrb[0].mxu0
      %v1800 = vadd.f32 0.0, %v1799
      %v1801 = vpop.f32.mrb[0].mxu0
      %v1802 = vpop.f32.mrb[0].mxu0
      %v1803 = vadd.f32 0.0, %v1802
      %v1804 = vpop.f32.mrb[0].mxu0
      %1805 = vmatprep.mubr.bf16.mxu0 0
      %1806 = vmatmul.mubr.bf16.gmra.mrb[0].mxu0 %v1718
      %v1807 = vpop.f32.mrb[0].mxu0
      %v1808 = vadd.f32 0.0, %v1807
      %v1809 = vpop.f32.mrb[0].mxu0
      %v1810 = vpop.f32.mrb[0].mxu0
      %v1811 = vadd.f32 0.0, %v1810
      %v1812 = vpop.f32.mrb[0].mxu0
      %1813 = vmatprep.mubr.bf16.mxu0 0
      %1814 = vmatmul.mubr.bf16.gmra.mrb[0].mxu0 %v1721
      %v1815 = vpop.f32.mrb[0].mxu0
      %v1816 = vadd.f32 0.0, %v1815
      %v1817 = vpop.f32.mrb[0].mxu0
      %v1818 = vpop.f32.mrb[0].mxu0
      %v1819 = vadd.f32 0.0, %v1818
      %v1820 = vpop.f32.mrb[0].mxu0
      %1821 = vmatprep.mubr.bf16.mxu0 0
      %1822 = vmatmul.mubr.bf16.gmra.mrb[0].mxu0 %v1724
      %v1823 = vpop.f32.mrb[0].mxu0
      %v1824 = vadd.f32 0.0, %v1823
      %v1825 = vpop.f32.mrb[0].mxu0
      %v1826 = vpop.f32.mrb[0].mxu0
      %v1827 = vadd.f32 0.0, %v1826
      %v1828 = vpop.f32.mrb[0].mxu0
      %1829 = vmatprep.mubr.bf16.mxu0 0
      %1830 = vmatmul.mubr.bf16.gmra.mrb[0].mxu0 %v1727
      %v1831 = vpop.f32.mrb[0].mxu0
      %v1832 = vadd.f32 0.0, %v1831
      %v1833 = vpop.f32.mrb[0].mxu0
      %v1834 = vpop.f32.mrb[0].mxu0
      %v1835 = vadd.f32 0.0, %v1834
      %v1836 = vpop.f32.mrb[0].mxu0
      %1837 = vmatprep.mubr.bf16.mxu0 0
      %1838 = vmatmul.mubr.bf16.gmra.mrb[0].mxu0 %v1730
      %v1839 = vpop.f32.mrb[0].mxu0
      %v1840 = vadd.f32 0.0, %v1839
      %v1841 = vpop.f32.mrb[0].mxu0
      %v1842 = vpop.f32.mrb[0].mxu0
      %v1843 = vadd.f32 0.0, %v1842
      %v1844 = vpop.f32.mrb[0].mxu0
      %1845 = vmatprep.mubr.bf16.mxu0 0
      %1846 = vmatmul.mubr.bf16.gmra.mrb[0].mxu0 %v1733
      %v1847 = vpop.f32.mrb[0].mxu0
      %v1848 = vadd.f32 0.0, %v1847
      %v1849 = vpop.f32.mrb[0].mxu0
      %v1850 = vpop.f32.mrb[0].mxu0
      %v1851 = vadd.f32 0.0, %v1850
      %v1852 = vpop.f32.mrb[0].mxu0
      %1853 = vmatprep.mubr.bf16.mxu0 0
      %1854 = vmatmul.mubr.bf16.gmra.mrb[0].mxu0 %v1736
      %v1855 = vpop.f32.mrb[0].mxu0
      %v1856 = vadd.f32 0.0, %v1855
      %v1857 = vpop.f32.mrb[0].mxu0
      %v1858 = vpop.f32.mrb[0].mxu0
      %v1859 = vadd.f32 0.0, %v1858
      %v1860 = vpop.f32.mrb[0].mxu0
      %1861 = vmatprep.mubr.bf16.mxu0 0
      %1862 = vmatmul.mubr.bf16.gmra.mrb[0].mxu0 %v1739
      %v1863 = vpop.f32.mrb[0].mxu0
      %v1864 = vadd.f32 0.0, %v1863
      %v1865 = vpop.f32.mrb[0].mxu0
      %v1866 = vpop.f32.mrb[0].mxu0
      %v1867 = vadd.f32 0.0, %v1866
      %v1868 = vpop.f32.mrb[0].mxu0
      %1869 = vmatprep.mubr.bf16.mxu0 0
      %1870 = vmatmul.mubr.bf16.gmra.mrb[0].mxu0 %v1742
      %v1871 = vpop.f32.mrb[0].mxu0
      %v1872 = vadd.f32 0.0, %v1871
      %v1873 = vpop.f32.mrb[0].mxu0
      %v1874 = vpop.f32.mrb[0].mxu0
      %v1875 = vadd.f32 0.0, %v1874
      %v1876 = vpop.f32.mrb[0].mxu0
      %1877 = vmatprep.mubr.bf16.mxu0 0
      %1878 = vmatmul.mubr.bf16.gmra.mrb[0].mxu0 %v1745
      %v1879 = vpop.f32.mrb[0].mxu0
      %v1880 = vadd.f32 0.0, %v1879
      %v1881 = vpop.f32.mrb[0].mxu0
      %v1882 = vpop.f32.mrb[0].mxu0
      %v1883 = vadd.f32 0.0, %v1882
      %v1884 = vpop.f32.mrb[0].mxu0
      %1885 = vmatprep.mubr.bf16.mxu0 0
      %1886 = vmatmul.mubr.bf16.gmra.mrb[0].mxu0 %v1748
      %v1887 = vpop.f32.mrb[0].mxu0
      %v1888 = vadd.f32 0.0, %v1887
      %v1889 = vpop.f32.mrb[0].mxu0
      %v1890 = vpop.f32.mrb[0].mxu0
      %v1891 = vadd.f32 0.0, %v1890
      %v1892 = vpop.f32.mrb[0].mxu0
      %1893 = vmatprep.mubr.bf16.mxu0 0
      %1894 = vmatmul.mubr.bf16.gmra.mrb[0].mxu0 %v1751
      %v1895 = vpop.f32.mrb[0].mxu0
      %v1896 = vadd.f32 0.0, %v1895
      %v1897 = vpop.f32.mrb[0].mxu0
      %v1898 = vpop.f32.mrb[0].mxu0
      %v1899 = vadd.f32 0.0, %v1898
      %v1900 = vpop.f32.mrb[0].mxu0
      %1901 = vmatprep.mubr.bf16.mxu0 0
      %1902 = vmatmul.mubr.bf16.gmra.mrb[0].mxu0 %v1754
      %v1903 = vpop.f32.mrb[0].mxu0
      %v1904 = vadd.f32 0.0, %v1903
      %v1905 = vpop.f32.mrb[0].mxu0
      %v1906 = vpop.f32.mrb[0].mxu0
      %v1907 = vadd.f32 0.0, %v1906
      %v1908 = vpop.f32.mrb[0].mxu0
      %1909 = vmatprep.mubr.bf16.mxu0 0
      %1910 = vmatmul.mubr.bf16.gmra.mrb[0].mxu0 %v1757
      %v1911 = vpop.f32.mrb[0].mxu0
      %v1912 = vadd.f32 0.0, %v1911
      %v1913 = vpop.f32.mrb[0].mxu0
      %v1914 = vpop.f32.mrb[0].mxu0
      %v1915 = vadd.f32 0.0, %v1914
      %v1916 = vpop.f32.mrb[0].mxu0
      %1917 = vmatprep.mubr.bf16.mxu0 0
      %1918 = vmatmul.mubr.bf16.gmra.mrb[0].mxu0 %v1760
      %v1919 = vpop.f32.mrb[0].mxu0
      %v1920 = vadd.f32 0.0, %v1919
      %v1921 = vpop.f32.mrb[0].mxu0
      %v1922 = vpop.f32.mrb[0].mxu0
      %v1923 = vadd.f32 0.0, %v1922
      %v1924 = vpop.f32.mrb[0].mxu0
      %1925 = vdwg.mxu0
      %vm1926 = vsmask.f32 256
      %v1928 = vshrl.u32 %v1679, 16
      %v1930 = vrot.slane %v1928, 7
      %v1932 = vshrl.u32 %v1680, 16
      %v1934 = vrot.slane %v1932, 7
      %v1935 = vshll.u32 %v1680, 16
      %v1937 = vor.u32 %v1934, %v1935
      %v1938 = vsel %vm1926, %v1930, %v1937
      %v1940 = vshrl.u32 %v1681, 16
      %v1942 = vrot.slane %v1940, 7
      %v1943 = vshll.u32 %v1681, 16
      %v1945 = vor.u32 %v1942, %v1943
      %v1946 = vsel %vm1926, %v1934, %v1945
      %v1948 = vshrl.u32 %v1682, 16
      %v1950 = vrot.slane %v1948, 7
      %v1951 = vshll.u32 %v1682, 16
      %v1953 = vor.u32 %v1950, %v1951
      %v1954 = vsel %vm1926, %v1942, %v1953
      %v1956 = vshrl.u32 %v1683, 16
      %v1958 = vrot.slane %v1956, 7
      %v1959 = vshll.u32 %v1683, 16
      %v1961 = vor.u32 %v1958, %v1959
      %v1962 = vsel %vm1926, %v1950, %v1961
      %v1964 = vshrl.u32 %v1684, 16
      %v1966 = vrot.slane %v1964, 7
      %v1967 = vshll.u32 %v1684, 16
      %v1969 = vor.u32 %v1966, %v1967
      %v1970 = vsel %vm1926, %v1958, %v1969
      %v1972 = vshrl.u32 %v1685, 16
      %v1974 = vrot.slane %v1972, 7
      %v1975 = vshll.u32 %v1685, 16
      %v1977 = vor.u32 %v1974, %v1975
      %v1978 = vsel %vm1926, %v1966, %v1977
      %v1980 = vshrl.u32 %v1686, 16
      %v1982 = vrot.slane %v1980, 7
      %v1983 = vshll.u32 %v1686, 16
      %v1985 = vor.u32 %v1982, %v1983
      %v1986 = vsel %vm1926, %v1974, %v1985
      %v1988 = vshrl.u32 %v1687, 16
      %v1990 = vrot.slane %v1988, 7
      %v1991 = vshll.u32 %v1687, 16
      %v1993 = vor.u32 %v1990, %v1991
      %v1994 = vsel %vm1926, %v1982, %v1993
      %v1996 = vshrl.u32 %v1688, 16
      %v1998 = vrot.slane %v1996, 7
      %v1999 = vshll.u32 %v1688, 16
      %v2001 = vor.u32 %v1998, %v1999
      %v2002 = vsel %vm1926, %v1990, %v2001
      %v2004 = vshrl.u32 %v1689, 16
      %v2006 = vrot.slane %v2004, 7
      %v2007 = vshll.u32 %v1689, 16
      %v2009 = vor.u32 %v2006, %v2007
      %v2010 = vsel %vm1926, %v1998, %v2009
      %v2012 = vshrl.u32 %v1690, 16
      %v2014 = vrot.slane %v2012, 7
      %v2015 = vshll.u32 %v1690, 16
      %v2017 = vor.u32 %v2014, %v2015
      %v2018 = vsel %vm1926, %v2006, %v2017
      %v2020 = vshrl.u32 %v1691, 16
      %v2022 = vrot.slane %v2020, 7
      %v2023 = vshll.u32 %v1691, 16
      %v2025 = vor.u32 %v2022, %v2023
      %v2026 = vsel %vm1926, %v2014, %v2025
      %v2028 = vshrl.u32 %v1692, 16
      %v2030 = vrot.slane %v2028, 7
      %v2031 = vshll.u32 %v1692, 16
      %v2033 = vor.u32 %v2030, %v2031
      %v2034 = vsel %vm1926, %v2022, %v2033
      %v2036 = vshrl.u32 %v1693, 16
      %v2038 = vrot.slane %v2036, 7
      %v2039 = vshll.u32 %v1693, 16
      %v2041 = vor.u32 %v2038, %v2039
      %v2042 = vsel %vm1926, %v2030, %v2041
      %v2044 = vshrl.u32 %v1694, 16
      %v2046 = vrot.slane %v2044, 7
      %v2047 = vshll.u32 %v1694, 16
      %v2049 = vor.u32 %v2046, %v2047
      %v2050 = vsel %vm1926, %v2038, %v2049
      %v2052 = vshrl.u32 %v1695, 16
      %v2054 = vrot.slane %v2052, 7
      %v2055 = vshll.u32 %v1695, 16
      %v2057 = vor.u32 %v2054, %v2055
      %v2058 = vsel %vm1926, %v2046, %v2057
      %v2060 = vsel %vm279, %v1938, 0
      %v2063 = vsel %vm279, %v1946, 0
      %v2066 = vsel %vm279, %v1954, 0
      %v2069 = vsel %vm279, %v1962, 0
      %v2072 = vsel %vm279, %v1970, 0
      %v2075 = vsel %vm279, %v1978, 0
      %v2078 = vsel %vm279, %v1986, 0
      %v2081 = vsel %vm279, %v1994, 0
      %v2084 = vsel %vm279, %v2002, 0
      %v2087 = vsel %vm279, %v2010, 0
      %v2090 = vsel %vm279, %v2018, 0
      %v2093 = vsel %vm279, %v2026, 0
      %v2096 = vsel %vm279, %v2034, 0
      %v2099 = vsel %vm279, %v2042, 0
      %v2102 = vsel %vm279, %v2050, 0
      %v2105 = vsel %vm279, %v2058, 0
      %v2108 = vsel %vm446, %v1696, 0
      %2110 = vmatprep.subr.bf16.mxu0 0
      %2111 = vmatpush1.bf16.msra.mxu0 %v2108
      %2112 = vmatprep.subr.bf16.mxu0 0
      %2113 = vmatpush1.bf16.msra.mxu0 0
      %2114 = vmatprep.subr.bf16.mxu0 0
      %2115 = vmatpush1.bf16.msra.mxu0 0
      %2116 = vmatprep.subr.bf16.mxu0 0
      %2117 = vmatpush1.bf16.msra.mxu0 0
      %2118 = vmatprep.subr.bf16.mxu0 0
      %2119 = vmatpush1.bf16.msra.mxu0 0
      %2120 = vmatprep.subr.bf16.mxu0 0
      %2121 = vmatpush1.bf16.msra.mxu0 0
      %2122 = vmatprep.subr.bf16.mxu0 0
      %2123 = vmatpush1.bf16.msra.mxu0 0
      %2124 = vmatprep.subr.bf16.mxu0 0
      %2125 = vmatpush1.bf16.msra.mxu0 0
      %2126 = vmatprep.subr.bf16.mxu0 0
      %2127 = vmatpush1.bf16.msra.mxu0 0
      %2128 = vmatprep.subr.bf16.mxu0 0
      %2129 = vmatpush1.bf16.msra.mxu0 0
      %2130 = vmatprep.subr.bf16.mxu0 0
      %2131 = vmatpush1.bf16.msra.mxu0 0
      %2132 = vmatprep.subr.bf16.mxu0 0
      %2133 = vmatpush1.bf16.msra.mxu0 0
      %2134 = vmatprep.subr.bf16.mxu0 0
      %2135 = vmatpush1.bf16.msra.mxu0 0
      %2136 = vmatprep.subr.bf16.mxu0 0
      %2137 = vmatpush1.bf16.msra.mxu0 0
      %2138 = vmatprep.subr.bf16.mxu0 0
      %2139 = vmatpush1.bf16.msra.mxu0 0
      %2140 = vmatprep.subr.bf16.mxu0 0
      %2141 = vmatpush1.bf16.msra.mxu0 0
      %2142 = vmatprep.mubr.bf16.mxu0 0
      %2143 = vmatmul.mubr.bf16.gmra.mrb[0].mxu0 %v2060
      %v2144 = vpop.f32.mrb[0].mxu0
      %v2145 = vadd.f32 %v1800, %v2144
      %v2146 = vpop.f32.mrb[0].mxu0
      %v2147 = vpop.f32.mrb[0].mxu0
      %v2148 = vadd.f32 %v1803, %v2147
      %v2149 = vpop.f32.mrb[0].mxu0
      %2150 = vmatprep.mubr.bf16.mxu0 0
      %2151 = vmatmul.mubr.bf16.gmra.mrb[0].mxu0 %v2063
      %v2152 = vpop.f32.mrb[0].mxu0
      %v2153 = vadd.f32 %v1808, %v2152
      %v2154 = vpop.f32.mrb[0].mxu0
      %v2155 = vpop.f32.mrb[0].mxu0
      %v2156 = vadd.f32 %v1811, %v2155
      %v2157 = vpop.f32.mrb[0].mxu0
      %2158 = vmatprep.mubr.bf16.mxu0 0
      %2159 = vmatmul.mubr.bf16.gmra.mrb[0].mxu0 %v2066
      %v2160 = vpop.f32.mrb[0].mxu0
      %v2161 = vadd.f32 %v1816, %v2160
      %v2162 = vpop.f32.mrb[0].mxu0
      %v2163 = vpop.f32.mrb[0].mxu0
      %v2164 = vadd.f32 %v1819, %v2163
      %v2165 = vpop.f32.mrb[0].mxu0
      %2166 = vmatprep.mubr.bf16.mxu0 0
      %2167 = vmatmul.mubr.bf16.gmra.mrb[0].mxu0 %v2069
      %v2168 = vpop.f32.mrb[0].mxu0
      %v2169 = vadd.f32 %v1824, %v2168
      %v2170 = vpop.f32.mrb[0].mxu0
      %v2171 = vpop.f32.mrb[0].mxu0
      %v2172 = vadd.f32 %v1827, %v2171
      %v2173 = vpop.f32.mrb[0].mxu0
      %2174 = vmatprep.mubr.bf16.mxu0 0
      %2175 = vmatmul.mubr.bf16.gmra.mrb[0].mxu0 %v2072
      %v2176 = vpop.f32.mrb[0].mxu0
      %v2177 = vadd.f32 %v1832, %v2176
      %v2178 = vpop.f32.mrb[0].mxu0
      %v2179 = vpop.f32.mrb[0].mxu0
      %v2180 = vadd.f32 %v1835, %v2179
      %v2181 = vpop.f32.mrb[0].mxu0
      %2182 = vmatprep.mubr.bf16.mxu0 0
      %2183 = vmatmul.mubr.bf16.gmra.mrb[0].mxu0 %v2075
      %v2184 = vpop.f32.mrb[0].mxu0
      %v2185 = vadd.f32 %v1840, %v2184
      %v2186 = vpop.f32.mrb[0].mxu0
      %v2187 = vpop.f32.mrb[0].mxu0
      %v2188 = vadd.f32 %v1843, %v2187
      %v2189 = vpop.f32.mrb[0].mxu0
      %2190 = vmatprep.mubr.bf16.mxu0 0
      %2191 = vmatmul.mubr.bf16.gmra.mrb[0].mxu0 %v2078
      %v2192 = vpop.f32.mrb[0].mxu0
      %v2193 = vadd.f32 %v1848, %v2192
      %v2194 = vpop.f32.mrb[0].mxu0
      %v2195 = vpop.f32.mrb[0].mxu0
      %v2196 = vadd.f32 %v1851, %v2195
      %v2197 = vpop.f32.mrb[0].mxu0
      %2198 = vmatprep.mubr.bf16.mxu0 0
      %2199 = vmatmul.mubr.bf16.gmra.mrb[0].mxu0 %v2081
      %v2200 = vpop.f32.mrb[0].mxu0
      %v2201 = vadd.f32 %v1856, %v2200
      %v2202 = vpop.f32.mrb[0].mxu0
      %v2203 = vpop.f32.mrb[0].mxu0
      %v2204 = vadd.f32 %v1859, %v2203
      %v2205 = vpop.f32.mrb[0].mxu0
      %2206 = vmatprep.mubr.bf16.mxu0 0
      %2207 = vmatmul.mubr.bf16.gmra.mrb[0].mxu0 %v2084
      %v2208 = vpop.f32.mrb[0].mxu0
      %v2209 = vadd.f32 %v1864, %v2208
      %v2210 = vpop.f32.mrb[0].mxu0
      %v2211 = vpop.f32.mrb[0].mxu0
      %v2212 = vadd.f32 %v1867, %v2211
      %v2213 = vpop.f32.mrb[0].mxu0
      %2214 = vmatprep.mubr.bf16.mxu0 0
      %2215 = vmatmul.mubr.bf16.gmra.mrb[0].mxu0 %v2087
      %v2216 = vpop.f32.mrb[0].mxu0
      %v2217 = vadd.f32 %v1872, %v2216
      %v2218 = vpop.f32.mrb[0].mxu0
      %v2219 = vpop.f32.mrb[0].mxu0
      %v2220 = vadd.f32 %v1875, %v2219
      %v2221 = vpop.f32.mrb[0].mxu0
      %2222 = vmatprep.mubr.bf16.mxu0 0
      %2223 = vmatmul.mubr.bf16.gmra.mrb[0].mxu0 %v2090
      %v2224 = vpop.f32.mrb[0].mxu0
      %v2225 = vadd.f32 %v1880, %v2224
      %v2226 = vpop.f32.mrb[0].mxu0
      %v2227 = vpop.f32.mrb[0].mxu0
      %v2228 = vadd.f32 %v1883, %v2227
      %v2229 = vpop.f32.mrb[0].mxu0
      %2230 = vmatprep.mubr.bf16.mxu0 0
      %2231 = vmatmul.mubr.bf16.gmra.mrb[0].mxu0 %v2093
      %v2232 = vpop.f32.mrb[0].mxu0
      %v2233 = vadd.f32 %v1888, %v2232
      %v2234 = vpop.f32.mrb[0].mxu0
      %v2235 = vpop.f32.mrb[0].mxu0
      %v2236 = vadd.f32 %v1891, %v2235
      %v2237 = vpop.f32.mrb[0].mxu0
      %2238 = vmatprep.mubr.bf16.mxu0 0
      %2239 = vmatmul.mubr.bf16.gmra.mrb[0].mxu0 %v2096
      %v2240 = vpop.f32.mrb[0].mxu0
      %v2241 = vadd.f32 %v1896, %v2240
      %v2242 = vpop.f32.mrb[0].mxu0
      %v2243 = vpop.f32.mrb[0].mxu0
      %v2244 = vadd.f32 %v1899, %v2243
      %v2245 = vpop.f32.mrb[0].mxu0
      %2246 = vmatprep.mubr.bf16.mxu0 0
      %2247 = vmatmul.mubr.bf16.gmra.mrb[0].mxu0 %v2099
      %v2248 = vpop.f32.mrb[0].mxu0
      %v2249 = vadd.f32 %v1904, %v2248
      %v2250 = vpop.f32.mrb[0].mxu0
      %v2251 = vpop.f32.mrb[0].mxu0
      %v2252 = vadd.f32 %v1907, %v2251
      %v2253 = vpop.f32.mrb[0].mxu0
      %2254 = vmatprep.mubr.bf16.mxu0 0
      %2255 = vmatmul.mubr.bf16.gmra.mrb[0].mxu0 %v2102
      %v2256 = vpop.f32.mrb[0].mxu0
      %v2257 = vadd.f32 %v1912, %v2256
      %v2258 = vpop.f32.mrb[0].mxu0
      %v2259 = vpop.f32.mrb[0].mxu0
      %v2260 = vadd.f32 %v1915, %v2259
      %v2261 = vpop.f32.mrb[0].mxu0
      %2262 = vmatprep.mubr.bf16.mxu0 0
      %2263 = vmatmul.mubr.bf16.gmra.mrb[0].mxu0 %v2105
      %v2264 = vpop.f32.mrb[0].mxu0
      %v2265 = vadd.f32 %v1920, %v2264
      %v2266 = vpop.f32.mrb[0].mxu0
      %v2267 = vpop.f32.mrb[0].mxu0
      %v2268 = vadd.f32 %v1923, %v2267
      %v2269 = vpop.f32.mrb[0].mxu0
      %2270 = vdwg.mxu0
      %v2271 = vld [vmem:[#allocation5 + $0x8] sm:$0xff]
      %v2272 = vld [vmem:[#allocation5 + $0x10] sm:$0xff]
      %v2273 = vld [vmem:[#allocation5 + $0x18] sm:$0xff]
      %v2274 = vld [vmem:[#allocation5 + $0x20] sm:$0xff]
      %v2275 = vld [vmem:[#allocation5 + $0x28] sm:$0xff]
      %v2276 = vld [vmem:[#allocation5 + $0x30] sm:$0xff]
      %v2277 = vld [vmem:[#allocation5 + $0x38] sm:$0xff]
      %v2278 = vld [vmem:[#allocation5 + $0x40] sm:$0xff]
      %v2279 = vld [vmem:[#allocation5 + $0x48] sm:$0xff]
      %v2280 = vld [vmem:[#allocation5 + $0x50] sm:$0xff]
      %v2281 = vld [vmem:[#allocation5 + $0x58] sm:$0xff]
      %v2282 = vld [vmem:[#allocation5 + $0x60] sm:$0xff]
      %v2283 = vld [vmem:[#allocation5 + $0x68] sm:$0xff]
      %v2284 = vld [vmem:[#allocation5 + $0x70] sm:$0xff]
      %v2285 = vld [vmem:[#allocation5 + $0x78] sm:$0xff]
      %v2286 = vld [vmem:[#allocation5 + $0x80] sm:$0xff]
      %v2287 = vld [vmem:[#allocation5 + $0x88] sm:$0x1]
      %v2288 = vld [vmem:[%s1 + $0x20] sm:$0xf]
      %vm2289 = vsmask.f32 7424
      %v2291 = vshrl.u32 %v2271, 16
      %v2293 = vshll.u32 %v2271, 16
      %v2295 = vrot.slane %v2293, 1
      %v2296 = vor.u32 %v2291, %v2295
      %v2298 = vshll.u32 %v2272, 16
      %v2300 = vrot.slane %v2298, 1
      %v2301 = vsel %vm2289, %v2296, %v2300
      %v2302 = vshrl.u32 %v2272, 16
      %v2304 = vor.u32 %v2302, %v2300
      %v2306 = vshll.u32 %v2273, 16
      %v2308 = vrot.slane %v2306, 1
      %v2309 = vsel %vm2289, %v2304, %v2308
      %v2310 = vshrl.u32 %v2273, 16
      %v2312 = vor.u32 %v2310, %v2308
      %v2314 = vshll.u32 %v2274, 16
      %v2316 = vrot.slane %v2314, 1
      %v2317 = vsel %vm2289, %v2312, %v2316
      %v2318 = vshrl.u32 %v2274, 16
      %v2320 = vor.u32 %v2318, %v2316
      %v2322 = vshll.u32 %v2275, 16
      %v2324 = vrot.slane %v2322, 1
      %v2325 = vsel %vm2289, %v2320, %v2324
      %v2326 = vshrl.u32 %v2275, 16
      %v2328 = vor.u32 %v2326, %v2324
      %v2330 = vshll.u32 %v2276, 16
      %v2332 = vrot.slane %v2330, 1
      %v2333 = vsel %vm2289, %v2328, %v2332
      %v2334 = vshrl.u32 %v2276, 16
      %v2336 = vor.u32 %v2334, %v2332
      %v2338 = vshll.u32 %v2277, 16
      %v2340 = vrot.slane %v2338, 1
      %v2341 = vsel %vm2289, %v2336, %v2340
      %v2342 = vshrl.u32 %v2277, 16
      %v2344 = vor.u32 %v2342, %v2340
      %v2346 = vshll.u32 %v2278, 16
      %v2348 = vrot.slane %v2346, 1
      %v2349 = vsel %vm2289, %v2344, %v2348
      %v2350 = vshrl.u32 %v2278, 16
      %v2352 = vor.u32 %v2350, %v2348
      %v2354 = vshll.u32 %v2279, 16
      %v2356 = vrot.slane %v2354, 1
      %v2357 = vsel %vm2289, %v2352, %v2356
      %v2358 = vshrl.u32 %v2279, 16
      %v2360 = vor.u32 %v2358, %v2356
      %v2362 = vshll.u32 %v2280, 16
      %v2364 = vrot.slane %v2362, 1
      %v2365 = vsel %vm2289, %v2360, %v2364
      %v2366 = vshrl.u32 %v2280, 16
      %v2368 = vor.u32 %v2366, %v2364
      %v2370 = vshll.u32 %v2281, 16
      %v2372 = vrot.slane %v2370, 1
      %v2373 = vsel %vm2289, %v2368, %v2372
      %v2374 = vshrl.u32 %v2281, 16
      %v2376 = vor.u32 %v2374, %v2372
      %v2378 = vshll.u32 %v2282, 16
      %v2380 = vrot.slane %v2378, 1
      %v2381 = vsel %vm2289, %v2376, %v2380
      %v2382 = vshrl.u32 %v2282, 16
      %v2384 = vor.u32 %v2382, %v2380
      %v2386 = vshll.u32 %v2283, 16
      %v2388 = vrot.slane %v2386, 1
      %v2389 = vsel %vm2289, %v2384, %v2388
      %v2390 = vshrl.u32 %v2283, 16
      %v2392 = vor.u32 %v2390, %v2388
      %v2394 = vshll.u32 %v2284, 16
      %v2396 = vrot.slane %v2394, 1
      %v2397 = vsel %vm2289, %v2392, %v2396
      %v2398 = vshrl.u32 %v2284, 16
      %v2400 = vor.u32 %v2398, %v2396
      %v2402 = vshll.u32 %v2285, 16
      %v2404 = vrot.slane %v2402, 1
      %v2405 = vsel %vm2289, %v2400, %v2404
      %v2406 = vshrl.u32 %v2285, 16
      %v2408 = vor.u32 %v2406, %v2404
      %v2410 = vshll.u32 %v2286, 16
      %v2412 = vrot.slane %v2410, 1
      %v2413 = vsel %vm2289, %v2408, %v2412
      %v2414 = vshrl.u32 %v2286, 16
      %v2416 = vor.u32 %v2414, %v2412
      %v2418 = vshll.u32 %v2287, 16
      %v2420 = vrot.slane %v2418, 1
      %v2421 = vsel %vm2289, %v2416, %v2420
      %v2423 = vsel %vm279, %v2301, 0
      %v2426 = vsel %vm279, %v2309, 0
      %v2429 = vsel %vm279, %v2317, 0
      %v2432 = vsel %vm279, %v2325, 0
      %v2435 = vsel %vm279, %v2333, 0
      %v2438 = vsel %vm279, %v2341, 0
      %v2441 = vsel %vm279, %v2349, 0
      %v2444 = vsel %vm279, %v2357, 0
      %v2447 = vsel %vm279, %v2365, 0
      %v2450 = vsel %vm279, %v2373, 0
      %v2453 = vsel %vm279, %v2381, 0
      %v2456 = vsel %vm279, %v2389, 0
      %v2459 = vsel %vm279, %v2397, 0
      %v2462 = vsel %vm279, %v2405, 0
      %v2465 = vsel %vm279, %v2413, 0
      %v2468 = vsel %vm279, %v2421, 0
      %v2471 = vsel %vm446, %v2288, 0
      %2473 = vmatprep.subr.bf16.mxu0 0
      %2474 = vmatpush1.bf16.msra.mxu0 %v2471
      %2475 = vmatprep.subr.bf16.mxu0 0
      %2476 = vmatpush1.bf16.msra.mxu0 0
      %2477 = vmatprep.subr.bf16.mxu0 0
      %2478 = vmatpush1.bf16.msra.mxu0 0
      %2479 = vmatprep.subr.bf16.mxu0 0
      %2480 = vmatpush1.bf16.msra.mxu0 0
      %2481 = vmatprep.subr.bf16.mxu0 0
      %2482 = vmatpush1.bf16.msra.mxu0 0
      %2483 = vmatprep.subr.bf16.mxu0 0
      %2484 = vmatpush1.bf16.msra.mxu0 0
      %2485 = vmatprep.subr.bf16.mxu0 0
      %2486 = vmatpush1.bf16.msra.mxu0 0
      %2487 = vmatprep.subr.bf16.mxu0 0
      %2488 = vmatpush1.bf16.msra.mxu0 0
      %2489 = vmatprep.subr.bf16.mxu0 0
      %2490 = vmatpush1.bf16.msra.mxu0 0
      %2491 = vmatprep.subr.bf16.mxu0 0
      %2492 = vmatpush1.bf16.msra.mxu0 0
      %2493 = vmatprep.subr.bf16.mxu0 0
      %2494 = vmatpush1.bf16.msra.mxu0 0
      %2495 = vmatprep.subr.bf16.mxu0 0
      %2496 = vmatpush1.bf16.msra.mxu0 0
      %2497 = vmatprep.subr.bf16.mxu0 0
      %2498 = vmatpush1.bf16.msra.mxu0 0
      %2499 = vmatprep.subr.bf16.mxu0 0
      %2500 = vmatpush1.bf16.msra.mxu0 0
      %2501 = vmatprep.subr.bf16.mxu0 0
      %2502 = vmatpush1.bf16.msra.mxu0 0
      %2503 = vmatprep.subr.bf16.mxu0 0
      %2504 = vmatpush1.bf16.msra.mxu0 0
      %2505 = vmatprep.mubr.bf16.mxu0 0
      %2506 = vmatmul.mubr.bf16.gmra.mrb[0].mxu0 %v2423
      %v2507 = vpop.f32.mrb[0].mxu0
      %v2508 = vadd.f32 0.0, %v2507
      %v2509 = vpop.f32.mrb[0].mxu0
      %v2510 = vpop.f32.mrb[0].mxu0
      %v2511 = vadd.f32 0.0, %v2510
      %v2512 = vpop.f32.mrb[0].mxu0
      %2513 = vmatprep.mubr.bf16.mxu0 0
      %2514 = vmatmul.mubr.bf16.gmra.mrb[0].mxu0 %v2426
      %v2515 = vpop.f32.mrb[0].mxu0
      %v2516 = vadd.f32 0.0, %v2515
      %v2517 = vpop.f32.mrb[0].mxu0
      %v2518 = vpop.f32.mrb[0].mxu0
      %v2519 = vadd.f32 0.0, %v2518
      %v2520 = vpop.f32.mrb[0].mxu0
      %2521 = vmatprep.mubr.bf16.mxu0 0
      %2522 = vmatmul.mubr.bf16.gmra.mrb[0].mxu0 %v2429
      %v2523 = vpop.f32.mrb[0].mxu0
      %v2524 = vadd.f32 0.0, %v2523
      %v2525 = vpop.f32.mrb[0].mxu0
      %v2526 = vpop.f32.mrb[0].mxu0
      %v2527 = vadd.f32 0.0, %v2526
      %v2528 = vpop.f32.mrb[0].mxu0
      %2529 = vmatprep.mubr.bf16.mxu0 0
      %2530 = vmatmul.mubr.bf16.gmra.mrb[0].mxu0 %v2432
      %v2531 = vpop.f32.mrb[0].mxu0
      %v2532 = vadd.f32 0.0, %v2531
      %v2533 = vpop.f32.mrb[0].mxu0
      %v2534 = vpop.f32.mrb[0].mxu0
      %v2535 = vadd.f32 0.0, %v2534
      %v2536 = vpop.f32.mrb[0].mxu0
      %2537 = vmatprep.mubr.bf16.mxu0 0
      %2538 = vmatmul.mubr.bf16.gmra.mrb[0].mxu0 %v2435
      %v2539 = vpop.f32.mrb[0].mxu0
      %v2540 = vadd.f32 0.0, %v2539
      %v2541 = vpop.f32.mrb[0].mxu0
      %v2542 = vpop.f32.mrb[0].mxu0
      %v2543 = vadd.f32 0.0, %v2542
      %v2544 = vpop.f32.mrb[0].mxu0
      %2545 = vmatprep.mubr.bf16.mxu0 0
      %2546 = vmatmul.mubr.bf16.gmra.mrb[0].mxu0 %v2438
      %v2547 = vpop.f32.mrb[0].mxu0
      %v2548 = vadd.f32 0.0, %v2547
      %v2549 = vpop.f32.mrb[0].mxu0
      %v2550 = vpop.f32.mrb[0].mxu0
      %v2551 = vadd.f32 0.0, %v2550
      %v2552 = vpop.f32.mrb[0].mxu0
      %2553 = vmatprep.mubr.bf16.mxu0 0
      %2554 = vmatmul.mubr.bf16.gmra.mrb[0].mxu0 %v2441
      %v2555 = vpop.f32.mrb[0].mxu0
      %v2556 = vadd.f32 0.0, %v2555
      %v2557 = vpop.f32.mrb[0].mxu0
      %v2558 = vpop.f32.mrb[0].mxu0
      %v2559 = vadd.f32 0.0, %v2558
      %v2560 = vpop.f32.mrb[0].mxu0
      %2561 = vmatprep.mubr.bf16.mxu0 0
      %2562 = vmatmul.mubr.bf16.gmra.mrb[0].mxu0 %v2444
      %v2563 = vpop.f32.mrb[0].mxu0
      %v2564 = vadd.f32 0.0, %v2563
      %v2565 = vpop.f32.mrb[0].mxu0
      %v2566 = vpop.f32.mrb[0].mxu0
      %v2567 = vadd.f32 0.0, %v2566
      %v2568 = vpop.f32.mrb[0].mxu0
      %2569 = vmatprep.mubr.bf16.mxu0 0
      %2570 = vmatmul.mubr.bf16.gmra.mrb[0].mxu0 %v2447
      %v2571 = vpop.f32.mrb[0].mxu0
      %v2572 = vadd.f32 0.0, %v2571
      %v2573 = vpop.f32.mrb[0].mxu0
      %v2574 = vpop.f32.mrb[0].mxu0
      %v2575 = vadd.f32 0.0, %v2574
      %v2576 = vpop.f32.mrb[0].mxu0
      %2577 = vmatprep.mubr.bf16.mxu0 0
      %2578 = vmatmul.mubr.bf16.gmra.mrb[0].mxu0 %v2450
      %v2579 = vpop.f32.mrb[0].mxu0
      %v2580 = vadd.f32 0.0, %v2579
      %v2581 = vpop.f32.mrb[0].mxu0
      %v2582 = vpop.f32.mrb[0].mxu0
      %v2583 = vadd.f32 0.0, %v2582
      %v2584 = vpop.f32.mrb[0].mxu0
      %2585 = vmatprep.mubr.bf16.mxu0 0
      %2586 = vmatmul.mubr.bf16.gmra.mrb[0].mxu0 %v2453
      %v2587 = vpop.f32.mrb[0].mxu0
      %v2588 = vadd.f32 0.0, %v2587
      %v2589 = vpop.f32.mrb[0].mxu0
      %v2590 = vpop.f32.mrb[0].mxu0
      %v2591 = vadd.f32 0.0, %v2590
      %v2592 = vpop.f32.mrb[0].mxu0
      %2593 = vmatprep.mubr.bf16.mxu0 0
      %2594 = vmatmul.mubr.bf16.gmra.mrb[0].mxu0 %v2456
      %v2595 = vpop.f32.mrb[0].mxu0
      %v2596 = vadd.f32 0.0, %v2595
      %v2597 = vpop.f32.mrb[0].mxu0
      %v2598 = vpop.f32.mrb[0].mxu0
      %v2599 = vadd.f32 0.0, %v2598
      %v2600 = vpop.f32.mrb[0].mxu0
      %2601 = vmatprep.mubr.bf16.mxu0 0
      %2602 = vmatmul.mubr.bf16.gmra.mrb[0].mxu0 %v2459
      %v2603 = vpop.f32.mrb[0].mxu0
      %v2604 = vadd.f32 0.0, %v2603
      %v2605 = vpop.f32.mrb[0].mxu0
      %v2606 = vpop.f32.mrb[0].mxu0
      %v2607 = vadd.f32 0.0, %v2606
      %v2608 = vpop.f32.mrb[0].mxu0
      %2609 = vmatprep.mubr.bf16.mxu0 0
      %2610 = vmatmul.mubr.bf16.gmra.mrb[0].mxu0 %v2462
      %v2611 = vpop.f32.mrb[0].mxu0
      %v2612 = vadd.f32 0.0, %v2611
      %v2613 = vpop.f32.mrb[0].mxu0
      %v2614 = vpop.f32.mrb[0].mxu0
      %v2615 = vadd.f32 0.0, %v2614
      %v2616 = vpop.f32.mrb[0].mxu0
      %2617 = vmatprep.mubr.bf16.mxu0 0
      %2618 = vmatmul.mubr.bf16.gmra.mrb[0].mxu0 %v2465
      %v2619 = vpop.f32.mrb[0].mxu0
      %v2620 = vadd.f32 0.0, %v2619
      %v2621 = vpop.f32.mrb[0].mxu0
      %v2622 = vpop.f32.mrb[0].mxu0
      %v2623 = vadd.f32 0.0, %v2622
      %v2624 = vpop.f32.mrb[0].mxu0
      %2625 = vmatprep.mubr.bf16.mxu0 0
      %2626 = vmatmul.mubr.bf16.gmra.mrb[0].mxu0 %v2468
      %v2627 = vpop.f32.mrb[0].mxu0
      %v2628 = vadd.f32 0.0, %v2627
      %v2629 = vpop.f32.mrb[0].mxu0
      %v2630 = vpop.f32.mrb[0].mxu0
      %v2631 = vadd.f32 0.0, %v2630
      %v2632 = vpop.f32.mrb[0].mxu0
      %2633 = vdwg.mxu0
      %v2634 = vadd.f32 %v2145, %v2508
      %v2635 = vadd.f32 %v2148, %v2511
      %v2636 = vadd.f32 %v2153, %v2516
      %v2637 = vadd.f32 %v2156, %v2519
      %v2638 = vadd.f32 %v2161, %v2524
      %v2639 = vadd.f32 %v2164, %v2527
      %v2640 = vadd.f32 %v2169, %v2532
      %v2641 = vadd.f32 %v2172, %v2535
      %v2642 = vadd.f32 %v2177, %v2540
      %v2643 = vadd.f32 %v2180, %v2543
      %v2644 = vadd.f32 %v2185, %v2548
      %v2645 = vadd.f32 %v2188, %v2551
      %v2646 = vadd.f32 %v2193, %v2556
      %v2647 = vadd.f32 %v2196, %v2559
      %v2648 = vadd.f32 %v2201, %v2564
      %v2649 = vadd.f32 %v2204, %v2567
      %v2650 = vadd.f32 %v2209, %v2572
      %v2651 = vadd.f32 %v2212, %v2575
      %v2652 = vadd.f32 %v2217, %v2580
      %v2653 = vadd.f32 %v2220, %v2583
      %v2654 = vadd.f32 %v2225, %v2588
      %v2655 = vadd.f32 %v2228, %v2591
      %v2656 = vadd.f32 %v2233, %v2596
      %v2657 = vadd.f32 %v2236, %v2599
      %v2658 = vadd.f32 %v2241, %v2604
      %v2659 = vadd.f32 %v2244, %v2607
      %v2660 = vadd.f32 %v2249, %v2612
      %v2661 = vadd.f32 %v2252, %v2615
      %v2662 = vadd.f32 %v2257, %v2620
      %v2663 = vadd.f32 %v2260, %v2623
      %v2664 = vadd.f32 %v2265, %v2628
      %v2665 = vadd.f32 %v2268, %v2631
      %v2666 = vld [vmem:[#allocation4 + $0x8] sm:$0x80]
      %v2667 = vld [vmem:[#allocation4 + $0x10] sm:$0xff]
      %v2668 = vld [vmem:[#allocation4 + $0x18] sm:$0xff]
      %v2669 = vld [vmem:[#allocation4 + $0x20] sm:$0xff]
      %v2670 = vld [vmem:[#allocation4 + $0x28] sm:$0xff]
      %v2671 = vld [vmem:[#allocation4 + $0x30] sm:$0xff]
      %v2672 = vld [vmem:[#allocation4 + $0x38] sm:$0xff]
      %v2673 = vld [vmem:[#allocation4 + $0x40] sm:$0xff]
      %v2674 = vld [vmem:[#allocation4 + $0x48] sm:$0xff]
      %v2675 = vld [vmem:[#allocation4 + $0x50] sm:$0xff]
      %v2676 = vld [vmem:[#allocation4 + $0x58] sm:$0xff]
      %v2677 = vld [vmem:[#allocation4 + $0x60] sm:$0xff]
      %v2678 = vld [vmem:[#allocation4 + $0x68] sm:$0xff]
      %v2679 = vld [vmem:[#allocation4 + $0x70] sm:$0xff]
      %v2680 = vld [vmem:[#allocation4 + $0x78] sm:$0xff]
      %v2681 = vld [vmem:[#allocation4 + $0x80] sm:$0xff]
      %v2682 = vld [vmem:[#allocation4 + $0x88] sm:$0xff]
      %v2683 = vld [vmem:[%s1 + $0x28] sm:$0xf]
      %v2685 = vshrl.u32 %v2666, 16
      %v2687 = vrot.slane %v2685, 7
      %v2689 = vshrl.u32 %v2667, 16
      %v2691 = vrot.slane %v2689, 7
      %v2692 = vshll.u32 %v2667, 16
      %v2694 = vor.u32 %v2691, %v2692
      %v2695 = vsel %vm1926, %v2687, %v2694
      %v2697 = vshrl.u32 %v2668, 16
      %v2699 = vrot.slane %v2697, 7
      %v2700 = vshll.u32 %v2668, 16
      %v2702 = vor.u32 %v2699, %v2700
      %v2703 = vsel %vm1926, %v2691, %v2702
      %v2705 = vshrl.u32 %v2669, 16
      %v2707 = vrot.slane %v2705, 7
      %v2708 = vshll.u32 %v2669, 16
      %v2710 = vor.u32 %v2707, %v2708
      %v2711 = vsel %vm1926, %v2699, %v2710
      %v2713 = vshrl.u32 %v2670, 16
      %v2715 = vrot.slane %v2713, 7
      %v2716 = vshll.u32 %v2670, 16
      %v2718 = vor.u32 %v2715, %v2716
      %v2719 = vsel %vm1926, %v2707, %v2718
      %v2721 = vshrl.u32 %v2671, 16
      %v2723 = vrot.slane %v2721, 7
      %v2724 = vshll.u32 %v2671, 16
      %v2726 = vor.u32 %v2723, %v2724
      %v2727 = vsel %vm1926, %v2715, %v2726
      %v2729 = vshrl.u32 %v2672, 16
      %v2731 = vrot.slane %v2729, 7
      %v2732 = vshll.u32 %v2672, 16
      %v2734 = vor.u32 %v2731, %v2732
      %v2735 = vsel %vm1926, %v2723, %v2734
      %v2737 = vshrl.u32 %v2673, 16
      %v2739 = vrot.slane %v2737, 7
      %v2740 = vshll.u32 %v2673, 16
      %v2742 = vor.u32 %v2739, %v2740
      %v2743 = vsel %vm1926, %v2731, %v2742
      %v2745 = vshrl.u32 %v2674, 16
      %v2747 = vrot.slane %v2745, 7
      %v2748 = vshll.u32 %v2674, 16
      %v2750 = vor.u32 %v2747, %v2748
      %v2751 = vsel %vm1926, %v2739, %v2750
      %v2753 = vshrl.u32 %v2675, 16
      %v2755 = vrot.slane %v2753, 7
      %v2756 = vshll.u32 %v2675, 16
      %v2758 = vor.u32 %v2755, %v2756
      %v2759 = vsel %vm1926, %v2747, %v2758
      %v2761 = vshrl.u32 %v2676, 16
      %v2763 = vrot.slane %v2761, 7
      %v2764 = vshll.u32 %v2676, 16
      %v2766 = vor.u32 %v2763, %v2764
      %v2767 = vsel %vm1926, %v2755, %v2766
      %v2769 = vshrl.u32 %v2677, 16
      %v2771 = vrot.slane %v2769, 7
      %v2772 = vshll.u32 %v2677, 16
      %v2774 = vor.u32 %v2771, %v2772
      %v2775 = vsel %vm1926, %v2763, %v2774
      %v2777 = vshrl.u32 %v2678, 16
      %v2779 = vrot.slane %v2777, 7
      %v2780 = vshll.u32 %v2678, 16
      %v2782 = vor.u32 %v2779, %v2780
      %v2783 = vsel %vm1926, %v2771, %v2782
      %v2785 = vshrl.u32 %v2679, 16
      %v2787 = vrot.slane %v2785, 7
      %v2788 = vshll.u32 %v2679, 16
      %v2790 = vor.u32 %v2787, %v2788
      %v2791 = vsel %vm1926, %v2779, %v2790
      %v2793 = vshrl.u32 %v2680, 16
      %v2795 = vrot.slane %v2793, 7
      %v2796 = vshll.u32 %v2680, 16
      %v2798 = vor.u32 %v2795, %v2796
      %v2799 = vsel %vm1926, %v2787, %v2798
      %v2801 = vshrl.u32 %v2681, 16
      %v2803 = vrot.slane %v2801, 7
      %v2804 = vshll.u32 %v2681, 16
      %v2806 = vor.u32 %v2803, %v2804
      %v2807 = vsel %vm1926, %v2795, %v2806
      %v2809 = vshrl.u32 %v2682, 16
      %v2811 = vrot.slane %v2809, 7
      %v2812 = vshll.u32 %v2682, 16
      %v2814 = vor.u32 %v2811, %v2812
      %v2815 = vsel %vm1926, %v2803, %v2814
      %v2817 = vsel %vm279, %v2695, 0
      %v2820 = vsel %vm279, %v2703, 0
      %v2823 = vsel %vm279, %v2711, 0
      %v2826 = vsel %vm279, %v2719, 0
      %v2829 = vsel %vm279, %v2727, 0
      %v2832 = vsel %vm279, %v2735, 0
      %v2835 = vsel %vm279, %v2743, 0
      %v2838 = vsel %vm279, %v2751, 0
      %v2841 = vsel %vm279, %v2759, 0
      %v2844 = vsel %vm279, %v2767, 0
      %v2847 = vsel %vm279, %v2775, 0
      %v2850 = vsel %vm279, %v2783, 0
      %v2853 = vsel %vm279, %v2791, 0
      %v2856 = vsel %vm279, %v2799, 0
      %v2859 = vsel %vm279, %v2807, 0
      %v2862 = vsel %vm279, %v2815, 0
      %v2865 = vsel %vm446, %v2683, 0
      %2867 = vmatprep.subr.bf16.mxu0 0
      %2868 = vmatpush1.bf16.msra.mxu0 %v2865
      %2869 = vmatprep.subr.bf16.mxu0 0
      %2870 = vmatpush1.bf16.msra.mxu0 0
      %2871 = vmatprep.subr.bf16.mxu0 0
      %2872 = vmatpush1.bf16.msra.mxu0 0
      %2873 = vmatprep.subr.bf16.mxu0 0
      %2874 = vmatpush1.bf16.msra.mxu0 0
      %2875 = vmatprep.subr.bf16.mxu0 0
      %2876 = vmatpush1.bf16.msra.mxu0 0
      %2877 = vmatprep.subr.bf16.mxu0 0
      %2878 = vmatpush1.bf16.msra.mxu0 0
      %2879 = vmatprep.subr.bf16.mxu0 0
      %2880 = vmatpush1.bf16.msra.mxu0 0
      %2881 = vmatprep.subr.bf16.mxu0 0
      %2882 = vmatpush1.bf16.msra.mxu0 0
      %2883 = vmatprep.subr.bf16.mxu0 0
      %2884 = vmatpush1.bf16.msra.mxu0 0
      %2885 = vmatprep.subr.bf16.mxu0 0
      %2886 = vmatpush1.bf16.msra.mxu0 0
      %2887 = vmatprep.subr.bf16.mxu0 0
      %2888 = vmatpush1.bf16.msra.mxu0 0
      %2889 = vmatprep.subr.bf16.mxu0 0
      %2890 = vmatpush1.bf16.msra.mxu0 0
      %2891 = vmatprep.subr.bf16.mxu0 0
      %2892 = vmatpush1.bf16.msra.mxu0 0
      %2893 = vmatprep.subr.bf16.mxu0 0
      %2894 = vmatpush1.bf16.msra.mxu0 0
      %2895 = vmatprep.subr.bf16.mxu0 0
      %2896 = vmatpush1.bf16.msra.mxu0 0
      %2897 = vmatprep.subr.bf16.mxu0 0
      %2898 = vmatpush1.bf16.msra.mxu0 0
      %2899 = vmatprep.mubr.bf16.mxu0 0
      %2900 = vmatmul.mubr.bf16.gmra.mrb[0].mxu0 %v2817
      %v2901 = vpop.f32.mrb[0].mxu0
      %v2902 = vadd.f32 0.0, %v2901
      %v2903 = vpop.f32.mrb[0].mxu0
      %v2904 = vpop.f32.mrb[0].mxu0
      %v2905 = vadd.f32 0.0, %v2904
      %v2906 = vpop.f32.mrb[0].mxu0
      %2907 = vmatprep.mubr.bf16.mxu0 0
      %2908 = vmatmul.mubr.bf16.gmra.mrb[0].mxu0 %v2820
      %v2909 = vpop.f32.mrb[0].mxu0
      %v2910 = vadd.f32 0.0, %v2909
      %v2911 = vpop.f32.mrb[0].mxu0
      %v2912 = vpop.f32.mrb[0].mxu0
      %v2913 = vadd.f32 0.0, %v2912
      %v2914 = vpop.f32.mrb[0].mxu0
      %2915 = vmatprep.mubr.bf16.mxu0 0
      %2916 = vmatmul.mubr.bf16.gmra.mrb[0].mxu0 %v2823
      %v2917 = vpop.f32.mrb[0].mxu0
      %v2918 = vadd.f32 0.0, %v2917
      %v2919 = vpop.f32.mrb[0].mxu0
      %v2920 = vpop.f32.mrb[0].mxu0
      %v2921 = vadd.f32 0.0, %v2920
      %v2922 = vpop.f32.mrb[0].mxu0
      %2923 = vmatprep.mubr.bf16.mxu0 0
      %2924 = vmatmul.mubr.bf16.gmra.mrb[0].mxu0 %v2826
      %v2925 = vpop.f32.mrb[0].mxu0
      %v2926 = vadd.f32 0.0, %v2925
      %v2927 = vpop.f32.mrb[0].mxu0
      %v2928 = vpop.f32.mrb[0].mxu0
      %v2929 = vadd.f32 0.0, %v2928
      %v2930 = vpop.f32.mrb[0].mxu0
      %2931 = vmatprep.mubr.bf16.mxu0 0
      %2932 = vmatmul.mubr.bf16.gmra.mrb[0].mxu0 %v2829
      %v2933 = vpop.f32.mrb[0].mxu0
      %v2934 = vadd.f32 0.0, %v2933
      %v2935 = vpop.f32.mrb[0].mxu0
      %v2936 = vpop.f32.mrb[0].mxu0
      %v2937 = vadd.f32 0.0, %v2936
      %v2938 = vpop.f32.mrb[0].mxu0
      %2939 = vmatprep.mubr.bf16.mxu0 0
      %2940 = vmatmul.mubr.bf16.gmra.mrb[0].mxu0 %v2832
      %v2941 = vpop.f32.mrb[0].mxu0
      %v2942 = vadd.f32 0.0, %v2941
      %v2943 = vpop.f32.mrb[0].mxu0
      %v2944 = vpop.f32.mrb[0].mxu0
      %v2945 = vadd.f32 0.0, %v2944
      %v2946 = vpop.f32.mrb[0].mxu0
      %2947 = vmatprep.mubr.bf16.mxu0 0
      %2948 = vmatmul.mubr.bf16.gmra.mrb[0].mxu0 %v2835
      %v2949 = vpop.f32.mrb[0].mxu0
      %v2950 = vadd.f32 0.0, %v2949
      %v2951 = vpop.f32.mrb[0].mxu0
      %v2952 = vpop.f32.mrb[0].mxu0
      %v2953 = vadd.f32 0.0, %v2952
      %v2954 = vpop.f32.mrb[0].mxu0
      %2955 = vmatprep.mubr.bf16.mxu0 0
      %2956 = vmatmul.mubr.bf16.gmra.mrb[0].mxu0 %v2838
      %v2957 = vpop.f32.mrb[0].mxu0
      %v2958 = vadd.f32 0.0, %v2957
      %v2959 = vpop.f32.mrb[0].mxu0
      %v2960 = vpop.f32.mrb[0].mxu0
      %v2961 = vadd.f32 0.0, %v2960
      %v2962 = vpop.f32.mrb[0].mxu0
      %2963 = vmatprep.mubr.bf16.mxu0 0
      %2964 = vmatmul.mubr.bf16.gmra.mrb[0].mxu0 %v2841
      %v2965 = vpop.f32.mrb[0].mxu0
      %v2966 = vadd.f32 0.0, %v2965
      %v2967 = vpop.f32.mrb[0].mxu0
      %v2968 = vpop.f32.mrb[0].mxu0
      %v2969 = vadd.f32 0.0, %v2968
      %v2970 = vpop.f32.mrb[0].mxu0
      %2971 = vmatprep.mubr.bf16.mxu0 0
      %2972 = vmatmul.mubr.bf16.gmra.mrb[0].mxu0 %v2844
      %v2973 = vpop.f32.mrb[0].mxu0
      %v2974 = vadd.f32 0.0, %v2973
      %v2975 = vpop.f32.mrb[0].mxu0
      %v2976 = vpop.f32.mrb[0].mxu0
      %v2977 = vadd.f32 0.0, %v2976
      %v2978 = vpop.f32.mrb[0].mxu0
      %2979 = vmatprep.mubr.bf16.mxu0 0
      %2980 = vmatmul.mubr.bf16.gmra.mrb[0].mxu0 %v2847
      %v2981 = vpop.f32.mrb[0].mxu0
      %v2982 = vadd.f32 0.0, %v2981
      %v2983 = vpop.f32.mrb[0].mxu0
      %v2984 = vpop.f32.mrb[0].mxu0
      %v2985 = vadd.f32 0.0, %v2984
      %v2986 = vpop.f32.mrb[0].mxu0
      %2987 = vmatprep.mubr.bf16.mxu0 0
      %2988 = vmatmul.mubr.bf16.gmra.mrb[0].mxu0 %v2850
      %v2989 = vpop.f32.mrb[0].mxu0
      %v2990 = vadd.f32 0.0, %v2989
      %v2991 = vpop.f32.mrb[0].mxu0
      %v2992 = vpop.f32.mrb[0].mxu0
      %v2993 = vadd.f32 0.0, %v2992
      %v2994 = vpop.f32.mrb[0].mxu0
      %2995 = vmatprep.mubr.bf16.mxu0 0
      %2996 = vmatmul.mubr.bf16.gmra.mrb[0].mxu0 %v2853
      %v2997 = vpop.f32.mrb[0].mxu0
      %v2998 = vadd.f32 0.0, %v2997
      %v2999 = vpop.f32.mrb[0].mxu0
      %v3000 = vpop.f32.mrb[0].mxu0
      %v3001 = vadd.f32 0.0, %v3000
      %v3002 = vpop.f32.mrb[0].mxu0
      %3003 = vmatprep.mubr.bf16.mxu0 0
      %3004 = vmatmul.mubr.bf16.gmra.mrb[0].mxu0 %v2856
      %v3005 = vpop.f32.mrb[0].mxu0
      %v3006 = vadd.f32 0.0, %v3005
      %v3007 = vpop.f32.mrb[0].mxu0
      %v3008 = vpop.f32.mrb[0].mxu0
      %v3009 = vadd.f32 0.0, %v3008
      %v3010 = vpop.f32.mrb[0].mxu0
      %3011 = vmatprep.mubr.bf16.mxu0 0
      %3012 = vmatmul.mubr.bf16.gmra.mrb[0].mxu0 %v2859
      %v3013 = vpop.f32.mrb[0].mxu0
      %v3014 = vadd.f32 0.0, %v3013
      %v3015 = vpop.f32.mrb[0].mxu0
      %v3016 = vpop.f32.mrb[0].mxu0
      %v3017 = vadd.f32 0.0, %v3016
      %v3018 = vpop.f32.mrb[0].mxu0
      %3019 = vmatprep.mubr.bf16.mxu0 0
      %3020 = vmatmul.mubr.bf16.gmra.mrb[0].mxu0 %v2862
      %v3021 = vpop.f32.mrb[0].mxu0
      %v3022 = vadd.f32 0.0, %v3021
      %v3023 = vpop.f32.mrb[0].mxu0
      %v3024 = vpop.f32.mrb[0].mxu0
      %v3025 = vadd.f32 0.0, %v3024
      %v3026 = vpop.f32.mrb[0].mxu0
      %3027 = vdwg.mxu0
      %v3028 = vadd.f32 %v2634, %v2902
      %v3029 = vadd.f32 %v2635, %v2905
      %v3030 = vadd.f32 %v2636, %v2910
      %v3031 = vadd.f32 %v2637, %v2913
      %v3032 = vadd.f32 %v2638, %v2918
      %v3033 = vadd.f32 %v2639, %v2921
      %v3034 = vadd.f32 %v2640, %v2926
      %v3035 = vadd.f32 %v2641, %v2929
      %v3036 = vadd.f32 %v2642, %v2934
      %v3037 = vadd.f32 %v2643, %v2937
      %v3038 = vadd.f32 %v2644, %v2942
      %v3039 = vadd.f32 %v2645, %v2945
      %v3040 = vadd.f32 %v2646, %v2950
      %v3041 = vadd.f32 %v2647, %v2953
      %v3042 = vadd.f32 %v2648, %v2958
      %v3043 = vadd.f32 %v2649, %v2961
      %v3044 = vadd.f32 %v2650, %v2966
      %v3045 = vadd.f32 %v2651, %v2969
      %v3046 = vadd.f32 %v2652, %v2974
      %v3047 = vadd.f32 %v2653, %v2977
      %v3048 = vadd.f32 %v2654, %v2982
      %v3049 = vadd.f32 %v2655, %v2985
      %v3050 = vadd.f32 %v2656, %v2990
      %v3051 = vadd.f32 %v2657, %v2993
      %v3052 = vadd.f32 %v2658, %v2998
      %v3053 = vadd.f32 %v2659, %v3001
      %v3054 = vadd.f32 %v2660, %v3006
      %v3055 = vadd.f32 %v2661, %v3009
      %v3056 = vadd.f32 %v2662, %v3014
      %v3057 = vadd.f32 %v2663, %v3017
      %v3058 = vadd.f32 %v2664, %v3022
      %v3059 = vadd.f32 %v2665, %v3025
      %v3060 = vld [vmem:[#allocation3 + $0x10] sm:$0xff]
      %v3061 = vld [vmem:[#allocation3 + $0x18] sm:$0xff]
      %v3062 = vld [vmem:[#allocation3 + $0x20] sm:$0xff]
      %v3063 = vld [vmem:[#allocation3 + $0x28] sm:$0xff]
      %v3064 = vld [vmem:[#allocation3 + $0x30] sm:$0xff]
      %v3065 = vld [vmem:[#allocation3 + $0x38] sm:$0xff]
      %v3066 = vld [vmem:[#allocation3 + $0x40] sm:$0xff]
      %v3067 = vld [vmem:[#allocation3 + $0x48] sm:$0xff]
      %v3068 = vld [vmem:[#allocation3 + $0x50] sm:$0xff]
      %v3069 = vld [vmem:[#allocation3 + $0x58] sm:$0xff]
      %v3070 = vld [vmem:[#allocation3 + $0x60] sm:$0xff]
      %v3071 = vld [vmem:[#allocation3 + $0x68] sm:$0xff]
      %v3072 = vld [vmem:[#allocation3 + $0x70] sm:$0xff]
      %v3073 = vld [vmem:[#allocation3 + $0x78] sm:$0xff]
      %v3074 = vld [vmem:[#allocation3 + $0x80] sm:$0xff]
      %v3075 = vld [vmem:[#allocation3 + $0x88] sm:$0xff]
      %v3076 = vld [vmem:[%s1 + $0x30] sm:$0xf]
      %v3078 = vsel %vm279, %v3060, 0
      %v3081 = vsel %vm279, %v3061, 0
      %v3084 = vsel %vm279, %v3062, 0
      %v3087 = vsel %vm279, %v3063, 0
      %v3090 = vsel %vm279, %v3064, 0
      %v3093 = vsel %vm279, %v3065, 0
      %v3096 = vsel %vm279, %v3066, 0
      %v3099 = vsel %vm279, %v3067, 0
      %v3102 = vsel %vm279, %v3068, 0
      %v3105 = vsel %vm279, %v3069, 0
      %v3108 = vsel %vm279, %v3070, 0
      %v3111 = vsel %vm279, %v3071, 0
      %v3114 = vsel %vm279, %v3072, 0
      %v3117 = vsel %vm279, %v3073, 0
      %v3120 = vsel %vm279, %v3074, 0
      %v3123 = vsel %vm279, %v3075, 0
      %v3126 = vsel %vm446, %v3076, 0
      %3128 = vmatprep.subr.bf16.mxu0 0
      %3129 = vmatpush1.bf16.msra.mxu0 %v3126
      %3130 = vmatprep.subr.bf16.mxu0 0
      %3131 = vmatpush1.bf16.msra.mxu0 0
      %3132 = vmatprep.subr.bf16.mxu0 0
      %3133 = vmatpush1.bf16.msra.mxu0 0
      %3134 = vmatprep.subr.bf16.mxu0 0
      %3135 = vmatpush1.bf16.msra.mxu0 0
      %3136 = vmatprep.subr.bf16.mxu0 0
      %3137 = vmatpush1.bf16.msra.mxu0 0
      %3138 = vmatprep.subr.bf16.mxu0 0
      %3139 = vmatpush1.bf16.msra.mxu0 0
      %3140 = vmatprep.subr.bf16.mxu0 0
      %3141 = vmatpush1.bf16.msra.mxu0 0
      %3142 = vmatprep.subr.bf16.mxu0 0
      %3143 = vmatpush1.bf16.msra.mxu0 0
      %3144 = vmatprep.subr.bf16.mxu0 0
      %3145 = vmatpush1.bf16.msra.mxu0 0
      %3146 = vmatprep.subr.bf16.mxu0 0
      %3147 = vmatpush1.bf16.msra.mxu0 0
      %3148 = vmatprep.subr.bf16.mxu0 0
      %3149 = vmatpush1.bf16.msra.mxu0 0
      %3150 = vmatprep.subr.bf16.mxu0 0
      %3151 = vmatpush1.bf16.msra.mxu0 0
      %3152 = vmatprep.subr.bf16.mxu0 0
      %3153 = vmatpush1.bf16.msra.mxu0 0
      %3154 = vmatprep.subr.bf16.mxu0 0
      %3155 = vmatpush1.bf16.msra.mxu0 0
      %3156 = vmatprep.subr.bf16.mxu0 0
      %3157 = vmatpush1.bf16.msra.mxu0 0
      %3158 = vmatprep.subr.bf16.mxu0 0
      %3159 = vmatpush1.bf16.msra.mxu0 0
      %3160 = vmatprep.mubr.bf16.mxu0 0
      %3161 = vmatmul.mubr.bf16.gmra.mrb[0].mxu0 %v3078
      %v3162 = vpop.f32.mrb[0].mxu0
      %v3163 = vadd.f32 0.0, %v3162
      %v3164 = vpop.f32.mrb[0].mxu0
      %v3165 = vpop.f32.mrb[0].mxu0
      %v3166 = vadd.f32 0.0, %v3165
      %v3167 = vpop.f32.mrb[0].mxu0
      %3168 = vmatprep.mubr.bf16.mxu0 0
      %3169 = vmatmul.mubr.bf16.gmra.mrb[0].mxu0 %v3081
      %v3170 = vpop.f32.mrb[0].mxu0
      %v3171 = vadd.f32 0.0, %v3170
      %v3172 = vpop.f32.mrb[0].mxu0
      %v3173 = vpop.f32.mrb[0].mxu0
      %v3174 = vadd.f32 0.0, %v3173
      %v3175 = vpop.f32.mrb[0].mxu0
      %3176 = vmatprep.mubr.bf16.mxu0 0
      %3177 = vmatmul.mubr.bf16.gmra.mrb[0].mxu0 %v3084
      %v3178 = vpop.f32.mrb[0].mxu0
      %v3179 = vadd.f32 0.0, %v3178
      %v3180 = vpop.f32.mrb[0].mxu0
      %v3181 = vpop.f32.mrb[0].mxu0
      %v3182 = vadd.f32 0.0, %v3181
      %v3183 = vpop.f32.mrb[0].mxu0
      %3184 = vmatprep.mubr.bf16.mxu0 0
      %3185 = vmatmul.mubr.bf16.gmra.mrb[0].mxu0 %v3087
      %v3186 = vpop.f32.mrb[0].mxu0
      %v3187 = vadd.f32 0.0, %v3186
      %v3188 = vpop.f32.mrb[0].mxu0
      %v3189 = vpop.f32.mrb[0].mxu0
      %v3190 = vadd.f32 0.0, %v3189
      %v3191 = vpop.f32.mrb[0].mxu0
      %3192 = vmatprep.mubr.bf16.mxu0 0
      %3193 = vmatmul.mubr.bf16.gmra.mrb[0].mxu0 %v3090
      %v3194 = vpop.f32.mrb[0].mxu0
      %v3195 = vadd.f32 0.0, %v3194
      %v3196 = vpop.f32.mrb[0].mxu0
      %v3197 = vpop.f32.mrb[0].mxu0
      %v3198 = vadd.f32 0.0, %v3197
      %v3199 = vpop.f32.mrb[0].mxu0
      %3200 = vmatprep.mubr.bf16.mxu0 0
      %3201 = vmatmul.mubr.bf16.gmra.mrb[0].mxu0 %v3093
      %v3202 = vpop.f32.mrb[0].mxu0
      %v3203 = vadd.f32 0.0, %v3202
      %v3204 = vpop.f32.mrb[0].mxu0
      %v3205 = vpop.f32.mrb[0].mxu0
      %v3206 = vadd.f32 0.0, %v3205
      %v3207 = vpop.f32.mrb[0].mxu0
      %3208 = vmatprep.mubr.bf16.mxu0 0
      %3209 = vmatmul.mubr.bf16.gmra.mrb[0].mxu0 %v3096
      %v3210 = vpop.f32.mrb[0].mxu0
      %v3211 = vadd.f32 0.0, %v3210
      %v3212 = vpop.f32.mrb[0].mxu0
      %v3213 = vpop.f32.mrb[0].mxu0
      %v3214 = vadd.f32 0.0, %v3213
      %v3215 = vpop.f32.mrb[0].mxu0
      %3216 = vmatprep.mubr.bf16.mxu0 0
      %3217 = vmatmul.mubr.bf16.gmra.mrb[0].mxu0 %v3099
      %v3218 = vpop.f32.mrb[0].mxu0
      %v3219 = vadd.f32 0.0, %v3218
      %v3220 = vpop.f32.mrb[0].mxu0
      %v3221 = vpop.f32.mrb[0].mxu0
      %v3222 = vadd.f32 0.0, %v3221
      %v3223 = vpop.f32.mrb[0].mxu0
      %3224 = vmatprep.mubr.bf16.mxu0 0
      %3225 = vmatmul.mubr.bf16.gmra.mrb[0].mxu0 %v3102
      %v3226 = vpop.f32.mrb[0].mxu0
      %v3227 = vadd.f32 0.0, %v3226
      %v3228 = vpop.f32.mrb[0].mxu0
      %v3229 = vpop.f32.mrb[0].mxu0
      %v3230 = vadd.f32 0.0, %v3229
      %v3231 = vpop.f32.mrb[0].mxu0
      %3232 = vmatprep.mubr.bf16.mxu0 0
      %3233 = vmatmul.mubr.bf16.gmra.mrb[0].mxu0 %v3105
      %v3234 = vpop.f32.mrb[0].mxu0
      %v3235 = vadd.f32 0.0, %v3234
      %v3236 = vpop.f32.mrb[0].mxu0
      %v3237 = vpop.f32.mrb[0].mxu0
      %v3238 = vadd.f32 0.0, %v3237
      %v3239 = vpop.f32.mrb[0].mxu0
      %3240 = vmatprep.mubr.bf16.mxu0 0
      %3241 = vmatmul.mubr.bf16.gmra.mrb[0].mxu0 %v3108
      %v3242 = vpop.f32.mrb[0].mxu0
      %v3243 = vadd.f32 0.0, %v3242
      %v3244 = vpop.f32.mrb[0].mxu0
      %v3245 = vpop.f32.mrb[0].mxu0
      %v3246 = vadd.f32 0.0, %v3245
      %v3247 = vpop.f32.mrb[0].mxu0
      %3248 = vmatprep.mubr.bf16.mxu0 0
      %3249 = vmatmul.mubr.bf16.gmra.mrb[0].mxu0 %v3111
      %v3250 = vpop.f32.mrb[0].mxu0
      %v3251 = vadd.f32 0.0, %v3250
      %v3252 = vpop.f32.mrb[0].mxu0
      %v3253 = vpop.f32.mrb[0].mxu0
      %v3254 = vadd.f32 0.0, %v3253
      %v3255 = vpop.f32.mrb[0].mxu0
      %3256 = vmatprep.mubr.bf16.mxu0 0
      %3257 = vmatmul.mubr.bf16.gmra.mrb[0].mxu0 %v3114
      %v3258 = vpop.f32.mrb[0].mxu0
      %v3259 = vadd.f32 0.0, %v3258
      %v3260 = vpop.f32.mrb[0].mxu0
      %v3261 = vpop.f32.mrb[0].mxu0
      %v3262 = vadd.f32 0.0, %v3261
      %v3263 = vpop.f32.mrb[0].mxu0
      %3264 = vmatprep.mubr.bf16.mxu0 0
      %3265 = vmatmul.mubr.bf16.gmra.mrb[0].mxu0 %v3117
      %v3266 = vpop.f32.mrb[0].mxu0
      %v3267 = vadd.f32 0.0, %v3266
      %v3268 = vpop.f32.mrb[0].mxu0
      %v3269 = vpop.f32.mrb[0].mxu0
      %v3270 = vadd.f32 0.0, %v3269
      %v3271 = vpop.f32.mrb[0].mxu0
      %3272 = vmatprep.mubr.bf16.mxu0 0
      %3273 = vmatmul.mubr.bf16.gmra.mrb[0].mxu0 %v3120
      %v3274 = vpop.f32.mrb[0].mxu0
      %v3275 = vadd.f32 0.0, %v3274
      %v3276 = vpop.f32.mrb[0].mxu0
      %v3277 = vpop.f32.mrb[0].mxu0
      %v3278 = vadd.f32 0.0, %v3277
      %v3279 = vpop.f32.mrb[0].mxu0
      %3280 = vmatprep.mubr.bf16.mxu0 0
      %3281 = vmatmul.mubr.bf16.gmra.mrb[0].mxu0 %v3123
      %v3282 = vpop.f32.mrb[0].mxu0
      %v3283 = vadd.f32 0.0, %v3282
      %v3284 = vpop.f32.mrb[0].mxu0
      %v3285 = vpop.f32.mrb[0].mxu0
      %v3286 = vadd.f32 0.0, %v3285
      %v3287 = vpop.f32.mrb[0].mxu0
      %3288 = vdwg.mxu0
      %v3289 = vadd.f32 %v3028, %v3163
      %v3290 = vadd.f32 %v3029, %v3166
      %v3291 = vadd.f32 %v3030, %v3171
      %v3292 = vadd.f32 %v3031, %v3174
      %v3293 = vadd.f32 %v3032, %v3179
      %v3294 = vadd.f32 %v3033, %v3182
      %v3295 = vadd.f32 %v3034, %v3187
      %v3296 = vadd.f32 %v3035, %v3190
      %v3297 = vadd.f32 %v3036, %v3195
      %v3298 = vadd.f32 %v3037, %v3198
      %v3299 = vadd.f32 %v3038, %v3203
      %v3300 = vadd.f32 %v3039, %v3206
      %v3301 = vadd.f32 %v3040, %v3211
      %v3302 = vadd.f32 %v3041, %v3214
      %v3303 = vadd.f32 %v3042, %v3219
      %v3304 = vadd.f32 %v3043, %v3222
      %v3305 = vadd.f32 %v3044, %v3227
      %v3306 = vadd.f32 %v3045, %v3230
      %v3307 = vadd.f32 %v3046, %v3235
      %v3308 = vadd.f32 %v3047, %v3238
      %v3309 = vadd.f32 %v3048, %v3243
      %v3310 = vadd.f32 %v3049, %v3246
      %v3311 = vadd.f32 %v3050, %v3251
      %v3312 = vadd.f32 %v3051, %v3254
      %v3313 = vadd.f32 %v3052, %v3259
      %v3314 = vadd.f32 %v3053, %v3262
      %v3315 = vadd.f32 %v3054, %v3267
      %v3316 = vadd.f32 %v3055, %v3270
      %v3317 = vadd.f32 %v3056, %v3275
      %v3318 = vadd.f32 %v3057, %v3278
      %v3319 = vadd.f32 %v3058, %v3283
      %v3320 = vadd.f32 %v3059, %v3286
      %v3321 = vld [vmem:[#allocation5 + $0x10] sm:$0xff]
      %v3322 = vld [vmem:[#allocation5 + $0x18] sm:$0xff]
      %v3323 = vld [vmem:[#allocation5 + $0x20] sm:$0xff]
      %v3324 = vld [vmem:[#allocation5 + $0x28] sm:$0xff]
      %v3325 = vld [vmem:[#allocation5 + $0x30] sm:$0xff]
      %v3326 = vld [vmem:[#allocation5 + $0x38] sm:$0xff]
      %v3327 = vld [vmem:[#allocation5 + $0x40] sm:$0xff]
      %v3328 = vld [vmem:[#allocation5 + $0x48] sm:$0xff]
      %v3329 = vld [vmem:[#allocation5 + $0x50] sm:$0xff]
      %v3330 = vld [vmem:[#allocation5 + $0x58] sm:$0xff]
      %v3331 = vld [vmem:[#allocation5 + $0x60] sm:$0xff]
      %v3332 = vld [vmem:[#allocation5 + $0x68] sm:$0xff]
      %v3333 = vld [vmem:[#allocation5 + $0x70] sm:$0xff]
      %v3334 = vld [vmem:[#allocation5 + $0x78] sm:$0xff]
      %v3335 = vld [vmem:[#allocation5 + $0x80] sm:$0xff]
      %v3336 = vld [vmem:[#allocation5 + $0x88] sm:$0xff]
      %v3337 = vld [vmem:[#allocation5 + $0x90] sm:$0x1]
      %v3338 = vld [vmem:[%s1 + $0x38] sm:$0xf]
      %v3340 = vshrl.u32 %v3321, 16
      %v3342 = vshll.u32 %v3321, 16
      %v3344 = vrot.slane %v3342, 1
      %v3345 = vor.u32 %v3340, %v3344
      %v3347 = vshll.u32 %v3322, 16
      %v3349 = vrot.slane %v3347, 1
      %v3350 = vsel %vm2289, %v3345, %v3349
      %v3351 = vshrl.u32 %v3322, 16
      %v3353 = vor.u32 %v3351, %v3349
      %v3355 = vshll.u32 %v3323, 16
      %v3357 = vrot.slane %v3355, 1
      %v3358 = vsel %vm2289, %v3353, %v3357
      %v3359 = vshrl.u32 %v3323, 16
      %v3361 = vor.u32 %v3359, %v3357
      %v3363 = vshll.u32 %v3324, 16
      %v3365 = vrot.slane %v3363, 1
      %v3366 = vsel %vm2289, %v3361, %v3365
      %v3367 = vshrl.u32 %v3324, 16
      %v3369 = vor.u32 %v3367, %v3365
      %v3371 = vshll.u32 %v3325, 16
      %v3373 = vrot.slane %v3371, 1
      %v3374 = vsel %vm2289, %v3369, %v3373
      %v3375 = vshrl.u32 %v3325, 16
      %v3377 = vor.u32 %v3375, %v3373
      %v3379 = vshll.u32 %v3326, 16
      %v3381 = vrot.slane %v3379, 1
      %v3382 = vsel %vm2289, %v3377, %v3381
      %v3383 = vshrl.u32 %v3326, 16
      %v3385 = vor.u32 %v3383, %v3381
      %v3387 = vshll.u32 %v3327, 16
      %v3389 = vrot.slane %v3387, 1
      %v3390 = vsel %vm2289, %v3385, %v3389
      %v3391 = vshrl.u32 %v3327, 16
      %v3393 = vor.u32 %v3391, %v3389
      %v3395 = vshll.u32 %v3328, 16
      %v3397 = vrot.slane %v3395, 1
      %v3398 = vsel %vm2289, %v3393, %v3397
      %v3399 = vshrl.u32 %v3328, 16
      %v3401 = vor.u32 %v3399, %v3397
      %v3403 = vshll.u32 %v3329, 16
      %v3405 = vrot.slane %v3403, 1
      %v3406 = vsel %vm2289, %v3401, %v3405
      %v3407 = vshrl.u32 %v3329, 16
      %v3409 = vor.u32 %v3407, %v3405
      %v3411 = vshll.u32 %v3330, 16
      %v3413 = vrot.slane %v3411, 1
      %v3414 = vsel %vm2289, %v3409, %v3413
      %v3415 = vshrl.u32 %v3330, 16
      %v3417 = vor.u32 %v3415, %v3413
      %v3419 = vshll.u32 %v3331, 16
      %v3421 = vrot.slane %v3419, 1
      %v3422 = vsel %vm2289, %v3417, %v3421
      %v3423 = vshrl.u32 %v3331, 16
      %v3425 = vor.u32 %v3423, %v3421
      %v3427 = vshll.u32 %v3332, 16
      %v3429 = vrot.slane %v3427, 1
      %v3430 = vsel %vm2289, %v3425, %v3429
      %v3431 = vshrl.u32 %v3332, 16
      %v3433 = vor.u32 %v3431, %v3429
      %v3435 = vshll.u32 %v3333, 16
      %v3437 = vrot.slane %v3435, 1
      %v3438 = vsel %vm2289, %v3433, %v3437
      %v3439 = vshrl.u32 %v3333, 16
      %v3441 = vor.u32 %v3439, %v3437
      %v3443 = vshll.u32 %v3334, 16
      %v3445 = vrot.slane %v3443, 1
      %v3446 = vsel %vm2289, %v3441, %v3445
      %v3447 = vshrl.u32 %v3334, 16
      %v3449 = vor.u32 %v3447, %v3445
      %v3451 = vshll.u32 %v3335, 16
      %v3453 = vrot.slane %v3451, 1
      %v3454 = vsel %vm2289, %v3449, %v3453
      %v3455 = vshrl.u32 %v3335, 16
      %v3457 = vor.u32 %v3455, %v3453
      %v3459 = vshll.u32 %v3336, 16
      %v3461 = vrot.slane %v3459, 1
      %v3462 = vsel %vm2289, %v3457, %v3461
      %v3463 = vshrl.u32 %v3336, 16
      %v3465 = vor.u32 %v3463, %v3461
      %v3467 = vshll.u32 %v3337, 16
      %v3469 = vrot.slane %v3467, 1
      %v3470 = vsel %vm2289, %v3465, %v3469
      %v3472 = vsel %vm279, %v3350, 0
      %v3475 = vsel %vm279, %v3358, 0
      %v3478 = vsel %vm279, %v3366, 0
      %v3481 = vsel %vm279, %v3374, 0
      %v3484 = vsel %vm279, %v3382, 0
      %v3487 = vsel %vm279, %v3390, 0
      %v3490 = vsel %vm279, %v3398, 0
      %v3493 = vsel %vm279, %v3406, 0
      %v3496 = vsel %vm279, %v3414, 0
      %v3499 = vsel %vm279, %v3422, 0
      %v3502 = vsel %vm279, %v3430, 0
      %v3505 = vsel %vm279, %v3438, 0
      %v3508 = vsel %vm279, %v3446, 0
      %v3511 = vsel %vm279, %v3454, 0
      %v3514 = vsel %vm279, %v3462, 0
      %v3517 = vsel %vm279, %v3470, 0
      %v3520 = vsel %vm446, %v3338, 0
      %3522 = vmatprep.subr.bf16.mxu0 0
      %3523 = vmatpush1.bf16.msra.mxu0 %v3520
      %3524 = vmatprep.subr.bf16.mxu0 0
      %3525 = vmatpush1.bf16.msra.mxu0 0
      %3526 = vmatprep.subr.bf16.mxu0 0
      %3527 = vmatpush1.bf16.msra.mxu0 0
      %3528 = vmatprep.subr.bf16.mxu0 0
      %3529 = vmatpush1.bf16.msra.mxu0 0
      %3530 = vmatprep.subr.bf16.mxu0 0
      %3531 = vmatpush1.bf16.msra.mxu0 0
      %3532 = vmatprep.subr.bf16.mxu0 0
      %3533 = vmatpush1.bf16.msra.mxu0 0
      %3534 = vmatprep.subr.bf16.mxu0 0
      %3535 = vmatpush1.bf16.msra.mxu0 0
      %3536 = vmatprep.subr.bf16.mxu0 0
      %3537 = vmatpush1.bf16.msra.mxu0 0
      %3538 = vmatprep.subr.bf16.mxu0 0
      %3539 = vmatpush1.bf16.msra.mxu0 0
      %3540 = vmatprep.subr.bf16.mxu0 0
      %3541 = vmatpush1.bf16.msra.mxu0 0
      %3542 = vmatprep.subr.bf16.mxu0 0
      %3543 = vmatpush1.bf16.msra.mxu0 0
      %3544 = vmatprep.subr.bf16.mxu0 0
      %3545 = vmatpush1.bf16.msra.mxu0 0
      %3546 = vmatprep.subr.bf16.mxu0 0
      %3547 = vmatpush1.bf16.msra.mxu0 0
      %3548 = vmatprep.subr.bf16.mxu0 0
      %3549 = vmatpush1.bf16.msra.mxu0 0
      %3550 = vmatprep.subr.bf16.mxu0 0
      %3551 = vmatpush1.bf16.msra.mxu0 0
      %3552 = vmatprep.subr.bf16.mxu0 0
      %3553 = vmatpush1.bf16.msra.mxu0 0
      %3554 = vmatprep.mubr.bf16.mxu0 0
      %3555 = vmatmul.mubr.bf16.gmra.mrb[0].mxu0 %v3472
      %v3556 = vpop.f32.mrb[0].mxu0
      %v3557 = vadd.f32 0.0, %v3556
      %v3558 = vpop.f32.mrb[0].mxu0
      %v3559 = vpop.f32.mrb[0].mxu0
      %v3560 = vadd.f32 0.0, %v3559
      %v3561 = vpop.f32.mrb[0].mxu0
      %3562 = vmatprep.mubr.bf16.mxu0 0
      %3563 = vmatmul.mubr.bf16.gmra.mrb[0].mxu0 %v3475
      %v3564 = vpop.f32.mrb[0].mxu0
      %v3565 = vadd.f32 0.0, %v3564
      %v3566 = vpop.f32.mrb[0].mxu0
      %v3567 = vpop.f32.mrb[0].mxu0
      %v3568 = vadd.f32 0.0, %v3567
      %v3569 = vpop.f32.mrb[0].mxu0
      %3570 = vmatprep.mubr.bf16.mxu0 0
      %3571 = vmatmul.mubr.bf16.gmra.mrb[0].mxu0 %v3478
      %v3572 = vpop.f32.mrb[0].mxu0
      %v3573 = vadd.f32 0.0, %v3572
      %v3574 = vpop.f32.mrb[0].mxu0
      %v3575 = vpop.f32.mrb[0].mxu0
      %v3576 = vadd.f32 0.0, %v3575
      %v3577 = vpop.f32.mrb[0].mxu0
      %3578 = vmatprep.mubr.bf16.mxu0 0
      %3579 = vmatmul.mubr.bf16.gmra.mrb[0].mxu0 %v3481
      %v3580 = vpop.f32.mrb[0].mxu0
      %v3581 = vadd.f32 0.0, %v3580
      %v3582 = vpop.f32.mrb[0].mxu0
      %v3583 = vpop.f32.mrb[0].mxu0
      %v3584 = vadd.f32 0.0, %v3583
      %v3585 = vpop.f32.mrb[0].mxu0
      %3586 = vmatprep.mubr.bf16.mxu0 0
      %3587 = vmatmul.mubr.bf16.gmra.mrb[0].mxu0 %v3484
      %v3588 = vpop.f32.mrb[0].mxu0
      %v3589 = vadd.f32 0.0, %v3588
      %v3590 = vpop.f32.mrb[0].mxu0
      %v3591 = vpop.f32.mrb[0].mxu0
      %v3592 = vadd.f32 0.0, %v3591
      %v3593 = vpop.f32.mrb[0].mxu0
      %3594 = vmatprep.mubr.bf16.mxu0 0
      %3595 = vmatmul.mubr.bf16.gmra.mrb[0].mxu0 %v3487
      %v3596 = vpop.f32.mrb[0].mxu0
      %v3597 = vadd.f32 0.0, %v3596
      %v3598 = vpop.f32.mrb[0].mxu0
      %v3599 = vpop.f32.mrb[0].mxu0
      %v3600 = vadd.f32 0.0, %v3599
      %v3601 = vpop.f32.mrb[0].mxu0
      %3602 = vmatprep.mubr.bf16.mxu0 0
      %3603 = vmatmul.mubr.bf16.gmra.mrb[0].mxu0 %v3490
      %v3604 = vpop.f32.mrb[0].mxu0
      %v3605 = vadd.f32 0.0, %v3604
      %v3606 = vpop.f32.mrb[0].mxu0
      %v3607 = vpop.f32.mrb[0].mxu0
      %v3608 = vadd.f32 0.0, %v3607
      %v3609 = vpop.f32.mrb[0].mxu0
      %3610 = vmatprep.mubr.bf16.mxu0 0
      %3611 = vmatmul.mubr.bf16.gmra.mrb[0].mxu0 %v3493
      %v3612 = vpop.f32.mrb[0].mxu0
      %v3613 = vadd.f32 0.0, %v3612
      %v3614 = vpop.f32.mrb[0].mxu0
      %v3615 = vpop.f32.mrb[0].mxu0
      %v3616 = vadd.f32 0.0, %v3615
      %v3617 = vpop.f32.mrb[0].mxu0
      %3618 = vmatprep.mubr.bf16.mxu0 0
      %3619 = vmatmul.mubr.bf16.gmra.mrb[0].mxu0 %v3496
      %v3620 = vpop.f32.mrb[0].mxu0
      %v3621 = vadd.f32 0.0, %v3620
      %v3622 = vpop.f32.mrb[0].mxu0
      %v3623 = vpop.f32.mrb[0].mxu0
      %v3624 = vadd.f32 0.0, %v3623
      %v3625 = vpop.f32.mrb[0].mxu0
      %3626 = vmatprep.mubr.bf16.mxu0 0
      %3627 = vmatmul.mubr.bf16.gmra.mrb[0].mxu0 %v3499
      %v3628 = vpop.f32.mrb[0].mxu0
      %v3629 = vadd.f32 0.0, %v3628
      %v3630 = vpop.f32.mrb[0].mxu0
      %v3631 = vpop.f32.mrb[0].mxu0
      %v3632 = vadd.f32 0.0, %v3631
      %v3633 = vpop.f32.mrb[0].mxu0
      %3634 = vmatprep.mubr.bf16.mxu0 0
      %3635 = vmatmul.mubr.bf16.gmra.mrb[0].mxu0 %v3502
      %v3636 = vpop.f32.mrb[0].mxu0
      %v3637 = vadd.f32 0.0, %v3636
      %v3638 = vpop.f32.mrb[0].mxu0
      %v3639 = vpop.f32.mrb[0].mxu0
      %v3640 = vadd.f32 0.0, %v3639
      %v3641 = vpop.f32.mrb[0].mxu0
      %3642 = vmatprep.mubr.bf16.mxu0 0
      %3643 = vmatmul.mubr.bf16.gmra.mrb[0].mxu0 %v3505
      %v3644 = vpop.f32.mrb[0].mxu0
      %v3645 = vadd.f32 0.0, %v3644
      %v3646 = vpop.f32.mrb[0].mxu0
      %v3647 = vpop.f32.mrb[0].mxu0
      %v3648 = vadd.f32 0.0, %v3647
      %v3649 = vpop.f32.mrb[0].mxu0
      %3650 = vmatprep.mubr.bf16.mxu0 0
      %3651 = vmatmul.mubr.bf16.gmra.mrb[0].mxu0 %v3508
      %v3652 = vpop.f32.mrb[0].mxu0
      %v3653 = vadd.f32 0.0, %v3652
      %v3654 = vpop.f32.mrb[0].mxu0
      %v3655 = vpop.f32.mrb[0].mxu0
      %v3656 = vadd.f32 0.0, %v3655
      %v3657 = vpop.f32.mrb[0].mxu0
      %3658 = vmatprep.mubr.bf16.mxu0 0
      %3659 = vmatmul.mubr.bf16.gmra.mrb[0].mxu0 %v3511
      %v3660 = vpop.f32.mrb[0].mxu0
      %v3661 = vadd.f32 0.0, %v3660
      %v3662 = vpop.f32.mrb[0].mxu0
      %v3663 = vpop.f32.mrb[0].mxu0
      %v3664 = vadd.f32 0.0, %v3663
      %v3665 = vpop.f32.mrb[0].mxu0
      %3666 = vmatprep.mubr.bf16.mxu0 0
      %3667 = vmatmul.mubr.bf16.gmra.mrb[0].mxu0 %v3514
      %v3668 = vpop.f32.mrb[0].mxu0
      %v3669 = vadd.f32 0.0, %v3668
      %v3670 = vpop.f32.mrb[0].mxu0
      %v3671 = vpop.f32.mrb[0].mxu0
      %v3672 = vadd.f32 0.0, %v3671
      %v3673 = vpop.f32.mrb[0].mxu0
      %3674 = vmatprep.mubr.bf16.mxu0 0
      %3675 = vmatmul.mubr.bf16.gmra.mrb[0].mxu0 %v3517
      %v3676 = vpop.f32.mrb[0].mxu0
      %v3677 = vadd.f32 0.0, %v3676
      %v3678 = vpop.f32.mrb[0].mxu0
      %v3679 = vpop.f32.mrb[0].mxu0
      %v3680 = vadd.f32 0.0, %v3679
      %v3681 = vpop.f32.mrb[0].mxu0
      %3682 = vdwg.mxu0
      %v3683 = vadd.f32 %v3289, %v3557
      %v3684 = vadd.f32 %v3290, %v3560
      %v3685 = vadd.f32 %v3291, %v3565
      %v3686 = vadd.f32 %v3292, %v3568
      %v3687 = vadd.f32 %v3293, %v3573
      %v3688 = vadd.f32 %v3294, %v3576
      %v3689 = vadd.f32 %v3295, %v3581
      %v3690 = vadd.f32 %v3296, %v3584
      %v3691 = vadd.f32 %v3297, %v3589
      %v3692 = vadd.f32 %v3298, %v3592
      %v3693 = vadd.f32 %v3299, %v3597
      %v3694 = vadd.f32 %v3300, %v3600
      %v3695 = vadd.f32 %v3301, %v3605
      %v3696 = vadd.f32 %v3302, %v3608
      %v3697 = vadd.f32 %v3303, %v3613
      %v3698 = vadd.f32 %v3304, %v3616
      %v3699 = vadd.f32 %v3305, %v3621
      %v3700 = vadd.f32 %v3306, %v3624
      %v3701 = vadd.f32 %v3307, %v3629
      %v3702 = vadd.f32 %v3308, %v3632
      %v3703 = vadd.f32 %v3309, %v3637
      %v3704 = vadd.f32 %v3310, %v3640
      %v3705 = vadd.f32 %v3311, %v3645
      %v3706 = vadd.f32 %v3312, %v3648
      %v3707 = vadd.f32 %v3313, %v3653
      %v3708 = vadd.f32 %v3314, %v3656
      %v3709 = vadd.f32 %v3315, %v3661
      %v3710 = vadd.f32 %v3316, %v3664
      %v3711 = vadd.f32 %v3317, %v3669
      %v3712 = vadd.f32 %v3318, %v3672
      %v3713 = vadd.f32 %v3319, %v3677
      %v3714 = vadd.f32 %v3320, %v3680
      %v3715 = vld [vmem:[#allocation4 + $0x10] sm:$0x80]
      %v3716 = vld [vmem:[#allocation4 + $0x18] sm:$0xff]
      %v3717 = vld [vmem:[#allocation4 + $0x20] sm:$0xff]
      %v3718 = vld [vmem:[#allocation4 + $0x28] sm:$0xff]
      %v3719 = vld [vmem:[#allocation4 + $0x30] sm:$0xff]
      %v3720 = vld [vmem:[#allocation4 + $0x38] sm:$0xff]
      %v3721 = vld [vmem:[#allocation4 + $0x40] sm:$0xff]
      %v3722 = vld [vmem:[#allocation4 + $0x48] sm:$0xff]
      %v3723 = vld [vmem:[#allocation4 + $0x50] sm:$0xff]
      %v3724 = vld [vmem:[#allocation4 + $0x58] sm:$0xff]
      %v3725 = vld [vmem:[#allocation4 + $0x60] sm:$0xff]
      %v3726 = vld [vmem:[#allocation4 + $0x68] sm:$0xff]
      %v3727 = vld [vmem:[#allocation4 + $0x70] sm:$0xff]
      %v3728 = vld [vmem:[#allocation4 + $0x78] sm:$0xff]
      %v3729 = vld [vmem:[#allocation4 + $0x80] sm:$0xff]
      %v3730 = vld [vmem:[#allocation4 + $0x88] sm:$0xff]
      %v3731 = vld [vmem:[#allocation4 + $0x90] sm:$0xff]
      %v3732 = vld [vmem:[%s1 + $0x40] sm:$0xf]
      %v3734 = vshrl.u32 %v3715, 16
      %v3736 = vrot.slane %v3734, 7
      %v3738 = vshrl.u32 %v3716, 16
      %v3740 = vrot.slane %v3738, 7
      %v3741 = vshll.u32 %v3716, 16
      %v3743 = vor.u32 %v3740, %v3741
      %v3744 = vsel %vm1926, %v3736, %v3743
      %v3746 = vshrl.u32 %v3717, 16
      %v3748 = vrot.slane %v3746, 7
      %v3749 = vshll.u32 %v3717, 16
      %v3751 = vor.u32 %v3748, %v3749
      %v3752 = vsel %vm1926, %v3740, %v3751
      %v3754 = vshrl.u32 %v3718, 16
      %v3756 = vrot.slane %v3754, 7
      %v3757 = vshll.u32 %v3718, 16
      %v3759 = vor.u32 %v3756, %v3757
      %v3760 = vsel %vm1926, %v3748, %v3759
      %v3762 = vshrl.u32 %v3719, 16
      %v3764 = vrot.slane %v3762, 7
      %v3765 = vshll.u32 %v3719, 16
      %v3767 = vor.u32 %v3764, %v3765
      %v3768 = vsel %vm1926, %v3756, %v3767
      %v3770 = vshrl.u32 %v3720, 16
      %v3772 = vrot.slane %v3770, 7
      %v3773 = vshll.u32 %v3720, 16
      %v3775 = vor.u32 %v3772, %v3773
      %v3776 = vsel %vm1926, %v3764, %v3775
      %v3778 = vshrl.u32 %v3721, 16
      %v3780 = vrot.slane %v3778, 7
      %v3781 = vshll.u32 %v3721, 16
      %v3783 = vor.u32 %v3780, %v3781
      %v3784 = vsel %vm1926, %v3772, %v3783
      %v3786 = vshrl.u32 %v3722, 16
      %v3788 = vrot.slane %v3786, 7
      %v3789 = vshll.u32 %v3722, 16
      %v3791 = vor.u32 %v3788, %v3789
      %v3792 = vsel %vm1926, %v3780, %v3791
      %v3794 = vshrl.u32 %v3723, 16
      %v3796 = vrot.slane %v3794, 7
      %v3797 = vshll.u32 %v3723, 16
      %v3799 = vor.u32 %v3796, %v3797
      %v3800 = vsel %vm1926, %v3788, %v3799
      %v3802 = vshrl.u32 %v3724, 16
      %v3804 = vrot.slane %v3802, 7
      %v3805 = vshll.u32 %v3724, 16
      %v3807 = vor.u32 %v3804, %v3805
      %v3808 = vsel %vm1926, %v3796, %v3807
      %v3810 = vshrl.u32 %v3725, 16
      %v3812 = vrot.slane %v3810, 7
      %v3813 = vshll.u32 %v3725, 16
      %v3815 = vor.u32 %v3812, %v3813
      %v3816 = vsel %vm1926, %v3804, %v3815
      %v3818 = vshrl.u32 %v3726, 16
      %v3820 = vrot.slane %v3818, 7
      %v3821 = vshll.u32 %v3726, 16
      %v3823 = vor.u32 %v3820, %v3821
      %v3824 = vsel %vm1926, %v3812, %v3823
      %v3826 = vshrl.u32 %v3727, 16
      %v3828 = vrot.slane %v3826, 7
      %v3829 = vshll.u32 %v3727, 16
      %v3831 = vor.u32 %v3828, %v3829
      %v3832 = vsel %vm1926, %v3820, %v3831
      %v3834 = vshrl.u32 %v3728, 16
      %v3836 = vrot.slane %v3834, 7
      %v3837 = vshll.u32 %v3728, 16
      %v3839 = vor.u32 %v3836, %v3837
      %v3840 = vsel %vm1926, %v3828, %v3839
      %v3842 = vshrl.u32 %v3729, 16
      %v3844 = vrot.slane %v3842, 7
      %v3845 = vshll.u32 %v3729, 16
      %v3847 = vor.u32 %v3844, %v3845
      %v3848 = vsel %vm1926, %v3836, %v3847
      %v3850 = vshrl.u32 %v3730, 16
      %v3852 = vrot.slane %v3850, 7
      %v3853 = vshll.u32 %v3730, 16
      %v3855 = vor.u32 %v3852, %v3853
      %v3856 = vsel %vm1926, %v3844, %v3855
      %v3858 = vshrl.u32 %v3731, 16
      %v3860 = vrot.slane %v3858, 7
      %v3861 = vshll.u32 %v3731, 16
      %v3863 = vor.u32 %v3860, %v3861
      %v3864 = vsel %vm1926, %v3852, %v3863
      %v3866 = vsel %vm279, %v3744, 0
      %v3869 = vsel %vm279, %v3752, 0
      %v3872 = vsel %vm279, %v3760, 0
      %v3875 = vsel %vm279, %v3768, 0
      %v3878 = vsel %vm279, %v3776, 0
      %v3881 = vsel %vm279, %v3784, 0
      %v3884 = vsel %vm279, %v3792, 0
      %v3887 = vsel %vm279, %v3800, 0
      %v3890 = vsel %vm279, %v3808, 0
      %v3893 = vsel %vm279, %v3816, 0
      %v3896 = vsel %vm279, %v3824, 0
      %v3899 = vsel %vm279, %v3832, 0
      %v3902 = vsel %vm279, %v3840, 0
      %v3905 = vsel %vm279, %v3848, 0
      %v3908 = vsel %vm279, %v3856, 0
      %v3911 = vsel %vm279, %v3864, 0
      %v3914 = vsel %vm446, %v3732, 0
      %3916 = vmatprep.subr.bf16.mxu0 0
      %3917 = vmatpush1.bf16.msra.mxu0 %v3914
      %3918 = vmatprep.subr.bf16.mxu0 0
      %3919 = vmatpush1.bf16.msra.mxu0 0
      %3920 = vmatprep.subr.bf16.mxu0 0
      %3921 = vmatpush1.bf16.msra.mxu0 0
      %3922 = vmatprep.subr.bf16.mxu0 0
      %3923 = vmatpush1.bf16.msra.mxu0 0
      %3924 = vmatprep.subr.bf16.mxu0 0
      %3925 = vmatpush1.bf16.msra.mxu0 0
      %3926 = vmatprep.subr.bf16.mxu0 0
      %3927 = vmatpush1.bf16.msra.mxu0 0
      %3928 = vmatprep.subr.bf16.mxu0 0
      %3929 = vmatpush1.bf16.msra.mxu0 0
      %3930 = vmatprep.subr.bf16.mxu0 0
      %3931 = vmatpush1.bf16.msra.mxu0 0
      %3932 = vmatprep.subr.bf16.mxu0 0
      %3933 = vmatpush1.bf16.msra.mxu0 0
      %3934 = vmatprep.subr.bf16.mxu0 0
      %3935 = vmatpush1.bf16.msra.mxu0 0
      %3936 = vmatprep.subr.bf16.mxu0 0
      %3937 = vmatpush1.bf16.msra.mxu0 0
      %3938 = vmatprep.subr.bf16.mxu0 0
      %3939 = vmatpush1.bf16.msra.mxu0 0
      %3940 = vmatprep.subr.bf16.mxu0 0
      %3941 = vmatpush1.bf16.msra.mxu0 0
      %3942 = vmatprep.subr.bf16.mxu0 0
      %3943 = vmatpush1.bf16.msra.mxu0 0
      %3944 = vmatprep.subr.bf16.mxu0 0
      %3945 = vmatpush1.bf16.msra.mxu0 0
      %3946 = vmatprep.subr.bf16.mxu0 0
      %3947 = vmatpush1.bf16.msra.mxu0 0
      %3948 = vmatprep.mubr.bf16.mxu0 0
      %3949 = vmatmul.mubr.bf16.gmra.mrb[0].mxu0 %v3866
      %v3950 = vpop.f32.mrb[0].mxu0
      %v3951 = vadd.f32 0.0, %v3950
      %v3952 = vpop.f32.mrb[0].mxu0
      %v3953 = vpop.f32.mrb[0].mxu0
      %v3954 = vadd.f32 0.0, %v3953
      %v3955 = vpop.f32.mrb[0].mxu0
      %3956 = vmatprep.mubr.bf16.mxu0 0
      %3957 = vmatmul.mubr.bf16.gmra.mrb[0].mxu0 %v3869
      %v3958 = vpop.f32.mrb[0].mxu0
      %v3959 = vadd.f32 0.0, %v3958
      %v3960 = vpop.f32.mrb[0].mxu0
      %v3961 = vpop.f32.mrb[0].mxu0
      %v3962 = vadd.f32 0.0, %v3961
      %v3963 = vpop.f32.mrb[0].mxu0
      %3964 = vmatprep.mubr.bf16.mxu0 0
      %3965 = vmatmul.mubr.bf16.gmra.mrb[0].mxu0 %v3872
      %v3966 = vpop.f32.mrb[0].mxu0
      %v3967 = vadd.f32 0.0, %v3966
      %v3968 = vpop.f32.mrb[0].mxu0
      %v3969 = vpop.f32.mrb[0].mxu0
      %v3970 = vadd.f32 0.0, %v3969
      %v3971 = vpop.f32.mrb[0].mxu0
      %3972 = vmatprep.mubr.bf16.mxu0 0
      %3973 = vmatmul.mubr.bf16.gmra.mrb[0].mxu0 %v3875
      %v3974 = vpop.f32.mrb[0].mxu0
      %v3975 = vadd.f32 0.0, %v3974
      %v3976 = vpop.f32.mrb[0].mxu0
      %v3977 = vpop.f32.mrb[0].mxu0
      %v3978 = vadd.f32 0.0, %v3977
      %v3979 = vpop.f32.mrb[0].mxu0
      %3980 = vmatprep.mubr.bf16.mxu0 0
      %3981 = vmatmul.mubr.bf16.gmra.mrb[0].mxu0 %v3878
      %v3982 = vpop.f32.mrb[0].mxu0
      %v3983 = vadd.f32 0.0, %v3982
      %v3984 = vpop.f32.mrb[0].mxu0
      %v3985 = vpop.f32.mrb[0].mxu0
      %v3986 = vadd.f32 0.0, %v3985
      %v3987 = vpop.f32.mrb[0].mxu0
      %3988 = vmatprep.mubr.bf16.mxu0 0
      %3989 = vmatmul.mubr.bf16.gmra.mrb[0].mxu0 %v3881
      %v3990 = vpop.f32.mrb[0].mxu0
      %v3991 = vadd.f32 0.0, %v3990
      %v3992 = vpop.f32.mrb[0].mxu0
      %v3993 = vpop.f32.mrb[0].mxu0
      %v3994 = vadd.f32 0.0, %v3993
      %v3995 = vpop.f32.mrb[0].mxu0
      %3996 = vmatprep.mubr.bf16.mxu0 0
      %3997 = vmatmul.mubr.bf16.gmra.mrb[0].mxu0 %v3884
      %v3998 = vpop.f32.mrb[0].mxu0
      %v3999 = vadd.f32 0.0, %v3998
      %v4000 = vpop.f32.mrb[0].mxu0
      %v4001 = vpop.f32.mrb[0].mxu0
      %v4002 = vadd.f32 0.0, %v4001
      %v4003 = vpop.f32.mrb[0].mxu0
      %4004 = vmatprep.mubr.bf16.mxu0 0
      %4005 = vmatmul.mubr.bf16.gmra.mrb[0].mxu0 %v3887
      %v4006 = vpop.f32.mrb[0].mxu0
      %v4007 = vadd.f32 0.0, %v4006
      %v4008 = vpop.f32.mrb[0].mxu0
      %v4009 = vpop.f32.mrb[0].mxu0
      %v4010 = vadd.f32 0.0, %v4009
      %v4011 = vpop.f32.mrb[0].mxu0
      %4012 = vmatprep.mubr.bf16.mxu0 0
      %4013 = vmatmul.mubr.bf16.gmra.mrb[0].mxu0 %v3890
      %v4014 = vpop.f32.mrb[0].mxu0
      %v4015 = vadd.f32 0.0, %v4014
      %v4016 = vpop.f32.mrb[0].mxu0
      %v4017 = vpop.f32.mrb[0].mxu0
      %v4018 = vadd.f32 0.0, %v4017
      %v4019 = vpop.f32.mrb[0].mxu0
      %4020 = vmatprep.mubr.bf16.mxu0 0
      %4021 = vmatmul.mubr.bf16.gmra.mrb[0].mxu0 %v3893
      %v4022 = vpop.f32.mrb[0].mxu0
      %v4023 = vadd.f32 0.0, %v4022
      %v4024 = vpop.f32.mrb[0].mxu0
      %v4025 = vpop.f32.mrb[0].mxu0
      %v4026 = vadd.f32 0.0, %v4025
      %v4027 = vpop.f32.mrb[0].mxu0
      %4028 = vmatprep.mubr.bf16.mxu0 0
      %4029 = vmatmul.mubr.bf16.gmra.mrb[0].mxu0 %v3896
      %v4030 = vpop.f32.mrb[0].mxu0
      %v4031 = vadd.f32 0.0, %v4030
      %v4032 = vpop.f32.mrb[0].mxu0
      %v4033 = vpop.f32.mrb[0].mxu0
      %v4034 = vadd.f32 0.0, %v4033
      %v4035 = vpop.f32.mrb[0].mxu0
      %4036 = vmatprep.mubr.bf16.mxu0 0
      %4037 = vmatmul.mubr.bf16.gmra.mrb[0].mxu0 %v3899
      %v4038 = vpop.f32.mrb[0].mxu0
      %v4039 = vadd.f32 0.0, %v4038
      %v4040 = vpop.f32.mrb[0].mxu0
      %v4041 = vpop.f32.mrb[0].mxu0
      %v4042 = vadd.f32 0.0, %v4041
      %v4043 = vpop.f32.mrb[0].mxu0
      %4044 = vmatprep.mubr.bf16.mxu0 0
      %4045 = vmatmul.mubr.bf16.gmra.mrb[0].mxu0 %v3902
      %v4046 = vpop.f32.mrb[0].mxu0
      %v4047 = vadd.f32 0.0, %v4046
      %v4048 = vpop.f32.mrb[0].mxu0
      %v4049 = vpop.f32.mrb[0].mxu0
      %v4050 = vadd.f32 0.0, %v4049
      %v4051 = vpop.f32.mrb[0].mxu0
      %4052 = vmatprep.mubr.bf16.mxu0 0
      %4053 = vmatmul.mubr.bf16.gmra.mrb[0].mxu0 %v3905
      %v4054 = vpop.f32.mrb[0].mxu0
      %v4055 = vadd.f32 0.0, %v4054
      %v4056 = vpop.f32.mrb[0].mxu0
      %v4057 = vpop.f32.mrb[0].mxu0
      %v4058 = vadd.f32 0.0, %v4057
      %v4059 = vpop.f32.mrb[0].mxu0
      %4060 = vmatprep.mubr.bf16.mxu0 0
      %4061 = vmatmul.mubr.bf16.gmra.mrb[0].mxu0 %v3908
      %v4062 = vpop.f32.mrb[0].mxu0
      %v4063 = vadd.f32 0.0, %v4062
      %v4064 = vpop.f32.mrb[0].mxu0
      %v4065 = vpop.f32.mrb[0].mxu0
      %v4066 = vadd.f32 0.0, %v4065
      %v4067 = vpop.f32.mrb[0].mxu0
      %4068 = vmatprep.mubr.bf16.mxu0 0
      %4069 = vmatmul.mubr.bf16.gmra.mrb[0].mxu0 %v3911
      %v4070 = vpop.f32.mrb[0].mxu0
      %v4071 = vadd.f32 0.0, %v4070
      %v4072 = vpop.f32.mrb[0].mxu0
      %v4073 = vpop.f32.mrb[0].mxu0
      %v4074 = vadd.f32 0.0, %v4073
      %v4075 = vpop.f32.mrb[0].mxu0
      %4076 = vdwg.mxu0
      %v4077 = vadd.f32 %v3683, %v3951
      %v4078 = vadd.f32 %v3684, %v3954
      %v4079 = vadd.f32 %v3685, %v3959
      %v4080 = vadd.f32 %v3686, %v3962
      %v4081 = vadd.f32 %v3687, %v3967
      %v4082 = vadd.f32 %v3688, %v3970
      %v4083 = vadd.f32 %v3689, %v3975
      %v4084 = vadd.f32 %v3690, %v3978
      %v4085 = vadd.f32 %v3691, %v3983
      %v4086 = vadd.f32 %v3692, %v3986
      %v4087 = vadd.f32 %v3693, %v3991
      %v4088 = vadd.f32 %v3694, %v3994
      %v4089 = vadd.f32 %v3695, %v3999
      %v4090 = vadd.f32 %v3696, %v4002
      %v4091 = vadd.f32 %v3697, %v4007
      %v4092 = vadd.f32 %v3698, %v4010
      %v4093 = vadd.f32 %v3699, %v4015
      %v4094 = vadd.f32 %v3700, %v4018
      %v4095 = vadd.f32 %v3701, %v4023
      %v4096 = vadd.f32 %v3702, %v4026
      %v4097 = vadd.f32 %v3703, %v4031
      %v4098 = vadd.f32 %v3704, %v4034
      %v4099 = vadd.f32 %v3705, %v4039
      %v4100 = vadd.f32 %v3706, %v4042
      %v4101 = vadd.f32 %v3707, %v4047
      %v4102 = vadd.f32 %v3708, %v4050
      %v4103 = vadd.f32 %v3709, %v4055
      %v4104 = vadd.f32 %v3710, %v4058
      %v4105 = vadd.f32 %v3711, %v4063
      %v4106 = vadd.f32 %v3712, %v4066
      %v4107 = vadd.f32 %v3713, %v4071
      %v4108 = vadd.f32 %v3714, %v4074
      %v4109 = vld [vmem:[#allocation3 + $0x18] sm:$0xff]
      %v4110 = vld [vmem:[#allocation3 + $0x20] sm:$0xff]
      %v4111 = vld [vmem:[#allocation3 + $0x28] sm:$0xff]
      %v4112 = vld [vmem:[#allocation3 + $0x30] sm:$0xff]
      %v4113 = vld [vmem:[#allocation3 + $0x38] sm:$0xff]
      %v4114 = vld [vmem:[#allocation3 + $0x40] sm:$0xff]
      %v4115 = vld [vmem:[#allocation3 + $0x48] sm:$0xff]
      %v4116 = vld [vmem:[#allocation3 + $0x50] sm:$0xff]
      %v4117 = vld [vmem:[#allocation3 + $0x58] sm:$0xff]
      %v4118 = vld [vmem:[#allocation3 + $0x60] sm:$0xff]
      %v4119 = vld [vmem:[#allocation3 + $0x68] sm:$0xff]
      %v4120 = vld [vmem:[#allocation3 + $0x70] sm:$0xff]
      %v4121 = vld [vmem:[#allocation3 + $0x78] sm:$0xff]
      %v4122 = vld [vmem:[#allocation3 + $0x80] sm:$0xff]
      %v4123 = vld [vmem:[#allocation3 + $0x88] sm:$0xff]
      %v4124 = vld [vmem:[#allocation3 + $0x90] sm:$0xff]
      %v4125 = vld [vmem:[%s1 + $0x48] sm:$0xf]
      %v4127 = vsel %vm279, %v4109, 0
      %v4130 = vsel %vm279, %v4110, 0
      %v4133 = vsel %vm279, %v4111, 0
      %v4136 = vsel %vm279, %v4112, 0
      %v4139 = vsel %vm279, %v4113, 0
      %v4142 = vsel %vm279, %v4114, 0
      %v4145 = vsel %vm279, %v4115, 0
      %v4148 = vsel %vm279, %v4116, 0
      %v4151 = vsel %vm279, %v4117, 0
      %v4154 = vsel %vm279, %v4118, 0
      %v4157 = vsel %vm279, %v4119, 0
      %v4160 = vsel %vm279, %v4120, 0
      %v4163 = vsel %vm279, %v4121, 0
      %v4166 = vsel %vm279, %v4122, 0
      %v4169 = vsel %vm279, %v4123, 0
      %v4172 = vsel %vm279, %v4124, 0
      %v4175 = vsel %vm446, %v4125, 0
      %4177 = vmatprep.subr.bf16.mxu0 0
      %4178 = vmatpush1.bf16.msra.mxu0 %v4175
      %4179 = vmatprep.subr.bf16.mxu0 0
      %4180 = vmatpush1.bf16.msra.mxu0 0
      %4181 = vmatprep.subr.bf16.mxu0 0
      %4182 = vmatpush1.bf16.msra.mxu0 0
      %4183 = vmatprep.subr.bf16.mxu0 0
      %4184 = vmatpush1.bf16.msra.mxu0 0
      %4185 = vmatprep.subr.bf16.mxu0 0
      %4186 = vmatpush1.bf16.msra.mxu0 0
      %4187 = vmatprep.subr.bf16.mxu0 0
      %4188 = vmatpush1.bf16.msra.mxu0 0
      %4189 = vmatprep.subr.bf16.mxu0 0
      %4190 = vmatpush1.bf16.msra.mxu0 0
      %4191 = vmatprep.subr.bf16.mxu0 0
      %4192 = vmatpush1.bf16.msra.mxu0 0
      %4193 = vmatprep.subr.bf16.mxu0 0
      %4194 = vmatpush1.bf16.msra.mxu0 0
      %4195 = vmatprep.subr.bf16.mxu0 0
      %4196 = vmatpush1.bf16.msra.mxu0 0
      %4197 = vmatprep.subr.bf16.mxu0 0
      %4198 = vmatpush1.bf16.msra.mxu0 0
      %4199 = vmatprep.subr.bf16.mxu0 0
      %4200 = vmatpush1.bf16.msra.mxu0 0
      %4201 = vmatprep.subr.bf16.mxu0 0
      %4202 = vmatpush1.bf16.msra.mxu0 0
      %4203 = vmatprep.subr.bf16.mxu0 0
      %4204 = vmatpush1.bf16.msra.mxu0 0
      %4205 = vmatprep.subr.bf16.mxu0 0
      %4206 = vmatpush1.bf16.msra.mxu0 0
      %4207 = vmatprep.subr.bf16.mxu0 0
      %4208 = vmatpush1.bf16.msra.mxu0 0
      %4209 = vmatprep.mubr.bf16.mxu0 0
      %4210 = vmatmul.mubr.bf16.gmra.mrb[0].mxu0 %v4127
      %v4211 = vpop.f32.mrb[0].mxu0
      %v4212 = vadd.f32 0.0, %v4211
      %v4213 = vpop.f32.mrb[0].mxu0
      %v4214 = vpop.f32.mrb[0].mxu0
      %v4215 = vadd.f32 0.0, %v4214
      %v4216 = vpop.f32.mrb[0].mxu0
      %4217 = vmatprep.mubr.bf16.mxu0 0
      %4218 = vmatmul.mubr.bf16.gmra.mrb[0].mxu0 %v4130
      %v4219 = vpop.f32.mrb[0].mxu0
      %v4220 = vadd.f32 0.0, %v4219
      %v4221 = vpop.f32.mrb[0].mxu0
      %v4222 = vpop.f32.mrb[0].mxu0
      %v4223 = vadd.f32 0.0, %v4222
      %v4224 = vpop.f32.mrb[0].mxu0
      %4225 = vmatprep.mubr.bf16.mxu0 0
      %4226 = vmatmul.mubr.bf16.gmra.mrb[0].mxu0 %v4133
      %v4227 = vpop.f32.mrb[0].mxu0
      %v4228 = vadd.f32 0.0, %v4227
      %v4229 = vpop.f32.mrb[0].mxu0
      %v4230 = vpop.f32.mrb[0].mxu0
      %v4231 = vadd.f32 0.0, %v4230
      %v4232 = vpop.f32.mrb[0].mxu0
      %4233 = vmatprep.mubr.bf16.mxu0 0
      %4234 = vmatmul.mubr.bf16.gmra.mrb[0].mxu0 %v4136
      %v4235 = vpop.f32.mrb[0].mxu0
      %v4236 = vadd.f32 0.0, %v4235
      %v4237 = vpop.f32.mrb[0].mxu0
      %v4238 = vpop.f32.mrb[0].mxu0
      %v4239 = vadd.f32 0.0, %v4238
      %v4240 = vpop.f32.mrb[0].mxu0
      %4241 = vmatprep.mubr.bf16.mxu0 0
      %4242 = vmatmul.mubr.bf16.gmra.mrb[0].mxu0 %v4139
      %v4243 = vpop.f32.mrb[0].mxu0
      %v4244 = vadd.f32 0.0, %v4243
      %v4245 = vpop.f32.mrb[0].mxu0
      %v4246 = vpop.f32.mrb[0].mxu0
      %v4247 = vadd.f32 0.0, %v4246
      %v4248 = vpop.f32.mrb[0].mxu0
      %4249 = vmatprep.mubr.bf16.mxu0 0
      %4250 = vmatmul.mubr.bf16.gmra.mrb[0].mxu0 %v4142
      %v4251 = vpop.f32.mrb[0].mxu0
      %v4252 = vadd.f32 0.0, %v4251
      %v4253 = vpop.f32.mrb[0].mxu0
      %v4254 = vpop.f32.mrb[0].mxu0
      %v4255 = vadd.f32 0.0, %v4254
      %v4256 = vpop.f32.mrb[0].mxu0
      %4257 = vmatprep.mubr.bf16.mxu0 0
      %4258 = vmatmul.mubr.bf16.gmra.mrb[0].mxu0 %v4145
      %v4259 = vpop.f32.mrb[0].mxu0
      %v4260 = vadd.f32 0.0, %v4259
      %v4261 = vpop.f32.mrb[0].mxu0
      %v4262 = vpop.f32.mrb[0].mxu0
      %v4263 = vadd.f32 0.0, %v4262
      %v4264 = vpop.f32.mrb[0].mxu0
      %4265 = vmatprep.mubr.bf16.mxu0 0
      %4266 = vmatmul.mubr.bf16.gmra.mrb[0].mxu0 %v4148
      %v4267 = vpop.f32.mrb[0].mxu0
      %v4268 = vadd.f32 0.0, %v4267
      %v4269 = vpop.f32.mrb[0].mxu0
      %v4270 = vpop.f32.mrb[0].mxu0
      %v4271 = vadd.f32 0.0, %v4270
      %v4272 = vpop.f32.mrb[0].mxu0
      %4273 = vmatprep.mubr.bf16.mxu0 0
      %4274 = vmatmul.mubr.bf16.gmra.mrb[0].mxu0 %v4151
      %v4275 = vpop.f32.mrb[0].mxu0
      %v4276 = vadd.f32 0.0, %v4275
      %v4277 = vpop.f32.mrb[0].mxu0
      %v4278 = vpop.f32.mrb[0].mxu0
      %v4279 = vadd.f32 0.0, %v4278
      %v4280 = vpop.f32.mrb[0].mxu0
      %4281 = vmatprep.mubr.bf16.mxu0 0
      %4282 = vmatmul.mubr.bf16.gmra.mrb[0].mxu0 %v4154
      %v4283 = vpop.f32.mrb[0].mxu0
      %v4284 = vadd.f32 0.0, %v4283
      %v4285 = vpop.f32.mrb[0].mxu0
      %v4286 = vpop.f32.mrb[0].mxu0
      %v4287 = vadd.f32 0.0, %v4286
      %v4288 = vpop.f32.mrb[0].mxu0
      %4289 = vmatprep.mubr.bf16.mxu0 0
      %4290 = vmatmul.mubr.bf16.gmra.mrb[0].mxu0 %v4157
      %v4291 = vpop.f32.mrb[0].mxu0
      %v4292 = vadd.f32 0.0, %v4291
      %v4293 = vpop.f32.mrb[0].mxu0
      %v4294 = vpop.f32.mrb[0].mxu0
      %v4295 = vadd.f32 0.0, %v4294
      %v4296 = vpop.f32.mrb[0].mxu0
      %4297 = vmatprep.mubr.bf16.mxu0 0
      %4298 = vmatmul.mubr.bf16.gmra.mrb[0].mxu0 %v4160
      %v4299 = vpop.f32.mrb[0].mxu0
      %v4300 = vadd.f32 0.0, %v4299
      %v4301 = vpop.f32.mrb[0].mxu0
      %v4302 = vpop.f32.mrb[0].mxu0
      %v4303 = vadd.f32 0.0, %v4302
      %v4304 = vpop.f32.mrb[0].mxu0
      %4305 = vmatprep.mubr.bf16.mxu0 0
      %4306 = vmatmul.mubr.bf16.gmra.mrb[0].mxu0 %v4163
      %v4307 = vpop.f32.mrb[0].mxu0
      %v4308 = vadd.f32 0.0, %v4307
      %v4309 = vpop.f32.mrb[0].mxu0
      %v4310 = vpop.f32.mrb[0].mxu0
      %v4311 = vadd.f32 0.0, %v4310
      %v4312 = vpop.f32.mrb[0].mxu0
      %4313 = vmatprep.mubr.bf16.mxu0 0
      %4314 = vmatmul.mubr.bf16.gmra.mrb[0].mxu0 %v4166
      %v4315 = vpop.f32.mrb[0].mxu0
      %v4316 = vadd.f32 0.0, %v4315
      %v4317 = vpop.f32.mrb[0].mxu0
      %v4318 = vpop.f32.mrb[0].mxu0
      %v4319 = vadd.f32 0.0, %v4318
      %v4320 = vpop.f32.mrb[0].mxu0
      %4321 = vmatprep.mubr.bf16.mxu0 0
      %4322 = vmatmul.mubr.bf16.gmra.mrb[0].mxu0 %v4169
      %v4323 = vpop.f32.mrb[0].mxu0
      %v4324 = vadd.f32 0.0, %v4323
      %v4325 = vpop.f32.mrb[0].mxu0
      %v4326 = vpop.f32.mrb[0].mxu0
      %v4327 = vadd.f32 0.0, %v4326
      %v4328 = vpop.f32.mrb[0].mxu0
      %4329 = vmatprep.mubr.bf16.mxu0 0
      %4330 = vmatmul.mubr.bf16.gmra.mrb[0].mxu0 %v4172
      %v4331 = vpop.f32.mrb[0].mxu0
      %v4332 = vadd.f32 0.0, %v4331
      %v4333 = vpop.f32.mrb[0].mxu0
      %v4334 = vpop.f32.mrb[0].mxu0
      %v4335 = vadd.f32 0.0, %v4334
      %v4336 = vpop.f32.mrb[0].mxu0
      %4337 = vdwg.mxu0
      %v4338 = vadd.f32 %v4077, %v4212
      %v4339 = vadd.f32 %v4078, %v4215
      %v4340 = vadd.f32 %v4079, %v4220
      %v4341 = vadd.f32 %v4080, %v4223
      %v4342 = vadd.f32 %v4081, %v4228
      %v4343 = vadd.f32 %v4082, %v4231
      %v4344 = vadd.f32 %v4083, %v4236
      %v4345 = vadd.f32 %v4084, %v4239
      %v4346 = vadd.f32 %v4085, %v4244
      %v4347 = vadd.f32 %v4086, %v4247
      %v4348 = vadd.f32 %v4087, %v4252
      %v4349 = vadd.f32 %v4088, %v4255
      %v4350 = vadd.f32 %v4089, %v4260
      %v4351 = vadd.f32 %v4090, %v4263
      %v4352 = vadd.f32 %v4091, %v4268
      %v4353 = vadd.f32 %v4092, %v4271
      %v4354 = vadd.f32 %v4093, %v4276
      %v4355 = vadd.f32 %v4094, %v4279
      %v4356 = vadd.f32 %v4095, %v4284
      %v4357 = vadd.f32 %v4096, %v4287
      %v4358 = vadd.f32 %v4097, %v4292
      %v4359 = vadd.f32 %v4098, %v4295
      %v4360 = vadd.f32 %v4099, %v4300
      %v4361 = vadd.f32 %v4100, %v4303
      %v4362 = vadd.f32 %v4101, %v4308
      %v4363 = vadd.f32 %v4102, %v4311
      %v4364 = vadd.f32 %v4103, %v4316
      %v4365 = vadd.f32 %v4104, %v4319
      %v4366 = vadd.f32 %v4105, %v4324
      %v4367 = vadd.f32 %v4106, %v4327
      %v4368 = vadd.f32 %v4107, %v4332
      %v4369 = vadd.f32 %v4108, %v4335
      %v4370 = vld [vmem:[#allocation5 + $0x18] sm:$0xff]
      %v4371 = vld [vmem:[#allocation5 + $0x20] sm:$0xff]
      %v4372 = vld [vmem:[#allocation5 + $0x28] sm:$0xff]
      %v4373 = vld [vmem:[#allocation5 + $0x30] sm:$0xff]
      %v4374 = vld [vmem:[#allocation5 + $0x38] sm:$0xff]
      %v4375 = vld [vmem:[#allocation5 + $0x40] sm:$0xff]
      %v4376 = vld [vmem:[#allocation5 + $0x48] sm:$0xff]
      %v4377 = vld [vmem:[#allocation5 + $0x50] sm:$0xff]
      %v4378 = vld [vmem:[#allocation5 + $0x58] sm:$0xff]
      %v4379 = vld [vmem:[#allocation5 + $0x60] sm:$0xff]
      %v4380 = vld [vmem:[#allocation5 + $0x68] sm:$0xff]
      %v4381 = vld [vmem:[#allocation5 + $0x70] sm:$0xff]
      %v4382 = vld [vmem:[#allocation5 + $0x78] sm:$0xff]
      %v4383 = vld [vmem:[#allocation5 + $0x80] sm:$0xff]
      %v4384 = vld [vmem:[#allocation5 + $0x88] sm:$0xff]
      %v4385 = vld [vmem:[#allocation5 + $0x90] sm:$0xff]
      %v4386 = vld [vmem:[#allocation5 + $0x98] sm:$0x1]
      %v4387 = vld [vmem:[%s1 + $0x50] sm:$0xf]
      %v4389 = vshrl.u32 %v4370, 16
      %v4391 = vshll.u32 %v4370, 16
      %v4393 = vrot.slane %v4391, 1
      %v4394 = vor.u32 %v4389, %v4393
      %v4396 = vshll.u32 %v4371, 16
      %v4398 = vrot.slane %v4396, 1
      %v4399 = vsel %vm2289, %v4394, %v4398
      %v4400 = vshrl.u32 %v4371, 16
      %v4402 = vor.u32 %v4400, %v4398
      %v4404 = vshll.u32 %v4372, 16
      %v4406 = vrot.slane %v4404, 1
      %v4407 = vsel %vm2289, %v4402, %v4406
      %v4408 = vshrl.u32 %v4372, 16
      %v4410 = vor.u32 %v4408, %v4406
      %v4412 = vshll.u32 %v4373, 16
      %v4414 = vrot.slane %v4412, 1
      %v4415 = vsel %vm2289, %v4410, %v4414
      %v4416 = vshrl.u32 %v4373, 16
      %v4418 = vor.u32 %v4416, %v4414
      %v4420 = vshll.u32 %v4374, 16
      %v4422 = vrot.slane %v4420, 1
      %v4423 = vsel %vm2289, %v4418, %v4422
      %v4424 = vshrl.u32 %v4374, 16
      %v4426 = vor.u32 %v4424, %v4422
      %v4428 = vshll.u32 %v4375, 16
      %v4430 = vrot.slane %v4428, 1
      %v4431 = vsel %vm2289, %v4426, %v4430
      %v4432 = vshrl.u32 %v4375, 16
      %v4434 = vor.u32 %v4432, %v4430
      %v4436 = vshll.u32 %v4376, 16
      %v4438 = vrot.slane %v4436, 1
      %v4439 = vsel %vm2289, %v4434, %v4438
      %v4440 = vshrl.u32 %v4376, 16
      %v4442 = vor.u32 %v4440, %v4438
      %v4444 = vshll.u32 %v4377, 16
      %v4446 = vrot.slane %v4444, 1
      %v4447 = vsel %vm2289, %v4442, %v4446
      %v4448 = vshrl.u32 %v4377, 16
      %v4450 = vor.u32 %v4448, %v4446
      %v4452 = vshll.u32 %v4378, 16
      %v4454 = vrot.slane %v4452, 1
      %v4455 = vsel %vm2289, %v4450, %v4454
      %v4456 = vshrl.u32 %v4378, 16
      %v4458 = vor.u32 %v4456, %v4454
      %v4460 = vshll.u32 %v4379, 16
      %v4462 = vrot.slane %v4460, 1
      %v4463 = vsel %vm2289, %v4458, %v4462
      %v4464 = vshrl.u32 %v4379, 16
      %v4466 = vor.u32 %v4464, %v4462
      %v4468 = vshll.u32 %v4380, 16
      %v4470 = vrot.slane %v4468, 1
      %v4471 = vsel %vm2289, %v4466, %v4470
      %v4472 = vshrl.u32 %v4380, 16
      %v4474 = vor.u32 %v4472, %v4470
      %v4476 = vshll.u32 %v4381, 16
      %v4478 = vrot.slane %v4476, 1
      %v4479 = vsel %vm2289, %v4474, %v4478
      %v4480 = vshrl.u32 %v4381, 16
      %v4482 = vor.u32 %v4480, %v4478
      %v4484 = vshll.u32 %v4382, 16
      %v4486 = vrot.slane %v4484, 1
      %v4487 = vsel %vm2289, %v4482, %v4486
      %v4488 = vshrl.u32 %v4382, 16
      %v4490 = vor.u32 %v4488, %v4486
      %v4492 = vshll.u32 %v4383, 16
      %v4494 = vrot.slane %v4492, 1
      %v4495 = vsel %vm2289, %v4490, %v4494
      %v4496 = vshrl.u32 %v4383, 16
      %v4498 = vor.u32 %v4496, %v4494
      %v4500 = vshll.u32 %v4384, 16
      %v4502 = vrot.slane %v4500, 1
      %v4503 = vsel %vm2289, %v4498, %v4502
      %v4504 = vshrl.u32 %v4384, 16
      %v4506 = vor.u32 %v4504, %v4502
      %v4508 = vshll.u32 %v4385, 16
      %v4510 = vrot.slane %v4508, 1
      %v4511 = vsel %vm2289, %v4506, %v4510
      %v4512 = vshrl.u32 %v4385, 16
      %v4514 = vor.u32 %v4512, %v4510
      %v4516 = vshll.u32 %v4386, 16
      %v4518 = vrot.slane %v4516, 1
      %v4519 = vsel %vm2289, %v4514, %v4518
      %v4521 = vsel %vm279, %v4399, 0
      %v4524 = vsel %vm279, %v4407, 0
      %v4527 = vsel %vm279, %v4415, 0
      %v4530 = vsel %vm279, %v4423, 0
      %v4533 = vsel %vm279, %v4431, 0
      %v4536 = vsel %vm279, %v4439, 0
      %v4539 = vsel %vm279, %v4447, 0
      %v4542 = vsel %vm279, %v4455, 0
      %v4545 = vsel %vm279, %v4463, 0
      %v4548 = vsel %vm279, %v4471, 0
      %v4551 = vsel %vm279, %v4479, 0
      %v4554 = vsel %vm279, %v4487, 0
      %v4557 = vsel %vm279, %v4495, 0
      %v4560 = vsel %vm279, %v4503, 0
      %v4563 = vsel %vm279, %v4511, 0
      %v4566 = vsel %vm279, %v4519, 0
      %v4569 = vsel %vm446, %v4387, 0
      %4571 = vmatprep.subr.bf16.mxu0 0
      %4572 = vmatpush1.bf16.msra.mxu0 %v4569
      %4573 = vmatprep.subr.bf16.mxu0 0
      %4574 = vmatpush1.bf16.msra.mxu0 0
      %4575 = vmatprep.subr.bf16.mxu0 0
      %4576 = vmatpush1.bf16.msra.mxu0 0
      %4577 = vmatprep.subr.bf16.mxu0 0
      %4578 = vmatpush1.bf16.msra.mxu0 0
      %4579 = vmatprep.subr.bf16.mxu0 0
      %4580 = vmatpush1.bf16.msra.mxu0 0
      %4581 = vmatprep.subr.bf16.mxu0 0
      %4582 = vmatpush1.bf16.msra.mxu0 0
      %4583 = vmatprep.subr.bf16.mxu0 0
      %4584 = vmatpush1.bf16.msra.mxu0 0
      %4585 = vmatprep.subr.bf16.mxu0 0
      %4586 = vmatpush1.bf16.msra.mxu0 0
      %4587 = vmatprep.subr.bf16.mxu0 0
      %4588 = vmatpush1.bf16.msra.mxu0 0
      %4589 = vmatprep.subr.bf16.mxu0 0
      %4590 = vmatpush1.bf16.msra.mxu0 0
      %4591 = vmatprep.subr.bf16.mxu0 0
      %4592 = vmatpush1.bf16.msra.mxu0 0
      %4593 = vmatprep.subr.bf16.mxu0 0
      %4594 = vmatpush1.bf16.msra.mxu0 0
      %4595 = vmatprep.subr.bf16.mxu0 0
      %4596 = vmatpush1.bf16.msra.mxu0 0
      %4597 = vmatprep.subr.bf16.mxu0 0
      %4598 = vmatpush1.bf16.msra.mxu0 0
      %4599 = vmatprep.subr.bf16.mxu0 0
      %4600 = vmatpush1.bf16.msra.mxu0 0
      %4601 = vmatprep.subr.bf16.mxu0 0
      %4602 = vmatpush1.bf16.msra.mxu0 0
      %4603 = vmatprep.mubr.bf16.mxu0 0
      %4604 = vmatmul.mubr.bf16.gmra.mrb[0].mxu0 %v4521
      %v4605 = vpop.f32.mrb[0].mxu0
      %v4606 = vadd.f32 0.0, %v4605
      %v4607 = vpop.f32.mrb[0].mxu0
      %v4608 = vpop.f32.mrb[0].mxu0
      %v4609 = vadd.f32 0.0, %v4608
      %v4610 = vpop.f32.mrb[0].mxu0
      %4611 = vmatprep.mubr.bf16.mxu0 0
      %4612 = vmatmul.mubr.bf16.gmra.mrb[0].mxu0 %v4524
      %v4613 = vpop.f32.mrb[0].mxu0
      %v4614 = vadd.f32 0.0, %v4613
      %v4615 = vpop.f32.mrb[0].mxu0
      %v4616 = vpop.f32.mrb[0].mxu0
      %v4617 = vadd.f32 0.0, %v4616
      %v4618 = vpop.f32.mrb[0].mxu0
      %4619 = vmatprep.mubr.bf16.mxu0 0
      %4620 = vmatmul.mubr.bf16.gmra.mrb[0].mxu0 %v4527
      %v4621 = vpop.f32.mrb[0].mxu0
      %v4622 = vadd.f32 0.0, %v4621
      %v4623 = vpop.f32.mrb[0].mxu0
      %v4624 = vpop.f32.mrb[0].mxu0
      %v4625 = vadd.f32 0.0, %v4624
      %v4626 = vpop.f32.mrb[0].mxu0
      %4627 = vmatprep.mubr.bf16.mxu0 0
      %4628 = vmatmul.mubr.bf16.gmra.mrb[0].mxu0 %v4530
      %v4629 = vpop.f32.mrb[0].mxu0
      %v4630 = vadd.f32 0.0, %v4629
      %v4631 = vpop.f32.mrb[0].mxu0
      %v4632 = vpop.f32.mrb[0].mxu0
      %v4633 = vadd.f32 0.0, %v4632
      %v4634 = vpop.f32.mrb[0].mxu0
      %4635 = vmatprep.mubr.bf16.mxu0 0
      %4636 = vmatmul.mubr.bf16.gmra.mrb[0].mxu0 %v4533
      %v4637 = vpop.f32.mrb[0].mxu0
      %v4638 = vadd.f32 0.0, %v4637
      %v4639 = vpop.f32.mrb[0].mxu0
      %v4640 = vpop.f32.mrb[0].mxu0
      %v4641 = vadd.f32 0.0, %v4640
      %v4642 = vpop.f32.mrb[0].mxu0
      %4643 = vmatprep.mubr.bf16.mxu0 0
      %4644 = vmatmul.mubr.bf16.gmra.mrb[0].mxu0 %v4536
      %v4645 = vpop.f32.mrb[0].mxu0
      %v4646 = vadd.f32 0.0, %v4645
      %v4647 = vpop.f32.mrb[0].mxu0
      %v4648 = vpop.f32.mrb[0].mxu0
      %v4649 = vadd.f32 0.0, %v4648
      %v4650 = vpop.f32.mrb[0].mxu0
      %4651 = vmatprep.mubr.bf16.mxu0 0
      %4652 = vmatmul.mubr.bf16.gmra.mrb[0].mxu0 %v4539
      %v4653 = vpop.f32.mrb[0].mxu0
      %v4654 = vadd.f32 0.0, %v4653
      %v4655 = vpop.f32.mrb[0].mxu0
      %v4656 = vpop.f32.mrb[0].mxu0
      %v4657 = vadd.f32 0.0, %v4656
      %v4658 = vpop.f32.mrb[0].mxu0
      %4659 = vmatprep.mubr.bf16.mxu0 0
      %4660 = vmatmul.mubr.bf16.gmra.mrb[0].mxu0 %v4542
      %v4661 = vpop.f32.mrb[0].mxu0
      %v4662 = vadd.f32 0.0, %v4661
      %v4663 = vpop.f32.mrb[0].mxu0
      %v4664 = vpop.f32.mrb[0].mxu0
      %v4665 = vadd.f32 0.0, %v4664
      %v4666 = vpop.f32.mrb[0].mxu0
      %4667 = vmatprep.mubr.bf16.mxu0 0
      %4668 = vmatmul.mubr.bf16.gmra.mrb[0].mxu0 %v4545
      %v4669 = vpop.f32.mrb[0].mxu0
      %v4670 = vadd.f32 0.0, %v4669
      %v4671 = vpop.f32.mrb[0].mxu0
      %v4672 = vpop.f32.mrb[0].mxu0
      %v4673 = vadd.f32 0.0, %v4672
      %v4674 = vpop.f32.mrb[0].mxu0
      %4675 = vmatprep.mubr.bf16.mxu0 0
      %4676 = vmatmul.mubr.bf16.gmra.mrb[0].mxu0 %v4548
      %v4677 = vpop.f32.mrb[0].mxu0
      %v4678 = vadd.f32 0.0, %v4677
      %v4679 = vpop.f32.mrb[0].mxu0
      %v4680 = vpop.f32.mrb[0].mxu0
      %v4681 = vadd.f32 0.0, %v4680
      %v4682 = vpop.f32.mrb[0].mxu0
      %4683 = vmatprep.mubr.bf16.mxu0 0
      %4684 = vmatmul.mubr.bf16.gmra.mrb[0].mxu0 %v4551
      %v4685 = vpop.f32.mrb[0].mxu0
      %v4686 = vadd.f32 0.0, %v4685
      %v4687 = vpop.f32.mrb[0].mxu0
      %v4688 = vpop.f32.mrb[0].mxu0
      %v4689 = vadd.f32 0.0, %v4688
      %v4690 = vpop.f32.mrb[0].mxu0
      %4691 = vmatprep.mubr.bf16.mxu0 0
      %4692 = vmatmul.mubr.bf16.gmra.mrb[0].mxu0 %v4554
      %v4693 = vpop.f32.mrb[0].mxu0
      %v4694 = vadd.f32 0.0, %v4693
      %v4695 = vpop.f32.mrb[0].mxu0
      %v4696 = vpop.f32.mrb[0].mxu0
      %v4697 = vadd.f32 0.0, %v4696
      %v4698 = vpop.f32.mrb[0].mxu0
      %4699 = vmatprep.mubr.bf16.mxu0 0
      %4700 = vmatmul.mubr.bf16.gmra.mrb[0].mxu0 %v4557
      %v4701 = vpop.f32.mrb[0].mxu0
      %v4702 = vadd.f32 0.0, %v4701
      %v4703 = vpop.f32.mrb[0].mxu0
      %v4704 = vpop.f32.mrb[0].mxu0
      %v4705 = vadd.f32 0.0, %v4704
      %v4706 = vpop.f32.mrb[0].mxu0
      %4707 = vmatprep.mubr.bf16.mxu0 0
      %4708 = vmatmul.mubr.bf16.gmra.mrb[0].mxu0 %v4560
      %v4709 = vpop.f32.mrb[0].mxu0
      %v4710 = vadd.f32 0.0, %v4709
      %v4711 = vpop.f32.mrb[0].mxu0
      %v4712 = vpop.f32.mrb[0].mxu0
      %v4713 = vadd.f32 0.0, %v4712
      %v4714 = vpop.f32.mrb[0].mxu0
      %4715 = vmatprep.mubr.bf16.mxu0 0
      %4716 = vmatmul.mubr.bf16.gmra.mrb[0].mxu0 %v4563
      %v4717 = vpop.f32.mrb[0].mxu0
      %v4718 = vadd.f32 0.0, %v4717
      %v4719 = vpop.f32.mrb[0].mxu0
      %v4720 = vpop.f32.mrb[0].mxu0
      %v4721 = vadd.f32 0.0, %v4720
      %v4722 = vpop.f32.mrb[0].mxu0
      %4723 = vmatprep.mubr.bf16.mxu0 0
      %4724 = vmatmul.mubr.bf16.gmra.mrb[0].mxu0 %v4566
      %v4725 = vpop.f32.mrb[0].mxu0
      %v4726 = vadd.f32 0.0, %v4725
      %v4727 = vpop.f32.mrb[0].mxu0
      %v4728 = vpop.f32.mrb[0].mxu0
      %v4729 = vadd.f32 0.0, %v4728
      %v4730 = vpop.f32.mrb[0].mxu0
      %4731 = vdwg.mxu0
      %v4732 = vadd.f32 %v4338, %v4606
      %v4733 = vadd.f32 %v4339, %v4609
      %v4734 = vadd.f32 %v4340, %v4614
      %v4735 = vadd.f32 %v4341, %v4617
      %v4736 = vadd.f32 %v4342, %v4622
      %v4737 = vadd.f32 %v4343, %v4625
      %v4738 = vadd.f32 %v4344, %v4630
      %v4739 = vadd.f32 %v4345, %v4633
      %v4740 = vadd.f32 %v4346, %v4638
      %v4741 = vadd.f32 %v4347, %v4641
      %v4742 = vadd.f32 %v4348, %v4646
      %v4743 = vadd.f32 %v4349, %v4649
      %v4744 = vadd.f32 %v4350, %v4654
      %v4745 = vadd.f32 %v4351, %v4657
      %v4746 = vadd.f32 %v4352, %v4662
      %v4747 = vadd.f32 %v4353, %v4665
      %v4748 = vadd.f32 %v4354, %v4670
      %v4749 = vadd.f32 %v4355, %v4673
      %v4750 = vadd.f32 %v4356, %v4678
      %v4751 = vadd.f32 %v4357, %v4681
      %v4752 = vadd.f32 %v4358, %v4686
      %v4753 = vadd.f32 %v4359, %v4689
      %v4754 = vadd.f32 %v4360, %v4694
      %v4755 = vadd.f32 %v4361, %v4697
      %v4756 = vadd.f32 %v4362, %v4702
      %v4757 = vadd.f32 %v4363, %v4705
      %v4758 = vadd.f32 %v4364, %v4710
      %v4759 = vadd.f32 %v4365, %v4713
      %v4760 = vadd.f32 %v4366, %v4718
      %v4761 = vadd.f32 %v4367, %v4721
      %v4762 = vadd.f32 %v4368, %v4726
      %v4763 = vadd.f32 %v4369, %v4729
      %v4764 = vld [vmem:[%s2 + $0x10] sm:$0x1]
      %v4765 = vlaneseq
      %v4766 = vshrl.u32 %v4765, 7
      %v4767 = vsub.s32 0, %v4766
      %v4768 = vrot.slane %v4764, %v4767
      %v4769 = vadd.f32 %v4732, %v4768
      %v4770 = vadd.f32 %v4733, %v4768
      %v4771 = vadd.f32 %v4734, %v4768
      %v4772 = vadd.f32 %v4735, %v4768
      %v4773 = vadd.f32 %v4736, %v4768
      %v4774 = vadd.f32 %v4737, %v4768
      %v4775 = vadd.f32 %v4738, %v4768
      %v4776 = vadd.f32 %v4739, %v4768
      %v4777 = vadd.f32 %v4740, %v4768
      %v4778 = vadd.f32 %v4741, %v4768
      %v4779 = vadd.f32 %v4742, %v4768
      %v4780 = vadd.f32 %v4743, %v4768
      %v4781 = vadd.f32 %v4744, %v4768
      %v4782 = vadd.f32 %v4745, %v4768
      %v4783 = vadd.f32 %v4746, %v4768
      %v4784 = vadd.f32 %v4747, %v4768
      %v4785 = vadd.f32 %v4748, %v4768
      %v4786 = vadd.f32 %v4749, %v4768
      %v4787 = vadd.f32 %v4750, %v4768
      %v4788 = vadd.f32 %v4751, %v4768
      %v4789 = vadd.f32 %v4752, %v4768
      %v4790 = vadd.f32 %v4753, %v4768
      %v4791 = vadd.f32 %v4754, %v4768
      %v4792 = vadd.f32 %v4755, %v4768
      %v4793 = vadd.f32 %v4756, %v4768
      %v4794 = vadd.f32 %v4757, %v4768
      %v4795 = vadd.f32 %v4758, %v4768
      %v4796 = vadd.f32 %v4759, %v4768
      %v4797 = vadd.f32 %v4760, %v4768
      %v4798 = vadd.f32 %v4761, %v4768
      %v4799 = vadd.f32 %v4762, %v4768
      %v4800 = vadd.f32 %v4763, %v4768
      %v4801 = vmul.f32 %v4769, 0.5
      %v4802 = vmul.f32 %v4770, 0.5
      %v4803 = vmul.f32 %v4771, 0.5
      %v4804 = vmul.f32 %v4772, 0.5
      %v4805 = vmul.f32 %v4773, 0.5
      %v4806 = vmul.f32 %v4774, 0.5
      %v4807 = vmul.f32 %v4775, 0.5
      %v4808 = vmul.f32 %v4776, 0.5
      %v4809 = vmul.f32 %v4777, 0.5
      %v4810 = vmul.f32 %v4778, 0.5
      %v4811 = vmul.f32 %v4779, 0.5
      %v4812 = vmul.f32 %v4780, 0.5
      %v4813 = vmul.f32 %v4781, 0.5
      %v4814 = vmul.f32 %v4782, 0.5
      %v4815 = vmul.f32 %v4783, 0.5
      %v4816 = vmul.f32 %v4784, 0.5
      %v4817 = vmul.f32 %v4785, 0.5
      %v4818 = vmul.f32 %v4786, 0.5
      %v4819 = vmul.f32 %v4787, 0.5
      %v4820 = vmul.f32 %v4788, 0.5
      %v4821 = vmul.f32 %v4789, 0.5
      %v4822 = vmul.f32 %v4790, 0.5
      %v4823 = vmul.f32 %v4791, 0.5
      %v4824 = vmul.f32 %v4792, 0.5
      %v4825 = vmul.f32 %v4793, 0.5
      %v4826 = vmul.f32 %v4794, 0.5
      %v4827 = vmul.f32 %v4795, 0.5
      %v4828 = vmul.f32 %v4796, 0.5
      %v4829 = vmul.f32 %v4797, 0.5
      %v4830 = vmul.f32 %v4798, 0.5
      %v4831 = vmul.f32 %v4799, 0.5
      %v4832 = vmul.f32 %v4800, 0.5
      %v4833 = vmul.f32 %v4769, 0.044715
      %v4834 = vmul.f32 %v4770, 0.044715
      %v4835 = vmul.f32 %v4771, 0.044715
      %v4836 = vmul.f32 %v4772, 0.044715
      %v4837 = vmul.f32 %v4773, 0.044715
      %v4838 = vmul.f32 %v4774, 0.044715
      %v4839 = vmul.f32 %v4775, 0.044715
      %v4840 = vmul.f32 %v4776, 0.044715
      %v4841 = vmul.f32 %v4777, 0.044715
      %v4842 = vmul.f32 %v4778, 0.044715
      %v4843 = vmul.f32 %v4779, 0.044715
      %v4844 = vmul.f32 %v4780, 0.044715
      %v4845 = vmul.f32 %v4781, 0.044715
      %v4846 = vmul.f32 %v4782, 0.044715
      %v4847 = vmul.f32 %v4783, 0.044715
      %v4848 = vmul.f32 %v4784, 0.044715
      %v4849 = vmul.f32 %v4785, 0.044715
      %v4850 = vmul.f32 %v4786, 0.044715
      %v4851 = vmul.f32 %v4787, 0.044715
      %v4852 = vmul.f32 %v4788, 0.044715
      %v4853 = vmul.f32 %v4789, 0.044715
      %v4854 = vmul.f32 %v4790, 0.044715
      %v4855 = vmul.f32 %v4791, 0.044715
      %v4856 = vmul.f32 %v4792, 0.044715
      %v4857 = vmul.f32 %v4793, 0.044715
      %v4858 = vmul.f32 %v4794, 0.044715
      %v4859 = vmul.f32 %v4795, 0.044715
      %v4860 = vmul.f32 %v4796, 0.044715
      %v4861 = vmul.f32 %v4797, 0.044715
      %v4862 = vmul.f32 %v4798, 0.044715
      %v4863 = vmul.f32 %v4799, 0.044715
      %v4864 = vmul.f32 %v4800, 0.044715
      %v4865 = vmul.f32 %v4833, %v4769
      %v4866 = vmul.f32 %v4834, %v4770
      %v4867 = vmul.f32 %v4835, %v4771
      %v4868 = vmul.f32 %v4836, %v4772
      %v4869 = vmul.f32 %v4837, %v4773
      %v4870 = vmul.f32 %v4838, %v4774
      %v4871 = vmul.f32 %v4839, %v4775
      %v4872 = vmul.f32 %v4840, %v4776
      %v4873 = vmul.f32 %v4841, %v4777
      %v4874 = vmul.f32 %v4842, %v4778
      %v4875 = vmul.f32 %v4843, %v4779
      %v4876 = vmul.f32 %v4844, %v4780
      %v4877 = vmul.f32 %v4845, %v4781
      %v4878 = vmul.f32 %v4846, %v4782
      %v4879 = vmul.f32 %v4847, %v4783
      %v4880 = vmul.f32 %v4848, %v4784
      %v4881 = vmul.f32 %v4849, %v4785
      %v4882 = vmul.f32 %v4850, %v4786
      %v4883 = vmul.f32 %v4851, %v4787
      %v4884 = vmul.f32 %v4852, %v4788
      %v4885 = vmul.f32 %v4853, %v4789
      %v4886 = vmul.f32 %v4854, %v4790
      %v4887 = vmul.f32 %v4855, %v4791
      %v4888 = vmul.f32 %v4856, %v4792
      %v4889 = vmul.f32 %v4857, %v4793
      %v4890 = vmul.f32 %v4858, %v4794
      %v4891 = vmul.f32 %v4859, %v4795
      %v4892 = vmul.f32 %v4860, %v4796
      %v4893 = vmul.f32 %v4861, %v4797
      %v4894 = vmul.f32 %v4862, %v4798
      %v4895 = vmul.f32 %v4863, %v4799
      %v4896 = vmul.f32 %v4864, %v4800
      %v4897 = vmul.f32 %v4865, %v4769
      %v4898 = vmul.f32 %v4866, %v4770
      %v4899 = vmul.f32 %v4867, %v4771
      %v4900 = vmul.f32 %v4868, %v4772
      %v4901 = vmul.f32 %v4869, %v4773
      %v4902 = vmul.f32 %v4870, %v4774
      %v4903 = vmul.f32 %v4871, %v4775
      %v4904 = vmul.f32 %v4872, %v4776
      %v4905 = vmul.f32 %v4873, %v4777
      %v4906 = vmul.f32 %v4874, %v4778
      %v4907 = vmul.f32 %v4875, %v4779
      %v4908 = vmul.f32 %v4876, %v4780
      %v4909 = vmul.f32 %v4877, %v4781
      %v4910 = vmul.f32 %v4878, %v4782
      %v4911 = vmul.f32 %v4879, %v4783
      %v4912 = vmul.f32 %v4880, %v4784
      %v4913 = vmul.f32 %v4881, %v4785
      %v4914 = vmul.f32 %v4882, %v4786
      %v4915 = vmul.f32 %v4883, %v4787
      %v4916 = vmul.f32 %v4884, %v4788
      %v4917 = vmul.f32 %v4885, %v4789
      %v4918 = vmul.f32 %v4886, %v4790
      %v4919 = vmul.f32 %v4887, %v4791
      %v4920 = vmul.f32 %v4888, %v4792
      %v4921 = vmul.f32 %v4889, %v4793
      %v4922 = vmul.f32 %v4890, %v4794
      %v4923 = vmul.f32 %v4891, %v4795
      %v4924 = vmul.f32 %v4892, %v4796
      %v4925 = vmul.f32 %v4893, %v4797
      %v4926 = vmul.f32 %v4894, %v4798
      %v4927 = vmul.f32 %v4895, %v4799
      %v4928 = vmul.f32 %v4896, %v4800
      %v4929 = vadd.f32 %v4769, %v4897
      %v4930 = vadd.f32 %v4770, %v4898
      %v4931 = vadd.f32 %v4771, %v4899
      %v4932 = vadd.f32 %v4772, %v4900
      %v4933 = vadd.f32 %v4773, %v4901
      %v4934 = vadd.f32 %v4774, %v4902
      %v4935 = vadd.f32 %v4775, %v4903
      %v4936 = vadd.f32 %v4776, %v4904
      %v4937 = vadd.f32 %v4777, %v4905
      %v4938 = vadd.f32 %v4778, %v4906
      %v4939 = vadd.f32 %v4779, %v4907
      %v4940 = vadd.f32 %v4780, %v4908
      %v4941 = vadd.f32 %v4781, %v4909
      %v4942 = vadd.f32 %v4782, %v4910
      %v4943 = vadd.f32 %v4783, %v4911
      %v4944 = vadd.f32 %v4784, %v4912
      %v4945 = vadd.f32 %v4785, %v4913
      %v4946 = vadd.f32 %v4786, %v4914
      %v4947 = vadd.f32 %v4787, %v4915
      %v4948 = vadd.f32 %v4788, %v4916
      %v4949 = vadd.f32 %v4789, %v4917
      %v4950 = vadd.f32 %v4790, %v4918
      %v4951 = vadd.f32 %v4791, %v4919
      %v4952 = vadd.f32 %v4792, %v4920
      %v4953 = vadd.f32 %v4793, %v4921
      %v4954 = vadd.f32 %v4794, %v4922
      %v4955 = vadd.f32 %v4795, %v4923
      %v4956 = vadd.f32 %v4796, %v4924
      %v4957 = vadd.f32 %v4797, %v4925
      %v4958 = vadd.f32 %v4798, %v4926
      %v4959 = vadd.f32 %v4799, %v4927
      %v4960 = vadd.f32 %v4800, %v4928
      %v4961 = vmul.f32 %v4929, 0.7978846
      %v4962 = vmul.f32 %v4930, 0.7978846
      %v4963 = vmul.f32 %v4931, 0.7978846
      %v4964 = vmul.f32 %v4932, 0.7978846
      %v4965 = vmul.f32 %v4933, 0.7978846
      %v4966 = vmul.f32 %v4934, 0.7978846
      %v4967 = vmul.f32 %v4935, 0.7978846
      %v4968 = vmul.f32 %v4936, 0.7978846
      %v4969 = vmul.f32 %v4937, 0.7978846
      %v4970 = vmul.f32 %v4938, 0.7978846
      %v4971 = vmul.f32 %v4939, 0.7978846
      %v4972 = vmul.f32 %v4940, 0.7978846
      %v4973 = vmul.f32 %v4941, 0.7978846
      %v4974 = vmul.f32 %v4942, 0.7978846
      %v4975 = vmul.f32 %v4943, 0.7978846
      %v4976 = vmul.f32 %v4944, 0.7978846
      %v4977 = vmul.f32 %v4945, 0.7978846
      %v4978 = vmul.f32 %v4946, 0.7978846
      %v4979 = vmul.f32 %v4947, 0.7978846
      %v4980 = vmul.f32 %v4948, 0.7978846
      %v4981 = vmul.f32 %v4949, 0.7978846
      %v4982 = vmul.f32 %v4950, 0.7978846
      %v4983 = vmul.f32 %v4951, 0.7978846
      %v4984 = vmul.f32 %v4952, 0.7978846
      %v4985 = vmul.f32 %v4953, 0.7978846
      %v4986 = vmul.f32 %v4954, 0.7978846
      %v4987 = vmul.f32 %v4955, 0.7978846
      %v4988 = vmul.f32 %v4956, 0.7978846
      %v4989 = vmul.f32 %v4957, 0.7978846
      %v4990 = vmul.f32 %v4958, 0.7978846
      %v4991 = vmul.f32 %v4959, 0.7978846
      %v4992 = vmul.f32 %v4960, 0.7978846
      %v4993 = vtanh.pop %v4961
      %v4994 = vtanh.pop %v4962
      %v4995 = vtanh.pop %v4963
      %v4996 = vtanh.pop %v4964
      %v4997 = vtanh.pop %v4965
      %v4998 = vtanh.pop %v4966
      %v4999 = vtanh.pop %v4967
      %v5000 = vtanh.pop %v4968
      %v5001 = vtanh.pop %v4969
      %v5002 = vtanh.pop %v4970
      %v5003 = vtanh.pop %v4971
      %v5004 = vtanh.pop %v4972
      %v5005 = vtanh.pop %v4973
      %v5006 = vtanh.pop %v4974
      %v5007 = vtanh.pop %v4975
      %v5008 = vtanh.pop %v4976
      %v5009 = vtanh.pop %v4977
      %v5010 = vtanh.pop %v4978
      %v5011 = vtanh.pop %v4979
      %v5012 = vtanh.pop %v4980
      %v5013 = vtanh.pop %v4981
      %v5014 = vtanh.pop %v4982
      %v5015 = vtanh.pop %v4983
      %v5016 = vtanh.pop %v4984
      %v5017 = vtanh.pop %v4985
      %v5018 = vtanh.pop %v4986
      %v5019 = vtanh.pop %v4987
      %v5020 = vtanh.pop %v4988
      %v5021 = vtanh.pop %v4989
      %v5022 = vtanh.pop %v4990
      %v5023 = vtanh.pop %v4991
      %v5024 = vtanh.pop %v4992
      %v5025 = vadd.f32 %v4993, 1.0
      %v5026 = vadd.f32 %v4994, 1.0
      %v5027 = vadd.f32 %v4995, 1.0
      %v5028 = vadd.f32 %v4996, 1.0
      %v5029 = vadd.f32 %v4997, 1.0
      %v5030 = vadd.f32 %v4998, 1.0
      %v5031 = vadd.f32 %v4999, 1.0
      %v5032 = vadd.f32 %v5000, 1.0
      %v5033 = vadd.f32 %v5001, 1.0
      %v5034 = vadd.f32 %v5002, 1.0
      %v5035 = vadd.f32 %v5003, 1.0
      %v5036 = vadd.f32 %v5004, 1.0
      %v5037 = vadd.f32 %v5005, 1.0
      %v5038 = vadd.f32 %v5006, 1.0
      %v5039 = vadd.f32 %v5007, 1.0
      %v5040 = vadd.f32 %v5008, 1.0
      %v5041 = vadd.f32 %v5009, 1.0
      %v5042 = vadd.f32 %v5010, 1.0
      %v5043 = vadd.f32 %v5011, 1.0
      %v5044 = vadd.f32 %v5012, 1.0
      %v5045 = vadd.f32 %v5013, 1.0
      %v5046 = vadd.f32 %v5014, 1.0
      %v5047 = vadd.f32 %v5015, 1.0
      %v5048 = vadd.f32 %v5016, 1.0
      %v5049 = vadd.f32 %v5017, 1.0
      %v5050 = vadd.f32 %v5018, 1.0
      %v5051 = vadd.f32 %v5019, 1.0
      %v5052 = vadd.f32 %v5020, 1.0
      %v5053 = vadd.f32 %v5021, 1.0
      %v5054 = vadd.f32 %v5022, 1.0
      %v5055 = vadd.f32 %v5023, 1.0
      %v5056 = vadd.f32 %v5024, 1.0
      %v5057 = vmul.f32 %v4801, %v5025
      %v5058 = vmul.f32 %v4802, %v5026
      %v5059 = vmul.f32 %v4803, %v5027
      %v5060 = vmul.f32 %v4804, %v5028
      %v5061 = vmul.f32 %v4805, %v5029
      %v5062 = vmul.f32 %v4806, %v5030
      %v5063 = vmul.f32 %v4807, %v5031
      %v5064 = vmul.f32 %v4808, %v5032
      %v5065 = vmul.f32 %v4809, %v5033
      %v5066 = vmul.f32 %v4810, %v5034
      %v5067 = vmul.f32 %v4811, %v5035
      %v5068 = vmul.f32 %v4812, %v5036
      %v5069 = vmul.f32 %v4813, %v5037
      %v5070 = vmul.f32 %v4814, %v5038
      %v5071 = vmul.f32 %v4815, %v5039
      %v5072 = vmul.f32 %v4816, %v5040
      %v5073 = vmul.f32 %v4817, %v5041
      %v5074 = vmul.f32 %v4818, %v5042
      %v5075 = vmul.f32 %v4819, %v5043
      %v5076 = vmul.f32 %v4820, %v5044
      %v5077 = vmul.f32 %v4821, %v5045
      %v5078 = vmul.f32 %v4822, %v5046
      %v5079 = vmul.f32 %v4823, %v5047
      %v5080 = vmul.f32 %v4824, %v5048
      %v5081 = vmul.f32 %v4825, %v5049
      %v5082 = vmul.f32 %v4826, %v5050
      %v5083 = vmul.f32 %v4827, %v5051
      %v5084 = vmul.f32 %v4828, %v5052
      %v5085 = vmul.f32 %v4829, %v5053
      %v5086 = vmul.f32 %v4830, %v5054
      %v5087 = vmul.f32 %v4831, %v5055
      %v5088 = vmul.f32 %v4832, %v5056
      %v5089 = vpack.c.bf16 %v5058, %v5057
      %v5090 = vpack.c.bf16 %v5060, %v5059
      %v5091 = vpack.c.bf16 %v5062, %v5061
      %v5092 = vpack.c.bf16 %v5064, %v5063
      %v5093 = vpack.c.bf16 %v5066, %v5065
      %v5094 = vpack.c.bf16 %v5068, %v5067
      %v5095 = vpack.c.bf16 %v5070, %v5069
      %v5096 = vpack.c.bf16 %v5072, %v5071
      %v5097 = vpack.c.bf16 %v5074, %v5073
      %v5098 = vpack.c.bf16 %v5076, %v5075
      %v5099 = vpack.c.bf16 %v5078, %v5077
      %v5100 = vpack.c.bf16 %v5080, %v5079
      %v5101 = vpack.c.bf16 %v5082, %v5081
      %v5102 = vpack.c.bf16 %v5084, %v5083
      %v5103 = vpack.c.bf16 %v5086, %v5085
      %v5104 = vpack.c.bf16 %v5088, %v5087
      %v5105 = vld [vmem:[%s1 + $0x58] sm:$0xf]
      %v5106 = vld [vmem:[%s2 + $0x18] sm:$0x1]
      %v5107 = vlaneseq
      %v5108 = vshrl.u32 %v5107, 7
      %v5109 = vsub.s32 0, %v5108
      %v5110 = vrot.slane %v5106, %v5109
      %v5112 = vsel %vm279, %v5089, 0
      %v5115 = vsel %vm279, %v5090, 0
      %v5118 = vsel %vm279, %v5091, 0
      %v5121 = vsel %vm279, %v5092, 0
      %v5124 = vsel %vm279, %v5093, 0
      %v5127 = vsel %vm279, %v5094, 0
      %v5130 = vsel %vm279, %v5095, 0
      %v5133 = vsel %vm279, %v5096, 0
      %v5136 = vsel %vm279, %v5097, 0
      %v5139 = vsel %vm279, %v5098, 0
      %v5142 = vsel %vm279, %v5099, 0
      %v5145 = vsel %vm279, %v5100, 0
      %v5148 = vsel %vm279, %v5101, 0
      %v5151 = vsel %vm279, %v5102, 0
      %v5154 = vsel %vm279, %v5103, 0
      %v5157 = vsel %vm279, %v5104, 0
      %v5160 = vsel %vm446, %v5105, 0
      %5162 = vmatprep.subr.bf16.mxu0 0
      %5163 = vmatpush1.bf16.msra.mxu0 %v5160
      %5164 = vmatprep.subr.bf16.mxu0 0
      %5165 = vmatpush1.bf16.msra.mxu0 0
      %5166 = vmatprep.subr.bf16.mxu0 0
      %5167 = vmatpush1.bf16.msra.mxu0 0
      %5168 = vmatprep.subr.bf16.mxu0 0
      %5169 = vmatpush1.bf16.msra.mxu0 0
      %5170 = vmatprep.subr.bf16.mxu0 0
      %5171 = vmatpush1.bf16.msra.mxu0 0
      %5172 = vmatprep.subr.bf16.mxu0 0
      %5173 = vmatpush1.bf16.msra.mxu0 0
      %5174 = vmatprep.subr.bf16.mxu0 0
      %5175 = vmatpush1.bf16.msra.mxu0 0
      %5176 = vmatprep.subr.bf16.mxu0 0
      %5177 = vmatpush1.bf16.msra.mxu0 0
      %5178 = vmatprep.subr.bf16.mxu0 0
      %5179 = vmatpush1.bf16.msra.mxu0 0
      %5180 = vmatprep.subr.bf16.mxu0 0
      %5181 = vmatpush1.bf16.msra.mxu0 0
      %5182 = vmatprep.subr.bf16.mxu0 0
      %5183 = vmatpush1.bf16.msra.mxu0 0
      %5184 = vmatprep.subr.bf16.mxu0 0
      %5185 = vmatpush1.bf16.msra.mxu0 0
      %5186 = vmatprep.subr.bf16.mxu0 0
      %5187 = vmatpush1.bf16.msra.mxu0 0
      %5188 = vmatprep.subr.bf16.mxu0 0
      %5189 = vmatpush1.bf16.msra.mxu0 0
      %5190 = vmatprep.subr.bf16.mxu0 0
      %5191 = vmatpush1.bf16.msra.mxu0 0
      %5192 = vmatprep.subr.bf16.mxu0 0
      %5193 = vmatpush1.bf16.msra.mxu0 0
      %5194 = vmatprep.mubr.bf16.mxu0 0
      %5195 = vmatmul.mubr.bf16.gmra.mrb[0].mxu0 %v5112
      %v5196 = vpop.f32.mrb[0].mxu0
      %v5197 = vadd.f32 %v5110, %v5196
      %v5198 = vpop.f32.mrb[0].mxu0
      %v5199 = vpop.f32.mrb[0].mxu0
      %v5200 = vadd.f32 %v5110, %v5199
      %v5201 = vpop.f32.mrb[0].mxu0
      %5202 = vmatprep.mubr.bf16.mxu0 0
      %5203 = vmatmul.mubr.bf16.gmra.mrb[0].mxu0 %v5115
      %v5204 = vpop.f32.mrb[0].mxu0
      %v5205 = vadd.f32 %v5110, %v5204
      %v5206 = vpop.f32.mrb[0].mxu0
      %v5207 = vpop.f32.mrb[0].mxu0
      %v5208 = vadd.f32 %v5110, %v5207
      %v5209 = vpop.f32.mrb[0].mxu0
      %5210 = vmatprep.mubr.bf16.mxu0 0
      %5211 = vmatmul.mubr.bf16.gmra.mrb[0].mxu0 %v5118
      %v5212 = vpop.f32.mrb[0].mxu0
      %v5213 = vadd.f32 %v5110, %v5212
      %v5214 = vpop.f32.mrb[0].mxu0
      %v5215 = vpop.f32.mrb[0].mxu0
      %v5216 = vadd.f32 %v5110, %v5215
      %v5217 = vpop.f32.mrb[0].mxu0
      %5218 = vmatprep.mubr.bf16.mxu0 0
      %5219 = vmatmul.mubr.bf16.gmra.mrb[0].mxu0 %v5121
      %v5220 = vpop.f32.mrb[0].mxu0
      %v5221 = vadd.f32 %v5110, %v5220
      %v5222 = vpop.f32.mrb[0].mxu0
      %v5223 = vpop.f32.mrb[0].mxu0
      %v5224 = vadd.f32 %v5110, %v5223
      %v5225 = vpop.f32.mrb[0].mxu0
      %5226 = vmatprep.mubr.bf16.mxu0 0
      %5227 = vmatmul.mubr.bf16.gmra.mrb[0].mxu0 %v5124
      %v5228 = vpop.f32.mrb[0].mxu0
      %v5229 = vadd.f32 %v5110, %v5228
      %v5230 = vpop.f32.mrb[0].mxu0
      %v5231 = vpop.f32.mrb[0].mxu0
      %v5232 = vadd.f32 %v5110, %v5231
      %v5233 = vpop.f32.mrb[0].mxu0
      %5234 = vmatprep.mubr.bf16.mxu0 0
      %5235 = vmatmul.mubr.bf16.gmra.mrb[0].mxu0 %v5127
      %v5236 = vpop.f32.mrb[0].mxu0
      %v5237 = vadd.f32 %v5110, %v5236
      %v5238 = vpop.f32.mrb[0].mxu0
      %v5239 = vpop.f32.mrb[0].mxu0
      %v5240 = vadd.f32 %v5110, %v5239
      %v5241 = vpop.f32.mrb[0].mxu0
      %5242 = vmatprep.mubr.bf16.mxu0 0
      %5243 = vmatmul.mubr.bf16.gmra.mrb[0].mxu0 %v5130
      %v5244 = vpop.f32.mrb[0].mxu0
      %v5245 = vadd.f32 %v5110, %v5244
      %v5246 = vpop.f32.mrb[0].mxu0
      %v5247 = vpop.f32.mrb[0].mxu0
      %v5248 = vadd.f32 %v5110, %v5247
      %v5249 = vpop.f32.mrb[0].mxu0
      %5250 = vmatprep.mubr.bf16.mxu0 0
      %5251 = vmatmul.mubr.bf16.gmra.mrb[0].mxu0 %v5133
      %v5252 = vpop.f32.mrb[0].mxu0
      %v5253 = vadd.f32 %v5110, %v5252
      %v5254 = vpop.f32.mrb[0].mxu0
      %v5255 = vpop.f32.mrb[0].mxu0
      %v5256 = vadd.f32 %v5110, %v5255
      %v5257 = vpop.f32.mrb[0].mxu0
      %5258 = vmatprep.mubr.bf16.mxu0 0
      %5259 = vmatmul.mubr.bf16.gmra.mrb[0].mxu0 %v5136
      %v5260 = vpop.f32.mrb[0].mxu0
      %v5261 = vadd.f32 %v5110, %v5260
      %v5262 = vpop.f32.mrb[0].mxu0
      %v5263 = vpop.f32.mrb[0].mxu0
      %v5264 = vadd.f32 %v5110, %v5263
      %v5265 = vpop.f32.mrb[0].mxu0
      %5266 = vmatprep.mubr.bf16.mxu0 0
      %5267 = vmatmul.mubr.bf16.gmra.mrb[0].mxu0 %v5139
      %v5268 = vpop.f32.mrb[0].mxu0
      %v5269 = vadd.f32 %v5110, %v5268
      %v5270 = vpop.f32.mrb[0].mxu0
      %v5271 = vpop.f32.mrb[0].mxu0
      %v5272 = vadd.f32 %v5110, %v5271
      %v5273 = vpop.f32.mrb[0].mxu0
      %5274 = vmatprep.mubr.bf16.mxu0 0
      %5275 = vmatmul.mubr.bf16.gmra.mrb[0].mxu0 %v5142
      %v5276 = vpop.f32.mrb[0].mxu0
      %v5277 = vadd.f32 %v5110, %v5276
      %v5278 = vpop.f32.mrb[0].mxu0
      %v5279 = vpop.f32.mrb[0].mxu0
      %v5280 = vadd.f32 %v5110, %v5279
      %v5281 = vpop.f32.mrb[0].mxu0
      %5282 = vmatprep.mubr.bf16.mxu0 0
      %5283 = vmatmul.mubr.bf16.gmra.mrb[0].mxu0 %v5145
      %v5284 = vpop.f32.mrb[0].mxu0
      %v5285 = vadd.f32 %v5110, %v5284
      %v5286 = vpop.f32.mrb[0].mxu0
      %v5287 = vpop.f32.mrb[0].mxu0
      %v5288 = vadd.f32 %v5110, %v5287
      %v5289 = vpop.f32.mrb[0].mxu0
      %5290 = vmatprep.mubr.bf16.mxu0 0
      %5291 = vmatmul.mubr.bf16.gmra.mrb[0].mxu0 %v5148
      %v5292 = vpop.f32.mrb[0].mxu0
      %v5293 = vadd.f32 %v5110, %v5292
      %v5294 = vpop.f32.mrb[0].mxu0
      %v5295 = vpop.f32.mrb[0].mxu0
      %v5296 = vadd.f32 %v5110, %v5295
      %v5297 = vpop.f32.mrb[0].mxu0
      %5298 = vmatprep.mubr.bf16.mxu0 0
      %5299 = vmatmul.mubr.bf16.gmra.mrb[0].mxu0 %v5151
      %v5300 = vpop.f32.mrb[0].mxu0
      %v5301 = vadd.f32 %v5110, %v5300
      %v5302 = vpop.f32.mrb[0].mxu0
      %v5303 = vpop.f32.mrb[0].mxu0
      %v5304 = vadd.f32 %v5110, %v5303
      %v5305 = vpop.f32.mrb[0].mxu0
      %5306 = vmatprep.mubr.bf16.mxu0 0
      %5307 = vmatmul.mubr.bf16.gmra.mrb[0].mxu0 %v5154
      %v5308 = vpop.f32.mrb[0].mxu0
      %v5309 = vadd.f32 %v5110, %v5308
      %v5310 = vpop.f32.mrb[0].mxu0
      %v5311 = vpop.f32.mrb[0].mxu0
      %v5312 = vadd.f32 %v5110, %v5311
      %v5313 = vpop.f32.mrb[0].mxu0
      %5314 = vmatprep.mubr.bf16.mxu0 0
      %5315 = vmatmul.mubr.bf16.gmra.mrb[0].mxu0 %v5157
      %v5316 = vpop.f32.mrb[0].mxu0
      %v5317 = vadd.f32 %v5110, %v5316
      %v5318 = vpop.f32.mrb[0].mxu0
      %v5319 = vpop.f32.mrb[0].mxu0
      %v5320 = vadd.f32 %v5110, %v5319
      %v5321 = vpop.f32.mrb[0].mxu0
      %5322 = vdwg.mxu0
      %v5323 = vsub.f32 0.0, %v5197
      %v5324 = vsub.f32 0.0, %v5200
      %v5325 = vsub.f32 0.0, %v5205
      %v5326 = vsub.f32 0.0, %v5208
      %v5327 = vsub.f32 0.0, %v5213
      %v5328 = vsub.f32 0.0, %v5216
      %v5329 = vsub.f32 0.0, %v5221
      %v5330 = vsub.f32 0.0, %v5224
      %v5331 = vsub.f32 0.0, %v5229
      %v5332 = vsub.f32 0.0, %v5232
      %v5333 = vsub.f32 0.0, %v5237
      %v5334 = vsub.f32 0.0, %v5240
      %v5335 = vsub.f32 0.0, %v5245
      %v5336 = vsub.f32 0.0, %v5248
      %v5337 = vsub.f32 0.0, %v5253
      %v5338 = vsub.f32 0.0, %v5256
      %v5339 = vsub.f32 0.0, %v5261
      %v5340 = vsub.f32 0.0, %v5264
      %v5341 = vsub.f32 0.0, %v5269
      %v5342 = vsub.f32 0.0, %v5272
      %v5343 = vsub.f32 0.0, %v5277
      %v5344 = vsub.f32 0.0, %v5280
      %v5345 = vsub.f32 0.0, %v5285
      %v5346 = vsub.f32 0.0, %v5288
      %v5347 = vsub.f32 0.0, %v5293
      %v5348 = vsub.f32 0.0, %v5296
      %v5349 = vsub.f32 0.0, %v5301
      %v5350 = vsub.f32 0.0, %v5304
      %v5351 = vsub.f32 0.0, %v5309
      %v5352 = vsub.f32 0.0, %v5312
      %v5353 = vsub.f32 0.0, %v5317
      %v5354 = vsub.f32 0.0, %v5320
      %v5355 = vmul.f32 %v5323, 1.442695
      %v5356 = vpow.pop %v5355
      %v5357 = vmul.f32 %v5324, 1.442695
      %v5358 = vpow.pop %v5357
      %v5359 = vmul.f32 %v5325, 1.442695
      %v5360 = vpow.pop %v5359
      %v5361 = vmul.f32 %v5326, 1.442695
      %v5362 = vpow.pop %v5361
      %v5363 = vmul.f32 %v5327, 1.442695
      %v5364 = vpow.pop %v5363
      %v5365 = vmul.f32 %v5328, 1.442695
      %v5366 = vpow.pop %v5365
      %v5367 = vmul.f32 %v5329, 1.442695
      %v5368 = vpow.pop %v5367
      %v5369 = vmul.f32 %v5330, 1.442695
      %v5370 = vpow.pop %v5369
      %v5371 = vmul.f32 %v5331, 1.442695
      %v5372 = vpow.pop %v5371
      %v5373 = vmul.f32 %v5332, 1.442695
      %v5374 = vpow.pop %v5373
      %v5375 = vmul.f32 %v5333, 1.442695
      %v5376 = vpow.pop %v5375
      %v5377 = vmul.f32 %v5334, 1.442695
      %v5378 = vpow.pop %v5377
      %v5379 = vmul.f32 %v5335, 1.442695
      %v5380 = vpow.pop %v5379
      %v5381 = vmul.f32 %v5336, 1.442695
      %v5382 = vpow.pop %v5381
      %v5383 = vmul.f32 %v5337, 1.442695
      %v5384 = vpow.pop %v5383
      %v5385 = vmul.f32 %v5338, 1.442695
      %v5386 = vpow.pop %v5385
      %v5387 = vmul.f32 %v5339, 1.442695
      %v5388 = vpow.pop %v5387
      %v5389 = vmul.f32 %v5340, 1.442695
      %v5390 = vpow.pop %v5389
      %v5391 = vmul.f32 %v5341, 1.442695
      %v5392 = vpow.pop %v5391
      %v5393 = vmul.f32 %v5342, 1.442695
      %v5394 = vpow.pop %v5393
      %v5395 = vmul.f32 %v5343, 1.442695
      %v5396 = vpow.pop %v5395
      %v5397 = vmul.f32 %v5344, 1.442695
      %v5398 = vpow.pop %v5397
      %v5399 = vmul.f32 %v5345, 1.442695
      %v5400 = vpow.pop %v5399
      %v5401 = vmul.f32 %v5346, 1.442695
      %v5402 = vpow.pop %v5401
      %v5403 = vmul.f32 %v5347, 1.442695
      %v5404 = vpow.pop %v5403
      %v5405 = vmul.f32 %v5348, 1.442695
      %v5406 = vpow.pop %v5405
      %v5407 = vmul.f32 %v5349, 1.442695
      %v5408 = vpow.pop %v5407
      %v5409 = vmul.f32 %v5350, 1.442695
      %v5410 = vpow.pop %v5409
      %v5411 = vmul.f32 %v5351, 1.442695
      %v5412 = vpow.pop %v5411
      %v5413 = vmul.f32 %v5352, 1.442695
      %v5414 = vpow.pop %v5413
      %v5415 = vmul.f32 %v5353, 1.442695
      %v5416 = vpow.pop %v5415
      %v5417 = vmul.f32 %v5354, 1.442695
      %v5418 = vpow.pop %v5417
      %v5419 = vadd.f32 %v5356, 1.0
      %v5420 = vadd.f32 %v5358, 1.0
      %v5421 = vadd.f32 %v5360, 1.0
      %v5422 = vadd.f32 %v5362, 1.0
      %v5423 = vadd.f32 %v5364, 1.0
      %v5424 = vadd.f32 %v5366, 1.0
      %v5425 = vadd.f32 %v5368, 1.0
      %v5426 = vadd.f32 %v5370, 1.0
      %v5427 = vadd.f32 %v5372, 1.0
      %v5428 = vadd.f32 %v5374, 1.0
      %v5429 = vadd.f32 %v5376, 1.0
      %v5430 = vadd.f32 %v5378, 1.0
      %v5431 = vadd.f32 %v5380, 1.0
      %v5432 = vadd.f32 %v5382, 1.0
      %v5433 = vadd.f32 %v5384, 1.0
      %v5434 = vadd.f32 %v5386, 1.0
      %v5435 = vadd.f32 %v5388, 1.0
      %v5436 = vadd.f32 %v5390, 1.0
      %v5437 = vadd.f32 %v5392, 1.0
      %v5438 = vadd.f32 %v5394, 1.0
      %v5439 = vadd.f32 %v5396, 1.0
      %v5440 = vadd.f32 %v5398, 1.0
      %v5441 = vadd.f32 %v5400, 1.0
      %v5442 = vadd.f32 %v5402, 1.0
      %v5443 = vadd.f32 %v5404, 1.0
      %v5444 = vadd.f32 %v5406, 1.0
      %v5445 = vadd.f32 %v5408, 1.0
      %v5446 = vadd.f32 %v5410, 1.0
      %v5447 = vadd.f32 %v5412, 1.0
      %v5448 = vadd.f32 %v5414, 1.0
      %v5449 = vadd.f32 %v5416, 1.0
      %v5450 = vadd.f32 %v5418, 1.0
      %v5451 = vrcp.pop %v5419
      %v5452 = vrcp.pop %v5420
      %v5453 = vrcp.pop %v5421
      %v5454 = vrcp.pop %v5422
      %v5455 = vrcp.pop %v5423
      %v5456 = vrcp.pop %v5424
      %v5457 = vrcp.pop %v5425
      %v5458 = vrcp.pop %v5426
      %v5459 = vrcp.pop %v5427
      %v5460 = vrcp.pop %v5428
      %v5461 = vrcp.pop %v5429
      %v5462 = vrcp.pop %v5430
      %v5463 = vrcp.pop %v5431
      %v5464 = vrcp.pop %v5432
      %v5465 = vrcp.pop %v5433
      %v5466 = vrcp.pop %v5434
      %v5467 = vrcp.pop %v5435
      %v5468 = vrcp.pop %v5436
      %v5469 = vrcp.pop %v5437
      %v5470 = vrcp.pop %v5438
      %v5471 = vrcp.pop %v5439
      %v5472 = vrcp.pop %v5440
      %v5473 = vrcp.pop %v5441
      %v5474 = vrcp.pop %v5442
      %v5475 = vrcp.pop %v5443
      %v5476 = vrcp.pop %v5444
      %v5477 = vrcp.pop %v5445
      %v5478 = vrcp.pop %v5446
      %v5479 = vrcp.pop %v5447
      %v5480 = vrcp.pop %v5448
      %v5481 = vrcp.pop %v5449
      %v5482 = vrcp.pop %v5450
      %v5483 = vmul.f32 %v5057, %v5451
      %v5484 = vmul.f32 %v5058, %v5452
      %v5485 = vmul.f32 %v5059, %v5453
      %v5486 = vmul.f32 %v5060, %v5454
      %v5487 = vmul.f32 %v5061, %v5455
      %v5488 = vmul.f32 %v5062, %v5456
      %v5489 = vmul.f32 %v5063, %v5457
      %v5490 = vmul.f32 %v5064, %v5458
      %v5491 = vmul.f32 %v5065, %v5459
      %v5492 = vmul.f32 %v5066, %v5460
      %v5493 = vmul.f32 %v5067, %v5461
      %v5494 = vmul.f32 %v5068, %v5462
      %v5495 = vmul.f32 %v5069, %v5463
      %v5496 = vmul.f32 %v5070, %v5464
      %v5497 = vmul.f32 %v5071, %v5465
      %v5498 = vmul.f32 %v5072, %v5466
      %v5499 = vmul.f32 %v5073, %v5467
      %v5500 = vmul.f32 %v5074, %v5468
      %v5501 = vmul.f32 %v5075, %v5469
      %v5502 = vmul.f32 %v5076, %v5470
      %v5503 = vmul.f32 %v5077, %v5471
      %v5504 = vmul.f32 %v5078, %v5472
      %v5505 = vmul.f32 %v5079, %v5473
      %v5506 = vmul.f32 %v5080, %v5474
      %v5507 = vmul.f32 %v5081, %v5475
      %v5508 = vmul.f32 %v5082, %v5476
      %v5509 = vmul.f32 %v5083, %v5477
      %v5510 = vmul.f32 %v5084, %v5478
      %v5511 = vmul.f32 %v5085, %v5479
      %v5512 = vmul.f32 %v5086, %v5480
      %v5513 = vmul.f32 %v5087, %v5481
      %v5514 = vmul.f32 %v5088, %v5482
      %5547 = vrot.lane.b32.xlu0 %v5483, 8
      %v5548 = vpop.permute.xlu0 %5547
      %5549 = vrot.lane.b32.xlu0 %v5484, 8
      %v5550 = vpop.permute.xlu0 %5549
      %5551 = vrot.lane.b32.xlu0 %v5485, 8
      %v5552 = vpop.permute.xlu0 %5551
      %5553 = vrot.lane.b32.xlu0 %v5486, 8
      %v5554 = vpop.permute.xlu0 %5553
      %5555 = vrot.lane.b32.xlu0 %v5487, 8
      %v5556 = vpop.permute.xlu0 %5555
      %5557 = vrot.lane.b32.xlu0 %v5488, 8
      %v5558 = vpop.permute.xlu0 %5557
      %5559 = vrot.lane.b32.xlu0 %v5489, 8
      %v5560 = vpop.permute.xlu0 %5559
      %5561 = vrot.lane.b32.xlu0 %v5490, 8
      %v5562 = vpop.permute.xlu0 %5561
      %5563 = vrot.lane.b32.xlu0 %v5491, 8
      %v5564 = vpop.permute.xlu0 %5563
      %5565 = vrot.lane.b32.xlu0 %v5492, 8
      %v5566 = vpop.permute.xlu0 %5565
      %5567 = vrot.lane.b32.xlu0 %v5493, 8
      %v5568 = vpop.permute.xlu0 %5567
      %5569 = vrot.lane.b32.xlu0 %v5494, 8
      %v5570 = vpop.permute.xlu0 %5569
      %5571 = vrot.lane.b32.xlu0 %v5495, 8
      %v5572 = vpop.permute.xlu0 %5571
      %5573 = vrot.lane.b32.xlu0 %v5496, 8
      %v5574 = vpop.permute.xlu0 %5573
      %5575 = vrot.lane.b32.xlu0 %v5497, 8
      %v5576 = vpop.permute.xlu0 %5575
      %5577 = vrot.lane.b32.xlu0 %v5498, 8
      %v5578 = vpop.permute.xlu0 %5577
      %5579 = vrot.lane.b32.xlu0 %v5499, 8
      %v5580 = vpop.permute.xlu0 %5579
      %5581 = vrot.lane.b32.xlu0 %v5500, 8
      %v5582 = vpop.permute.xlu0 %5581
      %5583 = vrot.lane.b32.xlu0 %v5501, 8
      %v5584 = vpop.permute.xlu0 %5583
      %5585 = vrot.lane.b32.xlu0 %v5502, 8
      %v5586 = vpop.permute.xlu0 %5585
      %5587 = vrot.lane.b32.xlu0 %v5503, 8
      %v5588 = vpop.permute.xlu0 %5587
      %5589 = vrot.lane.b32.xlu0 %v5504, 8
      %v5590 = vpop.permute.xlu0 %5589
      %5591 = vrot.lane.b32.xlu0 %v5505, 8
      %v5592 = vpop.permute.xlu0 %5591
      %5593 = vrot.lane.b32.xlu0 %v5506, 8
      %v5594 = vpop.permute.xlu0 %5593
      %5595 = vrot.lane.b32.xlu0 %v5507, 8
      %v5596 = vpop.permute.xlu0 %5595
      %5597 = vrot.lane.b32.xlu0 %v5508, 8
      %v5598 = vpop.permute.xlu0 %5597
      %5599 = vrot.lane.b32.xlu0 %v5509, 8
      %v5600 = vpop.permute.xlu0 %5599
      %5601 = vrot.lane.b32.xlu0 %v5510, 8
      %v5602 = vpop.permute.xlu0 %5601
      %5603 = vrot.lane.b32.xlu0 %v5511, 8
      %v5604 = vpop.permute.xlu0 %5603
      %5605 = vrot.lane.b32.xlu0 %v5512, 8
      %v5606 = vpop.permute.xlu0 %5605
      %5607 = vrot.lane.b32.xlu0 %v5513, 8
      %v5608 = vpop.permute.xlu0 %5607
      %5609 = vrot.lane.b32.xlu0 %v5514, 8
      %v5610 = vpop.permute.xlu0 %5609
      %vm5643 = vcmask 130112
      %5644 = vst.msk [vmem:[#allocation2] sm:$0xff] %vm5643, %v5548
      %5645 = vst.msk [vmem:[#allocation2 + $0x8] sm:$0xff] %vm5643, %v5550
      %5646 = vst.msk [vmem:[#allocation2 + $0x10] sm:$0xff] %vm5643, %v5552
      %5647 = vst.msk [vmem:[#allocation2 + $0x18] sm:$0xff] %vm5643, %v5554
      %5648 = vst.msk [vmem:[#allocation2 + $0x20] sm:$0xff] %vm5643, %v5556
      %5649 = vst.msk [vmem:[#allocation2 + $0x28] sm:$0xff] %vm5643, %v5558
      %5650 = vst.msk [vmem:[#allocation2 + $0x30] sm:$0xff] %vm5643, %v5560
      %5651 = vst.msk [vmem:[#allocation2 + $0x38] sm:$0xff] %vm5643, %v5562
      %5652 = vst.msk [vmem:[#allocation2 + $0x40] sm:$0xff] %vm5643, %v5564
      %5653 = vst.msk [vmem:[#allocation2 + $0x48] sm:$0xff] %vm5643, %v5566
      %5654 = vst.msk [vmem:[#allocation2 + $0x50] sm:$0xff] %vm5643, %v5568
      %5655 = vst.msk [vmem:[#allocation2 + $0x58] sm:$0xff] %vm5643, %v5570
      %5656 = vst.msk [vmem:[#allocation2 + $0x60] sm:$0xff] %vm5643, %v5572
      %5657 = vst.msk [vmem:[#allocation2 + $0x68] sm:$0xff] %vm5643, %v5574
      %5658 = vst.msk [vmem:[#allocation2 + $0x70] sm:$0xff] %vm5643, %v5576
      %5659 = vst.msk [vmem:[#allocation2 + $0x78] sm:$0xff] %vm5643, %v5578
      %5660 = vst.msk [vmem:[#allocation2 + $0x80] sm:$0xff] %vm5643, %v5580
      %5661 = vst.msk [vmem:[#allocation2 + $0x88] sm:$0xff] %vm5643, %v5582
      %5662 = vst.msk [vmem:[#allocation2 + $0x90] sm:$0xff] %vm5643, %v5584
      %5663 = vst.msk [vmem:[#allocation2 + $0x98] sm:$0xff] %vm5643, %v5586
      %5664 = vst.msk [vmem:[#allocation2 + $0xa0] sm:$0xff] %vm5643, %v5588
      %5665 = vst.msk [vmem:[#allocation2 + $0xa8] sm:$0xff] %vm5643, %v5590
      %5666 = vst.msk [vmem:[#allocation2 + $0xb0] sm:$0xff] %vm5643, %v5592
      %5667 = vst.msk [vmem:[#allocation2 + $0xb8] sm:$0xff] %vm5643, %v5594
      %5668 = vst.msk [vmem:[#allocation2 + $0xc0] sm:$0xff] %vm5643, %v5596
      %5669 = vst.msk [vmem:[#allocation2 + $0xc8] sm:$0xff] %vm5643, %v5598
      %5670 = vst.msk [vmem:[#allocation2 + $0xd0] sm:$0xff] %vm5643, %v5600
      %5671 = vst.msk [vmem:[#allocation2 + $0xd8] sm:$0xff] %vm5643, %v5602
      %5672 = vst.msk [vmem:[#allocation2 + $0xe0] sm:$0xff] %vm5643, %v5604
      %5673 = vst.msk [vmem:[#allocation2 + $0xe8] sm:$0xff] %vm5643, %v5606
      %5674 = vst.msk [vmem:[#allocation2 + $0xf0] sm:$0xff] %vm5643, %v5608
      %5675 = vst.msk [vmem:[#allocation2 + $0xf8] sm:$0xff] %vm5643, %v5610
      %v5676 = vld [vmem:[#allocation2] sm:$0xff]
      %v5677 = vld [vmem:[#allocation2 + $0x8] sm:$0xff]
      %v5678 = vld [vmem:[#allocation2 + $0x10] sm:$0xff]
      %v5679 = vld [vmem:[#allocation2 + $0x18] sm:$0xff]
      %v5680 = vld [vmem:[#allocation2 + $0x20] sm:$0xff]
      %v5681 = vld [vmem:[#allocation2 + $0x28] sm:$0xff]
      %v5682 = vld [vmem:[#allocation2 + $0x30] sm:$0xff]
      %v5683 = vld [vmem:[#allocation2 + $0x38] sm:$0xff]
      %v5684 = vld [vmem:[#allocation2 + $0x40] sm:$0xff]
      %v5685 = vld [vmem:[#allocation2 + $0x48] sm:$0xff]
      %v5686 = vld [vmem:[#allocation2 + $0x50] sm:$0xff]
      %v5687 = vld [vmem:[#allocation2 + $0x58] sm:$0xff]
      %v5688 = vld [vmem:[#allocation2 + $0x60] sm:$0xff]
      %v5689 = vld [vmem:[#allocation2 + $0x68] sm:$0xff]
      %v5690 = vld [vmem:[#allocation2 + $0x70] sm:$0xff]
      %v5691 = vld [vmem:[#allocation2 + $0x78] sm:$0xff]
      %v5692 = vld [vmem:[#allocation2 + $0x80] sm:$0xff]
      %v5693 = vld [vmem:[#allocation2 + $0x88] sm:$0xff]
      %v5694 = vld [vmem:[#allocation2 + $0x90] sm:$0xff]
      %v5695 = vld [vmem:[#allocation2 + $0x98] sm:$0xff]
      %v5696 = vld [vmem:[#allocation2 + $0xa0] sm:$0xff]
      %v5697 = vld [vmem:[#allocation2 + $0xa8] sm:$0xff]
      %v5698 = vld [vmem:[#allocation2 + $0xb0] sm:$0xff]
      %v5699 = vld [vmem:[#allocation2 + $0xb8] sm:$0xff]
      %v5700 = vld [vmem:[#allocation2 + $0xc0] sm:$0xff]
      %v5701 = vld [vmem:[#allocation2 + $0xc8] sm:$0xff]
      %v5702 = vld [vmem:[#allocation2 + $0xd0] sm:$0xff]
      %v5703 = vld [vmem:[#allocation2 + $0xd8] sm:$0xff]
      %v5704 = vld [vmem:[#allocation2 + $0xe0] sm:$0xff]
      %v5705 = vld [vmem:[#allocation2 + $0xe8] sm:$0xff]
      %v5706 = vld [vmem:[#allocation2 + $0xf0] sm:$0xff]
      %v5707 = vld [vmem:[#allocation2 + $0xf8] sm:$0xff]
      %v5708 = vpack.c.bf16 %v5677, %v5676
      %v5709 = vpack.c.bf16 %v5679, %v5678
      %v5710 = vpack.c.bf16 %v5681, %v5680
      %v5711 = vpack.c.bf16 %v5683, %v5682
      %v5712 = vpack.c.bf16 %v5685, %v5684
      %v5713 = vpack.c.bf16 %v5687, %v5686
      %v5714 = vpack.c.bf16 %v5689, %v5688
      %v5715 = vpack.c.bf16 %v5691, %v5690
      %v5716 = vpack.c.bf16 %v5693, %v5692
      %v5717 = vpack.c.bf16 %v5695, %v5694
      %v5718 = vpack.c.bf16 %v5697, %v5696
      %v5719 = vpack.c.bf16 %v5699, %v5698
      %v5720 = vpack.c.bf16 %v5701, %v5700
      %v5721 = vpack.c.bf16 %v5703, %v5702
      %v5722 = vpack.c.bf16 %v5705, %v5704
      %v5723 = vpack.c.bf16 %v5707, %v5706
      %v5724 = vld [vmem:[%s1 + $0x60] sm:$0xf]
      %v5725 = vld [vmem:[%s1 + $0x64] sm:$0xf]
      %v5726 = vld [vmem:[%s2 + $0x20] sm:$0x1]
      %v5727 = vlaneseq
      %v5728 = vshrl.u32 %v5727, 7
      %v5729 = vsub.s32 0, %v5728
      %v5730 = vrot.slane %v5726, %v5729
      %v5733 = vunpack.c.l.b16 %v5724
      %v5734 = vunpack.c.l.b16 %v5725
      %v5735 = vpack.c.b16 %v5734, %v5733
      %v5738 = vsel %vm200, %v5708, 0
      %v5741 = vsel %vm200, %v5709, 0
      %v5744 = vsel %vm200, %v5710, 0
      %v5747 = vsel %vm200, %v5711, 0
      %v5750 = vsel %vm200, %v5712, 0
      %v5753 = vsel %vm200, %v5713, 0
      %v5756 = vsel %vm200, %v5714, 0
      %v5759 = vsel %vm200, %v5715, 0
      %v5762 = vsel %vm200, %v5716, 0
      %v5765 = vsel %vm200, %v5717, 0
      %v5768 = vsel %vm200, %v5718, 0
      %v5771 = vsel %vm200, %v5719, 0
      %v5774 = vsel %vm200, %v5720, 0
      %v5777 = vsel %vm200, %v5721, 0
      %v5780 = vsel %vm200, %v5722, 0
      %v5783 = vsel %vm200, %v5723, 0
      %5785 = vmatprep.subr.bf16.mxu0 0
      %5786 = vmatpush1.bf16.msra.mxu0 %v5735
      %5787 = vmatprep.subr.bf16.mxu0 0
      %5788 = vmatpush1.bf16.msra.mxu0 0
      %5789 = vmatprep.subr.bf16.mxu0 0
      %5790 = vmatpush1.bf16.msra.mxu0 0
      %5791 = vmatprep.subr.bf16.mxu0 0
      %5792 = vmatpush1.bf16.msra.mxu0 0
      %5793 = vmatprep.subr.bf16.mxu0 0
      %5794 = vmatpush1.bf16.msra.mxu0 0
      %5795 = vmatprep.subr.bf16.mxu0 0
      %5796 = vmatpush1.bf16.msra.mxu0 0
      %5797 = vmatprep.subr.bf16.mxu0 0
      %5798 = vmatpush1.bf16.msra.mxu0 0
      %5799 = vmatprep.subr.bf16.mxu0 0
      %5800 = vmatpush1.bf16.msra.mxu0 0
      %5801 = vmatprep.subr.bf16.mxu0 0
      %5802 = vmatpush1.bf16.msra.mxu0 0
      %5803 = vmatprep.subr.bf16.mxu0 0
      %5804 = vmatpush1.bf16.msra.mxu0 0
      %5805 = vmatprep.subr.bf16.mxu0 0
      %5806 = vmatpush1.bf16.msra.mxu0 0
      %5807 = vmatprep.subr.bf16.mxu0 0
      %5808 = vmatpush1.bf16.msra.mxu0 0
      %5809 = vmatprep.subr.bf16.mxu0 0
      %5810 = vmatpush1.bf16.msra.mxu0 0
      %5811 = vmatprep.subr.bf16.mxu0 0
      %5812 = vmatpush1.bf16.msra.mxu0 0
      %5813 = vmatprep.subr.bf16.mxu0 0
      %5814 = vmatpush1.bf16.msra.mxu0 0
      %5815 = vmatprep.subr.bf16.mxu0 0
      %5816 = vmatpush1.bf16.msra.mxu0 0
      %5817 = vmatprep.mubr.bf16.mxu0 0
      %5818 = vmatmul.mubr.bf16.gmra.mrb[0].mxu0 %v5738
      %v5819 = vpop.f32.mrb[0].mxu0
      %v5820 = vadd.f32 %v5730, %v5819
      %v5821 = vpop.f32.mrb[0].mxu0
      %v5822 = vpop.f32.mrb[0].mxu0
      %v5823 = vadd.f32 %v5730, %v5822
      %v5824 = vpop.f32.mrb[0].mxu0
      %5825 = vmatprep.mubr.bf16.mxu0 0
      %5826 = vmatmul.mubr.bf16.gmra.mrb[0].mxu0 %v5741
      %v5827 = vpop.f32.mrb[0].mxu0
      %v5828 = vadd.f32 %v5730, %v5827
      %v5829 = vpop.f32.mrb[0].mxu0
      %v5830 = vpop.f32.mrb[0].mxu0
      %v5831 = vadd.f32 %v5730, %v5830
      %v5832 = vpop.f32.mrb[0].mxu0
      %5833 = vmatprep.mubr.bf16.mxu0 0
      %5834 = vmatmul.mubr.bf16.gmra.mrb[0].mxu0 %v5744
      %v5835 = vpop.f32.mrb[0].mxu0
      %v5836 = vadd.f32 %v5730, %v5835
      %v5837 = vpop.f32.mrb[0].mxu0
      %v5838 = vpop.f32.mrb[0].mxu0
      %v5839 = vadd.f32 %v5730, %v5838
      %v5840 = vpop.f32.mrb[0].mxu0
      %5841 = vmatprep.mubr.bf16.mxu0 0
      %5842 = vmatmul.mubr.bf16.gmra.mrb[0].mxu0 %v5747
      %v5843 = vpop.f32.mrb[0].mxu0
      %v5844 = vadd.f32 %v5730, %v5843
      %v5845 = vpop.f32.mrb[0].mxu0
      %v5846 = vpop.f32.mrb[0].mxu0
      %v5847 = vadd.f32 %v5730, %v5846
      %v5848 = vpop.f32.mrb[0].mxu0
      %5849 = vmatprep.mubr.bf16.mxu0 0
      %5850 = vmatmul.mubr.bf16.gmra.mrb[0].mxu0 %v5750
      %v5851 = vpop.f32.mrb[0].mxu0
      %v5852 = vadd.f32 %v5730, %v5851
      %v5853 = vpop.f32.mrb[0].mxu0
      %v5854 = vpop.f32.mrb[0].mxu0
      %v5855 = vadd.f32 %v5730, %v5854
      %v5856 = vpop.f32.mrb[0].mxu0
      %5857 = vmatprep.mubr.bf16.mxu0 0
      %5858 = vmatmul.mubr.bf16.gmra.mrb[0].mxu0 %v5753
      %v5859 = vpop.f32.mrb[0].mxu0
      %v5860 = vadd.f32 %v5730, %v5859
      %v5861 = vpop.f32.mrb[0].mxu0
      %v5862 = vpop.f32.mrb[0].mxu0
      %v5863 = vadd.f32 %v5730, %v5862
      %v5864 = vpop.f32.mrb[0].mxu0
      %5865 = vmatprep.mubr.bf16.mxu0 0
      %5866 = vmatmul.mubr.bf16.gmra.mrb[0].mxu0 %v5756
      %v5867 = vpop.f32.mrb[0].mxu0
      %v5868 = vadd.f32 %v5730, %v5867
      %v5869 = vpop.f32.mrb[0].mxu0
      %v5870 = vpop.f32.mrb[0].mxu0
      %v5871 = vadd.f32 %v5730, %v5870
      %v5872 = vpop.f32.mrb[0].mxu0
      %5873 = vmatprep.mubr.bf16.mxu0 0
      %5874 = vmatmul.mubr.bf16.gmra.mrb[0].mxu0 %v5759
      %v5875 = vpop.f32.mrb[0].mxu0
      %v5876 = vadd.f32 %v5730, %v5875
      %v5877 = vpop.f32.mrb[0].mxu0
      %v5878 = vpop.f32.mrb[0].mxu0
      %v5879 = vadd.f32 %v5730, %v5878
      %v5880 = vpop.f32.mrb[0].mxu0
      %5881 = vmatprep.mubr.bf16.mxu0 0
      %5882 = vmatmul.mubr.bf16.gmra.mrb[0].mxu0 %v5762
      %v5883 = vpop.f32.mrb[0].mxu0
      %v5884 = vadd.f32 %v5730, %v5883
      %v5885 = vpop.f32.mrb[0].mxu0
      %v5886 = vpop.f32.mrb[0].mxu0
      %v5887 = vadd.f32 %v5730, %v5886
      %v5888 = vpop.f32.mrb[0].mxu0
      %5889 = vmatprep.mubr.bf16.mxu0 0
      %5890 = vmatmul.mubr.bf16.gmra.mrb[0].mxu0 %v5765
      %v5891 = vpop.f32.mrb[0].mxu0
      %v5892 = vadd.f32 %v5730, %v5891
      %v5893 = vpop.f32.mrb[0].mxu0
      %v5894 = vpop.f32.mrb[0].mxu0
      %v5895 = vadd.f32 %v5730, %v5894
      %v5896 = vpop.f32.mrb[0].mxu0
      %5897 = vmatprep.mubr.bf16.mxu0 0
      %5898 = vmatmul.mubr.bf16.gmra.mrb[0].mxu0 %v5768
      %v5899 = vpop.f32.mrb[0].mxu0
      %v5900 = vadd.f32 %v5730, %v5899
      %v5901 = vpop.f32.mrb[0].mxu0
      %v5902 = vpop.f32.mrb[0].mxu0
      %v5903 = vadd.f32 %v5730, %v5902
      %v5904 = vpop.f32.mrb[0].mxu0
      %5905 = vmatprep.mubr.bf16.mxu0 0
      %5906 = vmatmul.mubr.bf16.gmra.mrb[0].mxu0 %v5771
      %v5907 = vpop.f32.mrb[0].mxu0
      %v5908 = vadd.f32 %v5730, %v5907
      %v5909 = vpop.f32.mrb[0].mxu0
      %v5910 = vpop.f32.mrb[0].mxu0
      %v5911 = vadd.f32 %v5730, %v5910
      %v5912 = vpop.f32.mrb[0].mxu0
      %5913 = vmatprep.mubr.bf16.mxu0 0
      %5914 = vmatmul.mubr.bf16.gmra.mrb[0].mxu0 %v5774
      %v5915 = vpop.f32.mrb[0].mxu0
      %v5916 = vadd.f32 %v5730, %v5915
      %v5917 = vpop.f32.mrb[0].mxu0
      %v5918 = vpop.f32.mrb[0].mxu0
      %v5919 = vadd.f32 %v5730, %v5918
      %v5920 = vpop.f32.mrb[0].mxu0
      %5921 = vmatprep.mubr.bf16.mxu0 0
      %5922 = vmatmul.mubr.bf16.gmra.mrb[0].mxu0 %v5777
      %v5923 = vpop.f32.mrb[0].mxu0
      %v5924 = vadd.f32 %v5730, %v5923
      %v5925 = vpop.f32.mrb[0].mxu0
      %v5926 = vpop.f32.mrb[0].mxu0
      %v5927 = vadd.f32 %v5730, %v5926
      %v5928 = vpop.f32.mrb[0].mxu0
      %5929 = vmatprep.mubr.bf16.mxu0 0
      %5930 = vmatmul.mubr.bf16.gmra.mrb[0].mxu0 %v5780
      %v5931 = vpop.f32.mrb[0].mxu0
      %v5932 = vadd.f32 %v5730, %v5931
      %v5933 = vpop.f32.mrb[0].mxu0
      %v5934 = vpop.f32.mrb[0].mxu0
      %v5935 = vadd.f32 %v5730, %v5934
      %v5936 = vpop.f32.mrb[0].mxu0
      %5937 = vmatprep.mubr.bf16.mxu0 0
      %5938 = vmatmul.mubr.bf16.gmra.mrb[0].mxu0 %v5783
      %v5939 = vpop.f32.mrb[0].mxu0
      %v5940 = vadd.f32 %v5730, %v5939
      %v5941 = vpop.f32.mrb[0].mxu0
      %v5942 = vpop.f32.mrb[0].mxu0
      %v5943 = vadd.f32 %v5730, %v5942
      %v5944 = vpop.f32.mrb[0].mxu0
      %5945 = vdwg.mxu0
      %v5946 = vmax.f32 %v5820, 0.0
      %v5947 = vmax.f32 %v5823, 0.0
      %v5948 = vmax.f32 %v5828, 0.0
      %v5949 = vmax.f32 %v5831, 0.0
      %v5950 = vmax.f32 %v5836, 0.0
      %v5951 = vmax.f32 %v5839, 0.0
      %v5952 = vmax.f32 %v5844, 0.0
      %v5953 = vmax.f32 %v5847, 0.0
      %v5954 = vmax.f32 %v5852, 0.0
      %v5955 = vmax.f32 %v5855, 0.0
      %v5956 = vmax.f32 %v5860, 0.0
      %v5957 = vmax.f32 %v5863, 0.0
      %v5958 = vmax.f32 %v5868, 0.0
      %v5959 = vmax.f32 %v5871, 0.0
      %v5960 = vmax.f32 %v5876, 0.0
      %v5961 = vmax.f32 %v5879, 0.0
      %v5962 = vmax.f32 %v5884, 0.0
      %v5963 = vmax.f32 %v5887, 0.0
      %v5964 = vmax.f32 %v5892, 0.0
      %v5965 = vmax.f32 %v5895, 0.0
      %v5966 = vmax.f32 %v5900, 0.0
      %v5967 = vmax.f32 %v5903, 0.0
      %v5968 = vmax.f32 %v5908, 0.0
      %v5969 = vmax.f32 %v5911, 0.0
      %v5970 = vmax.f32 %v5916, 0.0
      %v5971 = vmax.f32 %v5919, 0.0
      %v5972 = vmax.f32 %v5924, 0.0
      %v5973 = vmax.f32 %v5927, 0.0
      %v5974 = vmax.f32 %v5932, 0.0
      %v5975 = vmax.f32 %v5935, 0.0
      %v5976 = vmax.f32 %v5940, 0.0
      %v5977 = vmax.f32 %v5943, 0.0
      %v5978 = vpack.c.bf16 %v5947, %v5946
      %v5979 = vpack.c.bf16 %v5949, %v5948
      %v5980 = vpack.c.bf16 %v5951, %v5950
      %v5981 = vpack.c.bf16 %v5953, %v5952
      %v5982 = vpack.c.bf16 %v5955, %v5954
      %v5983 = vpack.c.bf16 %v5957, %v5956
      %v5984 = vpack.c.bf16 %v5959, %v5958
      %v5985 = vpack.c.bf16 %v5961, %v5960
      %v5986 = vpack.c.bf16 %v5963, %v5962
      %v5987 = vpack.c.bf16 %v5965, %v5964
      %v5988 = vpack.c.bf16 %v5967, %v5966
      %v5989 = vpack.c.bf16 %v5969, %v5968
      %v5990 = vpack.c.bf16 %v5971, %v5970
      %v5991 = vpack.c.bf16 %v5973, %v5972
      %v5992 = vpack.c.bf16 %v5975, %v5974
      %v5993 = vpack.c.bf16 %v5977, %v5976
      %v5994 = vld [vmem:[%s1 + $0x68] sm:$0xf]
      %v5995 = vld [vmem:[%s2 + $0x28] sm:$0x1]
      %v5996 = vlaneseq
      %v5997 = vshrl.u32 %v5996, 7
      %v5998 = vsub.s32 0, %v5997
      %v5999 = vrot.slane %v5995, %v5998
      %v6001 = vsel %vm279, %v5978, 0
      %v6004 = vsel %vm279, %v5979, 0
      %v6007 = vsel %vm279, %v5980, 0
      %v6010 = vsel %vm279, %v5981, 0
      %v6013 = vsel %vm279, %v5982, 0
      %v6016 = vsel %vm279, %v5983, 0
      %v6019 = vsel %vm279, %v5984, 0
      %v6022 = vsel %vm279, %v5985, 0
      %v6025 = vsel %vm279, %v5986, 0
      %v6028 = vsel %vm279, %v5987, 0
      %v6031 = vsel %vm279, %v5988, 0
      %v6034 = vsel %vm279, %v5989, 0
      %v6037 = vsel %vm279, %v5990, 0
      %v6040 = vsel %vm279, %v5991, 0
      %v6043 = vsel %vm279, %v5992, 0
      %v6046 = vsel %vm279, %v5993, 0
      %v6049 = vsel %vm446, %v5994, 0
      %6051 = vmatprep.subr.bf16.mxu0 0
      %6052 = vmatpush1.bf16.msra.mxu0 %v6049
      %6053 = vmatprep.subr.bf16.mxu0 0
      %6054 = vmatpush1.bf16.msra.mxu0 0
      %6055 = vmatprep.subr.bf16.mxu0 0
      %6056 = vmatpush1.bf16.msra.mxu0 0
      %6057 = vmatprep.subr.bf16.mxu0 0
      %6058 = vmatpush1.bf16.msra.mxu0 0
      %6059 = vmatprep.subr.bf16.mxu0 0
      %6060 = vmatpush1.bf16.msra.mxu0 0
      %6061 = vmatprep.subr.bf16.mxu0 0
      %6062 = vmatpush1.bf16.msra.mxu0 0
      %6063 = vmatprep.subr.bf16.mxu0 0
      %6064 = vmatpush1.bf16.msra.mxu0 0
      %6065 = vmatprep.subr.bf16.mxu0 0
      %6066 = vmatpush1.bf16.msra.mxu0 0
      %6067 = vmatprep.subr.bf16.mxu0 0
      %6068 = vmatpush1.bf16.msra.mxu0 0
      %6069 = vmatprep.subr.bf16.mxu0 0
      %6070 = vmatpush1.bf16.msra.mxu0 0
      %6071 = vmatprep.subr.bf16.mxu0 0
      %6072 = vmatpush1.bf16.msra.mxu0 0
      %6073 = vmatprep.subr.bf16.mxu0 0
      %6074 = vmatpush1.bf16.msra.mxu0 0
      %6075 = vmatprep.subr.bf16.mxu0 0
      %6076 = vmatpush1.bf16.msra.mxu0 0
      %6077 = vmatprep.subr.bf16.mxu0 0
      %6078 = vmatpush1.bf16.msra.mxu0 0
      %6079 = vmatprep.subr.bf16.mxu0 0
      %6080 = vmatpush1.bf16.msra.mxu0 0
      %6081 = vmatprep.subr.bf16.mxu0 0
      %6082 = vmatpush1.bf16.msra.mxu0 0
      %6083 = vmatprep.mubr.bf16.mxu0 0
      %6084 = vmatmul.mubr.bf16.gmra.mrb[0].mxu0 %v6001
      %v6085 = vpop.f32.mrb[0].mxu0
      %v6086 = vadd.f32 %v5999, %v6085
      %v6087 = vpop.f32.mrb[0].mxu0
      %v6088 = vpop.f32.mrb[0].mxu0
      %v6089 = vadd.f32 %v5999, %v6088
      %v6090 = vpop.f32.mrb[0].mxu0
      %6091 = vmatprep.mubr.bf16.mxu0 0
      %6092 = vmatmul.mubr.bf16.gmra.mrb[0].mxu0 %v6004
      %v6093 = vpop.f32.mrb[0].mxu0
      %v6094 = vadd.f32 %v5999, %v6093
      %v6095 = vpop.f32.mrb[0].mxu0
      %v6096 = vpop.f32.mrb[0].mxu0
      %v6097 = vadd.f32 %v5999, %v6096
      %v6098 = vpop.f32.mrb[0].mxu0
      %6099 = vmatprep.mubr.bf16.mxu0 0
      %6100 = vmatmul.mubr.bf16.gmra.mrb[0].mxu0 %v6007
      %v6101 = vpop.f32.mrb[0].mxu0
      %v6102 = vadd.f32 %v5999, %v6101
      %v6103 = vpop.f32.mrb[0].mxu0
      %v6104 = vpop.f32.mrb[0].mxu0
      %v6105 = vadd.f32 %v5999, %v6104
      %v6106 = vpop.f32.mrb[0].mxu0
      %6107 = vmatprep.mubr.bf16.mxu0 0
      %6108 = vmatmul.mubr.bf16.gmra.mrb[0].mxu0 %v6010
      %v6109 = vpop.f32.mrb[0].mxu0
      %v6110 = vadd.f32 %v5999, %v6109
      %v6111 = vpop.f32.mrb[0].mxu0
      %v6112 = vpop.f32.mrb[0].mxu0
      %v6113 = vadd.f32 %v5999, %v6112
      %v6114 = vpop.f32.mrb[0].mxu0
      %6115 = vmatprep.mubr.bf16.mxu0 0
      %6116 = vmatmul.mubr.bf16.gmra.mrb[0].mxu0 %v6013
      %v6117 = vpop.f32.mrb[0].mxu0
      %v6118 = vadd.f32 %v5999, %v6117
      %v6119 = vpop.f32.mrb[0].mxu0
      %v6120 = vpop.f32.mrb[0].mxu0
      %v6121 = vadd.f32 %v5999, %v6120
      %v6122 = vpop.f32.mrb[0].mxu0
      %6123 = vmatprep.mubr.bf16.mxu0 0
      %6124 = vmatmul.mubr.bf16.gmra.mrb[0].mxu0 %v6016
      %v6125 = vpop.f32.mrb[0].mxu0
      %v6126 = vadd.f32 %v5999, %v6125
      %v6127 = vpop.f32.mrb[0].mxu0
      %v6128 = vpop.f32.mrb[0].mxu0
      %v6129 = vadd.f32 %v5999, %v6128
      %v6130 = vpop.f32.mrb[0].mxu0
      %6131 = vmatprep.mubr.bf16.mxu0 0
      %6132 = vmatmul.mubr.bf16.gmra.mrb[0].mxu0 %v6019
      %v6133 = vpop.f32.mrb[0].mxu0
      %v6134 = vadd.f32 %v5999, %v6133
      %v6135 = vpop.f32.mrb[0].mxu0
      %v6136 = vpop.f32.mrb[0].mxu0
      %v6137 = vadd.f32 %v5999, %v6136
      %v6138 = vpop.f32.mrb[0].mxu0
      %6139 = vmatprep.mubr.bf16.mxu0 0
      %6140 = vmatmul.mubr.bf16.gmra.mrb[0].mxu0 %v6022
      %v6141 = vpop.f32.mrb[0].mxu0
      %v6142 = vadd.f32 %v5999, %v6141
      %v6143 = vpop.f32.mrb[0].mxu0
      %v6144 = vpop.f32.mrb[0].mxu0
      %v6145 = vadd.f32 %v5999, %v6144
      %v6146 = vpop.f32.mrb[0].mxu0
      %6147 = vmatprep.mubr.bf16.mxu0 0
      %6148 = vmatmul.mubr.bf16.gmra.mrb[0].mxu0 %v6025
      %v6149 = vpop.f32.mrb[0].mxu0
      %v6150 = vadd.f32 %v5999, %v6149
      %v6151 = vpop.f32.mrb[0].mxu0
      %v6152 = vpop.f32.mrb[0].mxu0
      %v6153 = vadd.f32 %v5999, %v6152
      %v6154 = vpop.f32.mrb[0].mxu0
      %6155 = vmatprep.mubr.bf16.mxu0 0
      %6156 = vmatmul.mubr.bf16.gmra.mrb[0].mxu0 %v6028
      %v6157 = vpop.f32.mrb[0].mxu0
      %v6158 = vadd.f32 %v5999, %v6157
      %v6159 = vpop.f32.mrb[0].mxu0
      %v6160 = vpop.f32.mrb[0].mxu0
      %v6161 = vadd.f32 %v5999, %v6160
      %v6162 = vpop.f32.mrb[0].mxu0
      %6163 = vmatprep.mubr.bf16.mxu0 0
      %6164 = vmatmul.mubr.bf16.gmra.mrb[0].mxu0 %v6031
      %v6165 = vpop.f32.mrb[0].mxu0
      %v6166 = vadd.f32 %v5999, %v6165
      %v6167 = vpop.f32.mrb[0].mxu0
      %v6168 = vpop.f32.mrb[0].mxu0
      %v6169 = vadd.f32 %v5999, %v6168
      %v6170 = vpop.f32.mrb[0].mxu0
      %6171 = vmatprep.mubr.bf16.mxu0 0
      %6172 = vmatmul.mubr.bf16.gmra.mrb[0].mxu0 %v6034
      %v6173 = vpop.f32.mrb[0].mxu0
      %v6174 = vadd.f32 %v5999, %v6173
      %v6175 = vpop.f32.mrb[0].mxu0
      %v6176 = vpop.f32.mrb[0].mxu0
      %v6177 = vadd.f32 %v5999, %v6176
      %v6178 = vpop.f32.mrb[0].mxu0
      %6179 = vmatprep.mubr.bf16.mxu0 0
      %6180 = vmatmul.mubr.bf16.gmra.mrb[0].mxu0 %v6037
      %v6181 = vpop.f32.mrb[0].mxu0
      %v6182 = vadd.f32 %v5999, %v6181
      %v6183 = vpop.f32.mrb[0].mxu0
      %v6184 = vpop.f32.mrb[0].mxu0
      %v6185 = vadd.f32 %v5999, %v6184
      %v6186 = vpop.f32.mrb[0].mxu0
      %6187 = vmatprep.mubr.bf16.mxu0 0
      %6188 = vmatmul.mubr.bf16.gmra.mrb[0].mxu0 %v6040
      %v6189 = vpop.f32.mrb[0].mxu0
      %v6190 = vadd.f32 %v5999, %v6189
      %v6191 = vpop.f32.mrb[0].mxu0
      %v6192 = vpop.f32.mrb[0].mxu0
      %v6193 = vadd.f32 %v5999, %v6192
      %v6194 = vpop.f32.mrb[0].mxu0
      %6195 = vmatprep.mubr.bf16.mxu0 0
      %6196 = vmatmul.mubr.bf16.gmra.mrb[0].mxu0 %v6043
      %v6197 = vpop.f32.mrb[0].mxu0
      %v6198 = vadd.f32 %v5999, %v6197
      %v6199 = vpop.f32.mrb[0].mxu0
      %v6200 = vpop.f32.mrb[0].mxu0
      %v6201 = vadd.f32 %v5999, %v6200
      %v6202 = vpop.f32.mrb[0].mxu0
      %6203 = vmatprep.mubr.bf16.mxu0 0
      %6204 = vmatmul.mubr.bf16.gmra.mrb[0].mxu0 %v6046
      %v6205 = vpop.f32.mrb[0].mxu0
      %v6206 = vadd.f32 %v5999, %v6205
      %v6207 = vpop.f32.mrb[0].mxu0
      %v6208 = vpop.f32.mrb[0].mxu0
      %v6209 = vadd.f32 %v5999, %v6208
      %v6210 = vpop.f32.mrb[0].mxu0
      %6211 = vdwg.mxu0
      %v6212 = vsub.f32 0.0, %v6086
      %v6213 = vsub.f32 0.0, %v6089
      %v6214 = vsub.f32 0.0, %v6094
      %v6215 = vsub.f32 0.0, %v6097
      %v6216 = vsub.f32 0.0, %v6102
      %v6217 = vsub.f32 0.0, %v6105
      %v6218 = vsub.f32 0.0, %v6110
      %v6219 = vsub.f32 0.0, %v6113
      %v6220 = vsub.f32 0.0, %v6118
      %v6221 = vsub.f32 0.0, %v6121
      %v6222 = vsub.f32 0.0, %v6126
      %v6223 = vsub.f32 0.0, %v6129
      %v6224 = vsub.f32 0.0, %v6134
      %v6225 = vsub.f32 0.0, %v6137
      %v6226 = vsub.f32 0.0, %v6142
      %v6227 = vsub.f32 0.0, %v6145
      %v6228 = vsub.f32 0.0, %v6150
      %v6229 = vsub.f32 0.0, %v6153
      %v6230 = vsub.f32 0.0, %v6158
      %v6231 = vsub.f32 0.0, %v6161
      %v6232 = vsub.f32 0.0, %v6166
      %v6233 = vsub.f32 0.0, %v6169
      %v6234 = vsub.f32 0.0, %v6174
      %v6235 = vsub.f32 0.0, %v6177
      %v6236 = vsub.f32 0.0, %v6182
      %v6237 = vsub.f32 0.0, %v6185
      %v6238 = vsub.f32 0.0, %v6190
      %v6239 = vsub.f32 0.0, %v6193
      %v6240 = vsub.f32 0.0, %v6198
      %v6241 = vsub.f32 0.0, %v6201
      %v6242 = vsub.f32 0.0, %v6206
      %v6243 = vsub.f32 0.0, %v6209
      %v6244 = vmul.f32 %v6212, 1.442695
      %v6245 = vpow.pop %v6244
      %v6246 = vmul.f32 %v6213, 1.442695
      %v6247 = vpow.pop %v6246
      %v6248 = vmul.f32 %v6214, 1.442695
      %v6249 = vpow.pop %v6248
      %v6250 = vmul.f32 %v6215, 1.442695
      %v6251 = vpow.pop %v6250
      %v6252 = vmul.f32 %v6216, 1.442695
      %v6253 = vpow.pop %v6252
      %v6254 = vmul.f32 %v6217, 1.442695
      %v6255 = vpow.pop %v6254
      %v6256 = vmul.f32 %v6218, 1.442695
      %v6257 = vpow.pop %v6256
      %v6258 = vmul.f32 %v6219, 1.442695
      %v6259 = vpow.pop %v6258
      %v6260 = vmul.f32 %v6220, 1.442695
      %v6261 = vpow.pop %v6260
      %v6262 = vmul.f32 %v6221, 1.442695
      %v6263 = vpow.pop %v6262
      %v6264 = vmul.f32 %v6222, 1.442695
      %v6265 = vpow.pop %v6264
      %v6266 = vmul.f32 %v6223, 1.442695
      %v6267 = vpow.pop %v6266
      %v6268 = vmul.f32 %v6224, 1.442695
      %v6269 = vpow.pop %v6268
      %v6270 = vmul.f32 %v6225, 1.442695
      %v6271 = vpow.pop %v6270
      %v6272 = vmul.f32 %v6226, 1.442695
      %v6273 = vpow.pop %v6272
      %v6274 = vmul.f32 %v6227, 1.442695
      %v6275 = vpow.pop %v6274
      %v6276 = vmul.f32 %v6228, 1.442695
      %v6277 = vpow.pop %v6276
      %v6278 = vmul.f32 %v6229, 1.442695
      %v6279 = vpow.pop %v6278
      %v6280 = vmul.f32 %v6230, 1.442695
      %v6281 = vpow.pop %v6280
      %v6282 = vmul.f32 %v6231, 1.442695
      %v6283 = vpow.pop %v6282
      %v6284 = vmul.f32 %v6232, 1.442695
      %v6285 = vpow.pop %v6284
      %v6286 = vmul.f32 %v6233, 1.442695
      %v6287 = vpow.pop %v6286
      %v6288 = vmul.f32 %v6234, 1.442695
      %v6289 = vpow.pop %v6288
      %v6290 = vmul.f32 %v6235, 1.442695
      %v6291 = vpow.pop %v6290
      %v6292 = vmul.f32 %v6236, 1.442695
      %v6293 = vpow.pop %v6292
      %v6294 = vmul.f32 %v6237, 1.442695
      %v6295 = vpow.pop %v6294
      %v6296 = vmul.f32 %v6238, 1.442695
      %v6297 = vpow.pop %v6296
      %v6298 = vmul.f32 %v6239, 1.442695
      %v6299 = vpow.pop %v6298
      %v6300 = vmul.f32 %v6240, 1.442695
      %v6301 = vpow.pop %v6300
      %v6302 = vmul.f32 %v6241, 1.442695
      %v6303 = vpow.pop %v6302
      %v6304 = vmul.f32 %v6242, 1.442695
      %v6305 = vpow.pop %v6304
      %v6306 = vmul.f32 %v6243, 1.442695
      %v6307 = vpow.pop %v6306
      %v6308 = vadd.f32 %v6245, 1.0
      %v6309 = vadd.f32 %v6247, 1.0
      %v6310 = vadd.f32 %v6249, 1.0
      %v6311 = vadd.f32 %v6251, 1.0
      %v6312 = vadd.f32 %v6253, 1.0
      %v6313 = vadd.f32 %v6255, 1.0
      %v6314 = vadd.f32 %v6257, 1.0
      %v6315 = vadd.f32 %v6259, 1.0
      %v6316 = vadd.f32 %v6261, 1.0
      %v6317 = vadd.f32 %v6263, 1.0
      %v6318 = vadd.f32 %v6265, 1.0
      %v6319 = vadd.f32 %v6267, 1.0
      %v6320 = vadd.f32 %v6269, 1.0
      %v6321 = vadd.f32 %v6271, 1.0
      %v6322 = vadd.f32 %v6273, 1.0
      %v6323 = vadd.f32 %v6275, 1.0
      %v6324 = vadd.f32 %v6277, 1.0
      %v6325 = vadd.f32 %v6279, 1.0
      %v6326 = vadd.f32 %v6281, 1.0
      %v6327 = vadd.f32 %v6283, 1.0
      %v6328 = vadd.f32 %v6285, 1.0
      %v6329 = vadd.f32 %v6287, 1.0
      %v6330 = vadd.f32 %v6289, 1.0
      %v6331 = vadd.f32 %v6291, 1.0
      %v6332 = vadd.f32 %v6293, 1.0
      %v6333 = vadd.f32 %v6295, 1.0
      %v6334 = vadd.f32 %v6297, 1.0
      %v6335 = vadd.f32 %v6299, 1.0
      %v6336 = vadd.f32 %v6301, 1.0
      %v6337 = vadd.f32 %v6303, 1.0
      %v6338 = vadd.f32 %v6305, 1.0
      %v6339 = vadd.f32 %v6307, 1.0
      %v6340 = vrcp.pop %v6308
      %v6341 = vrcp.pop %v6309
      %v6342 = vrcp.pop %v6310
      %v6343 = vrcp.pop %v6311
      %v6344 = vrcp.pop %v6312
      %v6345 = vrcp.pop %v6313
      %v6346 = vrcp.pop %v6314
      %v6347 = vrcp.pop %v6315
      %v6348 = vrcp.pop %v6316
      %v6349 = vrcp.pop %v6317
      %v6350 = vrcp.pop %v6318
      %v6351 = vrcp.pop %v6319
      %v6352 = vrcp.pop %v6320
      %v6353 = vrcp.pop %v6321
      %v6354 = vrcp.pop %v6322
      %v6355 = vrcp.pop %v6323
      %v6356 = vrcp.pop %v6324
      %v6357 = vrcp.pop %v6325
      %v6358 = vrcp.pop %v6326
      %v6359 = vrcp.pop %v6327
      %v6360 = vrcp.pop %v6328
      %v6361 = vrcp.pop %v6329
      %v6362 = vrcp.pop %v6330
      %v6363 = vrcp.pop %v6331
      %v6364 = vrcp.pop %v6332
      %v6365 = vrcp.pop %v6333
      %v6366 = vrcp.pop %v6334
      %v6367 = vrcp.pop %v6335
      %v6368 = vrcp.pop %v6336
      %v6369 = vrcp.pop %v6337
      %v6370 = vrcp.pop %v6338
      %v6371 = vrcp.pop %v6339
      %v6372 = vmul.f32 %v5676, %v6340
      %v6373 = vmul.f32 %v5677, %v6341
      %v6374 = vmul.f32 %v5678, %v6342
      %v6375 = vmul.f32 %v5679, %v6343
      %v6376 = vmul.f32 %v5680, %v6344
      %v6377 = vmul.f32 %v5681, %v6345
      %v6378 = vmul.f32 %v5682, %v6346
      %v6379 = vmul.f32 %v5683, %v6347
      %v6380 = vmul.f32 %v5684, %v6348
      %v6381 = vmul.f32 %v5685, %v6349
      %v6382 = vmul.f32 %v5686, %v6350
      %v6383 = vmul.f32 %v5687, %v6351
      %v6384 = vmul.f32 %v5688, %v6352
      %v6385 = vmul.f32 %v5689, %v6353
      %v6386 = vmul.f32 %v5690, %v6354
      %v6387 = vmul.f32 %v5691, %v6355
      %v6388 = vmul.f32 %v5692, %v6356
      %v6389 = vmul.f32 %v5693, %v6357
      %v6390 = vmul.f32 %v5694, %v6358
      %v6391 = vmul.f32 %v5695, %v6359
      %v6392 = vmul.f32 %v5696, %v6360
      %v6393 = vmul.f32 %v5697, %v6361
      %v6394 = vmul.f32 %v5698, %v6362
      %v6395 = vmul.f32 %v5699, %v6363
      %v6396 = vmul.f32 %v5700, %v6364
      %v6397 = vmul.f32 %v5701, %v6365
      %v6398 = vmul.f32 %v5702, %v6366
      %v6399 = vmul.f32 %v5703, %v6367
      %v6400 = vmul.f32 %v5704, %v6368
      %v6401 = vmul.f32 %v5705, %v6369
      %v6402 = vmul.f32 %v5706, %v6370
      %v6403 = vmul.f32 %v5707, %v6371
      %6436 = vrot.lane.b32.xlu0 %v6086, 112
      %v6437 = vpop.permute.xlu0 %6436
      %6438 = vrot.lane.b32.xlu0 %v6089, 112
      %v6439 = vpop.permute.xlu0 %6438
      %6440 = vrot.lane.b32.xlu0 %v6094, 112
      %v6441 = vpop.permute.xlu0 %6440
      %6442 = vrot.lane.b32.xlu0 %v6097, 112
      %v6443 = vpop.permute.xlu0 %6442
      %6444 = vrot.lane.b32.xlu0 %v6102, 112
      %v6445 = vpop.permute.xlu0 %6444
      %6446 = vrot.lane.b32.xlu0 %v6105, 112
      %v6447 = vpop.permute.xlu0 %6446
      %6448 = vrot.lane.b32.xlu0 %v6110, 112
      %v6449 = vpop.permute.xlu0 %6448
      %6450 = vrot.lane.b32.xlu0 %v6113, 112
      %v6451 = vpop.permute.xlu0 %6450
      %6452 = vrot.lane.b32.xlu0 %v6118, 112
      %v6453 = vpop.permute.xlu0 %6452
      %6454 = vrot.lane.b32.xlu0 %v6121, 112
      %v6455 = vpop.permute.xlu0 %6454
      %6456 = vrot.lane.b32.xlu0 %v6126, 112
      %v6457 = vpop.permute.xlu0 %6456
      %6458 = vrot.lane.b32.xlu0 %v6129, 112
      %v6459 = vpop.permute.xlu0 %6458
      %6460 = vrot.lane.b32.xlu0 %v6134, 112
      %v6461 = vpop.permute.xlu0 %6460
      %6462 = vrot.lane.b32.xlu0 %v6137, 112
      %v6463 = vpop.permute.xlu0 %6462
      %6464 = vrot.lane.b32.xlu0 %v6142, 112
      %v6465 = vpop.permute.xlu0 %6464
      %6466 = vrot.lane.b32.xlu0 %v6145, 112
      %v6467 = vpop.permute.xlu0 %6466
      %6468 = vrot.lane.b32.xlu0 %v6150, 112
      %v6469 = vpop.permute.xlu0 %6468
      %6470 = vrot.lane.b32.xlu0 %v6153, 112
      %v6471 = vpop.permute.xlu0 %6470
      %6472 = vrot.lane.b32.xlu0 %v6158, 112
      %v6473 = vpop.permute.xlu0 %6472
      %6474 = vrot.lane.b32.xlu0 %v6161, 112
      %v6475 = vpop.permute.xlu0 %6474
      %6476 = vrot.lane.b32.xlu0 %v6166, 112
      %v6477 = vpop.permute.xlu0 %6476
      %6478 = vrot.lane.b32.xlu0 %v6169, 112
      %v6479 = vpop.permute.xlu0 %6478
      %6480 = vrot.lane.b32.xlu0 %v6174, 112
      %v6481 = vpop.permute.xlu0 %6480
      %6482 = vrot.lane.b32.xlu0 %v6177, 112
      %v6483 = vpop.permute.xlu0 %6482
      %6484 = vrot.lane.b32.xlu0 %v6182, 112
      %v6485 = vpop.permute.xlu0 %6484
      %6486 = vrot.lane.b32.xlu0 %v6185, 112
      %v6487 = vpop.permute.xlu0 %6486
      %6488 = vrot.lane.b32.xlu0 %v6190, 112
      %v6489 = vpop.permute.xlu0 %6488
      %6490 = vrot.lane.b32.xlu0 %v6193, 112
      %v6491 = vpop.permute.xlu0 %6490
      %6492 = vrot.lane.b32.xlu0 %v6198, 112
      %v6493 = vpop.permute.xlu0 %6492
      %6494 = vrot.lane.b32.xlu0 %v6201, 112
      %v6495 = vpop.permute.xlu0 %6494
      %6496 = vrot.lane.b32.xlu0 %v6206, 112
      %v6497 = vpop.permute.xlu0 %6496
      %6498 = vrot.lane.b32.xlu0 %v6209, 112
      %v6499 = vpop.permute.xlu0 %6498
      %v6532 = vadd.f32 %v6372, %v6437
      %v6533 = vadd.f32 %v6373, %v6439
      %v6534 = vadd.f32 %v6374, %v6441
      %v6535 = vadd.f32 %v6375, %v6443
      %v6536 = vadd.f32 %v6376, %v6445
      %v6537 = vadd.f32 %v6377, %v6447
      %v6538 = vadd.f32 %v6378, %v6449
      %v6539 = vadd.f32 %v6379, %v6451
      %v6540 = vadd.f32 %v6380, %v6453
      %v6541 = vadd.f32 %v6381, %v6455
      %v6542 = vadd.f32 %v6382, %v6457
      %v6543 = vadd.f32 %v6383, %v6459
      %v6544 = vadd.f32 %v6384, %v6461
      %v6545 = vadd.f32 %v6385, %v6463
      %v6546 = vadd.f32 %v6386, %v6465
      %v6547 = vadd.f32 %v6387, %v6467
      %v6548 = vadd.f32 %v6388, %v6469
      %v6549 = vadd.f32 %v6389, %v6471
      %v6550 = vadd.f32 %v6390, %v6473
      %v6551 = vadd.f32 %v6391, %v6475
      %v6552 = vadd.f32 %v6392, %v6477
      %v6553 = vadd.f32 %v6393, %v6479
      %v6554 = vadd.f32 %v6394, %v6481
      %v6555 = vadd.f32 %v6395, %v6483
      %v6556 = vadd.f32 %v6396, %v6485
      %v6557 = vadd.f32 %v6397, %v6487
      %v6558 = vadd.f32 %v6398, %v6489
      %v6559 = vadd.f32 %v6399, %v6491
      %v6560 = vadd.f32 %v6400, %v6493
      %v6561 = vadd.f32 %v6401, %v6495
      %v6562 = vadd.f32 %v6402, %v6497
      %v6563 = vadd.f32 %v6403, %v6499
      %v6564 = vpack.c.bf16 %v6533, %v6532
      %v6565 = vpack.c.bf16 %v6535, %v6534
      %v6566 = vpack.c.bf16 %v6537, %v6536
      %v6567 = vpack.c.bf16 %v6539, %v6538
      %v6568 = vpack.c.bf16 %v6541, %v6540
      %v6569 = vpack.c.bf16 %v6543, %v6542
      %v6570 = vpack.c.bf16 %v6545, %v6544
      %v6571 = vpack.c.bf16 %v6547, %v6546
      %v6572 = vpack.c.bf16 %v6549, %v6548
      %v6573 = vpack.c.bf16 %v6551, %v6550
      %v6574 = vpack.c.bf16 %v6553, %v6552
      %v6575 = vpack.c.bf16 %v6555, %v6554
      %v6576 = vpack.c.bf16 %v6557, %v6556
      %v6577 = vpack.c.bf16 %v6559, %v6558
      %v6578 = vpack.c.bf16 %v6561, %v6560
      %v6579 = vpack.c.bf16 %v6563, %v6562
      %6580 = vst.msk [vmem:[#allocation3 + $0x10] sm:$0xff] %vm200, %v6564
      %6581 = vst.msk [vmem:[#allocation3 + $0x18] sm:$0xff] %vm200, %v6565
      %6582 = vst.msk [vmem:[#allocation3 + $0x20] sm:$0xff] %vm200, %v6566
      %6583 = vst.msk [vmem:[#allocation3 + $0x28] sm:$0xff] %vm200, %v6567
      %6584 = vst.msk [vmem:[#allocation3 + $0x30] sm:$0xff] %vm200, %v6568
      %6585 = vst.msk [vmem:[#allocation3 + $0x38] sm:$0xff] %vm200, %v6569
      %6586 = vst.msk [vmem:[#allocation3 + $0x40] sm:$0xff] %vm200, %v6570
      %6587 = vst.msk [vmem:[#allocation3 + $0x48] sm:$0xff] %vm200, %v6571
      %6588 = vst.msk [vmem:[#allocation3 + $0x50] sm:$0xff] %vm200, %v6572
      %6589 = vst.msk [vmem:[#allocation3 + $0x58] sm:$0xff] %vm200, %v6573
      %6590 = vst.msk [vmem:[#allocation3 + $0x60] sm:$0xff] %vm200, %v6574
      %6591 = vst.msk [vmem:[#allocation3 + $0x68] sm:$0xff] %vm200, %v6575
      %6592 = vst.msk [vmem:[#allocation3 + $0x70] sm:$0xff] %vm200, %v6576
      %6593 = vst.msk [vmem:[#allocation3 + $0x78] sm:$0xff] %vm200, %v6577
      %6594 = vst.msk [vmem:[#allocation3 + $0x80] sm:$0xff] %vm200, %v6578
      %6595 = vst.msk [vmem:[#allocation3 + $0x88] sm:$0xff] %vm200, %v6579
      %v6596 = vmul.f32 %v6532, %v1266
      %v6597 = vmul.f32 %v6533, %v1271
      %v6598 = vmul.f32 %v6534, %v1276
      %v6599 = vmul.f32 %v6535, %v1281
      %v6600 = vmul.f32 %v6536, %v1286
      %v6601 = vmul.f32 %v6537, %v1291
      %v6602 = vmul.f32 %v6538, %v1296
      %v6603 = vmul.f32 %v6539, %v1301
      %v6604 = vmul.f32 %v6540, %v1306
      %v6605 = vmul.f32 %v6541, %v1311
      %v6606 = vmul.f32 %v6542, %v1316
      %v6607 = vmul.f32 %v6543, %v1321
      %v6608 = vmul.f32 %v6544, %v1326
      %v6609 = vmul.f32 %v6545, %v1331
      %v6610 = vmul.f32 %v6546, %v1336
      %v6611 = vmul.f32 %v6547, %v1341
      %v6612 = vmul.f32 %v6548, %v1346
      %v6613 = vmul.f32 %v6549, %v1351
      %v6614 = vmul.f32 %v6550, %v1356
      %v6615 = vmul.f32 %v6551, %v1361
      %v6616 = vmul.f32 %v6552, %v1366
      %v6617 = vmul.f32 %v6553, %v1371
      %v6618 = vmul.f32 %v6554, %v1376
      %v6619 = vmul.f32 %v6555, %v1381
      %v6620 = vmul.f32 %v6556, %v1386
      %v6621 = vmul.f32 %v6557, %v1391
      %v6622 = vmul.f32 %v6558, %v1396
      %v6623 = vmul.f32 %v6559, %v1401
      %v6624 = vmul.f32 %v6560, %v1406
      %v6625 = vmul.f32 %v6561, %v1411
      %v6626 = vmul.f32 %v6562, %v1416
      %v6627 = vmul.f32 %v6563, %v1421
      %v6628 = vpack.c.bf16 %v6597, %v6596
      %v6629 = vpack.c.bf16 %v6599, %v6598
      %v6630 = vpack.c.bf16 %v6601, %v6600
      %v6631 = vpack.c.bf16 %v6603, %v6602
      %v6632 = vpack.c.bf16 %v6605, %v6604
      %v6633 = vpack.c.bf16 %v6607, %v6606
      %v6634 = vpack.c.bf16 %v6609, %v6608
      %v6635 = vpack.c.bf16 %v6611, %v6610
      %v6636 = vpack.c.bf16 %v6613, %v6612
      %v6637 = vpack.c.bf16 %v6615, %v6614
      %v6638 = vpack.c.bf16 %v6617, %v6616
      %v6639 = vpack.c.bf16 %v6619, %v6618
      %v6640 = vpack.c.bf16 %v6621, %v6620
      %v6641 = vpack.c.bf16 %v6623, %v6622
      %v6642 = vpack.c.bf16 %v6625, %v6624
      %v6643 = vpack.c.bf16 %v6627, %v6626
      %6644 = vst.msk [vmem:[#allocation4 + $0x10] sm:$0xff] %vm200, %v6628
      %6645 = vst.msk [vmem:[#allocation4 + $0x18] sm:$0xff] %vm200, %v6629
      %6646 = vst.msk [vmem:[#allocation4 + $0x20] sm:$0xff] %vm200, %v6630
      %6647 = vst.msk [vmem:[#allocation4 + $0x28] sm:$0xff] %vm200, %v6631
      %6648 = vst.msk [vmem:[#allocation4 + $0x30] sm:$0xff] %vm200, %v6632
      %6649 = vst.msk [vmem:[#allocation4 + $0x38] sm:$0xff] %vm200, %v6633
      %6650 = vst.msk [vmem:[#allocation4 + $0x40] sm:$0xff] %vm200, %v6634
      %6651 = vst.msk [vmem:[#allocation4 + $0x48] sm:$0xff] %vm200, %v6635
      %6652 = vst.msk [vmem:[#allocation4 + $0x50] sm:$0xff] %vm200, %v6636
      %6653 = vst.msk [vmem:[#allocation4 + $0x58] sm:$0xff] %vm200, %v6637
      %6654 = vst.msk [vmem:[#allocation4 + $0x60] sm:$0xff] %vm200, %v6638
      %6655 = vst.msk [vmem:[#allocation4 + $0x68] sm:$0xff] %vm200, %v6639
      %6656 = vst.msk [vmem:[#allocation4 + $0x70] sm:$0xff] %vm200, %v6640
      %6657 = vst.msk [vmem:[#allocation4 + $0x78] sm:$0xff] %vm200, %v6641
      %6658 = vst.msk [vmem:[#allocation4 + $0x80] sm:$0xff] %vm200, %v6642
      %6659 = vst.msk [vmem:[#allocation4 + $0x88] sm:$0xff] %vm200, %v6643
      %v6660 = vmul.f32 %v6532, %v1489
      %v6661 = vmul.f32 %v6533, %v1493
      %v6662 = vmul.f32 %v6534, %v1497
      %v6663 = vmul.f32 %v6535, %v1501
      %v6664 = vmul.f32 %v6536, %v1505
      %v6665 = vmul.f32 %v6537, %v1509
      %v6666 = vmul.f32 %v6538, %v1513
      %v6667 = vmul.f32 %v6539, %v1517
      %v6668 = vmul.f32 %v6540, %v1521
      %v6669 = vmul.f32 %v6541, %v1525
      %v6670 = vmul.f32 %v6542, %v1529
      %v6671 = vmul.f32 %v6543, %v1533
      %v6672 = vmul.f32 %v6544, %v1537
      %v6673 = vmul.f32 %v6545, %v1541
      %v6674 = vmul.f32 %v6546, %v1545
      %v6675 = vmul.f32 %v6547, %v1549
      %v6676 = vmul.f32 %v6548, %v1553
      %v6677 = vmul.f32 %v6549, %v1557
      %v6678 = vmul.f32 %v6550, %v1561
      %v6679 = vmul.f32 %v6551, %v1565
      %v6680 = vmul.f32 %v6552, %v1569
      %v6681 = vmul.f32 %v6553, %v1573
      %v6682 = vmul.f32 %v6554, %v1577
      %v6683 = vmul.f32 %v6555, %v1581
      %v6684 = vmul.f32 %v6556, %v1585
      %v6685 = vmul.f32 %v6557, %v1589
      %v6686 = vmul.f32 %v6558, %v1593
      %v6687 = vmul.f32 %v6559, %v1597
      %v6688 = vmul.f32 %v6560, %v1601
      %v6689 = vmul.f32 %v6561, %v1605
      %v6690 = vmul.f32 %v6562, %v1609
      %v6691 = vmul.f32 %v6563, %v1613
      %v6692 = vpack.c.bf16 %v6661, %v6660
      %v6693 = vpack.c.bf16 %v6663, %v6662
      %v6694 = vpack.c.bf16 %v6665, %v6664
      %v6695 = vpack.c.bf16 %v6667, %v6666
      %v6696 = vpack.c.bf16 %v6669, %v6668
      %v6697 = vpack.c.bf16 %v6671, %v6670
      %v6698 = vpack.c.bf16 %v6673, %v6672
      %v6699 = vpack.c.bf16 %v6675, %v6674
      %v6700 = vpack.c.bf16 %v6677, %v6676
      %v6701 = vpack.c.bf16 %v6679, %v6678
      %v6702 = vpack.c.bf16 %v6681, %v6680
      %v6703 = vpack.c.bf16 %v6683, %v6682
      %v6704 = vpack.c.bf16 %v6685, %v6684
      %v6705 = vpack.c.bf16 %v6687, %v6686
      %v6706 = vpack.c.bf16 %v6689, %v6688
      %v6707 = vpack.c.bf16 %v6691, %v6690
      %6708 = vst.msk [vmem:[#allocation5 + $0x10] sm:$0xff] %vm200, %v6692
      %6709 = vst.msk [vmem:[#allocation5 + $0x18] sm:$0xff] %vm200, %v6693
      %6710 = vst.msk [vmem:[#allocation5 + $0x20] sm:$0xff] %vm200, %v6694
      %6711 = vst.msk [vmem:[#allocation5 + $0x28] sm:$0xff] %vm200, %v6695
      %6712 = vst.msk [vmem:[#allocation5 + $0x30] sm:$0xff] %vm200, %v6696
      %6713 = vst.msk [vmem:[#allocation5 + $0x38] sm:$0xff] %vm200, %v6697
      %6714 = vst.msk [vmem:[#allocation5 + $0x40] sm:$0xff] %vm200, %v6698
      %6715 = vst.msk [vmem:[#allocation5 + $0x48] sm:$0xff] %vm200, %v6699
      %6716 = vst.msk [vmem:[#allocation5 + $0x50] sm:$0xff] %vm200, %v6700
      %6717 = vst.msk [vmem:[#allocation5 + $0x58] sm:$0xff] %vm200, %v6701
      %6718 = vst.msk [vmem:[#allocation5 + $0x60] sm:$0xff] %vm200, %v6702
      %6719 = vst.msk [vmem:[#allocation5 + $0x68] sm:$0xff] %vm200, %v6703
      %6720 = vst.msk [vmem:[#allocation5 + $0x70] sm:$0xff] %vm200, %v6704
      %6721 = vst.msk [vmem:[#allocation5 + $0x78] sm:$0xff] %vm200, %v6705
      %6722 = vst.msk [vmem:[#allocation5 + $0x80] sm:$0xff] %vm200, %v6706
      %6723 = vst.msk [vmem:[#allocation5 + $0x88] sm:$0xff] %vm200, %v6707
      %v6724 = vld [vmem:[#allocation4] sm:$0x80]
      %v6725 = vld [vmem:[#allocation4 + $0x8] sm:$0xff]
      %v6726 = vld [vmem:[#allocation4 + $0x10] sm:$0xff]
      %v6727 = vld [vmem:[#allocation4 + $0x18] sm:$0xff]
      %v6728 = vld [vmem:[#allocation4 + $0x20] sm:$0xff]
      %v6729 = vld [vmem:[#allocation4 + $0x28] sm:$0xff]
      %v6730 = vld [vmem:[#allocation4 + $0x30] sm:$0xff]
      %v6731 = vld [vmem:[#allocation4 + $0x38] sm:$0xff]
      %v6732 = vld [vmem:[#allocation4 + $0x40] sm:$0xff]
      %v6733 = vld [vmem:[#allocation4 + $0x48] sm:$0xff]
      %v6734 = vld [vmem:[#allocation4 + $0x50] sm:$0xff]
      %v6735 = vld [vmem:[#allocation4 + $0x58] sm:$0xff]
      %v6736 = vld [vmem:[#allocation4 + $0x60] sm:$0xff]
      %v6737 = vld [vmem:[#allocation4 + $0x68] sm:$0xff]
      %v6738 = vld [vmem:[#allocation4 + $0x70] sm:$0xff]
      %v6739 = vld [vmem:[#allocation4 + $0x78] sm:$0xff]
      %v6740 = vld [vmem:[#allocation4 + $0x80] sm:$0xff]
      %v6741 = vld [vmem:[%s1 + $0x70] sm:$0xf]
      %v6742 = vld [vmem:[%s1 + $0x74] sm:$0xf]
      %v6743 = vld [vmem:[#allocation3 + $0x8] sm:$0xff]
      %v6744 = vld [vmem:[#allocation3 + $0x10] sm:$0xff]
      %v6745 = vld [vmem:[#allocation3 + $0x18] sm:$0xff]
      %v6746 = vld [vmem:[#allocation3 + $0x20] sm:$0xff]
      %v6747 = vld [vmem:[#allocation3 + $0x28] sm:$0xff]
      %v6748 = vld [vmem:[#allocation3 + $0x30] sm:$0xff]
      %v6749 = vld [vmem:[#allocation3 + $0x38] sm:$0xff]
      %v6750 = vld [vmem:[#allocation3 + $0x40] sm:$0xff]
      %v6751 = vld [vmem:[#allocation3 + $0x48] sm:$0xff]
      %v6752 = vld [vmem:[#allocation3 + $0x50] sm:$0xff]
      %v6753 = vld [vmem:[#allocation3 + $0x58] sm:$0xff]
      %v6754 = vld [vmem:[#allocation3 + $0x60] sm:$0xff]
      %v6755 = vld [vmem:[#allocation3 + $0x68] sm:$0xff]
      %v6756 = vld [vmem:[#allocation3 + $0x70] sm:$0xff]
      %v6757 = vld [vmem:[#allocation3 + $0x78] sm:$0xff]
      %v6758 = vld [vmem:[#allocation3 + $0x80] sm:$0xff]
      %v6759 = vld [vmem:[%s1 + $0x78] sm:$0xf]
      %v6760 = vld [vmem:[%s1 + $0x7c] sm:$0xf]
      %v6763 = vunpack.c.l.b16 %v6759
      %v6764 = vunpack.c.l.b16 %v6760
      %v6765 = vpack.c.b16 %v6764, %v6763
      %v6768 = vsel %vm200, %v6743, 0
      %v6771 = vsel %vm200, %v6744, 0
      %v6774 = vsel %vm200, %v6745, 0
      %v6777 = vsel %vm200, %v6746, 0
      %v6780 = vsel %vm200, %v6747, 0
      %v6783 = vsel %vm200, %v6748, 0
      %v6786 = vsel %vm200, %v6749, 0
      %v6789 = vsel %vm200, %v6750, 0
      %v6792 = vsel %vm200, %v6751, 0
      %v6795 = vsel %vm200, %v6752, 0
      %v6798 = vsel %vm200, %v6753, 0
      %v6801 = vsel %vm200, %v6754, 0
      %v6804 = vsel %vm200, %v6755, 0
      %v6807 = vsel %vm200, %v6756, 0
      %v6810 = vsel %vm200, %v6757, 0
      %v6813 = vsel %vm200, %v6758, 0
      %6815 = vmatprep.subr.bf16.mxu0 0
      %6816 = vmatpush1.bf16.msra.mxu0 %v6765
      %6817 = vmatprep.subr.bf16.mxu0 0
      %6818 = vmatpush1.bf16.msra.mxu0 0
      %6819 = vmatprep.subr.bf16.mxu0 0
      %6820 = vmatpush1.bf16.msra.mxu0 0
      %6821 = vmatprep.subr.bf16.mxu0 0
      %6822 = vmatpush1.bf16.msra.mxu0 0
      %6823 = vmatprep.subr.bf16.mxu0 0
      %6824 = vmatpush1.bf16.msra.mxu0 0
      %6825 = vmatprep.subr.bf16.mxu0 0
      %6826 = vmatpush1.bf16.msra.mxu0 0
      %6827 = vmatprep.subr.bf16.mxu0 0
      %6828 = vmatpush1.bf16.msra.mxu0 0
      %6829 = vmatprep.subr.bf16.mxu0 0
      %6830 = vmatpush1.bf16.msra.mxu0 0
      %6831 = vmatprep.subr.bf16.mxu0 0
      %6832 = vmatpush1.bf16.msra.mxu0 0
      %6833 = vmatprep.subr.bf16.mxu0 0
      %6834 = vmatpush1.bf16.msra.mxu0 0
      %6835 = vmatprep.subr.bf16.mxu0 0
      %6836 = vmatpush1.bf16.msra.mxu0 0
      %6837 = vmatprep.subr.bf16.mxu0 0
      %6838 = vmatpush1.bf16.msra.mxu0 0
      %6839 = vmatprep.subr.bf16.mxu0 0
      %6840 = vmatpush1.bf16.msra.mxu0 0
      %6841 = vmatprep.subr.bf16.mxu0 0
      %6842 = vmatpush1.bf16.msra.mxu0 0
      %6843 = vmatprep.subr.bf16.mxu0 0
      %6844 = vmatpush1.bf16.msra.mxu0 0
      %6845 = vmatprep.subr.bf16.mxu0 0
      %6846 = vmatpush1.bf16.msra.mxu0 0
      %6847 = vmatprep.mubr.bf16.mxu0 0
      %6848 = vmatmul.mubr.bf16.gmra.mrb[0].mxu0 %v6768
      %v6849 = vpop.f32.mrb[0].mxu0
      %v6850 = vadd.f32 0.0, %v6849
      %v6851 = vpop.f32.mrb[0].mxu0
      %v6852 = vpop.f32.mrb[0].mxu0
      %v6853 = vadd.f32 0.0, %v6852
      %v6854 = vpop.f32.mrb[0].mxu0
      %6855 = vmatprep.mubr.bf16.mxu0 0
      %6856 = vmatmul.mubr.bf16.gmra.mrb[0].mxu0 %v6771
      %v6857 = vpop.f32.mrb[0].mxu0
      %v6858 = vadd.f32 0.0, %v6857
      %v6859 = vpop.f32.mrb[0].mxu0
      %v6860 = vpop.f32.mrb[0].mxu0
      %v6861 = vadd.f32 0.0, %v6860
      %v6862 = vpop.f32.mrb[0].mxu0
      %6863 = vmatprep.mubr.bf16.mxu0 0
      %6864 = vmatmul.mubr.bf16.gmra.mrb[0].mxu0 %v6774
      %v6865 = vpop.f32.mrb[0].mxu0
      %v6866 = vadd.f32 0.0, %v6865
      %v6867 = vpop.f32.mrb[0].mxu0
      %v6868 = vpop.f32.mrb[0].mxu0
      %v6869 = vadd.f32 0.0, %v6868
      %v6870 = vpop.f32.mrb[0].mxu0
      %6871 = vmatprep.mubr.bf16.mxu0 0
      %6872 = vmatmul.mubr.bf16.gmra.mrb[0].mxu0 %v6777
      %v6873 = vpop.f32.mrb[0].mxu0
      %v6874 = vadd.f32 0.0, %v6873
      %v6875 = vpop.f32.mrb[0].mxu0
      %v6876 = vpop.f32.mrb[0].mxu0
      %v6877 = vadd.f32 0.0, %v6876
      %v6878 = vpop.f32.mrb[0].mxu0
      %6879 = vmatprep.mubr.bf16.mxu0 0
      %6880 = vmatmul.mubr.bf16.gmra.mrb[0].mxu0 %v6780
      %v6881 = vpop.f32.mrb[0].mxu0
      %v6882 = vadd.f32 0.0, %v6881
      %v6883 = vpop.f32.mrb[0].mxu0
      %v6884 = vpop.f32.mrb[0].mxu0
      %v6885 = vadd.f32 0.0, %v6884
      %v6886 = vpop.f32.mrb[0].mxu0
      %6887 = vmatprep.mubr.bf16.mxu0 0
      %6888 = vmatmul.mubr.bf16.gmra.mrb[0].mxu0 %v6783
      %v6889 = vpop.f32.mrb[0].mxu0
      %v6890 = vadd.f32 0.0, %v6889
      %v6891 = vpop.f32.mrb[0].mxu0
      %v6892 = vpop.f32.mrb[0].mxu0
      %v6893 = vadd.f32 0.0, %v6892
      %v6894 = vpop.f32.mrb[0].mxu0
      %6895 = vmatprep.mubr.bf16.mxu0 0
      %6896 = vmatmul.mubr.bf16.gmra.mrb[0].mxu0 %v6786
      %v6897 = vpop.f32.mrb[0].mxu0
      %v6898 = vadd.f32 0.0, %v6897
      %v6899 = vpop.f32.mrb[0].mxu0
      %v6900 = vpop.f32.mrb[0].mxu0
      %v6901 = vadd.f32 0.0, %v6900
      %v6902 = vpop.f32.mrb[0].mxu0
      %6903 = vmatprep.mubr.bf16.mxu0 0
      %6904 = vmatmul.mubr.bf16.gmra.mrb[0].mxu0 %v6789
      %v6905 = vpop.f32.mrb[0].mxu0
      %v6906 = vadd.f32 0.0, %v6905
      %v6907 = vpop.f32.mrb[0].mxu0
      %v6908 = vpop.f32.mrb[0].mxu0
      %v6909 = vadd.f32 0.0, %v6908
      %v6910 = vpop.f32.mrb[0].mxu0
      %6911 = vmatprep.mubr.bf16.mxu0 0
      %6912 = vmatmul.mubr.bf16.gmra.mrb[0].mxu0 %v6792
      %v6913 = vpop.f32.mrb[0].mxu0
      %v6914 = vadd.f32 0.0, %v6913
      %v6915 = vpop.f32.mrb[0].mxu0
      %v6916 = vpop.f32.mrb[0].mxu0
      %v6917 = vadd.f32 0.0, %v6916
      %v6918 = vpop.f32.mrb[0].mxu0
      %6919 = vmatprep.mubr.bf16.mxu0 0
      %6920 = vmatmul.mubr.bf16.gmra.mrb[0].mxu0 %v6795
      %v6921 = vpop.f32.mrb[0].mxu0
      %v6922 = vadd.f32 0.0, %v6921
      %v6923 = vpop.f32.mrb[0].mxu0
      %v6924 = vpop.f32.mrb[0].mxu0
      %v6925 = vadd.f32 0.0, %v6924
      %v6926 = vpop.f32.mrb[0].mxu0
      %6927 = vmatprep.mubr.bf16.mxu0 0
      %6928 = vmatmul.mubr.bf16.gmra.mrb[0].mxu0 %v6798
      %v6929 = vpop.f32.mrb[0].mxu0
      %v6930 = vadd.f32 0.0, %v6929
      %v6931 = vpop.f32.mrb[0].mxu0
      %v6932 = vpop.f32.mrb[0].mxu0
      %v6933 = vadd.f32 0.0, %v6932
      %v6934 = vpop.f32.mrb[0].mxu0
      %6935 = vmatprep.mubr.bf16.mxu0 0
      %6936 = vmatmul.mubr.bf16.gmra.mrb[0].mxu0 %v6801
      %v6937 = vpop.f32.mrb[0].mxu0
      %v6938 = vadd.f32 0.0, %v6937
      %v6939 = vpop.f32.mrb[0].mxu0
      %v6940 = vpop.f32.mrb[0].mxu0
      %v6941 = vadd.f32 0.0, %v6940
      %v6942 = vpop.f32.mrb[0].mxu0
      %6943 = vmatprep.mubr.bf16.mxu0 0
      %6944 = vmatmul.mubr.bf16.gmra.mrb[0].mxu0 %v6804
      %v6945 = vpop.f32.mrb[0].mxu0
      %v6946 = vadd.f32 0.0, %v6945
      %v6947 = vpop.f32.mrb[0].mxu0
      %v6948 = vpop.f32.mrb[0].mxu0
      %v6949 = vadd.f32 0.0, %v6948
      %v6950 = vpop.f32.mrb[0].mxu0
      %6951 = vmatprep.mubr.bf16.mxu0 0
      %6952 = vmatmul.mubr.bf16.gmra.mrb[0].mxu0 %v6807
      %v6953 = vpop.f32.mrb[0].mxu0
      %v6954 = vadd.f32 0.0, %v6953
      %v6955 = vpop.f32.mrb[0].mxu0
      %v6956 = vpop.f32.mrb[0].mxu0
      %v6957 = vadd.f32 0.0, %v6956
      %v6958 = vpop.f32.mrb[0].mxu0
      %6959 = vmatprep.mubr.bf16.mxu0 0
      %6960 = vmatmul.mubr.bf16.gmra.mrb[0].mxu0 %v6810
      %v6961 = vpop.f32.mrb[0].mxu0
      %v6962 = vadd.f32 0.0, %v6961
      %v6963 = vpop.f32.mrb[0].mxu0
      %v6964 = vpop.f32.mrb[0].mxu0
      %v6965 = vadd.f32 0.0, %v6964
      %v6966 = vpop.f32.mrb[0].mxu0
      %6967 = vmatprep.mubr.bf16.mxu0 0
      %6968 = vmatmul.mubr.bf16.gmra.mrb[0].mxu0 %v6813
      %v6969 = vpop.f32.mrb[0].mxu0
      %v6970 = vadd.f32 0.0, %v6969
      %v6971 = vpop.f32.mrb[0].mxu0
      %v6972 = vpop.f32.mrb[0].mxu0
      %v6973 = vadd.f32 0.0, %v6972
      %v6974 = vpop.f32.mrb[0].mxu0
      %6975 = vdwg.mxu0
      %v6977 = vshrl.u32 %v6724, 16
      %v6979 = vrot.slane %v6977, 7
      %v6981 = vshrl.u32 %v6725, 16
      %v6983 = vrot.slane %v6981, 7
      %v6984 = vshll.u32 %v6725, 16
      %v6986 = vor.u32 %v6983, %v6984
      %v6987 = vsel %vm1926, %v6979, %v6986
      %v6989 = vshrl.u32 %v6726, 16
      %v6991 = vrot.slane %v6989, 7
      %v6992 = vshll.u32 %v6726, 16
      %v6994 = vor.u32 %v6991, %v6992
      %v6995 = vsel %vm1926, %v6983, %v6994
      %v6997 = vshrl.u32 %v6727, 16
      %v6999 = vrot.slane %v6997, 7
      %v7000 = vshll.u32 %v6727, 16
      %v7002 = vor.u32 %v6999, %v7000
      %v7003 = vsel %vm1926, %v6991, %v7002
      %v7005 = vshrl.u32 %v6728, 16
      %v7007 = vrot.slane %v7005, 7
      %v7008 = vshll.u32 %v6728, 16
      %v7010 = vor.u32 %v7007, %v7008
      %v7011 = vsel %vm1926, %v6999, %v7010
      %v7013 = vshrl.u32 %v6729, 16
      %v7015 = vrot.slane %v7013, 7
      %v7016 = vshll.u32 %v6729, 16
      %v7018 = vor.u32 %v7015, %v7016
      %v7019 = vsel %vm1926, %v7007, %v7018
      %v7021 = vshrl.u32 %v6730, 16
      %v7023 = vrot.slane %v7021, 7
      %v7024 = vshll.u32 %v6730, 16
      %v7026 = vor.u32 %v7023, %v7024
      %v7027 = vsel %vm1926, %v7015, %v7026
      %v7029 = vshrl.u32 %v6731, 16
      %v7031 = vrot.slane %v7029, 7
      %v7032 = vshll.u32 %v6731, 16
      %v7034 = vor.u32 %v7031, %v7032
      %v7035 = vsel %vm1926, %v7023, %v7034
      %v7037 = vshrl.u32 %v6732, 16
      %v7039 = vrot.slane %v7037, 7
      %v7040 = vshll.u32 %v6732, 16
      %v7042 = vor.u32 %v7039, %v7040
      %v7043 = vsel %vm1926, %v7031, %v7042
      %v7045 = vshrl.u32 %v6733, 16
      %v7047 = vrot.slane %v7045, 7
      %v7048 = vshll.u32 %v6733, 16
      %v7050 = vor.u32 %v7047, %v7048
      %v7051 = vsel %vm1926, %v7039, %v7050
      %v7053 = vshrl.u32 %v6734, 16
      %v7055 = vrot.slane %v7053, 7
      %v7056 = vshll.u32 %v6734, 16
      %v7058 = vor.u32 %v7055, %v7056
      %v7059 = vsel %vm1926, %v7047, %v7058
      %v7061 = vshrl.u32 %v6735, 16
      %v7063 = vrot.slane %v7061, 7
      %v7064 = vshll.u32 %v6735, 16
      %v7066 = vor.u32 %v7063, %v7064
      %v7067 = vsel %vm1926, %v7055, %v7066
      %v7069 = vshrl.u32 %v6736, 16
      %v7071 = vrot.slane %v7069, 7
      %v7072 = vshll.u32 %v6736, 16
      %v7074 = vor.u32 %v7071, %v7072
      %v7075 = vsel %vm1926, %v7063, %v7074
      %v7077 = vshrl.u32 %v6737, 16
      %v7079 = vrot.slane %v7077, 7
      %v7080 = vshll.u32 %v6737, 16
      %v7082 = vor.u32 %v7079, %v7080
      %v7083 = vsel %vm1926, %v7071, %v7082
      %v7085 = vshrl.u32 %v6738, 16
      %v7087 = vrot.slane %v7085, 7
      %v7088 = vshll.u32 %v6738, 16
      %v7090 = vor.u32 %v7087, %v7088
      %v7091 = vsel %vm1926, %v7079, %v7090
      %v7093 = vshrl.u32 %v6739, 16
      %v7095 = vrot.slane %v7093, 7
      %v7096 = vshll.u32 %v6739, 16
      %v7098 = vor.u32 %v7095, %v7096
      %v7099 = vsel %vm1926, %v7087, %v7098
      %v7101 = vshrl.u32 %v6740, 16
      %v7103 = vrot.slane %v7101, 7
      %v7104 = vshll.u32 %v6740, 16
      %v7106 = vor.u32 %v7103, %v7104
      %v7107 = vsel %vm1926, %v7095, %v7106
      %v7110 = vunpack.c.l.b16 %v6741
      %v7111 = vunpack.c.l.b16 %v6742
      %v7112 = vpack.c.b16 %v7111, %v7110
      %v7115 = vsel %vm200, %v6987, 0
      %v7118 = vsel %vm200, %v6995, 0
      %v7121 = vsel %vm200, %v7003, 0
      %v7124 = vsel %vm200, %v7011, 0
      %v7127 = vsel %vm200, %v7019, 0
      %v7130 = vsel %vm200, %v7027, 0
      %v7133 = vsel %vm200, %v7035, 0
      %v7136 = vsel %vm200, %v7043, 0
      %v7139 = vsel %vm200, %v7051, 0
      %v7142 = vsel %vm200, %v7059, 0
      %v7145 = vsel %vm200, %v7067, 0
      %v7148 = vsel %vm200, %v7075, 0
      %v7151 = vsel %vm200, %v7083, 0
      %v7154 = vsel %vm200, %v7091, 0
      %v7157 = vsel %vm200, %v7099, 0
      %v7160 = vsel %vm200, %v7107, 0
      %7162 = vmatprep.subr.bf16.mxu0 0
      %7163 = vmatpush1.bf16.msra.mxu0 %v7112
      %7164 = vmatprep.subr.bf16.mxu0 0
      %7165 = vmatpush1.bf16.msra.mxu0 0
      %7166 = vmatprep.subr.bf16.mxu0 0
      %7167 = vmatpush1.bf16.msra.mxu0 0
      %7168 = vmatprep.subr.bf16.mxu0 0
      %7169 = vmatpush1.bf16.msra.mxu0 0
      %7170 = vmatprep.subr.bf16.mxu0 0
      %7171 = vmatpush1.bf16.msra.mxu0 0
      %7172 = vmatprep.subr.bf16.mxu0 0
      %7173 = vmatpush1.bf16.msra.mxu0 0
      %7174 = vmatprep.subr.bf16.mxu0 0
      %7175 = vmatpush1.bf16.msra.mxu0 0
      %7176 = vmatprep.subr.bf16.mxu0 0
      %7177 = vmatpush1.bf16.msra.mxu0 0
      %7178 = vmatprep.subr.bf16.mxu0 0
      %7179 = vmatpush1.bf16.msra.mxu0 0
      %7180 = vmatprep.subr.bf16.mxu0 0
      %7181 = vmatpush1.bf16.msra.mxu0 0
      %7182 = vmatprep.subr.bf16.mxu0 0
      %7183 = vmatpush1.bf16.msra.mxu0 0
      %7184 = vmatprep.subr.bf16.mxu0 0
      %7185 = vmatpush1.bf16.msra.mxu0 0
      %7186 = vmatprep.subr.bf16.mxu0 0
      %7187 = vmatpush1.bf16.msra.mxu0 0
      %7188 = vmatprep.subr.bf16.mxu0 0
      %7189 = vmatpush1.bf16.msra.mxu0 0
      %7190 = vmatprep.subr.bf16.mxu0 0
      %7191 = vmatpush1.bf16.msra.mxu0 0
      %7192 = vmatprep.subr.bf16.mxu0 0
      %7193 = vmatpush1.bf16.msra.mxu0 0
      %7194 = vmatprep.mubr.bf16.mxu0 0
      %7195 = vmatmul.mubr.bf16.gmra.mrb[0].mxu0 %v7115
      %v7196 = vpop.f32.mrb[0].mxu0
      %v7197 = vadd.f32 %v6850, %v7196
      %v7198 = vpop.f32.mrb[0].mxu0
      %v7199 = vpop.f32.mrb[0].mxu0
      %v7200 = vadd.f32 %v6853, %v7199
      %v7201 = vpop.f32.mrb[0].mxu0
      %7202 = vmatprep.mubr.bf16.mxu0 0
      %7203 = vmatmul.mubr.bf16.gmra.mrb[0].mxu0 %v7118
      %v7204 = vpop.f32.mrb[0].mxu0
      %v7205 = vadd.f32 %v6858, %v7204
      %v7206 = vpop.f32.mrb[0].mxu0
      %v7207 = vpop.f32.mrb[0].mxu0
      %v7208 = vadd.f32 %v6861, %v7207
      %v7209 = vpop.f32.mrb[0].mxu0
      %7210 = vmatprep.mubr.bf16.mxu0 0
      %7211 = vmatmul.mubr.bf16.gmra.mrb[0].mxu0 %v7121
      %v7212 = vpop.f32.mrb[0].mxu0
      %v7213 = vadd.f32 %v6866, %v7212
      %v7214 = vpop.f32.mrb[0].mxu0
      %v7215 = vpop.f32.mrb[0].mxu0
      %v7216 = vadd.f32 %v6869, %v7215
      %v7217 = vpop.f32.mrb[0].mxu0
      %7218 = vmatprep.mubr.bf16.mxu0 0
      %7219 = vmatmul.mubr.bf16.gmra.mrb[0].mxu0 %v7124
      %v7220 = vpop.f32.mrb[0].mxu0
      %v7221 = vadd.f32 %v6874, %v7220
      %v7222 = vpop.f32.mrb[0].mxu0
      %v7223 = vpop.f32.mrb[0].mxu0
      %v7224 = vadd.f32 %v6877, %v7223
      %v7225 = vpop.f32.mrb[0].mxu0
      %7226 = vmatprep.mubr.bf16.mxu0 0
      %7227 = vmatmul.mubr.bf16.gmra.mrb[0].mxu0 %v7127
      %v7228 = vpop.f32.mrb[0].mxu0
      %v7229 = vadd.f32 %v6882, %v7228
      %v7230 = vpop.f32.mrb[0].mxu0
      %v7231 = vpop.f32.mrb[0].mxu0
      %v7232 = vadd.f32 %v6885, %v7231
      %v7233 = vpop.f32.mrb[0].mxu0
      %7234 = vmatprep.mubr.bf16.mxu0 0
      %7235 = vmatmul.mubr.bf16.gmra.mrb[0].mxu0 %v7130
      %v7236 = vpop.f32.mrb[0].mxu0
      %v7237 = vadd.f32 %v6890, %v7236
      %v7238 = vpop.f32.mrb[0].mxu0
      %v7239 = vpop.f32.mrb[0].mxu0
      %v7240 = vadd.f32 %v6893, %v7239
      %v7241 = vpop.f32.mrb[0].mxu0
      %7242 = vmatprep.mubr.bf16.mxu0 0
      %7243 = vmatmul.mubr.bf16.gmra.mrb[0].mxu0 %v7133
      %v7244 = vpop.f32.mrb[0].mxu0
      %v7245 = vadd.f32 %v6898, %v7244
      %v7246 = vpop.f32.mrb[0].mxu0
      %v7247 = vpop.f32.mrb[0].mxu0
      %v7248 = vadd.f32 %v6901, %v7247
      %v7249 = vpop.f32.mrb[0].mxu0
      %7250 = vmatprep.mubr.bf16.mxu0 0
      %7251 = vmatmul.mubr.bf16.gmra.mrb[0].mxu0 %v7136
      %v7252 = vpop.f32.mrb[0].mxu0
      %v7253 = vadd.f32 %v6906, %v7252
      %v7254 = vpop.f32.mrb[0].mxu0
      %v7255 = vpop.f32.mrb[0].mxu0
      %v7256 = vadd.f32 %v6909, %v7255
      %v7257 = vpop.f32.mrb[0].mxu0
      %7258 = vmatprep.mubr.bf16.mxu0 0
      %7259 = vmatmul.mubr.bf16.gmra.mrb[0].mxu0 %v7139
      %v7260 = vpop.f32.mrb[0].mxu0
      %v7261 = vadd.f32 %v6914, %v7260
      %v7262 = vpop.f32.mrb[0].mxu0
      %v7263 = vpop.f32.mrb[0].mxu0
      %v7264 = vadd.f32 %v6917, %v7263
      %v7265 = vpop.f32.mrb[0].mxu0
      %7266 = vmatprep.mubr.bf16.mxu0 0
      %7267 = vmatmul.mubr.bf16.gmra.mrb[0].mxu0 %v7142
      %v7268 = vpop.f32.mrb[0].mxu0
      %v7269 = vadd.f32 %v6922, %v7268
      %v7270 = vpop.f32.mrb[0].mxu0
      %v7271 = vpop.f32.mrb[0].mxu0
      %v7272 = vadd.f32 %v6925, %v7271
      %v7273 = vpop.f32.mrb[0].mxu0
      %7274 = vmatprep.mubr.bf16.mxu0 0
      %7275 = vmatmul.mubr.bf16.gmra.mrb[0].mxu0 %v7145
      %v7276 = vpop.f32.mrb[0].mxu0
      %v7277 = vadd.f32 %v6930, %v7276
      %v7278 = vpop.f32.mrb[0].mxu0
      %v7279 = vpop.f32.mrb[0].mxu0
      %v7280 = vadd.f32 %v6933, %v7279
      %v7281 = vpop.f32.mrb[0].mxu0
      %7282 = vmatprep.mubr.bf16.mxu0 0
      %7283 = vmatmul.mubr.bf16.gmra.mrb[0].mxu0 %v7148
      %v7284 = vpop.f32.mrb[0].mxu0
      %v7285 = vadd.f32 %v6938, %v7284
      %v7286 = vpop.f32.mrb[0].mxu0
      %v7287 = vpop.f32.mrb[0].mxu0
      %v7288 = vadd.f32 %v6941, %v7287
      %v7289 = vpop.f32.mrb[0].mxu0
      %7290 = vmatprep.mubr.bf16.mxu0 0
      %7291 = vmatmul.mubr.bf16.gmra.mrb[0].mxu0 %v7151
      %v7292 = vpop.f32.mrb[0].mxu0
      %v7293 = vadd.f32 %v6946, %v7292
      %v7294 = vpop.f32.mrb[0].mxu0
      %v7295 = vpop.f32.mrb[0].mxu0
      %v7296 = vadd.f32 %v6949, %v7295
      %v7297 = vpop.f32.mrb[0].mxu0
      %7298 = vmatprep.mubr.bf16.mxu0 0
      %7299 = vmatmul.mubr.bf16.gmra.mrb[0].mxu0 %v7154
      %v7300 = vpop.f32.mrb[0].mxu0
      %v7301 = vadd.f32 %v6954, %v7300
      %v7302 = vpop.f32.mrb[0].mxu0
      %v7303 = vpop.f32.mrb[0].mxu0
      %v7304 = vadd.f32 %v6957, %v7303
      %v7305 = vpop.f32.mrb[0].mxu0
      %7306 = vmatprep.mubr.bf16.mxu0 0
      %7307 = vmatmul.mubr.bf16.gmra.mrb[0].mxu0 %v7157
      %v7308 = vpop.f32.mrb[0].mxu0
      %v7309 = vadd.f32 %v6962, %v7308
      %v7310 = vpop.f32.mrb[0].mxu0
      %v7311 = vpop.f32.mrb[0].mxu0
      %v7312 = vadd.f32 %v6965, %v7311
      %v7313 = vpop.f32.mrb[0].mxu0
      %7314 = vmatprep.mubr.bf16.mxu0 0
      %7315 = vmatmul.mubr.bf16.gmra.mrb[0].mxu0 %v7160
      %v7316 = vpop.f32.mrb[0].mxu0
      %v7317 = vadd.f32 %v6970, %v7316
      %v7318 = vpop.f32.mrb[0].mxu0
      %v7319 = vpop.f32.mrb[0].mxu0
      %v7320 = vadd.f32 %v6973, %v7319
      %v7321 = vpop.f32.mrb[0].mxu0
      %7322 = vdwg.mxu0
      %v7323 = vld [vmem:[#allocation5 + $0x8] sm:$0xff]
      %v7324 = vld [vmem:[#allocation5 + $0x10] sm:$0xff]
      %v7325 = vld [vmem:[#allocation5 + $0x18] sm:$0xff]
      %v7326 = vld [vmem:[#allocation5 + $0x20] sm:$0xff]
      %v7327 = vld [vmem:[#allocation5 + $0x28] sm:$0xff]
      %v7328 = vld [vmem:[#allocation5 + $0x30] sm:$0xff]
      %v7329 = vld [vmem:[#allocation5 + $0x38] sm:$0xff]
      %v7330 = vld [vmem:[#allocation5 + $0x40] sm:$0xff]
      %v7331 = vld [vmem:[#allocation5 + $0x48] sm:$0xff]
      %v7332 = vld [vmem:[#allocation5 + $0x50] sm:$0xff]
      %v7333 = vld [vmem:[#allocation5 + $0x58] sm:$0xff]
      %v7334 = vld [vmem:[#allocation5 + $0x60] sm:$0xff]
      %v7335 = vld [vmem:[#allocation5 + $0x68] sm:$0xff]
      %v7336 = vld [vmem:[#allocation5 + $0x70] sm:$0xff]
      %v7337 = vld [vmem:[#allocation5 + $0x78] sm:$0xff]
      %v7338 = vld [vmem:[#allocation5 + $0x80] sm:$0xff]
      %v7339 = vld [vmem:[#allocation5 + $0x88] sm:$0x1]
      %v7340 = vld [vmem:[%s1 + $0x80] sm:$0xf]
      %v7341 = vld [vmem:[%s1 + $0x84] sm:$0xf]
      %v7343 = vshrl.u32 %v7323, 16
      %v7345 = vshll.u32 %v7323, 16
      %v7347 = vrot.slane %v7345, 1
      %v7348 = vor.u32 %v7343, %v7347
      %v7350 = vshll.u32 %v7324, 16
      %v7352 = vrot.slane %v7350, 1
      %v7353 = vsel %vm2289, %v7348, %v7352
      %v7354 = vshrl.u32 %v7324, 16
      %v7356 = vor.u32 %v7354, %v7352
      %v7358 = vshll.u32 %v7325, 16
      %v7360 = vrot.slane %v7358, 1
      %v7361 = vsel %vm2289, %v7356, %v7360
      %v7362 = vshrl.u32 %v7325, 16
      %v7364 = vor.u32 %v7362, %v7360
      %v7366 = vshll.u32 %v7326, 16
      %v7368 = vrot.slane %v7366, 1
      %v7369 = vsel %vm2289, %v7364, %v7368
      %v7370 = vshrl.u32 %v7326, 16
      %v7372 = vor.u32 %v7370, %v7368
      %v7374 = vshll.u32 %v7327, 16
      %v7376 = vrot.slane %v7374, 1
      %v7377 = vsel %vm2289, %v7372, %v7376
      %v7378 = vshrl.u32 %v7327, 16
      %v7380 = vor.u32 %v7378, %v7376
      %v7382 = vshll.u32 %v7328, 16
      %v7384 = vrot.slane %v7382, 1
      %v7385 = vsel %vm2289, %v7380, %v7384
      %v7386 = vshrl.u32 %v7328, 16
      %v7388 = vor.u32 %v7386, %v7384
      %v7390 = vshll.u32 %v7329, 16
      %v7392 = vrot.slane %v7390, 1
      %v7393 = vsel %vm2289, %v7388, %v7392
      %v7394 = vshrl.u32 %v7329, 16
      %v7396 = vor.u32 %v7394, %v7392
      %v7398 = vshll.u32 %v7330, 16
      %v7400 = vrot.slane %v7398, 1
      %v7401 = vsel %vm2289, %v7396, %v7400
      %v7402 = vshrl.u32 %v7330, 16
      %v7404 = vor.u32 %v7402, %v7400
      %v7406 = vshll.u32 %v7331, 16
      %v7408 = vrot.slane %v7406, 1
      %v7409 = vsel %vm2289, %v7404, %v7408
      %v7410 = vshrl.u32 %v7331, 16
      %v7412 = vor.u32 %v7410, %v7408
      %v7414 = vshll.u32 %v7332, 16
      %v7416 = vrot.slane %v7414, 1
      %v7417 = vsel %vm2289, %v7412, %v7416
      %v7418 = vshrl.u32 %v7332, 16
      %v7420 = vor.u32 %v7418, %v7416
      %v7422 = vshll.u32 %v7333, 16
      %v7424 = vrot.slane %v7422, 1
      %v7425 = vsel %vm2289, %v7420, %v7424
      %v7426 = vshrl.u32 %v7333, 16
      %v7428 = vor.u32 %v7426, %v7424
      %v7430 = vshll.u32 %v7334, 16
      %v7432 = vrot.slane %v7430, 1
      %v7433 = vsel %vm2289, %v7428, %v7432
      %v7434 = vshrl.u32 %v7334, 16
      %v7436 = vor.u32 %v7434, %v7432
      %v7438 = vshll.u32 %v7335, 16
      %v7440 = vrot.slane %v7438, 1
      %v7441 = vsel %vm2289, %v7436, %v7440
      %v7442 = vshrl.u32 %v7335, 16
      %v7444 = vor.u32 %v7442, %v7440
      %v7446 = vshll.u32 %v7336, 16
      %v7448 = vrot.slane %v7446, 1
      %v7449 = vsel %vm2289, %v7444, %v7448
      %v7450 = vshrl.u32 %v7336, 16
      %v7452 = vor.u32 %v7450, %v7448
      %v7454 = vshll.u32 %v7337, 16
      %v7456 = vrot.slane %v7454, 1
      %v7457 = vsel %vm2289, %v7452, %v7456
      %v7458 = vshrl.u32 %v7337, 16
      %v7460 = vor.u32 %v7458, %v7456
      %v7462 = vshll.u32 %v7338, 16
      %v7464 = vrot.slane %v7462, 1
      %v7465 = vsel %vm2289, %v7460, %v7464
      %v7466 = vshrl.u32 %v7338, 16
      %v7468 = vor.u32 %v7466, %v7464
      %v7470 = vshll.u32 %v7339, 16
      %v7472 = vrot.slane %v7470, 1
      %v7473 = vsel %vm2289, %v7468, %v7472
      %v7476 = vunpack.c.l.b16 %v7340
      %v7477 = vunpack.c.l.b16 %v7341
      %v7478 = vpack.c.b16 %v7477, %v7476
      %v7481 = vsel %vm200, %v7353, 0
      %v7484 = vsel %vm200, %v7361, 0
      %v7487 = vsel %vm200, %v7369, 0
      %v7490 = vsel %vm200, %v7377, 0
      %v7493 = vsel %vm200, %v7385, 0
      %v7496 = vsel %vm200, %v7393, 0
      %v7499 = vsel %vm200, %v7401, 0
      %v7502 = vsel %vm200, %v7409, 0
      %v7505 = vsel %vm200, %v7417, 0
      %v7508 = vsel %vm200, %v7425, 0
      %v7511 = vsel %vm200, %v7433, 0
      %v7514 = vsel %vm200, %v7441, 0
      %v7517 = vsel %vm200, %v7449, 0
      %v7520 = vsel %vm200, %v7457, 0
      %v7523 = vsel %vm200, %v7465, 0
      %v7526 = vsel %vm200, %v7473, 0
      %7528 = vmatprep.subr.bf16.mxu0 0
      %7529 = vmatpush1.bf16.msra.mxu0 %v7478
      %7530 = vmatprep.subr.bf16.mxu0 0
      %7531 = vmatpush1.bf16.msra.mxu0 0
      %7532 = vmatprep.subr.bf16.mxu0 0
      %7533 = vmatpush1.bf16.msra.mxu0 0
      %7534 = vmatprep.subr.bf16.mxu0 0
      %7535 = vmatpush1.bf16.msra.mxu0 0
      %7536 = vmatprep.subr.bf16.mxu0 0
      %7537 = vmatpush1.bf16.msra.mxu0 0
      %7538 = vmatprep.subr.bf16.mxu0 0
      %7539 = vmatpush1.bf16.msra.mxu0 0
      %7540 = vmatprep.subr.bf16.mxu0 0
      %7541 = vmatpush1.bf16.msra.mxu0 0
      %7542 = vmatprep.subr.bf16.mxu0 0
      %7543 = vmatpush1.bf16.msra.mxu0 0
      %7544 = vmatprep.subr.bf16.mxu0 0
      %7545 = vmatpush1.bf16.msra.mxu0 0
      %7546 = vmatprep.subr.bf16.mxu0 0
      %7547 = vmatpush1.bf16.msra.mxu0 0
      %7548 = vmatprep.subr.bf16.mxu0 0
      %7549 = vmatpush1.bf16.msra.mxu0 0
      %7550 = vmatprep.subr.bf16.mxu0 0
      %7551 = vmatpush1.bf16.msra.mxu0 0
      %7552 = vmatprep.subr.bf16.mxu0 0
      %7553 = vmatpush1.bf16.msra.mxu0 0
      %7554 = vmatprep.subr.bf16.mxu0 0
      %7555 = vmatpush1.bf16.msra.mxu0 0
      %7556 = vmatprep.subr.bf16.mxu0 0
      %7557 = vmatpush1.bf16.msra.mxu0 0
      %7558 = vmatprep.subr.bf16.mxu0 0
      %7559 = vmatpush1.bf16.msra.mxu0 0
      %7560 = vmatprep.mubr.bf16.mxu0 0
      %7561 = vmatmul.mubr.bf16.gmra.mrb[0].mxu0 %v7481
      %v7562 = vpop.f32.mrb[0].mxu0
      %v7563 = vadd.f32 0.0, %v7562
      %v7564 = vpop.f32.mrb[0].mxu0
      %v7565 = vpop.f32.mrb[0].mxu0
      %v7566 = vadd.f32 0.0, %v7565
      %v7567 = vpop.f32.mrb[0].mxu0
      %7568 = vmatprep.mubr.bf16.mxu0 0
      %7569 = vmatmul.mubr.bf16.gmra.mrb[0].mxu0 %v7484
      %v7570 = vpop.f32.mrb[0].mxu0
      %v7571 = vadd.f32 0.0, %v7570
      %v7572 = vpop.f32.mrb[0].mxu0
      %v7573 = vpop.f32.mrb[0].mxu0
      %v7574 = vadd.f32 0.0, %v7573
      %v7575 = vpop.f32.mrb[0].mxu0
      %7576 = vmatprep.mubr.bf16.mxu0 0
      %7577 = vmatmul.mubr.bf16.gmra.mrb[0].mxu0 %v7487
      %v7578 = vpop.f32.mrb[0].mxu0
      %v7579 = vadd.f32 0.0, %v7578
      %v7580 = vpop.f32.mrb[0].mxu0
      %v7581 = vpop.f32.mrb[0].mxu0
      %v7582 = vadd.f32 0.0, %v7581
      %v7583 = vpop.f32.mrb[0].mxu0
      %7584 = vmatprep.mubr.bf16.mxu0 0
      %7585 = vmatmul.mubr.bf16.gmra.mrb[0].mxu0 %v7490
      %v7586 = vpop.f32.mrb[0].mxu0
      %v7587 = vadd.f32 0.0, %v7586
      %v7588 = vpop.f32.mrb[0].mxu0
      %v7589 = vpop.f32.mrb[0].mxu0
      %v7590 = vadd.f32 0.0, %v7589
      %v7591 = vpop.f32.mrb[0].mxu0
      %7592 = vmatprep.mubr.bf16.mxu0 0
      %7593 = vmatmul.mubr.bf16.gmra.mrb[0].mxu0 %v7493
      %v7594 = vpop.f32.mrb[0].mxu0
      %v7595 = vadd.f32 0.0, %v7594
      %v7596 = vpop.f32.mrb[0].mxu0
      %v7597 = vpop.f32.mrb[0].mxu0
      %v7598 = vadd.f32 0.0, %v7597
      %v7599 = vpop.f32.mrb[0].mxu0
      %7600 = vmatprep.mubr.bf16.mxu0 0
      %7601 = vmatmul.mubr.bf16.gmra.mrb[0].mxu0 %v7496
      %v7602 = vpop.f32.mrb[0].mxu0
      %v7603 = vadd.f32 0.0, %v7602
      %v7604 = vpop.f32.mrb[0].mxu0
      %v7605 = vpop.f32.mrb[0].mxu0
      %v7606 = vadd.f32 0.0, %v7605
      %v7607 = vpop.f32.mrb[0].mxu0
      %7608 = vmatprep.mubr.bf16.mxu0 0
      %7609 = vmatmul.mubr.bf16.gmra.mrb[0].mxu0 %v7499
      %v7610 = vpop.f32.mrb[0].mxu0
      %v7611 = vadd.f32 0.0, %v7610
      %v7612 = vpop.f32.mrb[0].mxu0
      %v7613 = vpop.f32.mrb[0].mxu0
      %v7614 = vadd.f32 0.0, %v7613
      %v7615 = vpop.f32.mrb[0].mxu0
      %7616 = vmatprep.mubr.bf16.mxu0 0
      %7617 = vmatmul.mubr.bf16.gmra.mrb[0].mxu0 %v7502
      %v7618 = vpop.f32.mrb[0].mxu0
      %v7619 = vadd.f32 0.0, %v7618
      %v7620 = vpop.f32.mrb[0].mxu0
      %v7621 = vpop.f32.mrb[0].mxu0
      %v7622 = vadd.f32 0.0, %v7621
      %v7623 = vpop.f32.mrb[0].mxu0
      %7624 = vmatprep.mubr.bf16.mxu0 0
      %7625 = vmatmul.mubr.bf16.gmra.mrb[0].mxu0 %v7505
      %v7626 = vpop.f32.mrb[0].mxu0
      %v7627 = vadd.f32 0.0, %v7626
      %v7628 = vpop.f32.mrb[0].mxu0
      %v7629 = vpop.f32.mrb[0].mxu0
      %v7630 = vadd.f32 0.0, %v7629
      %v7631 = vpop.f32.mrb[0].mxu0
      %7632 = vmatprep.mubr.bf16.mxu0 0
      %7633 = vmatmul.mubr.bf16.gmra.mrb[0].mxu0 %v7508
      %v7634 = vpop.f32.mrb[0].mxu0
      %v7635 = vadd.f32 0.0, %v7634
      %v7636 = vpop.f32.mrb[0].mxu0
      %v7637 = vpop.f32.mrb[0].mxu0
      %v7638 = vadd.f32 0.0, %v7637
      %v7639 = vpop.f32.mrb[0].mxu0
      %7640 = vmatprep.mubr.bf16.mxu0 0
      %7641 = vmatmul.mubr.bf16.gmra.mrb[0].mxu0 %v7511
      %v7642 = vpop.f32.mrb[0].mxu0
      %v7643 = vadd.f32 0.0, %v7642
      %v7644 = vpop.f32.mrb[0].mxu0
      %v7645 = vpop.f32.mrb[0].mxu0
      %v7646 = vadd.f32 0.0, %v7645
      %v7647 = vpop.f32.mrb[0].mxu0
      %7648 = vmatprep.mubr.bf16.mxu0 0
      %7649 = vmatmul.mubr.bf16.gmra.mrb[0].mxu0 %v7514
      %v7650 = vpop.f32.mrb[0].mxu0
      %v7651 = vadd.f32 0.0, %v7650
      %v7652 = vpop.f32.mrb[0].mxu0
      %v7653 = vpop.f32.mrb[0].mxu0
      %v7654 = vadd.f32 0.0, %v7653
      %v7655 = vpop.f32.mrb[0].mxu0
      %7656 = vmatprep.mubr.bf16.mxu0 0
      %7657 = vmatmul.mubr.bf16.gmra.mrb[0].mxu0 %v7517
      %v7658 = vpop.f32.mrb[0].mxu0
      %v7659 = vadd.f32 0.0, %v7658
      %v7660 = vpop.f32.mrb[0].mxu0
      %v7661 = vpop.f32.mrb[0].mxu0
      %v7662 = vadd.f32 0.0, %v7661
      %v7663 = vpop.f32.mrb[0].mxu0
      %7664 = vmatprep.mubr.bf16.mxu0 0
      %7665 = vmatmul.mubr.bf16.gmra.mrb[0].mxu0 %v7520
      %v7666 = vpop.f32.mrb[0].mxu0
      %v7667 = vadd.f32 0.0, %v7666
      %v7668 = vpop.f32.mrb[0].mxu0
      %v7669 = vpop.f32.mrb[0].mxu0
      %v7670 = vadd.f32 0.0, %v7669
      %v7671 = vpop.f32.mrb[0].mxu0
      %7672 = vmatprep.mubr.bf16.mxu0 0
      %7673 = vmatmul.mubr.bf16.gmra.mrb[0].mxu0 %v7523
      %v7674 = vpop.f32.mrb[0].mxu0
      %v7675 = vadd.f32 0.0, %v7674
      %v7676 = vpop.f32.mrb[0].mxu0
      %v7677 = vpop.f32.mrb[0].mxu0
      %v7678 = vadd.f32 0.0, %v7677
      %v7679 = vpop.f32.mrb[0].mxu0
      %7680 = vmatprep.mubr.bf16.mxu0 0
      %7681 = vmatmul.mubr.bf16.gmra.mrb[0].mxu0 %v7526
      %v7682 = vpop.f32.mrb[0].mxu0
      %v7683 = vadd.f32 0.0, %v7682
      %v7684 = vpop.f32.mrb[0].mxu0
      %v7685 = vpop.f32.mrb[0].mxu0
      %v7686 = vadd.f32 0.0, %v7685
      %v7687 = vpop.f32.mrb[0].mxu0
      %7688 = vdwg.mxu0
      %v7689 = vadd.f32 %v7197, %v7563
      %v7690 = vadd.f32 %v7200, %v7566
      %v7691 = vadd.f32 %v7205, %v7571
      %v7692 = vadd.f32 %v7208, %v7574
      %v7693 = vadd.f32 %v7213, %v7579
      %v7694 = vadd.f32 %v7216, %v7582
      %v7695 = vadd.f32 %v7221, %v7587
      %v7696 = vadd.f32 %v7224, %v7590
      %v7697 = vadd.f32 %v7229, %v7595
      %v7698 = vadd.f32 %v7232, %v7598
      %v7699 = vadd.f32 %v7237, %v7603
      %v7700 = vadd.f32 %v7240, %v7606
      %v7701 = vadd.f32 %v7245, %v7611
      %v7702 = vadd.f32 %v7248, %v7614
      %v7703 = vadd.f32 %v7253, %v7619
      %v7704 = vadd.f32 %v7256, %v7622
      %v7705 = vadd.f32 %v7261, %v7627
      %v7706 = vadd.f32 %v7264, %v7630
      %v7707 = vadd.f32 %v7269, %v7635
      %v7708 = vadd.f32 %v7272, %v7638
      %v7709 = vadd.f32 %v7277, %v7643
      %v7710 = vadd.f32 %v7280, %v7646
      %v7711 = vadd.f32 %v7285, %v7651
      %v7712 = vadd.f32 %v7288, %v7654
      %v7713 = vadd.f32 %v7293, %v7659
      %v7714 = vadd.f32 %v7296, %v7662
      %v7715 = vadd.f32 %v7301, %v7667
      %v7716 = vadd.f32 %v7304, %v7670
      %v7717 = vadd.f32 %v7309, %v7675
      %v7718 = vadd.f32 %v7312, %v7678
      %v7719 = vadd.f32 %v7317, %v7683
      %v7720 = vadd.f32 %v7320, %v7686
      %v7721 = vld [vmem:[#allocation4 + $0x8] sm:$0x80]
      %v7722 = vld [vmem:[#allocation4 + $0x10] sm:$0xff]
      %v7723 = vld [vmem:[#allocation4 + $0x18] sm:$0xff]
      %v7724 = vld [vmem:[#allocation4 + $0x20] sm:$0xff]
      %v7725 = vld [vmem:[#allocation4 + $0x28] sm:$0xff]
      %v7726 = vld [vmem:[#allocation4 + $0x30] sm:$0xff]
      %v7727 = vld [vmem:[#allocation4 + $0x38] sm:$0xff]
      %v7728 = vld [vmem:[#allocation4 + $0x40] sm:$0xff]
      %v7729 = vld [vmem:[#allocation4 + $0x48] sm:$0xff]
      %v7730 = vld [vmem:[#allocation4 + $0x50] sm:$0xff]
      %v7731 = vld [vmem:[#allocation4 + $0x58] sm:$0xff]
      %v7732 = vld [vmem:[#allocation4 + $0x60] sm:$0xff]
      %v7733 = vld [vmem:[#allocation4 + $0x68] sm:$0xff]
      %v7734 = vld [vmem:[#allocation4 + $0x70] sm:$0xff]
      %v7735 = vld [vmem:[#allocation4 + $0x78] sm:$0xff]
      %v7736 = vld [vmem:[#allocation4 + $0x80] sm:$0xff]
      %v7737 = vld [vmem:[#allocation4 + $0x88] sm:$0xff]
      %v7738 = vld [vmem:[%s1 + $0x88] sm:$0xf]
      %v7739 = vld [vmem:[%s1 + $0x8c] sm:$0xf]
      %v7741 = vshrl.u32 %v7721, 16
      %v7743 = vrot.slane %v7741, 7
      %v7745 = vshrl.u32 %v7722, 16
      %v7747 = vrot.slane %v7745, 7
      %v7748 = vshll.u32 %v7722, 16
      %v7750 = vor.u32 %v7747, %v7748
      %v7751 = vsel %vm1926, %v7743, %v7750
      %v7753 = vshrl.u32 %v7723, 16
      %v7755 = vrot.slane %v7753, 7
      %v7756 = vshll.u32 %v7723, 16
      %v7758 = vor.u32 %v7755, %v7756
      %v7759 = vsel %vm1926, %v7747, %v7758
      %v7761 = vshrl.u32 %v7724, 16
      %v7763 = vrot.slane %v7761, 7
      %v7764 = vshll.u32 %v7724, 16
      %v7766 = vor.u32 %v7763, %v7764
      %v7767 = vsel %vm1926, %v7755, %v7766
      %v7769 = vshrl.u32 %v7725, 16
      %v7771 = vrot.slane %v7769, 7
      %v7772 = vshll.u32 %v7725, 16
      %v7774 = vor.u32 %v7771, %v7772
      %v7775 = vsel %vm1926, %v7763, %v7774
      %v7777 = vshrl.u32 %v7726, 16
      %v7779 = vrot.slane %v7777, 7
      %v7780 = vshll.u32 %v7726, 16
      %v7782 = vor.u32 %v7779, %v7780
      %v7783 = vsel %vm1926, %v7771, %v7782
      %v7785 = vshrl.u32 %v7727, 16
      %v7787 = vrot.slane %v7785, 7
      %v7788 = vshll.u32 %v7727, 16
      %v7790 = vor.u32 %v7787, %v7788
      %v7791 = vsel %vm1926, %v7779, %v7790
      %v7793 = vshrl.u32 %v7728, 16
      %v7795 = vrot.slane %v7793, 7
      %v7796 = vshll.u32 %v7728, 16
      %v7798 = vor.u32 %v7795, %v7796
      %v7799 = vsel %vm1926, %v7787, %v7798
      %v7801 = vshrl.u32 %v7729, 16
      %v7803 = vrot.slane %v7801, 7
      %v7804 = vshll.u32 %v7729, 16
      %v7806 = vor.u32 %v7803, %v7804
      %v7807 = vsel %vm1926, %v7795, %v7806
      %v7809 = vshrl.u32 %v7730, 16
      %v7811 = vrot.slane %v7809, 7
      %v7812 = vshll.u32 %v7730, 16
      %v7814 = vor.u32 %v7811, %v7812
      %v7815 = vsel %vm1926, %v7803, %v7814
      %v7817 = vshrl.u32 %v7731, 16
      %v7819 = vrot.slane %v7817, 7
      %v7820 = vshll.u32 %v7731, 16
      %v7822 = vor.u32 %v7819, %v7820
      %v7823 = vsel %vm1926, %v7811, %v7822
      %v7825 = vshrl.u32 %v7732, 16
      %v7827 = vrot.slane %v7825, 7
      %v7828 = vshll.u32 %v7732, 16
      %v7830 = vor.u32 %v7827, %v7828
      %v7831 = vsel %vm1926, %v7819, %v7830
      %v7833 = vshrl.u32 %v7733, 16
      %v7835 = vrot.slane %v7833, 7
      %v7836 = vshll.u32 %v7733, 16
      %v7838 = vor.u32 %v7835, %v7836
      %v7839 = vsel %vm1926, %v7827, %v7838
      %v7841 = vshrl.u32 %v7734, 16
      %v7843 = vrot.slane %v7841, 7
      %v7844 = vshll.u32 %v7734, 16
      %v7846 = vor.u32 %v7843, %v7844
      %v7847 = vsel %vm1926, %v7835, %v7846
      %v7849 = vshrl.u32 %v7735, 16
      %v7851 = vrot.slane %v7849, 7
      %v7852 = vshll.u32 %v7735, 16
      %v7854 = vor.u32 %v7851, %v7852
      %v7855 = vsel %vm1926, %v7843, %v7854
      %v7857 = vshrl.u32 %v7736, 16
      %v7859 = vrot.slane %v7857, 7
      %v7860 = vshll.u32 %v7736, 16
      %v7862 = vor.u32 %v7859, %v7860
      %v7863 = vsel %vm1926, %v7851, %v7862
      %v7865 = vshrl.u32 %v7737, 16
      %v7867 = vrot.slane %v7865, 7
      %v7868 = vshll.u32 %v7737, 16
      %v7870 = vor.u32 %v7867, %v7868
      %v7871 = vsel %vm1926, %v7859, %v7870
      %v7874 = vunpack.c.l.b16 %v7738
      %v7875 = vunpack.c.l.b16 %v7739
      %v7876 = vpack.c.b16 %v7875, %v7874
      %v7879 = vsel %vm200, %v7751, 0
      %v7882 = vsel %vm200, %v7759, 0
      %v7885 = vsel %vm200, %v7767, 0
      %v7888 = vsel %vm200, %v7775, 0
      %v7891 = vsel %vm200, %v7783, 0
      %v7894 = vsel %vm200, %v7791, 0
      %v7897 = vsel %vm200, %v7799, 0
      %v7900 = vsel %vm200, %v7807, 0
      %v7903 = vsel %vm200, %v7815, 0
      %v7906 = vsel %vm200, %v7823, 0
      %v7909 = vsel %vm200, %v7831, 0
      %v7912 = vsel %vm200, %v7839, 0
      %v7915 = vsel %vm200, %v7847, 0
      %v7918 = vsel %vm200, %v7855, 0
      %v7921 = vsel %vm200, %v7863, 0
      %v7924 = vsel %vm200, %v7871, 0
      %7926 = vmatprep.subr.bf16.mxu0 0
      %7927 = vmatpush1.bf16.msra.mxu0 %v7876
      %7928 = vmatprep.subr.bf16.mxu0 0
      %7929 = vmatpush1.bf16.msra.mxu0 0
      %7930 = vmatprep.subr.bf16.mxu0 0
      %7931 = vmatpush1.bf16.msra.mxu0 0
      %7932 = vmatprep.subr.bf16.mxu0 0
      %7933 = vmatpush1.bf16.msra.mxu0 0
      %7934 = vmatprep.subr.bf16.mxu0 0
      %7935 = vmatpush1.bf16.msra.mxu0 0
      %7936 = vmatprep.subr.bf16.mxu0 0
      %7937 = vmatpush1.bf16.msra.mxu0 0
      %7938 = vmatprep.subr.bf16.mxu0 0
      %7939 = vmatpush1.bf16.msra.mxu0 0
      %7940 = vmatprep.subr.bf16.mxu0 0
      %7941 = vmatpush1.bf16.msra.mxu0 0
      %7942 = vmatprep.subr.bf16.mxu0 0
      %7943 = vmatpush1.bf16.msra.mxu0 0
      %7944 = vmatprep.subr.bf16.mxu0 0
      %7945 = vmatpush1.bf16.msra.mxu0 0
      %7946 = vmatprep.subr.bf16.mxu0 0
      %7947 = vmatpush1.bf16.msra.mxu0 0
      %7948 = vmatprep.subr.bf16.mxu0 0
      %7949 = vmatpush1.bf16.msra.mxu0 0
      %7950 = vmatprep.subr.bf16.mxu0 0
      %7951 = vmatpush1.bf16.msra.mxu0 0
      %7952 = vmatprep.subr.bf16.mxu0 0
      %7953 = vmatpush1.bf16.msra.mxu0 0
      %7954 = vmatprep.subr.bf16.mxu0 0
      %7955 = vmatpush1.bf16.msra.mxu0 0
      %7956 = vmatprep.subr.bf16.mxu0 0
      %7957 = vmatpush1.bf16.msra.mxu0 0
      %7958 = vmatprep.mubr.bf16.mxu0 0
      %7959 = vmatmul.mubr.bf16.gmra.mrb[0].mxu0 %v7879
      %v7960 = vpop.f32.mrb[0].mxu0
      %v7961 = vadd.f32 0.0, %v7960
      %v7962 = vpop.f32.mrb[0].mxu0
      %v7963 = vpop.f32.mrb[0].mxu0
      %v7964 = vadd.f32 0.0, %v7963
      %v7965 = vpop.f32.mrb[0].mxu0
      %7966 = vmatprep.mubr.bf16.mxu0 0
      %7967 = vmatmul.mubr.bf16.gmra.mrb[0].mxu0 %v7882
      %v7968 = vpop.f32.mrb[0].mxu0
      %v7969 = vadd.f32 0.0, %v7968
      %v7970 = vpop.f32.mrb[0].mxu0
      %v7971 = vpop.f32.mrb[0].mxu0
      %v7972 = vadd.f32 0.0, %v7971
      %v7973 = vpop.f32.mrb[0].mxu0
      %7974 = vmatprep.mubr.bf16.mxu0 0
      %7975 = vmatmul.mubr.bf16.gmra.mrb[0].mxu0 %v7885
      %v7976 = vpop.f32.mrb[0].mxu0
      %v7977 = vadd.f32 0.0, %v7976
      %v7978 = vpop.f32.mrb[0].mxu0
      %v7979 = vpop.f32.mrb[0].mxu0
      %v7980 = vadd.f32 0.0, %v7979
      %v7981 = vpop.f32.mrb[0].mxu0
      %7982 = vmatprep.mubr.bf16.mxu0 0
      %7983 = vmatmul.mubr.bf16.gmra.mrb[0].mxu0 %v7888
      %v7984 = vpop.f32.mrb[0].mxu0
      %v7985 = vadd.f32 0.0, %v7984
      %v7986 = vpop.f32.mrb[0].mxu0
      %v7987 = vpop.f32.mrb[0].mxu0
      %v7988 = vadd.f32 0.0, %v7987
      %v7989 = vpop.f32.mrb[0].mxu0
      %7990 = vmatprep.mubr.bf16.mxu0 0
      %7991 = vmatmul.mubr.bf16.gmra.mrb[0].mxu0 %v7891
      %v7992 = vpop.f32.mrb[0].mxu0
      %v7993 = vadd.f32 0.0, %v7992
      %v7994 = vpop.f32.mrb[0].mxu0
      %v7995 = vpop.f32.mrb[0].mxu0
      %v7996 = vadd.f32 0.0, %v7995
      %v7997 = vpop.f32.mrb[0].mxu0
      %7998 = vmatprep.mubr.bf16.mxu0 0
      %7999 = vmatmul.mubr.bf16.gmra.mrb[0].mxu0 %v7894
      %v8000 = vpop.f32.mrb[0].mxu0
      %v8001 = vadd.f32 0.0, %v8000
      %v8002 = vpop.f32.mrb[0].mxu0
      %v8003 = vpop.f32.mrb[0].mxu0
      %v8004 = vadd.f32 0.0, %v8003
      %v8005 = vpop.f32.mrb[0].mxu0
      %8006 = vmatprep.mubr.bf16.mxu0 0
      %8007 = vmatmul.mubr.bf16.gmra.mrb[0].mxu0 %v7897
      %v8008 = vpop.f32.mrb[0].mxu0
      %v8009 = vadd.f32 0.0, %v8008
      %v8010 = vpop.f32.mrb[0].mxu0
      %v8011 = vpop.f32.mrb[0].mxu0
      %v8012 = vadd.f32 0.0, %v8011
      %v8013 = vpop.f32.mrb[0].mxu0
      %8014 = vmatprep.mubr.bf16.mxu0 0
      %8015 = vmatmul.mubr.bf16.gmra.mrb[0].mxu0 %v7900
      %v8016 = vpop.f32.mrb[0].mxu0
      %v8017 = vadd.f32 0.0, %v8016
      %v8018 = vpop.f32.mrb[0].mxu0
      %v8019 = vpop.f32.mrb[0].mxu0
      %v8020 = vadd.f32 0.0, %v8019
      %v8021 = vpop.f32.mrb[0].mxu0
      %8022 = vmatprep.mubr.bf16.mxu0 0
      %8023 = vmatmul.mubr.bf16.gmra.mrb[0].mxu0 %v7903
      %v8024 = vpop.f32.mrb[0].mxu0
      %v8025 = vadd.f32 0.0, %v8024
      %v8026 = vpop.f32.mrb[0].mxu0
      %v8027 = vpop.f32.mrb[0].mxu0
      %v8028 = vadd.f32 0.0, %v8027
      %v8029 = vpop.f32.mrb[0].mxu0
      %8030 = vmatprep.mubr.bf16.mxu0 0
      %8031 = vmatmul.mubr.bf16.gmra.mrb[0].mxu0 %v7906
      %v8032 = vpop.f32.mrb[0].mxu0
      %v8033 = vadd.f32 0.0, %v8032
      %v8034 = vpop.f32.mrb[0].mxu0
      %v8035 = vpop.f32.mrb[0].mxu0
      %v8036 = vadd.f32 0.0, %v8035
      %v8037 = vpop.f32.mrb[0].mxu0
      %8038 = vmatprep.mubr.bf16.mxu0 0
      %8039 = vmatmul.mubr.bf16.gmra.mrb[0].mxu0 %v7909
      %v8040 = vpop.f32.mrb[0].mxu0
      %v8041 = vadd.f32 0.0, %v8040
      %v8042 = vpop.f32.mrb[0].mxu0
      %v8043 = vpop.f32.mrb[0].mxu0
      %v8044 = vadd.f32 0.0, %v8043
      %v8045 = vpop.f32.mrb[0].mxu0
      %8046 = vmatprep.mubr.bf16.mxu0 0
      %8047 = vmatmul.mubr.bf16.gmra.mrb[0].mxu0 %v7912
      %v8048 = vpop.f32.mrb[0].mxu0
      %v8049 = vadd.f32 0.0, %v8048
      %v8050 = vpop.f32.mrb[0].mxu0
      %v8051 = vpop.f32.mrb[0].mxu0
      %v8052 = vadd.f32 0.0, %v8051
      %v8053 = vpop.f32.mrb[0].mxu0
      %8054 = vmatprep.mubr.bf16.mxu0 0
      %8055 = vmatmul.mubr.bf16.gmra.mrb[0].mxu0 %v7915
      %v8056 = vpop.f32.mrb[0].mxu0
      %v8057 = vadd.f32 0.0, %v8056
      %v8058 = vpop.f32.mrb[0].mxu0
      %v8059 = vpop.f32.mrb[0].mxu0
      %v8060 = vadd.f32 0.0, %v8059
      %v8061 = vpop.f32.mrb[0].mxu0
      %8062 = vmatprep.mubr.bf16.mxu0 0
      %8063 = vmatmul.mubr.bf16.gmra.mrb[0].mxu0 %v7918
      %v8064 = vpop.f32.mrb[0].mxu0
      %v8065 = vadd.f32 0.0, %v8064
      %v8066 = vpop.f32.mrb[0].mxu0
      %v8067 = vpop.f32.mrb[0].mxu0
      %v8068 = vadd.f32 0.0, %v8067
      %v8069 = vpop.f32.mrb[0].mxu0
      %8070 = vmatprep.mubr.bf16.mxu0 0
      %8071 = vmatmul.mubr.bf16.gmra.mrb[0].mxu0 %v7921
      %v8072 = vpop.f32.mrb[0].mxu0
      %v8073 = vadd.f32 0.0, %v8072
      %v8074 = vpop.f32.mrb[0].mxu0
      %v8075 = vpop.f32.mrb[0].mxu0
      %v8076 = vadd.f32 0.0, %v8075
      %v8077 = vpop.f32.mrb[0].mxu0
      %8078 = vmatprep.mubr.bf16.mxu0 0
      %8079 = vmatmul.mubr.bf16.gmra.mrb[0].mxu0 %v7924
      %v8080 = vpop.f32.mrb[0].mxu0
      %v8081 = vadd.f32 0.0, %v8080
      %v8082 = vpop.f32.mrb[0].mxu0
      %v8083 = vpop.f32.mrb[0].mxu0
      %v8084 = vadd.f32 0.0, %v8083
      %v8085 = vpop.f32.mrb[0].mxu0
      %8086 = vdwg.mxu0
      %v8087 = vadd.f32 %v7689, %v7961
      %v8088 = vadd.f32 %v7690, %v7964
      %v8089 = vadd.f32 %v7691, %v7969
      %v8090 = vadd.f32 %v7692, %v7972
      %v8091 = vadd.f32 %v7693, %v7977
      %v8092 = vadd.f32 %v7694, %v7980
      %v8093 = vadd.f32 %v7695, %v7985
      %v8094 = vadd.f32 %v7696, %v7988
      %v8095 = vadd.f32 %v7697, %v7993
      %v8096 = vadd.f32 %v7698, %v7996
      %v8097 = vadd.f32 %v7699, %v8001
      %v8098 = vadd.f32 %v7700, %v8004
      %v8099 = vadd.f32 %v7701, %v8009
      %v8100 = vadd.f32 %v7702, %v8012
      %v8101 = vadd.f32 %v7703, %v8017
      %v8102 = vadd.f32 %v7704, %v8020
      %v8103 = vadd.f32 %v7705, %v8025
      %v8104 = vadd.f32 %v7706, %v8028
      %v8105 = vadd.f32 %v7707, %v8033
      %v8106 = vadd.f32 %v7708, %v8036
      %v8107 = vadd.f32 %v7709, %v8041
      %v8108 = vadd.f32 %v7710, %v8044
      %v8109 = vadd.f32 %v7711, %v8049
      %v8110 = vadd.f32 %v7712, %v8052
      %v8111 = vadd.f32 %v7713, %v8057
      %v8112 = vadd.f32 %v7714, %v8060
      %v8113 = vadd.f32 %v7715, %v8065
      %v8114 = vadd.f32 %v7716, %v8068
      %v8115 = vadd.f32 %v7717, %v8073
      %v8116 = vadd.f32 %v7718, %v8076
      %v8117 = vadd.f32 %v7719, %v8081
      %v8118 = vadd.f32 %v7720, %v8084
      %v8119 = vld [vmem:[#allocation3 + $0x10] sm:$0xff]
      %v8120 = vld [vmem:[#allocation3 + $0x18] sm:$0xff]
      %v8121 = vld [vmem:[#allocation3 + $0x20] sm:$0xff]
      %v8122 = vld [vmem:[#allocation3 + $0x28] sm:$0xff]
      %v8123 = vld [vmem:[#allocation3 + $0x30] sm:$0xff]
      %v8124 = vld [vmem:[#allocation3 + $0x38] sm:$0xff]
      %v8125 = vld [vmem:[#allocation3 + $0x40] sm:$0xff]
      %v8126 = vld [vmem:[#allocation3 + $0x48] sm:$0xff]
      %v8127 = vld [vmem:[#allocation3 + $0x50] sm:$0xff]
      %v8128 = vld [vmem:[#allocation3 + $0x58] sm:$0xff]
      %v8129 = vld [vmem:[#allocation3 + $0x60] sm:$0xff]
      %v8130 = vld [vmem:[#allocation3 + $0x68] sm:$0xff]
      %v8131 = vld [vmem:[#allocation3 + $0x70] sm:$0xff]
      %v8132 = vld [vmem:[#allocation3 + $0x78] sm:$0xff]
      %v8133 = vld [vmem:[#allocation3 + $0x80] sm:$0xff]
      %v8134 = vld [vmem:[#allocation3 + $0x88] sm:$0xff]
      %v8135 = vld [vmem:[%s1 + $0x90] sm:$0xf]
      %v8136 = vld [vmem:[%s1 + $0x94] sm:$0xf]
      %v8139 = vunpack.c.l.b16 %v8135
      %v8140 = vunpack.c.l.b16 %v8136
      %v8141 = vpack.c.b16 %v8140, %v8139
      %v8144 = vsel %vm200, %v8119, 0
      %v8147 = vsel %vm200, %v8120, 0
      %v8150 = vsel %vm200, %v8121, 0
      %v8153 = vsel %vm200, %v8122, 0
      %v8156 = vsel %vm200, %v8123, 0
      %v8159 = vsel %vm200, %v8124, 0
      %v8162 = vsel %vm200, %v8125, 0
      %v8165 = vsel %vm200, %v8126, 0
      %v8168 = vsel %vm200, %v8127, 0
      %v8171 = vsel %vm200, %v8128, 0
      %v8174 = vsel %vm200, %v8129, 0
      %v8177 = vsel %vm200, %v8130, 0
      %v8180 = vsel %vm200, %v8131, 0
      %v8183 = vsel %vm200, %v8132, 0
      %v8186 = vsel %vm200, %v8133, 0
      %v8189 = vsel %vm200, %v8134, 0
      %8191 = vmatprep.subr.bf16.mxu0 0
      %8192 = vmatpush1.bf16.msra.mxu0 %v8141
      %8193 = vmatprep.subr.bf16.mxu0 0
      %8194 = vmatpush1.bf16.msra.mxu0 0
      %8195 = vmatprep.subr.bf16.mxu0 0
      %8196 = vmatpush1.bf16.msra.mxu0 0
      %8197 = vmatprep.subr.bf16.mxu0 0
      %8198 = vmatpush1.bf16.msra.mxu0 0
      %8199 = vmatprep.subr.bf16.mxu0 0
      %8200 = vmatpush1.bf16.msra.mxu0 0
      %8201 = vmatprep.subr.bf16.mxu0 0
      %8202 = vmatpush1.bf16.msra.mxu0 0
      %8203 = vmatprep.subr.bf16.mxu0 0
      %8204 = vmatpush1.bf16.msra.mxu0 0
      %8205 = vmatprep.subr.bf16.mxu0 0
      %8206 = vmatpush1.bf16.msra.mxu0 0
      %8207 = vmatprep.subr.bf16.mxu0 0
      %8208 = vmatpush1.bf16.msra.mxu0 0
      %8209 = vmatprep.subr.bf16.mxu0 0
      %8210 = vmatpush1.bf16.msra.mxu0 0
      %8211 = vmatprep.subr.bf16.mxu0 0
      %8212 = vmatpush1.bf16.msra.mxu0 0
      %8213 = vmatprep.subr.bf16.mxu0 0
      %8214 = vmatpush1.bf16.msra.mxu0 0
      %8215 = vmatprep.subr.bf16.mxu0 0
      %8216 = vmatpush1.bf16.msra.mxu0 0
      %8217 = vmatprep.subr.bf16.mxu0 0
      %8218 = vmatpush1.bf16.msra.mxu0 0
      %8219 = vmatprep.subr.bf16.mxu0 0
      %8220 = vmatpush1.bf16.msra.mxu0 0
      %8221 = vmatprep.subr.bf16.mxu0 0
      %8222 = vmatpush1.bf16.msra.mxu0 0
      %8223 = vmatprep.mubr.bf16.mxu0 0
      %8224 = vmatmul.mubr.bf16.gmra.mrb[0].mxu0 %v8144
      %v8225 = vpop.f32.mrb[0].mxu0
      %v8226 = vadd.f32 0.0, %v8225
      %v8227 = vpop.f32.mrb[0].mxu0
      %v8228 = vpop.f32.mrb[0].mxu0
      %v8229 = vadd.f32 0.0, %v8228
      %v8230 = vpop.f32.mrb[0].mxu0
      %8231 = vmatprep.mubr.bf16.mxu0 0
      %8232 = vmatmul.mubr.bf16.gmra.mrb[0].mxu0 %v8147
      %v8233 = vpop.f32.mrb[0].mxu0
      %v8234 = vadd.f32 0.0, %v8233
      %v8235 = vpop.f32.mrb[0].mxu0
      %v8236 = vpop.f32.mrb[0].mxu0
      %v8237 = vadd.f32 0.0, %v8236
      %v8238 = vpop.f32.mrb[0].mxu0
      %8239 = vmatprep.mubr.bf16.mxu0 0
      %8240 = vmatmul.mubr.bf16.gmra.mrb[0].mxu0 %v8150
      %v8241 = vpop.f32.mrb[0].mxu0
      %v8242 = vadd.f32 0.0, %v8241
      %v8243 = vpop.f32.mrb[0].mxu0
      %v8244 = vpop.f32.mrb[0].mxu0
      %v8245 = vadd.f32 0.0, %v8244
      %v8246 = vpop.f32.mrb[0].mxu0
      %8247 = vmatprep.mubr.bf16.mxu0 0
      %8248 = vmatmul.mubr.bf16.gmra.mrb[0].mxu0 %v8153
      %v8249 = vpop.f32.mrb[0].mxu0
      %v8250 = vadd.f32 0.0, %v8249
      %v8251 = vpop.f32.mrb[0].mxu0
      %v8252 = vpop.f32.mrb[0].mxu0
      %v8253 = vadd.f32 0.0, %v8252
      %v8254 = vpop.f32.mrb[0].mxu0
      %8255 = vmatprep.mubr.bf16.mxu0 0
      %8256 = vmatmul.mubr.bf16.gmra.mrb[0].mxu0 %v8156
      %v8257 = vpop.f32.mrb[0].mxu0
      %v8258 = vadd.f32 0.0, %v8257
      %v8259 = vpop.f32.mrb[0].mxu0
      %v8260 = vpop.f32.mrb[0].mxu0
      %v8261 = vadd.f32 0.0, %v8260
      %v8262 = vpop.f32.mrb[0].mxu0
      %8263 = vmatprep.mubr.bf16.mxu0 0
      %8264 = vmatmul.mubr.bf16.gmra.mrb[0].mxu0 %v8159
      %v8265 = vpop.f32.mrb[0].mxu0
      %v8266 = vadd.f32 0.0, %v8265
      %v8267 = vpop.f32.mrb[0].mxu0
      %v8268 = vpop.f32.mrb[0].mxu0
      %v8269 = vadd.f32 0.0, %v8268
      %v8270 = vpop.f32.mrb[0].mxu0
      %8271 = vmatprep.mubr.bf16.mxu0 0
      %8272 = vmatmul.mubr.bf16.gmra.mrb[0].mxu0 %v8162
      %v8273 = vpop.f32.mrb[0].mxu0
      %v8274 = vadd.f32 0.0, %v8273
      %v8275 = vpop.f32.mrb[0].mxu0
      %v8276 = vpop.f32.mrb[0].mxu0
      %v8277 = vadd.f32 0.0, %v8276
      %v8278 = vpop.f32.mrb[0].mxu0
      %8279 = vmatprep.mubr.bf16.mxu0 0
      %8280 = vmatmul.mubr.bf16.gmra.mrb[0].mxu0 %v8165
      %v8281 = vpop.f32.mrb[0].mxu0
      %v8282 = vadd.f32 0.0, %v8281
      %v8283 = vpop.f32.mrb[0].mxu0
      %v8284 = vpop.f32.mrb[0].mxu0
      %v8285 = vadd.f32 0.0, %v8284
      %v8286 = vpop.f32.mrb[0].mxu0
      %8287 = vmatprep.mubr.bf16.mxu0 0
      %8288 = vmatmul.mubr.bf16.gmra.mrb[0].mxu0 %v8168
      %v8289 = vpop.f32.mrb[0].mxu0
      %v8290 = vadd.f32 0.0, %v8289
      %v8291 = vpop.f32.mrb[0].mxu0
      %v8292 = vpop.f32.mrb[0].mxu0
      %v8293 = vadd.f32 0.0, %v8292
      %v8294 = vpop.f32.mrb[0].mxu0
      %8295 = vmatprep.mubr.bf16.mxu0 0
      %8296 = vmatmul.mubr.bf16.gmra.mrb[0].mxu0 %v8171
      %v8297 = vpop.f32.mrb[0].mxu0
      %v8298 = vadd.f32 0.0, %v8297
      %v8299 = vpop.f32.mrb[0].mxu0
      %v8300 = vpop.f32.mrb[0].mxu0
      %v8301 = vadd.f32 0.0, %v8300
      %v8302 = vpop.f32.mrb[0].mxu0
      %8303 = vmatprep.mubr.bf16.mxu0 0
      %8304 = vmatmul.mubr.bf16.gmra.mrb[0].mxu0 %v8174
      %v8305 = vpop.f32.mrb[0].mxu0
      %v8306 = vadd.f32 0.0, %v8305
      %v8307 = vpop.f32.mrb[0].mxu0
      %v8308 = vpop.f32.mrb[0].mxu0
      %v8309 = vadd.f32 0.0, %v8308
      %v8310 = vpop.f32.mrb[0].mxu0
      %8311 = vmatprep.mubr.bf16.mxu0 0
      %8312 = vmatmul.mubr.bf16.gmra.mrb[0].mxu0 %v8177
      %v8313 = vpop.f32.mrb[0].mxu0
      %v8314 = vadd.f32 0.0, %v8313
      %v8315 = vpop.f32.mrb[0].mxu0
      %v8316 = vpop.f32.mrb[0].mxu0
      %v8317 = vadd.f32 0.0, %v8316
      %v8318 = vpop.f32.mrb[0].mxu0
      %8319 = vmatprep.mubr.bf16.mxu0 0
      %8320 = vmatmul.mubr.bf16.gmra.mrb[0].mxu0 %v8180
      %v8321 = vpop.f32.mrb[0].mxu0
      %v8322 = vadd.f32 0.0, %v8321
      %v8323 = vpop.f32.mrb[0].mxu0
      %v8324 = vpop.f32.mrb[0].mxu0
      %v8325 = vadd.f32 0.0, %v8324
      %v8326 = vpop.f32.mrb[0].mxu0
      %8327 = vmatprep.mubr.bf16.mxu0 0
      %8328 = vmatmul.mubr.bf16.gmra.mrb[0].mxu0 %v8183
      %v8329 = vpop.f32.mrb[0].mxu0
      %v8330 = vadd.f32 0.0, %v8329
      %v8331 = vpop.f32.mrb[0].mxu0
      %v8332 = vpop.f32.mrb[0].mxu0
      %v8333 = vadd.f32 0.0, %v8332
      %v8334 = vpop.f32.mrb[0].mxu0
      %8335 = vmatprep.mubr.bf16.mxu0 0
      %8336 = vmatmul.mubr.bf16.gmra.mrb[0].mxu0 %v8186
      %v8337 = vpop.f32.mrb[0].mxu0
      %v8338 = vadd.f32 0.0, %v8337
      %v8339 = vpop.f32.mrb[0].mxu0
      %v8340 = vpop.f32.mrb[0].mxu0
      %v8341 = vadd.f32 0.0, %v8340
      %v8342 = vpop.f32.mrb[0].mxu0
      %8343 = vmatprep.mubr.bf16.mxu0 0
      %8344 = vmatmul.mubr.bf16.gmra.mrb[0].mxu0 %v8189
      %v8345 = vpop.f32.mrb[0].mxu0
      %v8346 = vadd.f32 0.0, %v8345
      %v8347 = vpop.f32.mrb[0].mxu0
      %v8348 = vpop.f32.mrb[0].mxu0
      %v8349 = vadd.f32 0.0, %v8348
      %v8350 = vpop.f32.mrb[0].mxu0
      %8351 = vdwg.mxu0
      %v8352 = vadd.f32 %v8087, %v8226
      %v8353 = vadd.f32 %v8088, %v8229
      %v8354 = vadd.f32 %v8089, %v8234
      %v8355 = vadd.f32 %v8090, %v8237
      %v8356 = vadd.f32 %v8091, %v8242
      %v8357 = vadd.f32 %v8092, %v8245
      %v8358 = vadd.f32 %v8093, %v8250
      %v8359 = vadd.f32 %v8094, %v8253
      %v8360 = vadd.f32 %v8095, %v8258
      %v8361 = vadd.f32 %v8096, %v8261
      %v8362 = vadd.f32 %v8097, %v8266
      %v8363 = vadd.f32 %v8098, %v8269
      %v8364 = vadd.f32 %v8099, %v8274
      %v8365 = vadd.f32 %v8100, %v8277
      %v8366 = vadd.f32 %v8101, %v8282
      %v8367 = vadd.f32 %v8102, %v8285
      %v8368 = vadd.f32 %v8103, %v8290
      %v8369 = vadd.f32 %v8104, %v8293
      %v8370 = vadd.f32 %v8105, %v8298
      %v8371 = vadd.f32 %v8106, %v8301
      %v8372 = vadd.f32 %v8107, %v8306
      %v8373 = vadd.f32 %v8108, %v8309
      %v8374 = vadd.f32 %v8109, %v8314
      %v8375 = vadd.f32 %v8110, %v8317
      %v8376 = vadd.f32 %v8111, %v8322
      %v8377 = vadd.f32 %v8112, %v8325
      %v8378 = vadd.f32 %v8113, %v8330
      %v8379 = vadd.f32 %v8114, %v8333
      %v8380 = vadd.f32 %v8115, %v8338
      %v8381 = vadd.f32 %v8116, %v8341
      %v8382 = vadd.f32 %v8117, %v8346
      %v8383 = vadd.f32 %v8118, %v8349
      %v8384 = vld [vmem:[#allocation5 + $0x10] sm:$0xff]
      %v8385 = vld [vmem:[#allocation5 + $0x18] sm:$0xff]
      %v8386 = vld [vmem:[#allocation5 + $0x20] sm:$0xff]
      %v8387 = vld [vmem:[#allocation5 + $0x28] sm:$0xff]
      %v8388 = vld [vmem:[#allocation5 + $0x30] sm:$0xff]
      %v8389 = vld [vmem:[#allocation5 + $0x38] sm:$0xff]
      %v8390 = vld [vmem:[#allocation5 + $0x40] sm:$0xff]
      %v8391 = vld [vmem:[#allocation5 + $0x48] sm:$0xff]
      %v8392 = vld [vmem:[#allocation5 + $0x50] sm:$0xff]
      %v8393 = vld [vmem:[#allocation5 + $0x58] sm:$0xff]
      %v8394 = vld [vmem:[#allocation5 + $0x60] sm:$0xff]
      %v8395 = vld [vmem:[#allocation5 + $0x68] sm:$0xff]
      %v8396 = vld [vmem:[#allocation5 + $0x70] sm:$0xff]
      %v8397 = vld [vmem:[#allocation5 + $0x78] sm:$0xff]
      %v8398 = vld [vmem:[#allocation5 + $0x80] sm:$0xff]
      %v8399 = vld [vmem:[#allocation5 + $0x88] sm:$0xff]
      %v8400 = vld [vmem:[#allocation5 + $0x90] sm:$0x1]
      %v8401 = vld [vmem:[%s1 + $0x98] sm:$0xf]
      %v8402 = vld [vmem:[%s1 + $0x9c] sm:$0xf]
      %v8404 = vshrl.u32 %v8384, 16
      %v8406 = vshll.u32 %v8384, 16
      %v8408 = vrot.slane %v8406, 1
      %v8409 = vor.u32 %v8404, %v8408
      %v8411 = vshll.u32 %v8385, 16
      %v8413 = vrot.slane %v8411, 1
      %v8414 = vsel %vm2289, %v8409, %v8413
      %v8415 = vshrl.u32 %v8385, 16
      %v8417 = vor.u32 %v8415, %v8413
      %v8419 = vshll.u32 %v8386, 16
      %v8421 = vrot.slane %v8419, 1
      %v8422 = vsel %vm2289, %v8417, %v8421
      %v8423 = vshrl.u32 %v8386, 16
      %v8425 = vor.u32 %v8423, %v8421
      %v8427 = vshll.u32 %v8387, 16
      %v8429 = vrot.slane %v8427, 1
      %v8430 = vsel %vm2289, %v8425, %v8429
      %v8431 = vshrl.u32 %v8387, 16
      %v8433 = vor.u32 %v8431, %v8429
      %v8435 = vshll.u32 %v8388, 16
      %v8437 = vrot.slane %v8435, 1
      %v8438 = vsel %vm2289, %v8433, %v8437
      %v8439 = vshrl.u32 %v8388, 16
      %v8441 = vor.u32 %v8439, %v8437
      %v8443 = vshll.u32 %v8389, 16
      %v8445 = vrot.slane %v8443, 1
      %v8446 = vsel %vm2289, %v8441, %v8445
      %v8447 = vshrl.u32 %v8389, 16
      %v8449 = vor.u32 %v8447, %v8445
      %v8451 = vshll.u32 %v8390, 16
      %v8453 = vrot.slane %v8451, 1
      %v8454 = vsel %vm2289, %v8449, %v8453
      %v8455 = vshrl.u32 %v8390, 16
      %v8457 = vor.u32 %v8455, %v8453
      %v8459 = vshll.u32 %v8391, 16
      %v8461 = vrot.slane %v8459, 1
      %v8462 = vsel %vm2289, %v8457, %v8461
      %v8463 = vshrl.u32 %v8391, 16
      %v8465 = vor.u32 %v8463, %v8461
      %v8467 = vshll.u32 %v8392, 16
      %v8469 = vrot.slane %v8467, 1
      %v8470 = vsel %vm2289, %v8465, %v8469
      %v8471 = vshrl.u32 %v8392, 16
      %v8473 = vor.u32 %v8471, %v8469
      %v8475 = vshll.u32 %v8393, 16
      %v8477 = vrot.slane %v8475, 1
      %v8478 = vsel %vm2289, %v8473, %v8477
      %v8479 = vshrl.u32 %v8393, 16
      %v8481 = vor.u32 %v8479, %v8477
      %v8483 = vshll.u32 %v8394, 16
      %v8485 = vrot.slane %v8483, 1
      %v8486 = vsel %vm2289, %v8481, %v8485
      %v8487 = vshrl.u32 %v8394, 16
      %v8489 = vor.u32 %v8487, %v8485
      %v8491 = vshll.u32 %v8395, 16
      %v8493 = vrot.slane %v8491, 1
      %v8494 = vsel %vm2289, %v8489, %v8493
      %v8495 = vshrl.u32 %v8395, 16
      %v8497 = vor.u32 %v8495, %v8493
      %v8499 = vshll.u32 %v8396, 16
      %v8501 = vrot.slane %v8499, 1
      %v8502 = vsel %vm2289, %v8497, %v8501
      %v8503 = vshrl.u32 %v8396, 16
      %v8505 = vor.u32 %v8503, %v8501
      %v8507 = vshll.u32 %v8397, 16
      %v8509 = vrot.slane %v8507, 1
      %v8510 = vsel %vm2289, %v8505, %v8509
      %v8511 = vshrl.u32 %v8397, 16
      %v8513 = vor.u32 %v8511, %v8509
      %v8515 = vshll.u32 %v8398, 16
      %v8517 = vrot.slane %v8515, 1
      %v8518 = vsel %vm2289, %v8513, %v8517
      %v8519 = vshrl.u32 %v8398, 16
      %v8521 = vor.u32 %v8519, %v8517
      %v8523 = vshll.u32 %v8399, 16
      %v8525 = vrot.slane %v8523, 1
      %v8526 = vsel %vm2289, %v8521, %v8525
      %v8527 = vshrl.u32 %v8399, 16
      %v8529 = vor.u32 %v8527, %v8525
      %v8531 = vshll.u32 %v8400, 16
      %v8533 = vrot.slane %v8531, 1
      %v8534 = vsel %vm2289, %v8529, %v8533
      %v8537 = vunpack.c.l.b16 %v8401
      %v8538 = vunpack.c.l.b16 %v8402
      %v8539 = vpack.c.b16 %v8538, %v8537
      %v8542 = vsel %vm200, %v8414, 0
      %v8545 = vsel %vm200, %v8422, 0
      %v8548 = vsel %vm200, %v8430, 0
      %v8551 = vsel %vm200, %v8438, 0
      %v8554 = vsel %vm200, %v8446, 0
      %v8557 = vsel %vm200, %v8454, 0
      %v8560 = vsel %vm200, %v8462, 0
      %v8563 = vsel %vm200, %v8470, 0
      %v8566 = vsel %vm200, %v8478, 0
      %v8569 = vsel %vm200, %v8486, 0
      %v8572 = vsel %vm200, %v8494, 0
      %v8575 = vsel %vm200, %v8502, 0
      %v8578 = vsel %vm200, %v8510, 0
      %v8581 = vsel %vm200, %v8518, 0
      %v8584 = vsel %vm200, %v8526, 0
      %v8587 = vsel %vm200, %v8534, 0
      %8589 = vmatprep.subr.bf16.mxu0 0
      %8590 = vmatpush1.bf16.msra.mxu0 %v8539
      %8591 = vmatprep.subr.bf16.mxu0 0
      %8592 = vmatpush1.bf16.msra.mxu0 0
      %8593 = vmatprep.subr.bf16.mxu0 0
      %8594 = vmatpush1.bf16.msra.mxu0 0
      %8595 = vmatprep.subr.bf16.mxu0 0
      %8596 = vmatpush1.bf16.msra.mxu0 0
      %8597 = vmatprep.subr.bf16.mxu0 0
      %8598 = vmatpush1.bf16.msra.mxu0 0
      %8599 = vmatprep.subr.bf16.mxu0 0
      %8600 = vmatpush1.bf16.msra.mxu0 0
      %8601 = vmatprep.subr.bf16.mxu0 0
      %8602 = vmatpush1.bf16.msra.mxu0 0
      %8603 = vmatprep.subr.bf16.mxu0 0
      %8604 = vmatpush1.bf16.msra.mxu0 0
      %8605 = vmatprep.subr.bf16.mxu0 0
      %8606 = vmatpush1.bf16.msra.mxu0 0
      %8607 = vmatprep.subr.bf16.mxu0 0
      %8608 = vmatpush1.bf16.msra.mxu0 0
      %8609 = vmatprep.subr.bf16.mxu0 0
      %8610 = vmatpush1.bf16.msra.mxu0 0
      %8611 = vmatprep.subr.bf16.mxu0 0
      %8612 = vmatpush1.bf16.msra.mxu0 0
      %8613 = vmatprep.subr.bf16.mxu0 0
      %8614 = vmatpush1.bf16.msra.mxu0 0
      %8615 = vmatprep.subr.bf16.mxu0 0
      %8616 = vmatpush1.bf16.msra.mxu0 0
      %8617 = vmatprep.subr.bf16.mxu0 0
      %8618 = vmatpush1.bf16.msra.mxu0 0
      %8619 = vmatprep.subr.bf16.mxu0 0
      %8620 = vmatpush1.bf16.msra.mxu0 0
      %8621 = vmatprep.mubr.bf16.mxu0 0
      %8622 = vmatmul.mubr.bf16.gmra.mrb[0].mxu0 %v8542
      %v8623 = vpop.f32.mrb[0].mxu0
      %v8624 = vadd.f32 0.0, %v8623
      %v8625 = vpop.f32.mrb[0].mxu0
      %v8626 = vpop.f32.mrb[0].mxu0
      %v8627 = vadd.f32 0.0, %v8626
      %v8628 = vpop.f32.mrb[0].mxu0
      %8629 = vmatprep.mubr.bf16.mxu0 0
      %8630 = vmatmul.mubr.bf16.gmra.mrb[0].mxu0 %v8545
      %v8631 = vpop.f32.mrb[0].mxu0
      %v8632 = vadd.f32 0.0, %v8631
      %v8633 = vpop.f32.mrb[0].mxu0
      %v8634 = vpop.f32.mrb[0].mxu0
      %v8635 = vadd.f32 0.0, %v8634
      %v8636 = vpop.f32.mrb[0].mxu0
      %8637 = vmatprep.mubr.bf16.mxu0 0
      %8638 = vmatmul.mubr.bf16.gmra.mrb[0].mxu0 %v8548
      %v8639 = vpop.f32.mrb[0].mxu0
      %v8640 = vadd.f32 0.0, %v8639
      %v8641 = vpop.f32.mrb[0].mxu0
      %v8642 = vpop.f32.mrb[0].mxu0
      %v8643 = vadd.f32 0.0, %v8642
      %v8644 = vpop.f32.mrb[0].mxu0
      %8645 = vmatprep.mubr.bf16.mxu0 0
      %8646 = vmatmul.mubr.bf16.gmra.mrb[0].mxu0 %v8551
      %v8647 = vpop.f32.mrb[0].mxu0
      %v8648 = vadd.f32 0.0, %v8647
      %v8649 = vpop.f32.mrb[0].mxu0
      %v8650 = vpop.f32.mrb[0].mxu0
      %v8651 = vadd.f32 0.0, %v8650
      %v8652 = vpop.f32.mrb[0].mxu0
      %8653 = vmatprep.mubr.bf16.mxu0 0
      %8654 = vmatmul.mubr.bf16.gmra.mrb[0].mxu0 %v8554
      %v8655 = vpop.f32.mrb[0].mxu0
      %v8656 = vadd.f32 0.0, %v8655
      %v8657 = vpop.f32.mrb[0].mxu0
      %v8658 = vpop.f32.mrb[0].mxu0
      %v8659 = vadd.f32 0.0, %v8658
      %v8660 = vpop.f32.mrb[0].mxu0
      %8661 = vmatprep.mubr.bf16.mxu0 0
      %8662 = vmatmul.mubr.bf16.gmra.mrb[0].mxu0 %v8557
      %v8663 = vpop.f32.mrb[0].mxu0
      %v8664 = vadd.f32 0.0, %v8663
      %v8665 = vpop.f32.mrb[0].mxu0
      %v8666 = vpop.f32.mrb[0].mxu0
      %v8667 = vadd.f32 0.0, %v8666
      %v8668 = vpop.f32.mrb[0].mxu0
      %8669 = vmatprep.mubr.bf16.mxu0 0
      %8670 = vmatmul.mubr.bf16.gmra.mrb[0].mxu0 %v8560
      %v8671 = vpop.f32.mrb[0].mxu0
      %v8672 = vadd.f32 0.0, %v8671
      %v8673 = vpop.f32.mrb[0].mxu0
      %v8674 = vpop.f32.mrb[0].mxu0
      %v8675 = vadd.f32 0.0, %v8674
      %v8676 = vpop.f32.mrb[0].mxu0
      %8677 = vmatprep.mubr.bf16.mxu0 0
      %8678 = vmatmul.mubr.bf16.gmra.mrb[0].mxu0 %v8563
      %v8679 = vpop.f32.mrb[0].mxu0
      %v8680 = vadd.f32 0.0, %v8679
      %v8681 = vpop.f32.mrb[0].mxu0
      %v8682 = vpop.f32.mrb[0].mxu0
      %v8683 = vadd.f32 0.0, %v8682
      %v8684 = vpop.f32.mrb[0].mxu0
      %8685 = vmatprep.mubr.bf16.mxu0 0
      %8686 = vmatmul.mubr.bf16.gmra.mrb[0].mxu0 %v8566
      %v8687 = vpop.f32.mrb[0].mxu0
      %v8688 = vadd.f32 0.0, %v8687
      %v8689 = vpop.f32.mrb[0].mxu0
      %v8690 = vpop.f32.mrb[0].mxu0
      %v8691 = vadd.f32 0.0, %v8690
      %v8692 = vpop.f32.mrb[0].mxu0
      %8693 = vmatprep.mubr.bf16.mxu0 0
      %8694 = vmatmul.mubr.bf16.gmra.mrb[0].mxu0 %v8569
      %v8695 = vpop.f32.mrb[0].mxu0
      %v8696 = vadd.f32 0.0, %v8695
      %v8697 = vpop.f32.mrb[0].mxu0
      %v8698 = vpop.f32.mrb[0].mxu0
      %v8699 = vadd.f32 0.0, %v8698
      %v8700 = vpop.f32.mrb[0].mxu0
      %8701 = vmatprep.mubr.bf16.mxu0 0
      %8702 = vmatmul.mubr.bf16.gmra.mrb[0].mxu0 %v8572
      %v8703 = vpop.f32.mrb[0].mxu0
      %v8704 = vadd.f32 0.0, %v8703
      %v8705 = vpop.f32.mrb[0].mxu0
      %v8706 = vpop.f32.mrb[0].mxu0
      %v8707 = vadd.f32 0.0, %v8706
      %v8708 = vpop.f32.mrb[0].mxu0
      %8709 = vmatprep.mubr.bf16.mxu0 0
      %8710 = vmatmul.mubr.bf16.gmra.mrb[0].mxu0 %v8575
      %v8711 = vpop.f32.mrb[0].mxu0
      %v8712 = vadd.f32 0.0, %v8711
      %v8713 = vpop.f32.mrb[0].mxu0
      %v8714 = vpop.f32.mrb[0].mxu0
      %v8715 = vadd.f32 0.0, %v8714
      %v8716 = vpop.f32.mrb[0].mxu0
      %8717 = vmatprep.mubr.bf16.mxu0 0
      %8718 = vmatmul.mubr.bf16.gmra.mrb[0].mxu0 %v8578
      %v8719 = vpop.f32.mrb[0].mxu0
      %v8720 = vadd.f32 0.0, %v8719
      %v8721 = vpop.f32.mrb[0].mxu0
      %v8722 = vpop.f32.mrb[0].mxu0
      %v8723 = vadd.f32 0.0, %v8722
      %v8724 = vpop.f32.mrb[0].mxu0
      %8725 = vmatprep.mubr.bf16.mxu0 0
      %8726 = vmatmul.mubr.bf16.gmra.mrb[0].mxu0 %v8581
      %v8727 = vpop.f32.mrb[0].mxu0
      %v8728 = vadd.f32 0.0, %v8727
      %v8729 = vpop.f32.mrb[0].mxu0
      %v8730 = vpop.f32.mrb[0].mxu0
      %v8731 = vadd.f32 0.0, %v8730
      %v8732 = vpop.f32.mrb[0].mxu0
      %8733 = vmatprep.mubr.bf16.mxu0 0
      %8734 = vmatmul.mubr.bf16.gmra.mrb[0].mxu0 %v8584
      %v8735 = vpop.f32.mrb[0].mxu0
      %v8736 = vadd.f32 0.0, %v8735
      %v8737 = vpop.f32.mrb[0].mxu0
      %v8738 = vpop.f32.mrb[0].mxu0
      %v8739 = vadd.f32 0.0, %v8738
      %v8740 = vpop.f32.mrb[0].mxu0
      %8741 = vmatprep.mubr.bf16.mxu0 0
      %8742 = vmatmul.mubr.bf16.gmra.mrb[0].mxu0 %v8587
      %v8743 = vpop.f32.mrb[0].mxu0
      %v8744 = vadd.f32 0.0, %v8743
      %v8745 = vpop.f32.mrb[0].mxu0
      %v8746 = vpop.f32.mrb[0].mxu0
      %v8747 = vadd.f32 0.0, %v8746
      %v8748 = vpop.f32.mrb[0].mxu0
      %8749 = vdwg.mxu0
      %v8750 = vadd.f32 %v8352, %v8624
      %v8751 = vadd.f32 %v8353, %v8627
      %v8752 = vadd.f32 %v8354, %v8632
      %v8753 = vadd.f32 %v8355, %v8635
      %v8754 = vadd.f32 %v8356, %v8640
      %v8755 = vadd.f32 %v8357, %v8643
      %v8756 = vadd.f32 %v8358, %v8648
      %v8757 = vadd.f32 %v8359, %v8651
      %v8758 = vadd.f32 %v8360, %v8656
      %v8759 = vadd.f32 %v8361, %v8659
      %v8760 = vadd.f32 %v8362, %v8664
      %v8761 = vadd.f32 %v8363, %v8667
      %v8762 = vadd.f32 %v8364, %v8672
      %v8763 = vadd.f32 %v8365, %v8675
      %v8764 = vadd.f32 %v8366, %v8680
      %v8765 = vadd.f32 %v8367, %v8683
      %v8766 = vadd.f32 %v8368, %v8688
      %v8767 = vadd.f32 %v8369, %v8691
      %v8768 = vadd.f32 %v8370, %v8696
      %v8769 = vadd.f32 %v8371, %v8699
      %v8770 = vadd.f32 %v8372, %v8704
      %v8771 = vadd.f32 %v8373, %v8707
      %v8772 = vadd.f32 %v8374, %v8712
      %v8773 = vadd.f32 %v8375, %v8715
      %v8774 = vadd.f32 %v8376, %v8720
      %v8775 = vadd.f32 %v8377, %v8723
      %v8776 = vadd.f32 %v8378, %v8728
      %v8777 = vadd.f32 %v8379, %v8731
      %v8778 = vadd.f32 %v8380, %v8736
      %v8779 = vadd.f32 %v8381, %v8739
      %v8780 = vadd.f32 %v8382, %v8744
      %v8781 = vadd.f32 %v8383, %v8747
      %v8782 = vld [vmem:[#allocation4 + $0x10] sm:$0x80]
      %v8783 = vld [vmem:[#allocation4 + $0x18] sm:$0xff]
      %v8784 = vld [vmem:[#allocation4 + $0x20] sm:$0xff]
      %v8785 = vld [vmem:[#allocation4 + $0x28] sm:$0xff]
      %v8786 = vld [vmem:[#allocation4 + $0x30] sm:$0xff]
      %v8787 = vld [vmem:[#allocation4 + $0x38] sm:$0xff]
      %v8788 = vld [vmem:[#allocation4 + $0x40] sm:$0xff]
      %v8789 = vld [vmem:[#allocation4 + $0x48] sm:$0xff]
      %v8790 = vld [vmem:[#allocation4 + $0x50] sm:$0xff]
      %v8791 = vld [vmem:[#allocation4 + $0x58] sm:$0xff]
      %v8792 = vld [vmem:[#allocation4 + $0x60] sm:$0xff]
      %v8793 = vld [vmem:[#allocation4 + $0x68] sm:$0xff]
      %v8794 = vld [vmem:[#allocation4 + $0x70] sm:$0xff]
      %v8795 = vld [vmem:[#allocation4 + $0x78] sm:$0xff]
      %v8796 = vld [vmem:[#allocation4 + $0x80] sm:$0xff]
      %v8797 = vld [vmem:[#allocation4 + $0x88] sm:$0xff]
      %v8798 = vld [vmem:[#allocation4 + $0x90] sm:$0xff]
      %v8799 = vld [vmem:[%s1 + $0xa0] sm:$0xf]
      %v8800 = vld [vmem:[%s1 + $0xa4] sm:$0xf]
      %v8802 = vshrl.u32 %v8782, 16
      %v8804 = vrot.slane %v8802, 7
      %v8806 = vshrl.u32 %v8783, 16
      %v8808 = vrot.slane %v8806, 7
      %v8809 = vshll.u32 %v8783, 16
      %v8811 = vor.u32 %v8808, %v8809
      %v8812 = vsel %vm1926, %v8804, %v8811
      %v8814 = vshrl.u32 %v8784, 16
      %v8816 = vrot.slane %v8814, 7
      %v8817 = vshll.u32 %v8784, 16
      %v8819 = vor.u32 %v8816, %v8817
      %v8820 = vsel %vm1926, %v8808, %v8819
      %v8822 = vshrl.u32 %v8785, 16
      %v8824 = vrot.slane %v8822, 7
      %v8825 = vshll.u32 %v8785, 16
      %v8827 = vor.u32 %v8824, %v8825
      %v8828 = vsel %vm1926, %v8816, %v8827
      %v8830 = vshrl.u32 %v8786, 16
      %v8832 = vrot.slane %v8830, 7
      %v8833 = vshll.u32 %v8786, 16
      %v8835 = vor.u32 %v8832, %v8833
      %v8836 = vsel %vm1926, %v8824, %v8835
      %v8838 = vshrl.u32 %v8787, 16
      %v8840 = vrot.slane %v8838, 7
      %v8841 = vshll.u32 %v8787, 16
      %v8843 = vor.u32 %v8840, %v8841
      %v8844 = vsel %vm1926, %v8832, %v8843
      %v8846 = vshrl.u32 %v8788, 16
      %v8848 = vrot.slane %v8846, 7
      %v8849 = vshll.u32 %v8788, 16
      %v8851 = vor.u32 %v8848, %v8849
      %v8852 = vsel %vm1926, %v8840, %v8851
      %v8854 = vshrl.u32 %v8789, 16
      %v8856 = vrot.slane %v8854, 7
      %v8857 = vshll.u32 %v8789, 16
      %v8859 = vor.u32 %v8856, %v8857
      %v8860 = vsel %vm1926, %v8848, %v8859
      %v8862 = vshrl.u32 %v8790, 16
      %v8864 = vrot.slane %v8862, 7
      %v8865 = vshll.u32 %v8790, 16
      %v8867 = vor.u32 %v8864, %v8865
      %v8868 = vsel %vm1926, %v8856, %v8867
      %v8870 = vshrl.u32 %v8791, 16
      %v8872 = vrot.slane %v8870, 7
      %v8873 = vshll.u32 %v8791, 16
      %v8875 = vor.u32 %v8872, %v8873
      %v8876 = vsel %vm1926, %v8864, %v8875
      %v8878 = vshrl.u32 %v8792, 16
      %v8880 = vrot.slane %v8878, 7
      %v8881 = vshll.u32 %v8792, 16
      %v8883 = vor.u32 %v8880, %v8881
      %v8884 = vsel %vm1926, %v8872, %v8883
      %v8886 = vshrl.u32 %v8793, 16
      %v8888 = vrot.slane %v8886, 7
      %v8889 = vshll.u32 %v8793, 16
      %v8891 = vor.u32 %v8888, %v8889
      %v8892 = vsel %vm1926, %v8880, %v8891
      %v8894 = vshrl.u32 %v8794, 16
      %v8896 = vrot.slane %v8894, 7
      %v8897 = vshll.u32 %v8794, 16
      %v8899 = vor.u32 %v8896, %v8897
      %v8900 = vsel %vm1926, %v8888, %v8899
      %v8902 = vshrl.u32 %v8795, 16
      %v8904 = vrot.slane %v8902, 7
      %v8905 = vshll.u32 %v8795, 16
      %v8907 = vor.u32 %v8904, %v8905
      %v8908 = vsel %vm1926, %v8896, %v8907
      %v8910 = vshrl.u32 %v8796, 16
      %v8912 = vrot.slane %v8910, 7
      %v8913 = vshll.u32 %v8796, 16
      %v8915 = vor.u32 %v8912, %v8913
      %v8916 = vsel %vm1926, %v8904, %v8915
      %v8918 = vshrl.u32 %v8797, 16
      %v8920 = vrot.slane %v8918, 7
      %v8921 = vshll.u32 %v8797, 16
      %v8923 = vor.u32 %v8920, %v8921
      %v8924 = vsel %vm1926, %v8912, %v8923
      %v8926 = vshrl.u32 %v8798, 16
      %v8928 = vrot.slane %v8926, 7
      %v8929 = vshll.u32 %v8798, 16
      %v8931 = vor.u32 %v8928, %v8929
      %v8932 = vsel %vm1926, %v8920, %v8931
      %v8935 = vunpack.c.l.b16 %v8799
      %v8936 = vunpack.c.l.b16 %v8800
      %v8937 = vpack.c.b16 %v8936, %v8935
      %v8940 = vsel %vm200, %v8812, 0
      %v8943 = vsel %vm200, %v8820, 0
      %v8946 = vsel %vm200, %v8828, 0
      %v8949 = vsel %vm200, %v8836, 0
      %v8952 = vsel %vm200, %v8844, 0
      %v8955 = vsel %vm200, %v8852, 0
      %v8958 = vsel %vm200, %v8860, 0
      %v8961 = vsel %vm200, %v8868, 0
      %v8964 = vsel %vm200, %v8876, 0
      %v8967 = vsel %vm200, %v8884, 0
      %v8970 = vsel %vm200, %v8892, 0
      %v8973 = vsel %vm200, %v8900, 0
      %v8976 = vsel %vm200, %v8908, 0
      %v8979 = vsel %vm200, %v8916, 0
      %v8982 = vsel %vm200, %v8924, 0
      %v8985 = vsel %vm200, %v8932, 0
      %8987 = vmatprep.subr.bf16.mxu0 0
      %8988 = vmatpush1.bf16.msra.mxu0 %v8937
      %8989 = vmatprep.subr.bf16.mxu0 0
      %8990 = vmatpush1.bf16.msra.mxu0 0
      %8991 = vmatprep.subr.bf16.mxu0 0
      %8992 = vmatpush1.bf16.msra.mxu0 0
      %8993 = vmatprep.subr.bf16.mxu0 0
      %8994 = vmatpush1.bf16.msra.mxu0 0
      %8995 = vmatprep.subr.bf16.mxu0 0
      %8996 = vmatpush1.bf16.msra.mxu0 0
      %8997 = vmatprep.subr.bf16.mxu0 0
      %8998 = vmatpush1.bf16.msra.mxu0 0
      %8999 = vmatprep.subr.bf16.mxu0 0
      %9000 = vmatpush1.bf16.msra.mxu0 0
      %9001 = vmatprep.subr.bf16.mxu0 0
      %9002 = vmatpush1.bf16.msra.mxu0 0
      %9003 = vmatprep.subr.bf16.mxu0 0
      %9004 = vmatpush1.bf16.msra.mxu0 0
      %9005 = vmatprep.subr.bf16.mxu0 0
      %9006 = vmatpush1.bf16.msra.mxu0 0
      %9007 = vmatprep.subr.bf16.mxu0 0
      %9008 = vmatpush1.bf16.msra.mxu0 0
      %9009 = vmatprep.subr.bf16.mxu0 0
      %9010 = vmatpush1.bf16.msra.mxu0 0
      %9011 = vmatprep.subr.bf16.mxu0 0
      %9012 = vmatpush1.bf16.msra.mxu0 0
      %9013 = vmatprep.subr.bf16.mxu0 0
      %9014 = vmatpush1.bf16.msra.mxu0 0
      %9015 = vmatprep.subr.bf16.mxu0 0
      %9016 = vmatpush1.bf16.msra.mxu0 0
      %9017 = vmatprep.subr.bf16.mxu0 0
      %9018 = vmatpush1.bf16.msra.mxu0 0
      %9019 = vmatprep.mubr.bf16.mxu0 0
      %9020 = vmatmul.mubr.bf16.gmra.mrb[0].mxu0 %v8940
      %v9021 = vpop.f32.mrb[0].mxu0
      %v9022 = vadd.f32 0.0, %v9021
      %v9023 = vpop.f32.mrb[0].mxu0
      %v9024 = vpop.f32.mrb[0].mxu0
      %v9025 = vadd.f32 0.0, %v9024
      %v9026 = vpop.f32.mrb[0].mxu0
      %9027 = vmatprep.mubr.bf16.mxu0 0
      %9028 = vmatmul.mubr.bf16.gmra.mrb[0].mxu0 %v8943
      %v9029 = vpop.f32.mrb[0].mxu0
      %v9030 = vadd.f32 0.0, %v9029
      %v9031 = vpop.f32.mrb[0].mxu0
      %v9032 = vpop.f32.mrb[0].mxu0
      %v9033 = vadd.f32 0.0, %v9032
      %v9034 = vpop.f32.mrb[0].mxu0
      %9035 = vmatprep.mubr.bf16.mxu0 0
      %9036 = vmatmul.mubr.bf16.gmra.mrb[0].mxu0 %v8946
      %v9037 = vpop.f32.mrb[0].mxu0
      %v9038 = vadd.f32 0.0, %v9037
      %v9039 = vpop.f32.mrb[0].mxu0
      %v9040 = vpop.f32.mrb[0].mxu0
      %v9041 = vadd.f32 0.0, %v9040
      %v9042 = vpop.f32.mrb[0].mxu0
      %9043 = vmatprep.mubr.bf16.mxu0 0
      %9044 = vmatmul.mubr.bf16.gmra.mrb[0].mxu0 %v8949
      %v9045 = vpop.f32.mrb[0].mxu0
      %v9046 = vadd.f32 0.0, %v9045
      %v9047 = vpop.f32.mrb[0].mxu0
      %v9048 = vpop.f32.mrb[0].mxu0
      %v9049 = vadd.f32 0.0, %v9048
      %v9050 = vpop.f32.mrb[0].mxu0
      %9051 = vmatprep.mubr.bf16.mxu0 0
      %9052 = vmatmul.mubr.bf16.gmra.mrb[0].mxu0 %v8952
      %v9053 = vpop.f32.mrb[0].mxu0
      %v9054 = vadd.f32 0.0, %v9053
      %v9055 = vpop.f32.mrb[0].mxu0
      %v9056 = vpop.f32.mrb[0].mxu0
      %v9057 = vadd.f32 0.0, %v9056
      %v9058 = vpop.f32.mrb[0].mxu0
      %9059 = vmatprep.mubr.bf16.mxu0 0
      %9060 = vmatmul.mubr.bf16.gmra.mrb[0].mxu0 %v8955
      %v9061 = vpop.f32.mrb[0].mxu0
      %v9062 = vadd.f32 0.0, %v9061
      %v9063 = vpop.f32.mrb[0].mxu0
      %v9064 = vpop.f32.mrb[0].mxu0
      %v9065 = vadd.f32 0.0, %v9064
      %v9066 = vpop.f32.mrb[0].mxu0
      %9067 = vmatprep.mubr.bf16.mxu0 0
      %9068 = vmatmul.mubr.bf16.gmra.mrb[0].mxu0 %v8958
      %v9069 = vpop.f32.mrb[0].mxu0
      %v9070 = vadd.f32 0.0, %v9069
      %v9071 = vpop.f32.mrb[0].mxu0
      %v9072 = vpop.f32.mrb[0].mxu0
      %v9073 = vadd.f32 0.0, %v9072
      %v9074 = vpop.f32.mrb[0].mxu0
      %9075 = vmatprep.mubr.bf16.mxu0 0
      %9076 = vmatmul.mubr.bf16.gmra.mrb[0].mxu0 %v8961
      %v9077 = vpop.f32.mrb[0].mxu0
      %v9078 = vadd.f32 0.0, %v9077
      %v9079 = vpop.f32.mrb[0].mxu0
      %v9080 = vpop.f32.mrb[0].mxu0
      %v9081 = vadd.f32 0.0, %v9080
      %v9082 = vpop.f32.mrb[0].mxu0
      %9083 = vmatprep.mubr.bf16.mxu0 0
      %9084 = vmatmul.mubr.bf16.gmra.mrb[0].mxu0 %v8964
      %v9085 = vpop.f32.mrb[0].mxu0
      %v9086 = vadd.f32 0.0, %v9085
      %v9087 = vpop.f32.mrb[0].mxu0
      %v9088 = vpop.f32.mrb[0].mxu0
      %v9089 = vadd.f32 0.0, %v9088
      %v9090 = vpop.f32.mrb[0].mxu0
      %9091 = vmatprep.mubr.bf16.mxu0 0
      %9092 = vmatmul.mubr.bf16.gmra.mrb[0].mxu0 %v8967
      %v9093 = vpop.f32.mrb[0].mxu0
      %v9094 = vadd.f32 0.0, %v9093
      %v9095 = vpop.f32.mrb[0].mxu0
      %v9096 = vpop.f32.mrb[0].mxu0
      %v9097 = vadd.f32 0.0, %v9096
      %v9098 = vpop.f32.mrb[0].mxu0
      %9099 = vmatprep.mubr.bf16.mxu0 0
      %9100 = vmatmul.mubr.bf16.gmra.mrb[0].mxu0 %v8970
      %v9101 = vpop.f32.mrb[0].mxu0
      %v9102 = vadd.f32 0.0, %v9101
      %v9103 = vpop.f32.mrb[0].mxu0
      %v9104 = vpop.f32.mrb[0].mxu0
      %v9105 = vadd.f32 0.0, %v9104
      %v9106 = vpop.f32.mrb[0].mxu0
      %9107 = vmatprep.mubr.bf16.mxu0 0
      %9108 = vmatmul.mubr.bf16.gmra.mrb[0].mxu0 %v8973
      %v9109 = vpop.f32.mrb[0].mxu0
      %v9110 = vadd.f32 0.0, %v9109
      %v9111 = vpop.f32.mrb[0].mxu0
      %v9112 = vpop.f32.mrb[0].mxu0
      %v9113 = vadd.f32 0.0, %v9112
      %v9114 = vpop.f32.mrb[0].mxu0
      %9115 = vmatprep.mubr.bf16.mxu0 0
      %9116 = vmatmul.mubr.bf16.gmra.mrb[0].mxu0 %v8976
      %v9117 = vpop.f32.mrb[0].mxu0
      %v9118 = vadd.f32 0.0, %v9117
      %v9119 = vpop.f32.mrb[0].mxu0
      %v9120 = vpop.f32.mrb[0].mxu0
      %v9121 = vadd.f32 0.0, %v9120
      %v9122 = vpop.f32.mrb[0].mxu0
      %9123 = vmatprep.mubr.bf16.mxu0 0
      %9124 = vmatmul.mubr.bf16.gmra.mrb[0].mxu0 %v8979
      %v9125 = vpop.f32.mrb[0].mxu0
      %v9126 = vadd.f32 0.0, %v9125
      %v9127 = vpop.f32.mrb[0].mxu0
      %v9128 = vpop.f32.mrb[0].mxu0
      %v9129 = vadd.f32 0.0, %v9128
      %v9130 = vpop.f32.mrb[0].mxu0
      %9131 = vmatprep.mubr.bf16.mxu0 0
      %9132 = vmatmul.mubr.bf16.gmra.mrb[0].mxu0 %v8982
      %v9133 = vpop.f32.mrb[0].mxu0
      %v9134 = vadd.f32 0.0, %v9133
      %v9135 = vpop.f32.mrb[0].mxu0
      %v9136 = vpop.f32.mrb[0].mxu0
      %v9137 = vadd.f32 0.0, %v9136
      %v9138 = vpop.f32.mrb[0].mxu0
      %9139 = vmatprep.mubr.bf16.mxu0 0
      %9140 = vmatmul.mubr.bf16.gmra.mrb[0].mxu0 %v8985
      %v9141 = vpop.f32.mrb[0].mxu0
      %v9142 = vadd.f32 0.0, %v9141
      %v9143 = vpop.f32.mrb[0].mxu0
      %v9144 = vpop.f32.mrb[0].mxu0
      %v9145 = vadd.f32 0.0, %v9144
      %v9146 = vpop.f32.mrb[0].mxu0
      %9147 = vdwg.mxu0
      %v9148 = vadd.f32 %v8750, %v9022
      %v9149 = vadd.f32 %v8751, %v9025
      %v9150 = vadd.f32 %v8752, %v9030
      %v9151 = vadd.f32 %v8753, %v9033
      %v9152 = vadd.f32 %v8754, %v9038
      %v9153 = vadd.f32 %v8755, %v9041
      %v9154 = vadd.f32 %v8756, %v9046
      %v9155 = vadd.f32 %v8757, %v9049
      %v9156 = vadd.f32 %v8758, %v9054
      %v9157 = vadd.f32 %v8759, %v9057
      %v9158 = vadd.f32 %v8760, %v9062
      %v9159 = vadd.f32 %v8761, %v9065
      %v9160 = vadd.f32 %v8762, %v9070
      %v9161 = vadd.f32 %v8763, %v9073
      %v9162 = vadd.f32 %v8764, %v9078
      %v9163 = vadd.f32 %v8765, %v9081
      %v9164 = vadd.f32 %v8766, %v9086
      %v9165 = vadd.f32 %v8767, %v9089
      %v9166 = vadd.f32 %v8768, %v9094
      %v9167 = vadd.f32 %v8769, %v9097
      %v9168 = vadd.f32 %v8770, %v9102
      %v9169 = vadd.f32 %v8771, %v9105
      %v9170 = vadd.f32 %v8772, %v9110
      %v9171 = vadd.f32 %v8773, %v9113
      %v9172 = vadd.f32 %v8774, %v9118
      %v9173 = vadd.f32 %v8775, %v9121
      %v9174 = vadd.f32 %v8776, %v9126
      %v9175 = vadd.f32 %v8777, %v9129
      %v9176 = vadd.f32 %v8778, %v9134
      %v9177 = vadd.f32 %v8779, %v9137
      %v9178 = vadd.f32 %v8780, %v9142
      %v9179 = vadd.f32 %v8781, %v9145
      %v9180 = vld [vmem:[#allocation3 + $0x18] sm:$0xff]
      %v9181 = vld [vmem:[#allocation3 + $0x20] sm:$0xff]
      %v9182 = vld [vmem:[#allocation3 + $0x28] sm:$0xff]
      %v9183 = vld [vmem:[#allocation3 + $0x30] sm:$0xff]
      %v9184 = vld [vmem:[#allocation3 + $0x38] sm:$0xff]
      %v9185 = vld [vmem:[#allocation3 + $0x40] sm:$0xff]
      %v9186 = vld [vmem:[#allocation3 + $0x48] sm:$0xff]
      %v9187 = vld [vmem:[#allocation3 + $0x50] sm:$0xff]
      %v9188 = vld [vmem:[#allocation3 + $0x58] sm:$0xff]
      %v9189 = vld [vmem:[#allocation3 + $0x60] sm:$0xff]
      %v9190 = vld [vmem:[#allocation3 + $0x68] sm:$0xff]
      %v9191 = vld [vmem:[#allocation3 + $0x70] sm:$0xff]
      %v9192 = vld [vmem:[#allocation3 + $0x78] sm:$0xff]
      %v9193 = vld [vmem:[#allocation3 + $0x80] sm:$0xff]
      %v9194 = vld [vmem:[#allocation3 + $0x88] sm:$0xff]
      %v9195 = vld [vmem:[#allocation3 + $0x90] sm:$0xff]
      %v9196 = vld [vmem:[%s1 + $0xa8] sm:$0xf]
      %v9197 = vld [vmem:[%s1 + $0xac] sm:$0xf]
      %v9200 = vunpack.c.l.b16 %v9196
      %v9201 = vunpack.c.l.b16 %v9197
      %v9202 = vpack.c.b16 %v9201, %v9200
      %v9205 = vsel %vm200, %v9180, 0
      %v9208 = vsel %vm200, %v9181, 0
      %v9211 = vsel %vm200, %v9182, 0
      %v9214 = vsel %vm200, %v9183, 0
      %v9217 = vsel %vm200, %v9184, 0
      %v9220 = vsel %vm200, %v9185, 0
      %v9223 = vsel %vm200, %v9186, 0
      %v9226 = vsel %vm200, %v9187, 0
      %v9229 = vsel %vm200, %v9188, 0
      %v9232 = vsel %vm200, %v9189, 0
      %v9235 = vsel %vm200, %v9190, 0
      %v9238 = vsel %vm200, %v9191, 0
      %v9241 = vsel %vm200, %v9192, 0
      %v9244 = vsel %vm200, %v9193, 0
      %v9247 = vsel %vm200, %v9194, 0
      %v9250 = vsel %vm200, %v9195, 0
      %9252 = vmatprep.subr.bf16.mxu0 0
      %9253 = vmatpush1.bf16.msra.mxu0 %v9202
      %9254 = vmatprep.subr.bf16.mxu0 0
      %9255 = vmatpush1.bf16.msra.mxu0 0
      %9256 = vmatprep.subr.bf16.mxu0 0
      %9257 = vmatpush1.bf16.msra.mxu0 0
      %9258 = vmatprep.subr.bf16.mxu0 0
      %9259 = vmatpush1.bf16.msra.mxu0 0
      %9260 = vmatprep.subr.bf16.mxu0 0
      %9261 = vmatpush1.bf16.msra.mxu0 0
      %9262 = vmatprep.subr.bf16.mxu0 0
      %9263 = vmatpush1.bf16.msra.mxu0 0
      %9264 = vmatprep.subr.bf16.mxu0 0
      %9265 = vmatpush1.bf16.msra.mxu0 0
      %9266 = vmatprep.subr.bf16.mxu0 0
      %9267 = vmatpush1.bf16.msra.mxu0 0
      %9268 = vmatprep.subr.bf16.mxu0 0
      %9269 = vmatpush1.bf16.msra.mxu0 0
      %9270 = vmatprep.subr.bf16.mxu0 0
      %9271 = vmatpush1.bf16.msra.mxu0 0
      %9272 = vmatprep.subr.bf16.mxu0 0
      %9273 = vmatpush1.bf16.msra.mxu0 0
      %9274 = vmatprep.subr.bf16.mxu0 0
      %9275 = vmatpush1.bf16.msra.mxu0 0
      %9276 = vmatprep.subr.bf16.mxu0 0
      %9277 = vmatpush1.bf16.msra.mxu0 0
      %9278 = vmatprep.subr.bf16.mxu0 0
      %9279 = vmatpush1.bf16.msra.mxu0 0
      %9280 = vmatprep.subr.bf16.mxu0 0
      %9281 = vmatpush1.bf16.msra.mxu0 0
      %9282 = vmatprep.subr.bf16.mxu0 0
      %9283 = vmatpush1.bf16.msra.mxu0 0
      %9284 = vmatprep.mubr.bf16.mxu0 0
      %9285 = vmatmul.mubr.bf16.gmra.mrb[0].mxu0 %v9205
      %v9286 = vpop.f32.mrb[0].mxu0
      %v9287 = vadd.f32 0.0, %v9286
      %v9288 = vpop.f32.mrb[0].mxu0
      %v9289 = vpop.f32.mrb[0].mxu0
      %v9290 = vadd.f32 0.0, %v9289
      %v9291 = vpop.f32.mrb[0].mxu0
      %9292 = vmatprep.mubr.bf16.mxu0 0
      %9293 = vmatmul.mubr.bf16.gmra.mrb[0].mxu0 %v9208
      %v9294 = vpop.f32.mrb[0].mxu0
      %v9295 = vadd.f32 0.0, %v9294
      %v9296 = vpop.f32.mrb[0].mxu0
      %v9297 = vpop.f32.mrb[0].mxu0
      %v9298 = vadd.f32 0.0, %v9297
      %v9299 = vpop.f32.mrb[0].mxu0
      %9300 = vmatprep.mubr.bf16.mxu0 0
      %9301 = vmatmul.mubr.bf16.gmra.mrb[0].mxu0 %v9211
      %v9302 = vpop.f32.mrb[0].mxu0
      %v9303 = vadd.f32 0.0, %v9302
      %v9304 = vpop.f32.mrb[0].mxu0
      %v9305 = vpop.f32.mrb[0].mxu0
      %v9306 = vadd.f32 0.0, %v9305
      %v9307 = vpop.f32.mrb[0].mxu0
      %9308 = vmatprep.mubr.bf16.mxu0 0
      %9309 = vmatmul.mubr.bf16.gmra.mrb[0].mxu0 %v9214
      %v9310 = vpop.f32.mrb[0].mxu0
      %v9311 = vadd.f32 0.0, %v9310
      %v9312 = vpop.f32.mrb[0].mxu0
      %v9313 = vpop.f32.mrb[0].mxu0
      %v9314 = vadd.f32 0.0, %v9313
      %v9315 = vpop.f32.mrb[0].mxu0
      %9316 = vmatprep.mubr.bf16.mxu0 0
      %9317 = vmatmul.mubr.bf16.gmra.mrb[0].mxu0 %v9217
      %v9318 = vpop.f32.mrb[0].mxu0
      %v9319 = vadd.f32 0.0, %v9318
      %v9320 = vpop.f32.mrb[0].mxu0
      %v9321 = vpop.f32.mrb[0].mxu0
      %v9322 = vadd.f32 0.0, %v9321
      %v9323 = vpop.f32.mrb[0].mxu0
      %9324 = vmatprep.mubr.bf16.mxu0 0
      %9325 = vmatmul.mubr.bf16.gmra.mrb[0].mxu0 %v9220
      %v9326 = vpop.f32.mrb[0].mxu0
      %v9327 = vadd.f32 0.0, %v9326
      %v9328 = vpop.f32.mrb[0].mxu0
      %v9329 = vpop.f32.mrb[0].mxu0
      %v9330 = vadd.f32 0.0, %v9329
      %v9331 = vpop.f32.mrb[0].mxu0
      %9332 = vmatprep.mubr.bf16.mxu0 0
      %9333 = vmatmul.mubr.bf16.gmra.mrb[0].mxu0 %v9223
      %v9334 = vpop.f32.mrb[0].mxu0
      %v9335 = vadd.f32 0.0, %v9334
      %v9336 = vpop.f32.mrb[0].mxu0
      %v9337 = vpop.f32.mrb[0].mxu0
      %v9338 = vadd.f32 0.0, %v9337
      %v9339 = vpop.f32.mrb[0].mxu0
      %9340 = vmatprep.mubr.bf16.mxu0 0
      %9341 = vmatmul.mubr.bf16.gmra.mrb[0].mxu0 %v9226
      %v9342 = vpop.f32.mrb[0].mxu0
      %v9343 = vadd.f32 0.0, %v9342
      %v9344 = vpop.f32.mrb[0].mxu0
      %v9345 = vpop.f32.mrb[0].mxu0
      %v9346 = vadd.f32 0.0, %v9345
      %v9347 = vpop.f32.mrb[0].mxu0
      %9348 = vmatprep.mubr.bf16.mxu0 0
      %9349 = vmatmul.mubr.bf16.gmra.mrb[0].mxu0 %v9229
      %v9350 = vpop.f32.mrb[0].mxu0
      %v9351 = vadd.f32 0.0, %v9350
      %v9352 = vpop.f32.mrb[0].mxu0
      %v9353 = vpop.f32.mrb[0].mxu0
      %v9354 = vadd.f32 0.0, %v9353
      %v9355 = vpop.f32.mrb[0].mxu0
      %9356 = vmatprep.mubr.bf16.mxu0 0
      %9357 = vmatmul.mubr.bf16.gmra.mrb[0].mxu0 %v9232
      %v9358 = vpop.f32.mrb[0].mxu0
      %v9359 = vadd.f32 0.0, %v9358
      %v9360 = vpop.f32.mrb[0].mxu0
      %v9361 = vpop.f32.mrb[0].mxu0
      %v9362 = vadd.f32 0.0, %v9361
      %v9363 = vpop.f32.mrb[0].mxu0
      %9364 = vmatprep.mubr.bf16.mxu0 0
      %9365 = vmatmul.mubr.bf16.gmra.mrb[0].mxu0 %v9235
      %v9366 = vpop.f32.mrb[0].mxu0
      %v9367 = vadd.f32 0.0, %v9366
      %v9368 = vpop.f32.mrb[0].mxu0
      %v9369 = vpop.f32.mrb[0].mxu0
      %v9370 = vadd.f32 0.0, %v9369
      %v9371 = vpop.f32.mrb[0].mxu0
      %9372 = vmatprep.mubr.bf16.mxu0 0
      %9373 = vmatmul.mubr.bf16.gmra.mrb[0].mxu0 %v9238
      %v9374 = vpop.f32.mrb[0].mxu0
      %v9375 = vadd.f32 0.0, %v9374
      %v9376 = vpop.f32.mrb[0].mxu0
      %v9377 = vpop.f32.mrb[0].mxu0
      %v9378 = vadd.f32 0.0, %v9377
      %v9379 = vpop.f32.mrb[0].mxu0
      %9380 = vmatprep.mubr.bf16.mxu0 0
      %9381 = vmatmul.mubr.bf16.gmra.mrb[0].mxu0 %v9241
      %v9382 = vpop.f32.mrb[0].mxu0
      %v9383 = vadd.f32 0.0, %v9382
      %v9384 = vpop.f32.mrb[0].mxu0
      %v9385 = vpop.f32.mrb[0].mxu0
      %v9386 = vadd.f32 0.0, %v9385
      %v9387 = vpop.f32.mrb[0].mxu0
      %9388 = vmatprep.mubr.bf16.mxu0 0
      %9389 = vmatmul.mubr.bf16.gmra.mrb[0].mxu0 %v9244
      %v9390 = vpop.f32.mrb[0].mxu0
      %v9391 = vadd.f32 0.0, %v9390
      %v9392 = vpop.f32.mrb[0].mxu0
      %v9393 = vpop.f32.mrb[0].mxu0
      %v9394 = vadd.f32 0.0, %v9393
      %v9395 = vpop.f32.mrb[0].mxu0
      %9396 = vmatprep.mubr.bf16.mxu0 0
      %9397 = vmatmul.mubr.bf16.gmra.mrb[0].mxu0 %v9247
      %v9398 = vpop.f32.mrb[0].mxu0
      %v9399 = vadd.f32 0.0, %v9398
      %v9400 = vpop.f32.mrb[0].mxu0
      %v9401 = vpop.f32.mrb[0].mxu0
      %v9402 = vadd.f32 0.0, %v9401
      %v9403 = vpop.f32.mrb[0].mxu0
      %9404 = vmatprep.mubr.bf16.mxu0 0
      %9405 = vmatmul.mubr.bf16.gmra.mrb[0].mxu0 %v9250
      %v9406 = vpop.f32.mrb[0].mxu0
      %v9407 = vadd.f32 0.0, %v9406
      %v9408 = vpop.f32.mrb[0].mxu0
      %v9409 = vpop.f32.mrb[0].mxu0
      %v9410 = vadd.f32 0.0, %v9409
      %v9411 = vpop.f32.mrb[0].mxu0
      %9412 = vdwg.mxu0
      %v9413 = vadd.f32 %v9148, %v9287
      %v9414 = vadd.f32 %v9149, %v9290
      %v9415 = vadd.f32 %v9150, %v9295
      %v9416 = vadd.f32 %v9151, %v9298
      %v9417 = vadd.f32 %v9152, %v9303
      %v9418 = vadd.f32 %v9153, %v9306
      %v9419 = vadd.f32 %v9154, %v9311
      %v9420 = vadd.f32 %v9155, %v9314
      %v9421 = vadd.f32 %v9156, %v9319
      %v9422 = vadd.f32 %v9157, %v9322
      %v9423 = vadd.f32 %v9158, %v9327
      %v9424 = vadd.f32 %v9159, %v9330
      %v9425 = vadd.f32 %v9160, %v9335
      %v9426 = vadd.f32 %v9161, %v9338
      %v9427 = vadd.f32 %v9162, %v9343
      %v9428 = vadd.f32 %v9163, %v9346
      %v9429 = vadd.f32 %v9164, %v9351
      %v9430 = vadd.f32 %v9165, %v9354
      %v9431 = vadd.f32 %v9166, %v9359
      %v9432 = vadd.f32 %v9167, %v9362
      %v9433 = vadd.f32 %v9168, %v9367
      %v9434 = vadd.f32 %v9169, %v9370
      %v9435 = vadd.f32 %v9170, %v9375
      %v9436 = vadd.f32 %v9171, %v9378
      %v9437 = vadd.f32 %v9172, %v9383
      %v9438 = vadd.f32 %v9173, %v9386
      %v9439 = vadd.f32 %v9174, %v9391
      %v9440 = vadd.f32 %v9175, %v9394
      %v9441 = vadd.f32 %v9176, %v9399
      %v9442 = vadd.f32 %v9177, %v9402
      %v9443 = vadd.f32 %v9178, %v9407
      %v9444 = vadd.f32 %v9179, %v9410
      %v9445 = vld [vmem:[#allocation5 + $0x18] sm:$0xff]
      %v9446 = vld [vmem:[#allocation5 + $0x20] sm:$0xff]
      %v9447 = vld [vmem:[#allocation5 + $0x28] sm:$0xff]
      %v9448 = vld [vmem:[#allocation5 + $0x30] sm:$0xff]
      %v9449 = vld [vmem:[#allocation5 + $0x38] sm:$0xff]
      %v9450 = vld [vmem:[#allocation5 + $0x40] sm:$0xff]
      %v9451 = vld [vmem:[#allocation5 + $0x48] sm:$0xff]
      %v9452 = vld [vmem:[#allocation5 + $0x50] sm:$0xff]
      %v9453 = vld [vmem:[#allocation5 + $0x58] sm:$0xff]
      %v9454 = vld [vmem:[#allocation5 + $0x60] sm:$0xff]
      %v9455 = vld [vmem:[#allocation5 + $0x68] sm:$0xff]
      %v9456 = vld [vmem:[#allocation5 + $0x70] sm:$0xff]
      %v9457 = vld [vmem:[#allocation5 + $0x78] sm:$0xff]
      %v9458 = vld [vmem:[#allocation5 + $0x80] sm:$0xff]
      %v9459 = vld [vmem:[#allocation5 + $0x88] sm:$0xff]
      %v9460 = vld [vmem:[#allocation5 + $0x90] sm:$0xff]
      %v9461 = vld [vmem:[#allocation5 + $0x98] sm:$0x1]
      %v9462 = vld [vmem:[%s1 + $0xb0] sm:$0xf]
      %v9463 = vld [vmem:[%s1 + $0xb4] sm:$0xf]
      %v9465 = vshrl.u32 %v9445, 16
      %v9467 = vshll.u32 %v9445, 16
      %v9469 = vrot.slane %v9467, 1
      %v9470 = vor.u32 %v9465, %v9469
      %v9472 = vshll.u32 %v9446, 16
      %v9474 = vrot.slane %v9472, 1
      %v9475 = vsel %vm2289, %v9470, %v9474
      %v9476 = vshrl.u32 %v9446, 16
      %v9478 = vor.u32 %v9476, %v9474
      %v9480 = vshll.u32 %v9447, 16
      %v9482 = vrot.slane %v9480, 1
      %v9483 = vsel %vm2289, %v9478, %v9482
      %v9484 = vshrl.u32 %v9447, 16
      %v9486 = vor.u32 %v9484, %v9482
      %v9488 = vshll.u32 %v9448, 16
      %v9490 = vrot.slane %v9488, 1
      %v9491 = vsel %vm2289, %v9486, %v9490
      %v9492 = vshrl.u32 %v9448, 16
      %v9494 = vor.u32 %v9492, %v9490
      %v9496 = vshll.u32 %v9449, 16
      %v9498 = vrot.slane %v9496, 1
      %v9499 = vsel %vm2289, %v9494, %v9498
      %v9500 = vshrl.u32 %v9449, 16
      %v9502 = vor.u32 %v9500, %v9498
      %v9504 = vshll.u32 %v9450, 16
      %v9506 = vrot.slane %v9504, 1
      %v9507 = vsel %vm2289, %v9502, %v9506
      %v9508 = vshrl.u32 %v9450, 16
      %v9510 = vor.u32 %v9508, %v9506
      %v9512 = vshll.u32 %v9451, 16
      %v9514 = vrot.slane %v9512, 1
      %v9515 = vsel %vm2289, %v9510, %v9514
      %v9516 = vshrl.u32 %v9451, 16
      %v9518 = vor.u32 %v9516, %v9514
      %v9520 = vshll.u32 %v9452, 16
      %v9522 = vrot.slane %v9520, 1
      %v9523 = vsel %vm2289, %v9518, %v9522
      %v9524 = vshrl.u32 %v9452, 16
      %v9526 = vor.u32 %v9524, %v9522
      %v9528 = vshll.u32 %v9453, 16
      %v9530 = vrot.slane %v9528, 1
      %v9531 = vsel %vm2289, %v9526, %v9530
      %v9532 = vshrl.u32 %v9453, 16
      %v9534 = vor.u32 %v9532, %v9530
      %v9536 = vshll.u32 %v9454, 16
      %v9538 = vrot.slane %v9536, 1
      %v9539 = vsel %vm2289, %v9534, %v9538
      %v9540 = vshrl.u32 %v9454, 16
      %v9542 = vor.u32 %v9540, %v9538
      %v9544 = vshll.u32 %v9455, 16
      %v9546 = vrot.slane %v9544, 1
      %v9547 = vsel %vm2289, %v9542, %v9546
      %v9548 = vshrl.u32 %v9455, 16
      %v9550 = vor.u32 %v9548, %v9546
      %v9552 = vshll.u32 %v9456, 16
      %v9554 = vrot.slane %v9552, 1
      %v9555 = vsel %vm2289, %v9550, %v9554
      %v9556 = vshrl.u32 %v9456, 16
      %v9558 = vor.u32 %v9556, %v9554
      %v9560 = vshll.u32 %v9457, 16
      %v9562 = vrot.slane %v9560, 1
      %v9563 = vsel %vm2289, %v9558, %v9562
      %v9564 = vshrl.u32 %v9457, 16
      %v9566 = vor.u32 %v9564, %v9562
      %v9568 = vshll.u32 %v9458, 16
      %v9570 = vrot.slane %v9568, 1
      %v9571 = vsel %vm2289, %v9566, %v9570
      %v9572 = vshrl.u32 %v9458, 16
      %v9574 = vor.u32 %v9572, %v9570
      %v9576 = vshll.u32 %v9459, 16
      %v9578 = vrot.slane %v9576, 1
      %v9579 = vsel %vm2289, %v9574, %v9578
      %v9580 = vshrl.u32 %v9459, 16
      %v9582 = vor.u32 %v9580, %v9578
      %v9584 = vshll.u32 %v9460, 16
      %v9586 = vrot.slane %v9584, 1
      %v9587 = vsel %vm2289, %v9582, %v9586
      %v9588 = vshrl.u32 %v9460, 16
      %v9590 = vor.u32 %v9588, %v9586
      %v9592 = vshll.u32 %v9461, 16
      %v9594 = vrot.slane %v9592, 1
      %v9595 = vsel %vm2289, %v9590, %v9594
      %v9598 = vunpack.c.l.b16 %v9462
      %v9599 = vunpack.c.l.b16 %v9463
      %v9600 = vpack.c.b16 %v9599, %v9598
      %v9603 = vsel %vm200, %v9475, 0
      %v9606 = vsel %vm200, %v9483, 0
      %v9609 = vsel %vm200, %v9491, 0
      %v9612 = vsel %vm200, %v9499, 0
      %v9615 = vsel %vm200, %v9507, 0
      %v9618 = vsel %vm200, %v9515, 0
      %v9621 = vsel %vm200, %v9523, 0
      %v9624 = vsel %vm200, %v9531, 0
      %v9627 = vsel %vm200, %v9539, 0
      %v9630 = vsel %vm200, %v9547, 0
      %v9633 = vsel %vm200, %v9555, 0
      %v9636 = vsel %vm200, %v9563, 0
      %v9639 = vsel %vm200, %v9571, 0
      %v9642 = vsel %vm200, %v9579, 0
      %v9645 = vsel %vm200, %v9587, 0
      %v9648 = vsel %vm200, %v9595, 0
      %9650 = vmatprep.subr.bf16.mxu0 0
      %9651 = vmatpush1.bf16.msra.mxu0 %v9600
      %9652 = vmatprep.subr.bf16.mxu0 0
      %9653 = vmatpush1.bf16.msra.mxu0 0
      %9654 = vmatprep.subr.bf16.mxu0 0
      %9655 = vmatpush1.bf16.msra.mxu0 0
      %9656 = vmatprep.subr.bf16.mxu0 0
      %9657 = vmatpush1.bf16.msra.mxu0 0
      %9658 = vmatprep.subr.bf16.mxu0 0
      %9659 = vmatpush1.bf16.msra.mxu0 0
      %9660 = vmatprep.subr.bf16.mxu0 0
      %9661 = vmatpush1.bf16.msra.mxu0 0
      %9662 = vmatprep.subr.bf16.mxu0 0
      %9663 = vmatpush1.bf16.msra.mxu0 0
      %9664 = vmatprep.subr.bf16.mxu0 0
      %9665 = vmatpush1.bf16.msra.mxu0 0
      %9666 = vmatprep.subr.bf16.mxu0 0
      %9667 = vmatpush1.bf16.msra.mxu0 0
      %9668 = vmatprep.subr.bf16.mxu0 0
      %9669 = vmatpush1.bf16.msra.mxu0 0
      %9670 = vmatprep.subr.bf16.mxu0 0
      %9671 = vmatpush1.bf16.msra.mxu0 0
      %9672 = vmatprep.subr.bf16.mxu0 0
      %9673 = vmatpush1.bf16.msra.mxu0 0
      %9674 = vmatprep.subr.bf16.mxu0 0
      %9675 = vmatpush1.bf16.msra.mxu0 0
      %9676 = vmatprep.subr.bf16.mxu0 0
      %9677 = vmatpush1.bf16.msra.mxu0 0
      %9678 = vmatprep.subr.bf16.mxu0 0
      %9679 = vmatpush1.bf16.msra.mxu0 0
      %9680 = vmatprep.subr.bf16.mxu0 0
      %9681 = vmatpush1.bf16.msra.mxu0 0
      %9682 = vmatprep.mubr.bf16.mxu0 0
      %9683 = vmatmul.mubr.bf16.gmra.mrb[0].mxu0 %v9603
      %v9684 = vpop.f32.mrb[0].mxu0
      %v9685 = vadd.f32 0.0, %v9684
      %v9686 = vpop.f32.mrb[0].mxu0
      %v9687 = vpop.f32.mrb[0].mxu0
      %v9688 = vadd.f32 0.0, %v9687
      %v9689 = vpop.f32.mrb[0].mxu0
      %9690 = vmatprep.mubr.bf16.mxu0 0
      %9691 = vmatmul.mubr.bf16.gmra.mrb[0].mxu0 %v9606
      %v9692 = vpop.f32.mrb[0].mxu0
      %v9693 = vadd.f32 0.0, %v9692
      %v9694 = vpop.f32.mrb[0].mxu0
      %v9695 = vpop.f32.mrb[0].mxu0
      %v9696 = vadd.f32 0.0, %v9695
      %v9697 = vpop.f32.mrb[0].mxu0
      %9698 = vmatprep.mubr.bf16.mxu0 0
      %9699 = vmatmul.mubr.bf16.gmra.mrb[0].mxu0 %v9609
      %v9700 = vpop.f32.mrb[0].mxu0
      %v9701 = vadd.f32 0.0, %v9700
      %v9702 = vpop.f32.mrb[0].mxu0
      %v9703 = vpop.f32.mrb[0].mxu0
      %v9704 = vadd.f32 0.0, %v9703
      %v9705 = vpop.f32.mrb[0].mxu0
      %9706 = vmatprep.mubr.bf16.mxu0 0
      %9707 = vmatmul.mubr.bf16.gmra.mrb[0].mxu0 %v9612
      %v9708 = vpop.f32.mrb[0].mxu0
      %v9709 = vadd.f32 0.0, %v9708
      %v9710 = vpop.f32.mrb[0].mxu0
      %v9711 = vpop.f32.mrb[0].mxu0
      %v9712 = vadd.f32 0.0, %v9711
      %v9713 = vpop.f32.mrb[0].mxu0
      %9714 = vmatprep.mubr.bf16.mxu0 0
      %9715 = vmatmul.mubr.bf16.gmra.mrb[0].mxu0 %v9615
      %v9716 = vpop.f32.mrb[0].mxu0
      %v9717 = vadd.f32 0.0, %v9716
      %v9718 = vpop.f32.mrb[0].mxu0
      %v9719 = vpop.f32.mrb[0].mxu0
      %v9720 = vadd.f32 0.0, %v9719
      %v9721 = vpop.f32.mrb[0].mxu0
      %9722 = vmatprep.mubr.bf16.mxu0 0
      %9723 = vmatmul.mubr.bf16.gmra.mrb[0].mxu0 %v9618
      %v9724 = vpop.f32.mrb[0].mxu0
      %v9725 = vadd.f32 0.0, %v9724
      %v9726 = vpop.f32.mrb[0].mxu0
      %v9727 = vpop.f32.mrb[0].mxu0
      %v9728 = vadd.f32 0.0, %v9727
      %v9729 = vpop.f32.mrb[0].mxu0
      %9730 = vmatprep.mubr.bf16.mxu0 0
      %9731 = vmatmul.mubr.bf16.gmra.mrb[0].mxu0 %v9621
      %v9732 = vpop.f32.mrb[0].mxu0
      %v9733 = vadd.f32 0.0, %v9732
      %v9734 = vpop.f32.mrb[0].mxu0
      %v9735 = vpop.f32.mrb[0].mxu0
      %v9736 = vadd.f32 0.0, %v9735
      %v9737 = vpop.f32.mrb[0].mxu0
      %9738 = vmatprep.mubr.bf16.mxu0 0
      %9739 = vmatmul.mubr.bf16.gmra.mrb[0].mxu0 %v9624
      %v9740 = vpop.f32.mrb[0].mxu0
      %v9741 = vadd.f32 0.0, %v9740
      %v9742 = vpop.f32.mrb[0].mxu0
      %v9743 = vpop.f32.mrb[0].mxu0
      %v9744 = vadd.f32 0.0, %v9743
      %v9745 = vpop.f32.mrb[0].mxu0
      %9746 = vmatprep.mubr.bf16.mxu0 0
      %9747 = vmatmul.mubr.bf16.gmra.mrb[0].mxu0 %v9627
      %v9748 = vpop.f32.mrb[0].mxu0
      %v9749 = vadd.f32 0.0, %v9748
      %v9750 = vpop.f32.mrb[0].mxu0
      %v9751 = vpop.f32.mrb[0].mxu0
      %v9752 = vadd.f32 0.0, %v9751
      %v9753 = vpop.f32.mrb[0].mxu0
      %9754 = vmatprep.mubr.bf16.mxu0 0
      %9755 = vmatmul.mubr.bf16.gmra.mrb[0].mxu0 %v9630
      %v9756 = vpop.f32.mrb[0].mxu0
      %v9757 = vadd.f32 0.0, %v9756
      %v9758 = vpop.f32.mrb[0].mxu0
      %v9759 = vpop.f32.mrb[0].mxu0
      %v9760 = vadd.f32 0.0, %v9759
      %v9761 = vpop.f32.mrb[0].mxu0
      %9762 = vmatprep.mubr.bf16.mxu0 0
      %9763 = vmatmul.mubr.bf16.gmra.mrb[0].mxu0 %v9633
      %v9764 = vpop.f32.mrb[0].mxu0
      %v9765 = vadd.f32 0.0, %v9764
      %v9766 = vpop.f32.mrb[0].mxu0
      %v9767 = vpop.f32.mrb[0].mxu0
      %v9768 = vadd.f32 0.0, %v9767
      %v9769 = vpop.f32.mrb[0].mxu0
      %9770 = vmatprep.mubr.bf16.mxu0 0
      %9771 = vmatmul.mubr.bf16.gmra.mrb[0].mxu0 %v9636
      %v9772 = vpop.f32.mrb[0].mxu0
      %v9773 = vadd.f32 0.0, %v9772
      %v9774 = vpop.f32.mrb[0].mxu0
      %v9775 = vpop.f32.mrb[0].mxu0
      %v9776 = vadd.f32 0.0, %v9775
      %v9777 = vpop.f32.mrb[0].mxu0
      %9778 = vmatprep.mubr.bf16.mxu0 0
      %9779 = vmatmul.mubr.bf16.gmra.mrb[0].mxu0 %v9639
      %v9780 = vpop.f32.mrb[0].mxu0
      %v9781 = vadd.f32 0.0, %v9780
      %v9782 = vpop.f32.mrb[0].mxu0
      %v9783 = vpop.f32.mrb[0].mxu0
      %v9784 = vadd.f32 0.0, %v9783
      %v9785 = vpop.f32.mrb[0].mxu0
      %9786 = vmatprep.mubr.bf16.mxu0 0
      %9787 = vmatmul.mubr.bf16.gmra.mrb[0].mxu0 %v9642
      %v9788 = vpop.f32.mrb[0].mxu0
      %v9789 = vadd.f32 0.0, %v9788
      %v9790 = vpop.f32.mrb[0].mxu0
      %v9791 = vpop.f32.mrb[0].mxu0
      %v9792 = vadd.f32 0.0, %v9791
      %v9793 = vpop.f32.mrb[0].mxu0
      %9794 = vmatprep.mubr.bf16.mxu0 0
      %9795 = vmatmul.mubr.bf16.gmra.mrb[0].mxu0 %v9645
      %v9796 = vpop.f32.mrb[0].mxu0
      %v9797 = vadd.f32 0.0, %v9796
      %v9798 = vpop.f32.mrb[0].mxu0
      %v9799 = vpop.f32.mrb[0].mxu0
      %v9800 = vadd.f32 0.0, %v9799
      %v9801 = vpop.f32.mrb[0].mxu0
      %9802 = vmatprep.mubr.bf16.mxu0 0
      %9803 = vmatmul.mubr.bf16.gmra.mrb[0].mxu0 %v9648
      %v9804 = vpop.f32.mrb[0].mxu0
      %v9805 = vadd.f32 0.0, %v9804
      %v9806 = vpop.f32.mrb[0].mxu0
      %v9807 = vpop.f32.mrb[0].mxu0
      %v9808 = vadd.f32 0.0, %v9807
      %v9809 = vpop.f32.mrb[0].mxu0
      %9810 = vdwg.mxu0
      %v9811 = vadd.f32 %v9413, %v9685
      %v9812 = vadd.f32 %v9414, %v9688
      %v9813 = vadd.f32 %v9415, %v9693
      %v9814 = vadd.f32 %v9416, %v9696
      %v9815 = vadd.f32 %v9417, %v9701
      %v9816 = vadd.f32 %v9418, %v9704
      %v9817 = vadd.f32 %v9419, %v9709
      %v9818 = vadd.f32 %v9420, %v9712
      %v9819 = vadd.f32 %v9421, %v9717
      %v9820 = vadd.f32 %v9422, %v9720
      %v9821 = vadd.f32 %v9423, %v9725
      %v9822 = vadd.f32 %v9424, %v9728
      %v9823 = vadd.f32 %v9425, %v9733
      %v9824 = vadd.f32 %v9426, %v9736
      %v9825 = vadd.f32 %v9427, %v9741
      %v9826 = vadd.f32 %v9428, %v9744
      %v9827 = vadd.f32 %v9429, %v9749
      %v9828 = vadd.f32 %v9430, %v9752
      %v9829 = vadd.f32 %v9431, %v9757
      %v9830 = vadd.f32 %v9432, %v9760
      %v9831 = vadd.f32 %v9433, %v9765
      %v9832 = vadd.f32 %v9434, %v9768
      %v9833 = vadd.f32 %v9435, %v9773
      %v9834 = vadd.f32 %v9436, %v9776
      %v9835 = vadd.f32 %v9437, %v9781
      %v9836 = vadd.f32 %v9438, %v9784
      %v9837 = vadd.f32 %v9439, %v9789
      %v9838 = vadd.f32 %v9440, %v9792
      %v9839 = vadd.f32 %v9441, %v9797
      %v9840 = vadd.f32 %v9442, %v9800
      %v9841 = vadd.f32 %v9443, %v9805
      %v9842 = vadd.f32 %v9444, %v9808
      %v9843 = vld [vmem:[%s2 + $0x30] sm:$0x1]
      %v9844 = vlaneseq
      %v9845 = vshrl.u32 %v9844, 7
      %v9846 = vsub.s32 0, %v9845
      %v9847 = vrot.slane %v9843, %v9846
      %v9848 = vadd.f32 %v9811, %v9847
      %v9849 = vadd.f32 %v9812, %v9847
      %v9850 = vadd.f32 %v9813, %v9847
      %v9851 = vadd.f32 %v9814, %v9847
      %v9852 = vadd.f32 %v9815, %v9847
      %v9853 = vadd.f32 %v9816, %v9847
      %v9854 = vadd.f32 %v9817, %v9847
      %v9855 = vadd.f32 %v9818, %v9847
      %v9856 = vadd.f32 %v9819, %v9847
      %v9857 = vadd.f32 %v9820, %v9847
      %v9858 = vadd.f32 %v9821, %v9847
      %v9859 = vadd.f32 %v9822, %v9847
      %v9860 = vadd.f32 %v9823, %v9847
      %v9861 = vadd.f32 %v9824, %v9847
      %v9862 = vadd.f32 %v9825, %v9847
      %v9863 = vadd.f32 %v9826, %v9847
      %v9864 = vadd.f32 %v9827, %v9847
      %v9865 = vadd.f32 %v9828, %v9847
      %v9866 = vadd.f32 %v9829, %v9847
      %v9867 = vadd.f32 %v9830, %v9847
      %v9868 = vadd.f32 %v9831, %v9847
      %v9869 = vadd.f32 %v9832, %v9847
      %v9870 = vadd.f32 %v9833, %v9847
      %v9871 = vadd.f32 %v9834, %v9847
      %v9872 = vadd.f32 %v9835, %v9847
      %v9873 = vadd.f32 %v9836, %v9847
      %v9874 = vadd.f32 %v9837, %v9847
      %v9875 = vadd.f32 %v9838, %v9847
      %v9876 = vadd.f32 %v9839, %v9847
      %v9877 = vadd.f32 %v9840, %v9847
      %v9878 = vadd.f32 %v9841, %v9847
      %v9879 = vadd.f32 %v9842, %v9847
      %v9880 = vmul.f32 %v9848, 0.5
      %v9881 = vmul.f32 %v9849, 0.5
      %v9882 = vmul.f32 %v9850, 0.5
      %v9883 = vmul.f32 %v9851, 0.5
      %v9884 = vmul.f32 %v9852, 0.5
      %v9885 = vmul.f32 %v9853, 0.5
      %v9886 = vmul.f32 %v9854, 0.5
      %v9887 = vmul.f32 %v9855, 0.5
      %v9888 = vmul.f32 %v9856, 0.5
      %v9889 = vmul.f32 %v9857, 0.5
      %v9890 = vmul.f32 %v9858, 0.5
      %v9891 = vmul.f32 %v9859, 0.5
      %v9892 = vmul.f32 %v9860, 0.5
      %v9893 = vmul.f32 %v9861, 0.5
      %v9894 = vmul.f32 %v9862, 0.5
      %v9895 = vmul.f32 %v9863, 0.5
      %v9896 = vmul.f32 %v9864, 0.5
      %v9897 = vmul.f32 %v9865, 0.5
      %v9898 = vmul.f32 %v9866, 0.5
      %v9899 = vmul.f32 %v9867, 0.5
      %v9900 = vmul.f32 %v9868, 0.5
      %v9901 = vmul.f32 %v9869, 0.5
      %v9902 = vmul.f32 %v9870, 0.5
      %v9903 = vmul.f32 %v9871, 0.5
      %v9904 = vmul.f32 %v9872, 0.5
      %v9905 = vmul.f32 %v9873, 0.5
      %v9906 = vmul.f32 %v9874, 0.5
      %v9907 = vmul.f32 %v9875, 0.5
      %v9908 = vmul.f32 %v9876, 0.5
      %v9909 = vmul.f32 %v9877, 0.5
      %v9910 = vmul.f32 %v9878, 0.5
      %v9911 = vmul.f32 %v9879, 0.5
      %v9912 = vmul.f32 %v9848, 0.044715
      %v9913 = vmul.f32 %v9849, 0.044715
      %v9914 = vmul.f32 %v9850, 0.044715
      %v9915 = vmul.f32 %v9851, 0.044715
      %v9916 = vmul.f32 %v9852, 0.044715
      %v9917 = vmul.f32 %v9853, 0.044715
      %v9918 = vmul.f32 %v9854, 0.044715
      %v9919 = vmul.f32 %v9855, 0.044715
      %v9920 = vmul.f32 %v9856, 0.044715
      %v9921 = vmul.f32 %v9857, 0.044715
      %v9922 = vmul.f32 %v9858, 0.044715
      %v9923 = vmul.f32 %v9859, 0.044715
      %v9924 = vmul.f32 %v9860, 0.044715
      %v9925 = vmul.f32 %v9861, 0.044715
      %v9926 = vmul.f32 %v9862, 0.044715
      %v9927 = vmul.f32 %v9863, 0.044715
      %v9928 = vmul.f32 %v9864, 0.044715
      %v9929 = vmul.f32 %v9865, 0.044715
      %v9930 = vmul.f32 %v9866, 0.044715
      %v9931 = vmul.f32 %v9867, 0.044715
      %v9932 = vmul.f32 %v9868, 0.044715
      %v9933 = vmul.f32 %v9869, 0.044715
      %v9934 = vmul.f32 %v9870, 0.044715
      %v9935 = vmul.f32 %v9871, 0.044715
      %v9936 = vmul.f32 %v9872, 0.044715
      %v9937 = vmul.f32 %v9873, 0.044715
      %v9938 = vmul.f32 %v9874, 0.044715
      %v9939 = vmul.f32 %v9875, 0.044715
      %v9940 = vmul.f32 %v9876, 0.044715
      %v9941 = vmul.f32 %v9877, 0.044715
      %v9942 = vmul.f32 %v9878, 0.044715
      %v9943 = vmul.f32 %v9879, 0.044715
      %v9944 = vmul.f32 %v9912, %v9848
      %v9945 = vmul.f32 %v9913, %v9849
      %v9946 = vmul.f32 %v9914, %v9850
      %v9947 = vmul.f32 %v9915, %v9851
      %v9948 = vmul.f32 %v9916, %v9852
      %v9949 = vmul.f32 %v9917, %v9853
      %v9950 = vmul.f32 %v9918, %v9854
      %v9951 = vmul.f32 %v9919, %v9855
      %v9952 = vmul.f32 %v9920, %v9856
      %v9953 = vmul.f32 %v9921, %v9857
      %v9954 = vmul.f32 %v9922, %v9858
      %v9955 = vmul.f32 %v9923, %v9859
      %v9956 = vmul.f32 %v9924, %v9860
      %v9957 = vmul.f32 %v9925, %v9861
      %v9958 = vmul.f32 %v9926, %v9862
      %v9959 = vmul.f32 %v9927, %v9863
      %v9960 = vmul.f32 %v9928, %v9864
      %v9961 = vmul.f32 %v9929, %v9865
      %v9962 = vmul.f32 %v9930, %v9866
      %v9963 = vmul.f32 %v9931, %v9867
      %v9964 = vmul.f32 %v9932, %v9868
      %v9965 = vmul.f32 %v9933, %v9869
      %v9966 = vmul.f32 %v9934, %v9870
      %v9967 = vmul.f32 %v9935, %v9871
      %v9968 = vmul.f32 %v9936, %v9872
      %v9969 = vmul.f32 %v9937, %v9873
      %v9970 = vmul.f32 %v9938, %v9874
      %v9971 = vmul.f32 %v9939, %v9875
      %v9972 = vmul.f32 %v9940, %v9876
      %v9973 = vmul.f32 %v9941, %v9877
      %v9974 = vmul.f32 %v9942, %v9878
      %v9975 = vmul.f32 %v9943, %v9879
      %v9976 = vmul.f32 %v9944, %v9848
      %v9977 = vmul.f32 %v9945, %v9849
      %v9978 = vmul.f32 %v9946, %v9850
      %v9979 = vmul.f32 %v9947, %v9851
      %v9980 = vmul.f32 %v9948, %v9852
      %v9981 = vmul.f32 %v9949, %v9853
      %v9982 = vmul.f32 %v9950, %v9854
      %v9983 = vmul.f32 %v9951, %v9855
      %v9984 = vmul.f32 %v9952, %v9856
      %v9985 = vmul.f32 %v9953, %v9857
      %v9986 = vmul.f32 %v9954, %v9858
      %v9987 = vmul.f32 %v9955, %v9859
      %v9988 = vmul.f32 %v9956, %v9860
      %v9989 = vmul.f32 %v9957, %v9861
      %v9990 = vmul.f32 %v9958, %v9862
      %v9991 = vmul.f32 %v9959, %v9863
      %v9992 = vmul.f32 %v9960, %v9864
      %v9993 = vmul.f32 %v9961, %v9865
      %v9994 = vmul.f32 %v9962, %v9866
      %v9995 = vmul.f32 %v9963, %v9867
      %v9996 = vmul.f32 %v9964, %v9868
      %v9997 = vmul.f32 %v9965, %v9869
      %v9998 = vmul.f32 %v9966, %v9870
      %v9999 = vmul.f32 %v9967, %v9871
      %v10000 = vmul.f32 %v9968, %v9872
      %v10001 = vmul.f32 %v9969, %v9873
      %v10002 = vmul.f32 %v9970, %v9874
      %v10003 = vmul.f32 %v9971, %v9875
      %v10004 = vmul.f32 %v9972, %v9876
      %v10005 = vmul.f32 %v9973, %v9877
      %v10006 = vmul.f32 %v9974, %v9878
      %v10007 = vmul.f32 %v9975, %v9879
      %v10008 = vadd.f32 %v9848, %v9976
      %v10009 = vadd.f32 %v9849, %v9977
      %v10010 = vadd.f32 %v9850, %v9978
      %v10011 = vadd.f32 %v9851, %v9979
      %v10012 = vadd.f32 %v9852, %v9980
      %v10013 = vadd.f32 %v9853, %v9981
      %v10014 = vadd.f32 %v9854, %v9982
      %v10015 = vadd.f32 %v9855, %v9983
      %v10016 = vadd.f32 %v9856, %v9984
      %v10017 = vadd.f32 %v9857, %v9985
      %v10018 = vadd.f32 %v9858, %v9986
      %v10019 = vadd.f32 %v9859, %v9987
      %v10020 = vadd.f32 %v9860, %v9988
      %v10021 = vadd.f32 %v9861, %v9989
      %v10022 = vadd.f32 %v9862, %v9990
      %v10023 = vadd.f32 %v9863, %v9991
      %v10024 = vadd.f32 %v9864, %v9992
      %v10025 = vadd.f32 %v9865, %v9993
      %v10026 = vadd.f32 %v9866, %v9994
      %v10027 = vadd.f32 %v9867, %v9995
      %v10028 = vadd.f32 %v9868, %v9996
      %v10029 = vadd.f32 %v9869, %v9997
      %v10030 = vadd.f32 %v9870, %v9998
      %v10031 = vadd.f32 %v9871, %v9999
      %v10032 = vadd.f32 %v9872, %v10000
      %v10033 = vadd.f32 %v9873, %v10001
      %v10034 = vadd.f32 %v9874, %v10002
      %v10035 = vadd.f32 %v9875, %v10003
      %v10036 = vadd.f32 %v9876, %v10004
      %v10037 = vadd.f32 %v9877, %v10005
      %v10038 = vadd.f32 %v9878, %v10006
      %v10039 = vadd.f32 %v9879, %v10007
      %v10040 = vmul.f32 %v10008, 0.7978846
      %v10041 = vmul.f32 %v10009, 0.7978846
      %v10042 = vmul.f32 %v10010, 0.7978846
      %v10043 = vmul.f32 %v10011, 0.7978846
      %v10044 = vmul.f32 %v10012, 0.7978846
      %v10045 = vmul.f32 %v10013, 0.7978846
      %v10046 = vmul.f32 %v10014, 0.7978846
      %v10047 = vmul.f32 %v10015, 0.7978846
      %v10048 = vmul.f32 %v10016, 0.7978846
      %v10049 = vmul.f32 %v10017, 0.7978846
      %v10050 = vmul.f32 %v10018, 0.7978846
      %v10051 = vmul.f32 %v10019, 0.7978846
      %v10052 = vmul.f32 %v10020, 0.7978846
      %v10053 = vmul.f32 %v10021, 0.7978846
      %v10054 = vmul.f32 %v10022, 0.7978846
      %v10055 = vmul.f32 %v10023, 0.7978846
      %v10056 = vmul.f32 %v10024, 0.7978846
      %v10057 = vmul.f32 %v10025, 0.7978846
      %v10058 = vmul.f32 %v10026, 0.7978846
      %v10059 = vmul.f32 %v10027, 0.7978846
      %v10060 = vmul.f32 %v10028, 0.7978846
      %v10061 = vmul.f32 %v10029, 0.7978846
      %v10062 = vmul.f32 %v10030, 0.7978846
      %v10063 = vmul.f32 %v10031, 0.7978846
      %v10064 = vmul.f32 %v10032, 0.7978846
      %v10065 = vmul.f32 %v10033, 0.7978846
      %v10066 = vmul.f32 %v10034, 0.7978846
      %v10067 = vmul.f32 %v10035, 0.7978846
      %v10068 = vmul.f32 %v10036, 0.7978846
      %v10069 = vmul.f32 %v10037, 0.7978846
      %v10070 = vmul.f32 %v10038, 0.7978846
      %v10071 = vmul.f32 %v10039, 0.7978846
      %v10072 = vtanh.pop %v10040
      %v10073 = vtanh.pop %v10041
      %v10074 = vtanh.pop %v10042
      %v10075 = vtanh.pop %v10043
      %v10076 = vtanh.pop %v10044
      %v10077 = vtanh.pop %v10045
      %v10078 = vtanh.pop %v10046
      %v10079 = vtanh.pop %v10047
      %v10080 = vtanh.pop %v10048
      %v10081 = vtanh.pop %v10049
      %v10082 = vtanh.pop %v10050
      %v10083 = vtanh.pop %v10051
      %v10084 = vtanh.pop %v10052
      %v10085 = vtanh.pop %v10053
      %v10086 = vtanh.pop %v10054
      %v10087 = vtanh.pop %v10055
      %v10088 = vtanh.pop %v10056
      %v10089 = vtanh.pop %v10057
      %v10090 = vtanh.pop %v10058
      %v10091 = vtanh.pop %v10059
      %v10092 = vtanh.pop %v10060
      %v10093 = vtanh.pop %v10061
      %v10094 = vtanh.pop %v10062
      %v10095 = vtanh.pop %v10063
      %v10096 = vtanh.pop %v10064
      %v10097 = vtanh.pop %v10065
      %v10098 = vtanh.pop %v10066
      %v10099 = vtanh.pop %v10067
      %v10100 = vtanh.pop %v10068
      %v10101 = vtanh.pop %v10069
      %v10102 = vtanh.pop %v10070
      %v10103 = vtanh.pop %v10071
      %v10104 = vadd.f32 %v10072, 1.0
      %v10105 = vadd.f32 %v10073, 1.0
      %v10106 = vadd.f32 %v10074, 1.0
      %v10107 = vadd.f32 %v10075, 1.0
      %v10108 = vadd.f32 %v10076, 1.0
      %v10109 = vadd.f32 %v10077, 1.0
      %v10110 = vadd.f32 %v10078, 1.0
      %v10111 = vadd.f32 %v10079, 1.0
      %v10112 = vadd.f32 %v10080, 1.0
      %v10113 = vadd.f32 %v10081, 1.0
      %v10114 = vadd.f32 %v10082, 1.0
      %v10115 = vadd.f32 %v10083, 1.0
      %v10116 = vadd.f32 %v10084, 1.0
      %v10117 = vadd.f32 %v10085, 1.0
      %v10118 = vadd.f32 %v10086, 1.0
      %v10119 = vadd.f32 %v10087, 1.0
      %v10120 = vadd.f32 %v10088, 1.0
      %v10121 = vadd.f32 %v10089, 1.0
      %v10122 = vadd.f32 %v10090, 1.0
      %v10123 = vadd.f32 %v10091, 1.0
      %v10124 = vadd.f32 %v10092, 1.0
      %v10125 = vadd.f32 %v10093, 1.0
      %v10126 = vadd.f32 %v10094, 1.0
      %v10127 = vadd.f32 %v10095, 1.0
      %v10128 = vadd.f32 %v10096, 1.0
      %v10129 = vadd.f32 %v10097, 1.0
      %v10130 = vadd.f32 %v10098, 1.0
      %v10131 = vadd.f32 %v10099, 1.0
      %v10132 = vadd.f32 %v10100, 1.0
      %v10133 = vadd.f32 %v10101, 1.0
      %v10134 = vadd.f32 %v10102, 1.0
      %v10135 = vadd.f32 %v10103, 1.0
      %v10136 = vmul.f32 %v9880, %v10104
      %v10137 = vmul.f32 %v9881, %v10105
      %v10138 = vmul.f32 %v9882, %v10106
      %v10139 = vmul.f32 %v9883, %v10107
      %v10140 = vmul.f32 %v9884, %v10108
      %v10141 = vmul.f32 %v9885, %v10109
      %v10142 = vmul.f32 %v9886, %v10110
      %v10143 = vmul.f32 %v9887, %v10111
      %v10144 = vmul.f32 %v9888, %v10112
      %v10145 = vmul.f32 %v9889, %v10113
      %v10146 = vmul.f32 %v9890, %v10114
      %v10147 = vmul.f32 %v9891, %v10115
      %v10148 = vmul.f32 %v9892, %v10116
      %v10149 = vmul.f32 %v9893, %v10117
      %v10150 = vmul.f32 %v9894, %v10118
      %v10151 = vmul.f32 %v9895, %v10119
      %v10152 = vmul.f32 %v9896, %v10120
      %v10153 = vmul.f32 %v9897, %v10121
      %v10154 = vmul.f32 %v9898, %v10122
      %v10155 = vmul.f32 %v9899, %v10123
      %v10156 = vmul.f32 %v9900, %v10124
      %v10157 = vmul.f32 %v9901, %v10125
      %v10158 = vmul.f32 %v9902, %v10126
      %v10159 = vmul.f32 %v9903, %v10127
      %v10160 = vmul.f32 %v9904, %v10128
      %v10161 = vmul.f32 %v9905, %v10129
      %v10162 = vmul.f32 %v9906, %v10130
      %v10163 = vmul.f32 %v9907, %v10131
      %v10164 = vmul.f32 %v9908, %v10132
      %v10165 = vmul.f32 %v9909, %v10133
      %v10166 = vmul.f32 %v9910, %v10134
      %v10167 = vmul.f32 %v9911, %v10135
      %v10168 = vpack.c.bf16 %v10137, %v10136
      %v10169 = vpack.c.bf16 %v10139, %v10138
      %v10170 = vpack.c.bf16 %v10141, %v10140
      %v10171 = vpack.c.bf16 %v10143, %v10142
      %v10172 = vpack.c.bf16 %v10145, %v10144
      %v10173 = vpack.c.bf16 %v10147, %v10146
      %v10174 = vpack.c.bf16 %v10149, %v10148
      %v10175 = vpack.c.bf16 %v10151, %v10150
      %v10176 = vpack.c.bf16 %v10153, %v10152
      %v10177 = vpack.c.bf16 %v10155, %v10154
      %v10178 = vpack.c.bf16 %v10157, %v10156
      %v10179 = vpack.c.bf16 %v10159, %v10158
      %v10180 = vpack.c.bf16 %v10161, %v10160
      %v10181 = vpack.c.bf16 %v10163, %v10162
      %v10182 = vpack.c.bf16 %v10165, %v10164
      %v10183 = vpack.c.bf16 %v10167, %v10166
      %v10184 = vld [vmem:[%s1 + $0xb8] sm:$0xf]
      %v10185 = vld [vmem:[%s2 + $0x38] sm:$0x1]
      %v10186 = vlaneseq
      %v10187 = vshrl.u32 %v10186, 7
      %v10188 = vsub.s32 0, %v10187
      %v10189 = vrot.slane %v10185, %v10188
      %v10191 = vsel %vm279, %v10168, 0
      %v10194 = vsel %vm279, %v10169, 0
      %v10197 = vsel %vm279, %v10170, 0
      %v10200 = vsel %vm279, %v10171, 0
      %v10203 = vsel %vm279, %v10172, 0
      %v10206 = vsel %vm279, %v10173, 0
      %v10209 = vsel %vm279, %v10174, 0
      %v10212 = vsel %vm279, %v10175, 0
      %v10215 = vsel %vm279, %v10176, 0
      %v10218 = vsel %vm279, %v10177, 0
      %v10221 = vsel %vm279, %v10178, 0
      %v10224 = vsel %vm279, %v10179, 0
      %v10227 = vsel %vm279, %v10180, 0
      %v10230 = vsel %vm279, %v10181, 0
      %v10233 = vsel %vm279, %v10182, 0
      %v10236 = vsel %vm279, %v10183, 0
      %v10239 = vsel %vm446, %v10184, 0
      %10241 = vmatprep.subr.bf16.mxu0 0
      %10242 = vmatpush1.bf16.msra.mxu0 %v10239
      %10243 = vmatprep.subr.bf16.mxu0 0
      %10244 = vmatpush1.bf16.msra.mxu0 0
      %10245 = vmatprep.subr.bf16.mxu0 0
      %10246 = vmatpush1.bf16.msra.mxu0 0
      %10247 = vmatprep.subr.bf16.mxu0 0
      %10248 = vmatpush1.bf16.msra.mxu0 0
      %10249 = vmatprep.subr.bf16.mxu0 0
      %10250 = vmatpush1.bf16.msra.mxu0 0
      %10251 = vmatprep.subr.bf16.mxu0 0
      %10252 = vmatpush1.bf16.msra.mxu0 0
      %10253 = vmatprep.subr.bf16.mxu0 0
      %10254 = vmatpush1.bf16.msra.mxu0 0
      %10255 = vmatprep.subr.bf16.mxu0 0
      %10256 = vmatpush1.bf16.msra.mxu0 0
      %10257 = vmatprep.subr.bf16.mxu0 0
      %10258 = vmatpush1.bf16.msra.mxu0 0
      %10259 = vmatprep.subr.bf16.mxu0 0
      %10260 = vmatpush1.bf16.msra.mxu0 0
      %10261 = vmatprep.subr.bf16.mxu0 0
      %10262 = vmatpush1.bf16.msra.mxu0 0
      %10263 = vmatprep.subr.bf16.mxu0 0
      %10264 = vmatpush1.bf16.msra.mxu0 0
      %10265 = vmatprep.subr.bf16.mxu0 0
      %10266 = vmatpush1.bf16.msra.mxu0 0
      %10267 = vmatprep.subr.bf16.mxu0 0
      %10268 = vmatpush1.bf16.msra.mxu0 0
      %10269 = vmatprep.subr.bf16.mxu0 0
      %10270 = vmatpush1.bf16.msra.mxu0 0
      %10271 = vmatprep.subr.bf16.mxu0 0
      %10272 = vmatpush1.bf16.msra.mxu0 0
      %10273 = vmatprep.mubr.bf16.mxu0 0
      %10274 = vmatmul.mubr.bf16.gmra.mrb[0].mxu0 %v10191
      %v10275 = vpop.f32.mrb[0].mxu0
      %v10276 = vadd.f32 %v10189, %v10275
      %v10277 = vpop.f32.mrb[0].mxu0
      %v10278 = vpop.f32.mrb[0].mxu0
      %v10279 = vadd.f32 %v10189, %v10278
      %v10280 = vpop.f32.mrb[0].mxu0
      %10281 = vmatprep.mubr.bf16.mxu0 0
      %10282 = vmatmul.mubr.bf16.gmra.mrb[0].mxu0 %v10194
      %v10283 = vpop.f32.mrb[0].mxu0
      %v10284 = vadd.f32 %v10189, %v10283
      %v10285 = vpop.f32.mrb[0].mxu0
      %v10286 = vpop.f32.mrb[0].mxu0
      %v10287 = vadd.f32 %v10189, %v10286
      %v10288 = vpop.f32.mrb[0].mxu0
      %10289 = vmatprep.mubr.bf16.mxu0 0
      %10290 = vmatmul.mubr.bf16.gmra.mrb[0].mxu0 %v10197
      %v10291 = vpop.f32.mrb[0].mxu0
      %v10292 = vadd.f32 %v10189, %v10291
      %v10293 = vpop.f32.mrb[0].mxu0
      %v10294 = vpop.f32.mrb[0].mxu0
      %v10295 = vadd.f32 %v10189, %v10294
      %v10296 = vpop.f32.mrb[0].mxu0
      %10297 = vmatprep.mubr.bf16.mxu0 0
      %10298 = vmatmul.mubr.bf16.gmra.mrb[0].mxu0 %v10200
      %v10299 = vpop.f32.mrb[0].mxu0
      %v10300 = vadd.f32 %v10189, %v10299
      %v10301 = vpop.f32.mrb[0].mxu0
      %v10302 = vpop.f32.mrb[0].mxu0
      %v10303 = vadd.f32 %v10189, %v10302
      %v10304 = vpop.f32.mrb[0].mxu0
      %10305 = vmatprep.mubr.bf16.mxu0 0
      %10306 = vmatmul.mubr.bf16.gmra.mrb[0].mxu0 %v10203
      %v10307 = vpop.f32.mrb[0].mxu0
      %v10308 = vadd.f32 %v10189, %v10307
      %v10309 = vpop.f32.mrb[0].mxu0
      %v10310 = vpop.f32.mrb[0].mxu0
      %v10311 = vadd.f32 %v10189, %v10310
      %v10312 = vpop.f32.mrb[0].mxu0
      %10313 = vmatprep.mubr.bf16.mxu0 0
      %10314 = vmatmul.mubr.bf16.gmra.mrb[0].mxu0 %v10206
      %v10315 = vpop.f32.mrb[0].mxu0
      %v10316 = vadd.f32 %v10189, %v10315
      %v10317 = vpop.f32.mrb[0].mxu0
      %v10318 = vpop.f32.mrb[0].mxu0
      %v10319 = vadd.f32 %v10189, %v10318
      %v10320 = vpop.f32.mrb[0].mxu0
      %10321 = vmatprep.mubr.bf16.mxu0 0
      %10322 = vmatmul.mubr.bf16.gmra.mrb[0].mxu0 %v10209
      %v10323 = vpop.f32.mrb[0].mxu0
      %v10324 = vadd.f32 %v10189, %v10323
      %v10325 = vpop.f32.mrb[0].mxu0
      %v10326 = vpop.f32.mrb[0].mxu0
      %v10327 = vadd.f32 %v10189, %v10326
      %v10328 = vpop.f32.mrb[0].mxu0
      %10329 = vmatprep.mubr.bf16.mxu0 0
      %10330 = vmatmul.mubr.bf16.gmra.mrb[0].mxu0 %v10212
      %v10331 = vpop.f32.mrb[0].mxu0
      %v10332 = vadd.f32 %v10189, %v10331
      %v10333 = vpop.f32.mrb[0].mxu0
      %v10334 = vpop.f32.mrb[0].mxu0
      %v10335 = vadd.f32 %v10189, %v10334
      %v10336 = vpop.f32.mrb[0].mxu0
      %10337 = vmatprep.mubr.bf16.mxu0 0
      %10338 = vmatmul.mubr.bf16.gmra.mrb[0].mxu0 %v10215
      %v10339 = vpop.f32.mrb[0].mxu0
      %v10340 = vadd.f32 %v10189, %v10339
      %v10341 = vpop.f32.mrb[0].mxu0
      %v10342 = vpop.f32.mrb[0].mxu0
      %v10343 = vadd.f32 %v10189, %v10342
      %v10344 = vpop.f32.mrb[0].mxu0
      %10345 = vmatprep.mubr.bf16.mxu0 0
      %10346 = vmatmul.mubr.bf16.gmra.mrb[0].mxu0 %v10218
      %v10347 = vpop.f32.mrb[0].mxu0
      %v10348 = vadd.f32 %v10189, %v10347
      %v10349 = vpop.f32.mrb[0].mxu0
      %v10350 = vpop.f32.mrb[0].mxu0
      %v10351 = vadd.f32 %v10189, %v10350
      %v10352 = vpop.f32.mrb[0].mxu0
      %10353 = vmatprep.mubr.bf16.mxu0 0
      %10354 = vmatmul.mubr.bf16.gmra.mrb[0].mxu0 %v10221
      %v10355 = vpop.f32.mrb[0].mxu0
      %v10356 = vadd.f32 %v10189, %v10355
      %v10357 = vpop.f32.mrb[0].mxu0
      %v10358 = vpop.f32.mrb[0].mxu0
      %v10359 = vadd.f32 %v10189, %v10358
      %v10360 = vpop.f32.mrb[0].mxu0
      %10361 = vmatprep.mubr.bf16.mxu0 0
      %10362 = vmatmul.mubr.bf16.gmra.mrb[0].mxu0 %v10224
      %v10363 = vpop.f32.mrb[0].mxu0
      %v10364 = vadd.f32 %v10189, %v10363
      %v10365 = vpop.f32.mrb[0].mxu0
      %v10366 = vpop.f32.mrb[0].mxu0
      %v10367 = vadd.f32 %v10189, %v10366
      %v10368 = vpop.f32.mrb[0].mxu0
      %10369 = vmatprep.mubr.bf16.mxu0 0
      %10370 = vmatmul.mubr.bf16.gmra.mrb[0].mxu0 %v10227
      %v10371 = vpop.f32.mrb[0].mxu0
      %v10372 = vadd.f32 %v10189, %v10371
      %v10373 = vpop.f32.mrb[0].mxu0
      %v10374 = vpop.f32.mrb[0].mxu0
      %v10375 = vadd.f32 %v10189, %v10374
      %v10376 = vpop.f32.mrb[0].mxu0
      %10377 = vmatprep.mubr.bf16.mxu0 0
      %10378 = vmatmul.mubr.bf16.gmra.mrb[0].mxu0 %v10230
      %v10379 = vpop.f32.mrb[0].mxu0
      %v10380 = vadd.f32 %v10189, %v10379
      %v10381 = vpop.f32.mrb[0].mxu0
      %v10382 = vpop.f32.mrb[0].mxu0
      %v10383 = vadd.f32 %v10189, %v10382
      %v10384 = vpop.f32.mrb[0].mxu0
      %10385 = vmatprep.mubr.bf16.mxu0 0
      %10386 = vmatmul.mubr.bf16.gmra.mrb[0].mxu0 %v10233
      %v10387 = vpop.f32.mrb[0].mxu0
      %v10388 = vadd.f32 %v10189, %v10387
      %v10389 = vpop.f32.mrb[0].mxu0
      %v10390 = vpop.f32.mrb[0].mxu0
      %v10391 = vadd.f32 %v10189, %v10390
      %v10392 = vpop.f32.mrb[0].mxu0
      %10393 = vmatprep.mubr.bf16.mxu0 0
      %10394 = vmatmul.mubr.bf16.gmra.mrb[0].mxu0 %v10236
      %v10395 = vpop.f32.mrb[0].mxu0
      %v10396 = vadd.f32 %v10189, %v10395
      %v10397 = vpop.f32.mrb[0].mxu0
      %v10398 = vpop.f32.mrb[0].mxu0
      %v10399 = vadd.f32 %v10189, %v10398
      %v10400 = vpop.f32.mrb[0].mxu0
      %10401 = vdwg.mxu0
      %v10402 = vsub.f32 0.0, %v10276
      %v10403 = vsub.f32 0.0, %v10279
      %v10404 = vsub.f32 0.0, %v10284
      %v10405 = vsub.f32 0.0, %v10287
      %v10406 = vsub.f32 0.0, %v10292
      %v10407 = vsub.f32 0.0, %v10295
      %v10408 = vsub.f32 0.0, %v10300
      %v10409 = vsub.f32 0.0, %v10303
      %v10410 = vsub.f32 0.0, %v10308
      %v10411 = vsub.f32 0.0, %v10311
      %v10412 = vsub.f32 0.0, %v10316
      %v10413 = vsub.f32 0.0, %v10319
      %v10414 = vsub.f32 0.0, %v10324
      %v10415 = vsub.f32 0.0, %v10327
      %v10416 = vsub.f32 0.0, %v10332
      %v10417 = vsub.f32 0.0, %v10335
      %v10418 = vsub.f32 0.0, %v10340
      %v10419 = vsub.f32 0.0, %v10343
      %v10420 = vsub.f32 0.0, %v10348
      %v10421 = vsub.f32 0.0, %v10351
      %v10422 = vsub.f32 0.0, %v10356
      %v10423 = vsub.f32 0.0, %v10359
      %v10424 = vsub.f32 0.0, %v10364
      %v10425 = vsub.f32 0.0, %v10367
      %v10426 = vsub.f32 0.0, %v10372
      %v10427 = vsub.f32 0.0, %v10375
      %v10428 = vsub.f32 0.0, %v10380
      %v10429 = vsub.f32 0.0, %v10383
      %v10430 = vsub.f32 0.0, %v10388
      %v10431 = vsub.f32 0.0, %v10391
      %v10432 = vsub.f32 0.0, %v10396
      %v10433 = vsub.f32 0.0, %v10399
      %v10434 = vmul.f32 %v10402, 1.442695
      %v10435 = vpow.pop %v10434
      %v10436 = vmul.f32 %v10403, 1.442695
      %v10437 = vpow.pop %v10436
      %v10438 = vmul.f32 %v10404, 1.442695
      %v10439 = vpow.pop %v10438
      %v10440 = vmul.f32 %v10405, 1.442695
      %v10441 = vpow.pop %v10440
      %v10442 = vmul.f32 %v10406, 1.442695
      %v10443 = vpow.pop %v10442
      %v10444 = vmul.f32 %v10407, 1.442695
      %v10445 = vpow.pop %v10444
      %v10446 = vmul.f32 %v10408, 1.442695
      %v10447 = vpow.pop %v10446
      %v10448 = vmul.f32 %v10409, 1.442695
      %v10449 = vpow.pop %v10448
      %v10450 = vmul.f32 %v10410, 1.442695
      %v10451 = vpow.pop %v10450
      %v10452 = vmul.f32 %v10411, 1.442695
      %v10453 = vpow.pop %v10452
      %v10454 = vmul.f32 %v10412, 1.442695
      %v10455 = vpow.pop %v10454
      %v10456 = vmul.f32 %v10413, 1.442695
      %v10457 = vpow.pop %v10456
      %v10458 = vmul.f32 %v10414, 1.442695
      %v10459 = vpow.pop %v10458
      %v10460 = vmul.f32 %v10415, 1.442695
      %v10461 = vpow.pop %v10460
      %v10462 = vmul.f32 %v10416, 1.442695
      %v10463 = vpow.pop %v10462
      %v10464 = vmul.f32 %v10417, 1.442695
      %v10465 = vpow.pop %v10464
      %v10466 = vmul.f32 %v10418, 1.442695
      %v10467 = vpow.pop %v10466
      %v10468 = vmul.f32 %v10419, 1.442695
      %v10469 = vpow.pop %v10468
      %v10470 = vmul.f32 %v10420, 1.442695
      %v10471 = vpow.pop %v10470
      %v10472 = vmul.f32 %v10421, 1.442695
      %v10473 = vpow.pop %v10472
      %v10474 = vmul.f32 %v10422, 1.442695
      %v10475 = vpow.pop %v10474
      %v10476 = vmul.f32 %v10423, 1.442695
      %v10477 = vpow.pop %v10476
      %v10478 = vmul.f32 %v10424, 1.442695
      %v10479 = vpow.pop %v10478
      %v10480 = vmul.f32 %v10425, 1.442695
      %v10481 = vpow.pop %v10480
      %v10482 = vmul.f32 %v10426, 1.442695
      %v10483 = vpow.pop %v10482
      %v10484 = vmul.f32 %v10427, 1.442695
      %v10485 = vpow.pop %v10484
      %v10486 = vmul.f32 %v10428, 1.442695
      %v10487 = vpow.pop %v10486
      %v10488 = vmul.f32 %v10429, 1.442695
      %v10489 = vpow.pop %v10488
      %v10490 = vmul.f32 %v10430, 1.442695
      %v10491 = vpow.pop %v10490
      %v10492 = vmul.f32 %v10431, 1.442695
      %v10493 = vpow.pop %v10492
      %v10494 = vmul.f32 %v10432, 1.442695
      %v10495 = vpow.pop %v10494
      %v10496 = vmul.f32 %v10433, 1.442695
      %v10497 = vpow.pop %v10496
      %v10498 = vadd.f32 %v10435, 1.0
      %v10499 = vadd.f32 %v10437, 1.0
      %v10500 = vadd.f32 %v10439, 1.0
      %v10501 = vadd.f32 %v10441, 1.0
      %v10502 = vadd.f32 %v10443, 1.0
      %v10503 = vadd.f32 %v10445, 1.0
      %v10504 = vadd.f32 %v10447, 1.0
      %v10505 = vadd.f32 %v10449, 1.0
      %v10506 = vadd.f32 %v10451, 1.0
      %v10507 = vadd.f32 %v10453, 1.0
      %v10508 = vadd.f32 %v10455, 1.0
      %v10509 = vadd.f32 %v10457, 1.0
      %v10510 = vadd.f32 %v10459, 1.0
      %v10511 = vadd.f32 %v10461, 1.0
      %v10512 = vadd.f32 %v10463, 1.0
      %v10513 = vadd.f32 %v10465, 1.0
      %v10514 = vadd.f32 %v10467, 1.0
      %v10515 = vadd.f32 %v10469, 1.0
      %v10516 = vadd.f32 %v10471, 1.0
      %v10517 = vadd.f32 %v10473, 1.0
      %v10518 = vadd.f32 %v10475, 1.0
      %v10519 = vadd.f32 %v10477, 1.0
      %v10520 = vadd.f32 %v10479, 1.0
      %v10521 = vadd.f32 %v10481, 1.0
      %v10522 = vadd.f32 %v10483, 1.0
      %v10523 = vadd.f32 %v10485, 1.0
      %v10524 = vadd.f32 %v10487, 1.0
      %v10525 = vadd.f32 %v10489, 1.0
      %v10526 = vadd.f32 %v10491, 1.0
      %v10527 = vadd.f32 %v10493, 1.0
      %v10528 = vadd.f32 %v10495, 1.0
      %v10529 = vadd.f32 %v10497, 1.0
      %v10530 = vrcp.pop %v10498
      %v10531 = vrcp.pop %v10499
      %v10532 = vrcp.pop %v10500
      %v10533 = vrcp.pop %v10501
      %v10534 = vrcp.pop %v10502
      %v10535 = vrcp.pop %v10503
      %v10536 = vrcp.pop %v10504
      %v10537 = vrcp.pop %v10505
      %v10538 = vrcp.pop %v10506
      %v10539 = vrcp.pop %v10507
      %v10540 = vrcp.pop %v10508
      %v10541 = vrcp.pop %v10509
      %v10542 = vrcp.pop %v10510
      %v10543 = vrcp.pop %v10511
      %v10544 = vrcp.pop %v10512
      %v10545 = vrcp.pop %v10513
      %v10546 = vrcp.pop %v10514
      %v10547 = vrcp.pop %v10515
      %v10548 = vrcp.pop %v10516
      %v10549 = vrcp.pop %v10517
      %v10550 = vrcp.pop %v10518
      %v10551 = vrcp.pop %v10519
      %v10552 = vrcp.pop %v10520
      %v10553 = vrcp.pop %v10521
      %v10554 = vrcp.pop %v10522
      %v10555 = vrcp.pop %v10523
      %v10556 = vrcp.pop %v10524
      %v10557 = vrcp.pop %v10525
      %v10558 = vrcp.pop %v10526
      %v10559 = vrcp.pop %v10527
      %v10560 = vrcp.pop %v10528
      %v10561 = vrcp.pop %v10529
      %v10562 = vmul.f32 %v10136, %v10530
      %v10563 = vmul.f32 %v10137, %v10531
      %v10564 = vmul.f32 %v10138, %v10532
      %v10565 = vmul.f32 %v10139, %v10533
      %v10566 = vmul.f32 %v10140, %v10534
      %v10567 = vmul.f32 %v10141, %v10535
      %v10568 = vmul.f32 %v10142, %v10536
      %v10569 = vmul.f32 %v10143, %v10537
      %v10570 = vmul.f32 %v10144, %v10538
      %v10571 = vmul.f32 %v10145, %v10539
      %v10572 = vmul.f32 %v10146, %v10540
      %v10573 = vmul.f32 %v10147, %v10541
      %v10574 = vmul.f32 %v10148, %v10542
      %v10575 = vmul.f32 %v10149, %v10543
      %v10576 = vmul.f32 %v10150, %v10544
      %v10577 = vmul.f32 %v10151, %v10545
      %v10578 = vmul.f32 %v10152, %v10546
      %v10579 = vmul.f32 %v10153, %v10547
      %v10580 = vmul.f32 %v10154, %v10548
      %v10581 = vmul.f32 %v10155, %v10549
      %v10582 = vmul.f32 %v10156, %v10550
      %v10583 = vmul.f32 %v10157, %v10551
      %v10584 = vmul.f32 %v10158, %v10552
      %v10585 = vmul.f32 %v10159, %v10553
      %v10586 = vmul.f32 %v10160, %v10554
      %v10587 = vmul.f32 %v10161, %v10555
      %v10588 = vmul.f32 %v10162, %v10556
      %v10589 = vmul.f32 %v10163, %v10557
      %v10590 = vmul.f32 %v10164, %v10558
      %v10591 = vmul.f32 %v10165, %v10559
      %v10592 = vmul.f32 %v10166, %v10560
      %v10593 = vmul.f32 %v10167, %v10561
      %10626 = vrot.lane.b32.xlu0 %v10562, 16
      %v10627 = vpop.permute.xlu0 %10626
      %10628 = vrot.lane.b32.xlu0 %v10563, 16
      %v10629 = vpop.permute.xlu0 %10628
      %10630 = vrot.lane.b32.xlu0 %v10564, 16
      %v10631 = vpop.permute.xlu0 %10630
      %10632 = vrot.lane.b32.xlu0 %v10565, 16
      %v10633 = vpop.permute.xlu0 %10632
      %10634 = vrot.lane.b32.xlu0 %v10566, 16
      %v10635 = vpop.permute.xlu0 %10634
      %10636 = vrot.lane.b32.xlu0 %v10567, 16
      %v10637 = vpop.permute.xlu0 %10636
      %10638 = vrot.lane.b32.xlu0 %v10568, 16
      %v10639 = vpop.permute.xlu0 %10638
      %10640 = vrot.lane.b32.xlu0 %v10569, 16
      %v10641 = vpop.permute.xlu0 %10640
      %10642 = vrot.lane.b32.xlu0 %v10570, 16
      %v10643 = vpop.permute.xlu0 %10642
      %10644 = vrot.lane.b32.xlu0 %v10571, 16
      %v10645 = vpop.permute.xlu0 %10644
      %10646 = vrot.lane.b32.xlu0 %v10572, 16
      %v10647 = vpop.permute.xlu0 %10646
      %10648 = vrot.lane.b32.xlu0 %v10573, 16
      %v10649 = vpop.permute.xlu0 %10648
      %10650 = vrot.lane.b32.xlu0 %v10574, 16
      %v10651 = vpop.permute.xlu0 %10650
      %10652 = vrot.lane.b32.xlu0 %v10575, 16
      %v10653 = vpop.permute.xlu0 %10652
      %10654 = vrot.lane.b32.xlu0 %v10576, 16
      %v10655 = vpop.permute.xlu0 %10654
      %10656 = vrot.lane.b32.xlu0 %v10577, 16
      %v10657 = vpop.permute.xlu0 %10656
      %10658 = vrot.lane.b32.xlu0 %v10578, 16
      %v10659 = vpop.permute.xlu0 %10658
      %10660 = vrot.lane.b32.xlu0 %v10579, 16
      %v10661 = vpop.permute.xlu0 %10660
      %10662 = vrot.lane.b32.xlu0 %v10580, 16
      %v10663 = vpop.permute.xlu0 %10662
      %10664 = vrot.lane.b32.xlu0 %v10581, 16
      %v10665 = vpop.permute.xlu0 %10664
      %10666 = vrot.lane.b32.xlu0 %v10582, 16
      %v10667 = vpop.permute.xlu0 %10666
      %10668 = vrot.lane.b32.xlu0 %v10583, 16
      %v10669 = vpop.permute.xlu0 %10668
      %10670 = vrot.lane.b32.xlu0 %v10584, 16
      %v10671 = vpop.permute.xlu0 %10670
      %10672 = vrot.lane.b32.xlu0 %v10585, 16
      %v10673 = vpop.permute.xlu0 %10672
      %10674 = vrot.lane.b32.xlu0 %v10586, 16
      %v10675 = vpop.permute.xlu0 %10674
      %10676 = vrot.lane.b32.xlu0 %v10587, 16
      %v10677 = vpop.permute.xlu0 %10676
      %10678 = vrot.lane.b32.xlu0 %v10588, 16
      %v10679 = vpop.permute.xlu0 %10678
      %10680 = vrot.lane.b32.xlu0 %v10589, 16
      %v10681 = vpop.permute.xlu0 %10680
      %10682 = vrot.lane.b32.xlu0 %v10590, 16
      %v10683 = vpop.permute.xlu0 %10682
      %10684 = vrot.lane.b32.xlu0 %v10591, 16
      %v10685 = vpop.permute.xlu0 %10684
      %10686 = vrot.lane.b32.xlu0 %v10592, 16
      %v10687 = vpop.permute.xlu0 %10686
      %10688 = vrot.lane.b32.xlu0 %v10593, 16
      %v10689 = vpop.permute.xlu0 %10688
      %vm10722 = vcmask 195712
      %10723 = vst.msk [vmem:[#allocation2] sm:$0xff] %vm10722, %v10627
      %10724 = vst.msk [vmem:[#allocation2 + $0x8] sm:$0xff] %vm10722, %v10629
      %10725 = vst.msk [vmem:[#allocation2 + $0x10] sm:$0xff] %vm10722, %v10631
      %10726 = vst.msk [vmem:[#allocation2 + $0x18] sm:$0xff] %vm10722, %v10633
      %10727 = vst.msk [vmem:[#allocation2 + $0x20] sm:$0xff] %vm10722, %v10635
      %10728 = vst.msk [vmem:[#allocation2 + $0x28] sm:$0xff] %vm10722, %v10637
      %10729 = vst.msk [vmem:[#allocation2 + $0x30] sm:$0xff] %vm10722, %v10639
      %10730 = vst.msk [vmem:[#allocation2 + $0x38] sm:$0xff] %vm10722, %v10641
      %10731 = vst.msk [vmem:[#allocation2 + $0x40] sm:$0xff] %vm10722, %v10643
      %10732 = vst.msk [vmem:[#allocation2 + $0x48] sm:$0xff] %vm10722, %v10645
      %10733 = vst.msk [vmem:[#allocation2 + $0x50] sm:$0xff] %vm10722, %v10647
      %10734 = vst.msk [vmem:[#allocation2 + $0x58] sm:$0xff] %vm10722, %v10649
      %10735 = vst.msk [vmem:[#allocation2 + $0x60] sm:$0xff] %vm10722, %v10651
      %10736 = vst.msk [vmem:[#allocation2 + $0x68] sm:$0xff] %vm10722, %v10653
      %10737 = vst.msk [vmem:[#allocation2 + $0x70] sm:$0xff] %vm10722, %v10655
      %10738 = vst.msk [vmem:[#allocation2 + $0x78] sm:$0xff] %vm10722, %v10657
      %10739 = vst.msk [vmem:[#allocation2 + $0x80] sm:$0xff] %vm10722, %v10659
      %10740 = vst.msk [vmem:[#allocation2 + $0x88] sm:$0xff] %vm10722, %v10661
      %10741 = vst.msk [vmem:[#allocation2 + $0x90] sm:$0xff] %vm10722, %v10663
      %10742 = vst.msk [vmem:[#allocation2 + $0x98] sm:$0xff] %vm10722, %v10665
      %10743 = vst.msk [vmem:[#allocation2 + $0xa0] sm:$0xff] %vm10722, %v10667
      %10744 = vst.msk [vmem:[#allocation2 + $0xa8] sm:$0xff] %vm10722, %v10669
      %10745 = vst.msk [vmem:[#allocation2 + $0xb0] sm:$0xff] %vm10722, %v10671
      %10746 = vst.msk [vmem:[#allocation2 + $0xb8] sm:$0xff] %vm10722, %v10673
      %10747 = vst.msk [vmem:[#allocation2 + $0xc0] sm:$0xff] %vm10722, %v10675
      %10748 = vst.msk [vmem:[#allocation2 + $0xc8] sm:$0xff] %vm10722, %v10677
      %10749 = vst.msk [vmem:[#allocation2 + $0xd0] sm:$0xff] %vm10722, %v10679
      %10750 = vst.msk [vmem:[#allocation2 + $0xd8] sm:$0xff] %vm10722, %v10681
      %10751 = vst.msk [vmem:[#allocation2 + $0xe0] sm:$0xff] %vm10722, %v10683
      %10752 = vst.msk [vmem:[#allocation2 + $0xe8] sm:$0xff] %vm10722, %v10685
      %10753 = vst.msk [vmem:[#allocation2 + $0xf0] sm:$0xff] %vm10722, %v10687
      %10754 = vst.msk [vmem:[#allocation2 + $0xf8] sm:$0xff] %vm10722, %v10689
      %v10755 = vld [vmem:[%s1 + $0xc0] sm:$0xf]
      %v10756 = vld [vmem:[#allocation2] sm:$0xff]
      %v10757 = vld [vmem:[#allocation2 + $0x8] sm:$0xff]
      %v10758 = vld [vmem:[#allocation2 + $0x10] sm:$0xff]
      %v10759 = vld [vmem:[#allocation2 + $0x18] sm:$0xff]
      %v10760 = vld [vmem:[#allocation2 + $0x20] sm:$0xff]
      %v10761 = vld [vmem:[#allocation2 + $0x28] sm:$0xff]
      %v10762 = vld [vmem:[#allocation2 + $0x30] sm:$0xff]
      %v10763 = vld [vmem:[#allocation2 + $0x38] sm:$0xff]
      %v10764 = vld [vmem:[#allocation2 + $0x40] sm:$0xff]
      %v10765 = vld [vmem:[#allocation2 + $0x48] sm:$0xff]
      %v10766 = vld [vmem:[#allocation2 + $0x50] sm:$0xff]
      %v10767 = vld [vmem:[#allocation2 + $0x58] sm:$0xff]
      %v10768 = vld [vmem:[#allocation2 + $0x60] sm:$0xff]
      %v10769 = vld [vmem:[#allocation2 + $0x68] sm:$0xff]
      %v10770 = vld [vmem:[#allocation2 + $0x70] sm:$0xff]
      %v10771 = vld [vmem:[#allocation2 + $0x78] sm:$0xff]
      %v10772 = vld [vmem:[#allocation2 + $0x80] sm:$0xff]
      %v10773 = vld [vmem:[#allocation2 + $0x88] sm:$0xff]
      %v10774 = vld [vmem:[#allocation2 + $0x90] sm:$0xff]
      %v10775 = vld [vmem:[#allocation2 + $0x98] sm:$0xff]
      %v10776 = vld [vmem:[#allocation2 + $0xa0] sm:$0xff]
      %v10777 = vld [vmem:[#allocation2 + $0xa8] sm:$0xff]
      %v10778 = vld [vmem:[#allocation2 + $0xb0] sm:$0xff]
      %v10779 = vld [vmem:[#allocation2 + $0xb8] sm:$0xff]
      %v10780 = vld [vmem:[#allocation2 + $0xc0] sm:$0xff]
      %v10781 = vld [vmem:[#allocation2 + $0xc8] sm:$0xff]
      %v10782 = vld [vmem:[#allocation2 + $0xd0] sm:$0xff]
      %v10783 = vld [vmem:[#allocation2 + $0xd8] sm:$0xff]
      %v10784 = vld [vmem:[#allocation2 + $0xe0] sm:$0xff]
      %v10785 = vld [vmem:[#allocation2 + $0xe8] sm:$0xff]
      %v10786 = vld [vmem:[#allocation2 + $0xf0] sm:$0xff]
      %v10787 = vld [vmem:[#allocation2 + $0xf8] sm:$0xff]
      %v10788 = vpack.c.bf16 %v10757, %v10756
      %v10789 = vpack.c.bf16 %v10759, %v10758
      %v10790 = vpack.c.bf16 %v10761, %v10760
      %v10791 = vpack.c.bf16 %v10763, %v10762
      %v10792 = vpack.c.bf16 %v10765, %v10764
      %v10793 = vpack.c.bf16 %v10767, %v10766
      %v10794 = vpack.c.bf16 %v10769, %v10768
      %v10795 = vpack.c.bf16 %v10771, %v10770
      %v10796 = vpack.c.bf16 %v10773, %v10772
      %v10797 = vpack.c.bf16 %v10775, %v10774
      %v10798 = vpack.c.bf16 %v10777, %v10776
      %v10799 = vpack.c.bf16 %v10779, %v10778
      %v10800 = vpack.c.bf16 %v10781, %v10780
      %v10801 = vpack.c.bf16 %v10783, %v10782
      %v10802 = vpack.c.bf16 %v10785, %v10784
      %v10803 = vpack.c.bf16 %v10787, %v10786
      %v10804 = vld [vmem:[%s2 + $0x40] sm:$0xff]
      %10806 = vset.pattern.permute.xlu0 0
      %10807 = vperm.xlu0 %10806, %v10804
      %v10808 = vpop.permute.xlu0 %10807
      %vm10810 = vcmask 195584
      %v10812 = vsel %vm10810, %v10755, 0
      %v10815 = vsel %vm10810, %v10788, 0
      %v10818 = vsel %vm10810, %v10789, 0
      %v10821 = vsel %vm10810, %v10790, 0
      %v10824 = vsel %vm10810, %v10791, 0
      %v10827 = vsel %vm10810, %v10792, 0
      %v10830 = vsel %vm10810, %v10793, 0
      %v10833 = vsel %vm10810, %v10794, 0
      %v10836 = vsel %vm10810, %v10795, 0
      %v10839 = vsel %vm10810, %v10796, 0
      %v10842 = vsel %vm10810, %v10797, 0
      %v10845 = vsel %vm10810, %v10798, 0
      %v10848 = vsel %vm10810, %v10799, 0
      %v10851 = vsel %vm10810, %v10800, 0
      %v10854 = vsel %vm10810, %v10801, 0
      %v10857 = vsel %vm10810, %v10802, 0
      %v10860 = vsel %vm10810, %v10803, 0
      %10862 = vmatprep.subr.bf16.mxu0 0
      %10863 = vmatpush1.bf16.xpose.msra.mxu0 %v10815
      %10864 = vmatprep.subr.bf16.mxu0 0
      %10865 = vmatpush1.bf16.xpose.msra.mxu0 %v10818
      %10866 = vmatprep.subr.bf16.mxu0 0
      %10867 = vmatpush1.bf16.xpose.msra.mxu0 %v10821
      %10868 = vmatprep.subr.bf16.mxu0 0
      %10869 = vmatpush1.bf16.xpose.msra.mxu0 %v10824
      %10870 = vmatprep.subr.bf16.mxu0 0
      %10871 = vmatpush1.bf16.xpose.msra.mxu0 %v10827
      %10872 = vmatprep.subr.bf16.mxu0 0
      %10873 = vmatpush1.bf16.xpose.msra.mxu0 %v10830
      %10874 = vmatprep.subr.bf16.mxu0 0
      %10875 = vmatpush1.bf16.xpose.msra.mxu0 %v10833
      %10876 = vmatprep.subr.bf16.mxu0 0
      %10877 = vmatpush1.bf16.xpose.msra.mxu0 %v10836
      %10878 = vmatprep.subr.bf16.mxu0 0
      %10879 = vmatpush1.bf16.xpose.msra.mxu0 %v10839
      %10880 = vmatprep.subr.bf16.mxu0 0
      %10881 = vmatpush1.bf16.xpose.msra.mxu0 %v10842
      %10882 = vmatprep.subr.bf16.mxu0 0
      %10883 = vmatpush1.bf16.xpose.msra.mxu0 %v10845
      %10884 = vmatprep.subr.bf16.mxu0 0
      %10885 = vmatpush1.bf16.xpose.msra.mxu0 %v10848
      %10886 = vmatprep.subr.bf16.mxu0 0
      %10887 = vmatpush1.bf16.xpose.msra.mxu0 %v10851
      %10888 = vmatprep.subr.bf16.mxu0 0
      %10889 = vmatpush1.bf16.xpose.msra.mxu0 %v10854
      %10890 = vmatprep.subr.bf16.mxu0 0
      %10891 = vmatpush1.bf16.xpose.msra.mxu0 %v10857
      %10892 = vmatprep.subr.bf16.mxu0 0
      %10893 = vmatpush1.bf16.xpose.msra.mxu0 %v10860
      %10894 = vmatprep.mubr.bf16.mxu0 0
      %10895 = vmatmul.mubr.bf16.gmra.mrb[0].mxu0 %v10812
      %v10896 = vpop.f32.mrb[0].mxu0
      %v10897 = vadd.f32 %v10808, %v10896
      %v10898 = vpop.f32.mrb[0].mxu0
      %v10899 = vadd.f32 %v10808, %v10898
      %v10900 = vpop.f32.mrb[0].mxu0
      %v10901 = vpop.f32.mrb[0].mxu0
      %10902 = vdwg.mxu0
      %s10903 = sld [smem:[#allocation6]]
      %v10904 = vstv %s10903
      %v10905 = vmul.f32 %v10904, %v10897
      %v10906 = vmul.f32 %v10904, %v10899
      %s10907 = ssub.f32 1.0, %s10903
      %v10908 = vld [vmem:[%s193] sm:$0xff]
      %v10909 = vld [vmem:[%s193 + $0x8] sm:$0xff]
      %v10910 = vstv %s10907
      %v10911 = vmul.f32 %v10910, %v10908
      %v10912 = vmul.f32 %v10910, %v10909
      %v10913 = vadd.f32 %v10905, %v10911
      %v10914 = vadd.f32 %v10906, %v10912
      %10915 = vst [vmem:[%s198] sm:$0xff] %v10913
      %10916 = vst [vmem:[%s198 + $0x8] sm:$0xff] %v10914
      %p10917 = scmp.lt.s32.totalorder %s16, 1
      %s10918 = scalar_select %p10917, %s16, 1
      %s10919 = smul.addr %s10918, 2
      %s10920 = smul.addr %s10919, 8
      %s10921 = scalar_lea.vmem %s4, %s10920
      // Predicated region
      $region37: #{block_forward_pallas.1} parent=35 // pred_check
        %p10922 = pneg %p123
      $region38: #{block_forward_pallas.1} parent=35 // pred_check_branch
        %10924 = sbr.rel (%p10922) target = $region40
      $region39: #{block_forward_pallas.1} parent=35 // pred_region
        _
      $region40: #{block_forward_pallas.1} parent=35 // pred_fallthru
        _
    $region36: #{block_forward_pallas.1} parent=5 // pred_fallthru
      _
    %p10925 = scmp.le.s32.totalorder 2, %s11
    // Predicated region
    $region41: #{block_forward_pallas.1} parent=5 // pred_check
      %p10926 = pneg %p10925
    $region42: #{block_forward_pallas.1} parent=5 // pred_check_branch
      %10928 = sbr.rel (%p10926) target = $region44
    $region43: #{block_forward_pallas.1} parent=5 // pred_region
      %s10929 = ssub.s32 %s11, 2
      // Predicated region
      $region45: #{block_forward_pallas.1} parent=43 // pred_check
        %p10930 = pneg %p129
      $region46: #{block_forward_pallas.1} parent=43 // pred_check_branch
        %10932 = sbr.rel (%p10930) target = $region48
      $region47: #{block_forward_pallas.1} parent=43 // pred_region
        %p10933 = scmp.lt.s32.totalorder %s17, 1
        %s10934 = scalar_select %p10933, %s17, 1
        %s10935 = smul.addr %s10934, 2
        %s10936 = smul.addr %s10935, 8
        %s10937 = scalar_lea.vmem %s4, %s10936
      $region48: #{block_forward_pallas.1} parent=43 // pred_fallthru
        _
    $region44: #{block_forward_pallas.1} parent=5 // pred_fallthru
      _
  $region6: #{block_forward_pallas.1} parent=0 // loop_footer
    %s15 = sadd.s32 1, %s11
  $region7: #{block_forward_pallas.1} parent=0 // loop_footer_branch
    %10 = sbr.rel target = $region3
  $region8: #{block_forward_pallas.1} parent=0 // loop_exit
    _

</llo_original>
